<compile_context>
chip_gen: v5e
topology: v5e:2x2
jax: 0.10.0
libtpu: 0.0.40
codegen_flags: <defaults>
</compile_context>

<pallas_src>
import functools

import jax
import jax.numpy as jnp
from jax.experimental import pallas as pl
from jax.experimental.pallas import tpu as pltpu

# Make the pure-JAX reference use true f32 matmuls so the comparison is tight.
jax.config.update("jax_default_matmul_precision", "highest")

_NEG_INF = -1e30


# ---------------------------------------------------------------------------
# Rotary positional embedding (lane-dense folded-head layout).
# ---------------------------------------------------------------------------
def _make_rope_cache(seq_len, d_head, n_head, base=10000):
    """Stacked f32 cache (3, S, H*D):
       [0] = cos, [1] = -sin masked to the first half of every head,
       [2] = +sin masked to the second half of every head."""
    inv_freq = 1.0 / (base ** (jnp.arange(0, d_head, 2, dtype=jnp.float32) / d_head))
    t = jnp.arange(seq_len, dtype=jnp.float32)
    freqs = jnp.einsum("i,j->ij", t, inv_freq)          # (S, D/2)
    emb = jnp.concatenate([freqs, freqs], axis=-1)      # (S, D)
    cos = jnp.cos(emb)
    sin = jnp.sin(emb)
    first_half = (jnp.arange(d_head) < d_head // 2).astype(jnp.float32)
    sin_neg = -sin * first_half[None, :]                # nonzero on first half
    sin_pos = sin * (1.0 - first_half)[None, :]         # nonzero on second half
    cos_hd = jnp.tile(cos, (1, n_head))                 # (S, H*D)
    sin_neg_hd = jnp.tile(sin_neg, (1, n_head))
    sin_pos_hd = jnp.tile(sin_pos, (1, n_head))
    return jnp.stack([cos_hd, sin_neg_hd, sin_pos_hd], axis=0)


def _rope_kernel(d_head, q_ref, k_ref, c_ref, qo_ref, ko_ref):
    # q_ref/k_ref/qo_ref/ko_ref: (1, S_t, H*D); c_ref: (3, S_t, H*D) f32.
    cos = c_ref[0]
    sin_lo = c_ref[1]          # -sin on the first half of each head, else 0
    sin_hi = c_ref[2]          # +sin on the second half of each head, else 0
    hd = cos.shape[-1]
    half = d_head // 2
    lane_axis = cos.ndim - 1

    def rope(x):
        xf = x.astype(jnp.float32)
        # rotate_half per head via two XLU lane rotations; the half-masked
        # sin tables zero out lanes pulled from the neighbouring head.
        x_up = pltpu.roll(xf, hd - half, lane_axis)   # x[p + half] at lane p
        x_dn = pltpu.roll(xf, half, lane_axis)        # x[p - half] at lane p
        return xf * cos + x_up * sin_lo + x_dn * sin_hi

    qo_ref[0] = rope(q_ref[0]).astype(qo_ref.dtype)
    ko_ref[0] = rope(k_ref[0]).astype(ko_ref.dtype)


def apply_rotary(q_f, k_f, cache, d_head, seq_block=512):
    """q_f, k_f: [B, S, H*D] (folded heads, lane dense). cache: (3, S, H*D)."""
    B, S, HD = q_f.shape
    s_t = min(seq_block, S)
    assert S % s_t == 0 and s_t % 8 == 0 and HD % 128 == 0

    qk_spec = pl.BlockSpec((1, s_t, HD), lambda b, s: (b, s, 0))
    cache_spec = pl.BlockSpec((3, s_t, HD), lambda b, s: (0, s, 0))

    # TODO(synk): pass input_output_aliases={0: 0, 1: 1} when callers allow
    # in-place RoPE to avoid two fresh HBM output allocations.
    return pl.pallas_call(
        functools.partial(_rope_kernel, d_head),
        out_shape=(jax.ShapeDtypeStruct(q_f.shape, q_f.dtype),
                   jax.ShapeDtypeStruct(k_f.shape, k_f.dtype)),
        grid_spec=pltpu.PrefetchScalarGridSpec(
            num_scalar_prefetch=0,
            grid=(B, S // s_t),
            in_specs=[qk_spec, qk_spec, cache_spec],
            out_specs=[pl.BlockSpec((1, s_t, HD), lambda b, s: (b, s, 0)),
                       pl.BlockSpec((1, s_t, HD), lambda b, s: (b, s, 0))],
        ),
        compiler_params=pltpu.CompilerParams(
            dimension_semantics=("parallel", "parallel")),
    )(q_f, k_f, cache)


# ---------------------------------------------------------------------------
# Causal flash attention (online softmax).
# ---------------------------------------------------------------------------
def _flash_kernel(q_ref, k_ref, v_ref, o_ref, m_sc, l_sc, acc_sc):
    # q_ref/o_ref: (1, tq, D); k_ref/v_ref: (1, tk, D).
    tq, d = q_ref.shape[1], q_ref.shape[2]
    tk = k_ref.shape[1]
    qi = pl.program_id(1)
    kj = pl.program_id(2)

    @pl.when(kj == 0)
    def _init():
        m_sc[...] = jnp.full(m_sc.shape, _NEG_INF, dtype=m_sc.dtype)
        l_sc[...] = jnp.zeros(l_sc.shape, dtype=l_sc.dtype)
        acc_sc[...] = jnp.zeros(acc_sc.shape, dtype=acc_sc.dtype)

    # Skip kv blocks that lie entirely above the causal diagonal.
    @pl.when(kj * tk <= qi * tq + (tq - 1))
    def _compute():
        q = q_ref[0].astype(jnp.float32) * (d ** -0.5)
        k = k_ref[0].astype(jnp.float32)
        s = jax.lax.dot_general(q, k, (((1,), (1,)), ((), ())),
                                preferred_element_type=jnp.float32)   # (tq, tk)
        row = qi * tq + jax.lax.broadcasted_iota(jnp.int32, (tq, tk), 0)
        col = kj * tk + jax.lax.broadcasted_iota(jnp.int32, (tq, tk), 1)
        s = jnp.where(row >= col, s, _NEG_INF)

        m_prev = m_sc[...]                                            # (tq, 1)
        m_new = jnp.maximum(m_prev, jnp.max(s, axis=-1, keepdims=True))
        alpha = jnp.exp(m_prev - m_new)
        p = jnp.exp(s - m_new)
        l_sc[...] = alpha * l_sc[...] + jnp.sum(p, axis=-1, keepdims=True)
        acc_sc[...] = alpha * acc_sc[...] + jnp.dot(
            p, v_ref[0].astype(jnp.float32), preferred_element_type=jnp.float32)
        m_sc[...] = m_new

    @pl.when(kj == pl.num_programs(2) - 1)
    def _finalize():
        inv_l = pl.reciprocal(l_sc[...], approx=False)
        o_ref[0] = (acc_sc[...] * inv_l).astype(o_ref.dtype)


def flash_attention_causal(q, k, v, block_q=128, block_k=128):
    """q, k, v: [B*H, S, D] -> causal attention output [B*H, S, D]."""
    BH, S, D = q.shape
    tq = min(block_q, S)
    tk = min(block_k, S)
    assert S % tq == 0 and S % tk == 0

    return pl.pallas_call(
        _flash_kernel,
        out_shape=jax.ShapeDtypeStruct((BH, S, D), q.dtype),
        grid_spec=pltpu.PrefetchScalarGridSpec(
            num_scalar_prefetch=0,
            grid=(BH, S // tq, S // tk),
            in_specs=[
                pl.BlockSpec((1, tq, D), lambda b, i, j: (b, i, 0)),
                pl.BlockSpec((1, tk, D), lambda b, i, j: (b, j, 0)),
                pl.BlockSpec((1, tk, D), lambda b, i, j: (b, j, 0)),
            ],
            out_specs=pl.BlockSpec((1, tq, D), lambda b, i, j: (b, i, 0)),
            scratch_shapes=[
                pltpu.VMEM((tq, 1), jnp.float32),   # running max
                pltpu.VMEM((tq, 1), jnp.float32),   # running sum
                pltpu.VMEM((tq, D), jnp.float32),   # output accumulator
            ],
        ),
        compiler_params=pltpu.CompilerParams(
            dimension_semantics=("parallel", "parallel", "arbitrary")),
    )(q, k, v)


# ---------------------------------------------------------------------------
# Tiled matmul for the linear projections (bias=False, the Config default).
# ---------------------------------------------------------------------------
def _matmul_kernel(a_ref, b_ref, o_ref, acc_ref):
    @pl.when(pl.program_id(2) == 0)
    def _():
        acc_ref[...] = jnp.zeros(acc_ref.shape, dtype=acc_ref.dtype)

    acc_ref[...] += jnp.dot(a_ref[...], b_ref[...],
                            preferred_element_type=jnp.float32)

    @pl.when(pl.program_id(2) == pl.num_programs(2) - 1)
    def _():
        o_ref[...] = acc_ref[...].astype(o_ref.dtype)


def matmul(a, b, block_m=128, block_n=128, block_k=128):
    M, K = a.shape
    K2, N = b.shape
    assert K == K2
    tm, tn, tk = min(block_m, M), min(block_n, N), min(block_k, K)
    assert M % tm == 0 and N % tn == 0 and K % tk == 0

    return pl.pallas_call(
        _matmul_kernel,
        out_shape=jax.ShapeDtypeStruct((M, N), a.dtype),
        grid_spec=pltpu.PrefetchScalarGridSpec(
            num_scalar_prefetch=0,
            grid=(M // tm, N // tn, K // tk),
            in_specs=[pl.BlockSpec((tm, tk), lambda i, j, k: (i, k)),
                      pl.BlockSpec((tk, tn), lambda i, j, k: (k, j))],
            out_specs=pl.BlockSpec((tm, tn), lambda i, j, k: (i, j)),
            scratch_shapes=[pltpu.VMEM((tm, tn), jnp.float32)],
        ),
        compiler_params=pltpu.CompilerParams(
            dimension_semantics=("parallel", "parallel", "arbitrary")),
    )(a, b)


# ---------------------------------------------------------------------------
# Full Attention.forward
# ---------------------------------------------------------------------------
def attention_forward(x, w_qkv, w_o, n_head):
    """x: [B, S, d_model]; w_qkv: [3*d_model, d_model]; w_o: [d_model, d_model]."""
    B, S, d_model = x.shape
    H = n_head
    D = d_model // H
    assert d_model % H == 0 and D % 2 == 0

    # qkv projection (Pallas tiled matmul); weight is PyTorch [out, in].
    qkv = matmul(x.reshape(B * S, d_model), w_qkv.T).reshape(B, S, 3 * d_model)

    # '(n n_head d_head)' ordering -> each slab is already the lane-dense
    # folded-head layout [B, S, H*D] the RoPE kernel wants.
    q_f = qkv[:, :, 0:d_model]
    k_f = qkv[:, :, d_model:2 * d_model]
    v_f = qkv[:, :, 2 * d_model:3 * d_model]

    cache = _make_rope_cache(S, D, H)                 # (3, S, H*D), f32
    q_f, k_f = apply_rotary(q_f, k_f, cache, D)

    # Fold (B, H) for the attention kernel: [B, S, H*D] -> [B*H, S, D].
    def to_bh(t):
        return t.reshape(B, S, H, D).transpose(0, 2, 1, 3).reshape(B * H, S, D)

    z = flash_attention_causal(to_bh(q_f), to_bh(k_f), to_bh(v_f))
    z = z.reshape(B, H, S, D).transpose(0, 2, 1, 3).reshape(B * S, d_model)

    out = matmul(z, w_o.T)                            # output projection
    return out.reshape(B, S, d_model)


# ---------------------------------------------------------------------------
# Pure-JAX reference (mirrors the PyTorch module's eval path).
# ---------------------------------------------------------------------------
def _rotate_half_ref(x):
    d = x.shape[-1] // 2
    return jnp.concatenate([-x[..., d:], x[..., :d]], axis=-1)


def attention_reference(x, w_qkv, w_o, n_head):
    B, S, d_model = x.shape
    H = n_head
    D = d_model // H
    qkv = jnp.einsum("bsm,nm->bsn", x, w_qkv)
    qkv = qkv.reshape(B, S, 3, H, D).transpose(2, 0, 3, 1, 4)   # (3, B, H, S, D)
    q, k, v = qkv[0], qkv[1], qkv[2]

    inv_freq = 1.0 / (10000 ** (jnp.arange(0, D, 2, dtype=jnp.float32) / D))
    t = jnp.arange(S, dtype=jnp.float32)
    freqs = jnp.einsum("i,j->ij", t, inv_freq)
    emb = jnp.concatenate([freqs, freqs], axis=-1)
    cos = jnp.cos(emb)[None, None]
    sin = jnp.sin(emb)[None, None]
    q = q * cos + _rotate_half_ref(q) * sin
    k = k * cos + _rotate_half_ref(k) * sin

    scores = jnp.einsum("bhqd,bhkd->bhqk", q, k) / (D ** 0.5)
    mask = jnp.tril(jnp.ones((S, S), dtype=bool))
    scores = jnp.where(mask[None, None], scores, -jnp.inf)
    pattern = jax.nn.softmax(scores, axis=-1)
    z = jnp.einsum("bhqk,bhkd->bhqd", pattern, v)
    z = z.transpose(0, 2, 1, 3).reshape(B, S, d_model)
    return jnp.einsum("bsm,nm->bsn", z, w_o)


if __name__ == "__main__":
    key = jax.random.PRNGKey(0)
    kx, kw1, kw2 = jax.random.split(key, 3)

    # Small Config-consistent shapes: n_head=4, d_head=32 -> d_model=128,
    # seq (n_ctx) = 128, batch = 2.
    B, S, H, D = 2, 128, 4, 32
    d_model = H * D

    x = jax.random.normal(kx, (B, S, d_model), dtype=jnp.float32)
    w_qkv = jax.random.normal(kw1, (3 * d_model, d_model), dtype=jnp.float32)
    w_qkv = w_qkv * (d_model ** -0.5)
    w_o = jax.random.normal(kw2, (d_model, d_model), dtype=jnp.float32)
    w_o = w_o * (d_model ** -0.5)

    fwd = jax.jit(attention_forward, static_argnums=(3,))
    out = fwd(x, w_qkv, w_o, H)
    jax.block_until_ready(out)

    ref = attention_reference(x, w_qkv, w_o, H)
    assert out.shape == (B, S, d_model)
    max_err = float(jnp.max(jnp.abs(out - ref)))
    assert jnp.allclose(out, ref, atol=2e-3, rtol=2e-3), max_err

    print("KERNEL_OK")
</pallas_src>

<mosaic_0001>
module attributes {stable_mosaic.version = 11 : i64} {
  func.func @_matmul_kernel(%arg0: i32, %arg1: i32, %arg2: i32, %arg3: memref<128x128xf32, #tpu.memory_space<vmem>>, %arg4: memref<128x128xf32, #tpu.memory_space<vmem>>, %arg5: memref<128x128xf32, #tpu.memory_space<vmem>>, %arg6: memref<128x128xf32, #tpu.memory_space<vmem>>) attributes {dimension_semantics = [#tpu.dimension_semantics<parallel>, #tpu.dimension_semantics<parallel>, #tpu.dimension_semantics<arbitrary>], iteration_bounds = array<i64: 2, 3, 1>, scalar_prefetch = 0 : i64, scratch_operands = 1 : i64, tpu.core_type = #tpu.core_type<tc>, window_params = [{transform_indices = @transform_0, window_bounds = array<i64: 128, 128>}, {transform_indices = @transform_1, window_bounds = array<i64: 128, 128>}, {transform_indices = @transform_2, window_bounds = array<i64: 128, 128>}]} {
    %c0_i32 = arith.constant 0 : i32
    %0 = arith.cmpi eq, %arg2, %c0_i32 : i32
    %1 = arith.extui %0 : i1 to i32
    %c0_i32_0 = arith.constant 0 : i32
    %2 = arith.cmpi ne, %1, %c0_i32_0 : i32
    scf.if %2 {
      %cst_10 = arith.constant 0.000000e+00 : f32
      %12 = vector.broadcast %cst_10 : f32 to vector<128x128xf32>
      %c0_11 = arith.constant 0 : index
      %c0_12 = arith.constant 0 : index
      %13 = vector.load %arg6[%c0_11, %c0_12] : memref<128x128xf32, #tpu.memory_space<vmem>>, vector<128x128xf32>
      tpu.vector_store %arg6[%c0_11, %c0_12], %12 {strides = array<i32>} : memref<128x128xf32, #tpu.memory_space<vmem>>, vector<128x128xf32>,
    } else {
    }
    %c0 = arith.constant 0 : index
    %c0_1 = arith.constant 0 : index
    %3 = vector.load %arg6[%c0, %c0_1] : memref<128x128xf32, #tpu.memory_space<vmem>>, vector<128x128xf32>
    %c0_2 = arith.constant 0 : index
    %c0_3 = arith.constant 0 : index
    %4 = vector.load %arg3[%c0_2, %c0_3] : memref<128x128xf32, #tpu.memory_space<vmem>>, vector<128x128xf32>
    %c0_4 = arith.constant 0 : index
    %c0_5 = arith.constant 0 : index
    %5 = vector.load %arg4[%c0_4, %c0_5] : memref<128x128xf32, #tpu.memory_space<vmem>>, vector<128x128xf32>
    %cst = arith.constant dense<0.000000e+00> : vector<128x128xf32>
    %6 = tpu.matmul %4, %5, %cst {dimension_numbers = #tpu.dot_dimension_numbers<[1], [0], [0], [1], [0, 0, 1, 1], [], []>, precision = #tpu.contract_precision<fp32>} : vector<128x128xf32>, vector<128x128xf32>, vector<128x128xf32> -> vector<128x128xf32>
    %7 = arith.addf %3, %6 : vector<128x128xf32>
    %c0_6 = arith.constant 0 : index
    %c0_7 = arith.constant 0 : index
    %8 = vector.load %arg6[%c0_6, %c0_7] : memref<128x128xf32, #tpu.memory_space<vmem>>, vector<128x128xf32>
    tpu.vector_store %arg6[%c0_6, %c0_7], %7 {strides = array<i32>} : memref<128x128xf32, #tpu.memory_space<vmem>>, vector<128x128xf32>,
    %c0_i32_8 = arith.constant 0 : i32
    %9 = arith.cmpi eq, %arg2, %c0_i32_8 : i32
    %10 = arith.extui %9 : i1 to i32
    %c0_i32_9 = arith.constant 0 : i32
    %11 = arith.cmpi ne, %10, %c0_i32_9 : i32
    scf.if %11 {
      %c0_10 = arith.constant 0 : index
      %c0_11 = arith.constant 0 : index
      %12 = vector.load %arg6[%c0_10, %c0_11] : memref<128x128xf32, #tpu.memory_space<vmem>>, vector<128x128xf32>
      %c0_12 = arith.constant 0 : index
      %c0_13 = arith.constant 0 : index
      %13 = vector.load %arg5[%c0_12, %c0_13] : memref<128x128xf32, #tpu.memory_space<vmem>>, vector<128x128xf32>
      tpu.vector_store %arg5[%c0_12, %c0_13], %12 {strides = array<i32>} : memref<128x128xf32, #tpu.memory_space<vmem>>, vector<128x128xf32>,
    } else {
    }
    return
  }
  func.func @transform_0(%arg0: i32, %arg1: i32, %arg2: i32) -> (i32, i32) {
    %c0_i32 = arith.constant 0 : i32
    return %arg0, %arg2 : i32, i32
  }
  func.func @transform_1(%arg0: i32, %arg1: i32, %arg2: i32) -> (i32, i32) {
    %c0_i32 = arith.constant 0 : i32
    return %arg2, %arg1 : i32, i32
  }
  func.func @transform_2(%arg0: i32, %arg1: i32, %arg2: i32) -> (i32, i32) {
    %c0_i32 = arith.constant 0 : i32
    return %arg0, %arg1 : i32, i32
  }
}

module attributes {stable_mosaic.version = 11 : i64} {
  func.func @_rope_kernel(%arg0: i32, %arg1: i32, %arg2: memref<1x128x128xf32, #tpu.memory_space<vmem>>, %arg3: memref<1x128x128xf32, #tpu.memory_space<vmem>>, %arg4: memref<3x128x128xf32, #tpu.memory_space<vmem>>, %arg5: memref<1x128x128xf32, #tpu.memory_space<vmem>>, %arg6: memref<1x128x128xf32, #tpu.memory_space<vmem>>) attributes {dimension_semantics = [#tpu.dimension_semantics<parallel>, #tpu.dimension_semantics<parallel>], iteration_bounds = array<i64: 2, 1>, scalar_prefetch = 0 : i64, scratch_operands = 0 : i64, tpu.core_type = #tpu.core_type<tc>, window_params = [{transform_indices = @transform_0, window_bounds = array<i64: 1, 128, 128>}, {transform_indices = @transform_1, window_bounds = array<i64: 1, 128, 128>}, {transform_indices = @transform_2, window_bounds = array<i64: 3, 128, 128>}, {transform_indices = @transform_3, window_bounds = array<i64: 1, 128, 128>}, {transform_indices = @transform_4, window_bounds = array<i64: 1, 128, 128>}]} {
    %c0 = arith.constant 0 : index
    %c0_0 = arith.constant 0 : index
    %c0_1 = arith.constant 0 : index
    %0 = vector.load %arg4[%c0, %c0_0, %c0_1] : memref<3x128x128xf32, #tpu.memory_space<vmem>>, vector<1x128x128xf32>
    %1 = vector.shape_cast %0 : vector<1x128x128xf32> to vector<128x128xf32>
    %c1 = arith.constant 1 : index
    %c0_2 = arith.constant 0 : index
    %c0_3 = arith.constant 0 : index
    %2 = vector.load %arg4[%c1, %c0_2, %c0_3] : memref<3x128x128xf32, #tpu.memory_space<vmem>>, vector<1x128x128xf32>
    %3 = vector.shape_cast %2 : vector<1x128x128xf32> to vector<128x128xf32>
    %c2 = arith.constant 2 : index
    %c0_4 = arith.constant 0 : index
    %c0_5 = arith.constant 0 : index
    %4 = vector.load %arg4[%c2, %c0_4, %c0_5] : memref<3x128x128xf32, #tpu.memory_space<vmem>>, vector<1x128x128xf32>
    %5 = vector.shape_cast %4 : vector<1x128x128xf32> to vector<128x128xf32>
    %c0_6 = arith.constant 0 : index
    %c0_7 = arith.constant 0 : index
    %c0_8 = arith.constant 0 : index
    %6 = vector.load %arg2[%c0_6, %c0_7, %c0_8] : memref<1x128x128xf32, #tpu.memory_space<vmem>>, vector<1x128x128xf32>
    %7 = vector.shape_cast %6 : vector<1x128x128xf32> to vector<128x128xf32>
    %c112_i32 = arith.constant 112 : i32
    %8 = tpu.dynamic_rotate %7 by %c112_i32 dim 1 : vector<128x128xf32>, i32 -> vector<128x128xf32>
    %c16_i32 = arith.constant 16 : i32
    %9 = tpu.dynamic_rotate %7 by %c16_i32 dim 1 : vector<128x128xf32>, i32 -> vector<128x128xf32>
    %10 = arith.mulf %7, %1 : vector<128x128xf32>
    %11 = arith.mulf %8, %3 : vector<128x128xf32>
    %12 = arith.addf %10, %11 : vector<128x128xf32>
    %13 = arith.mulf %9, %5 : vector<128x128xf32>
    %14 = arith.addf %12, %13 : vector<128x128xf32>
    %c0_9 = arith.constant 0 : index
    %c0_10 = arith.constant 0 : index
    %c0_11 = arith.constant 0 : index
    %15 = vector.load %arg5[%c0_9, %c0_10, %c0_11] : memref<1x128x128xf32, #tpu.memory_space<vmem>>, vector<1x128x128xf32>
    %16 = vector.shape_cast %15 : vector<1x128x128xf32> to vector<128x128xf32>
    %17 = vector.shape_cast %14 : vector<128x128xf32> to vector<1x128x128xf32>
    tpu.vector_store %arg5[%c0_9, %c0_10, %c0_11], %17 {strides = array<i32>} : memref<1x128x128xf32, #tpu.memory_space<vmem>>, vector<1x128x128xf32>,
    %c0_12 = arith.constant 0 : index
    %c0_13 = arith.constant 0 : index
    %c0_14 = arith.constant 0 : index
    %18 = vector.load %arg3[%c0_12, %c0_13, %c0_14] : memref<1x128x128xf32, #tpu.memory_space<vmem>>, vector<1x128x128xf32>
    %19 = vector.shape_cast %18 : vector<1x128x128xf32> to vector<128x128xf32>
    %c112_i32_15 = arith.constant 112 : i32
    %20 = tpu.dynamic_rotate %19 by %c112_i32_15 dim 1 : vector<128x128xf32>, i32 -> vector<128x128xf32>
    %c16_i32_16 = arith.constant 16 : i32
    %21 = tpu.dynamic_rotate %19 by %c16_i32_16 dim 1 : vector<128x128xf32>, i32 -> vector<128x128xf32>
    %22 = arith.mulf %19, %1 : vector<128x128xf32>
    %23 = arith.mulf %20, %3 : vector<128x128xf32>
    %24 = arith.addf %22, %23 : vector<128x128xf32>
    %25 = arith.mulf %21, %5 : vector<128x128xf32>
    %26 = arith.addf %24, %25 : vector<128x128xf32>
    %c0_17 = arith.constant 0 : index
    %c0_18 = arith.constant 0 : index
    %c0_19 = arith.constant 0 : index
    %27 = vector.load %arg6[%c0_17, %c0_18, %c0_19] : memref<1x128x128xf32, #tpu.memory_space<vmem>>, vector<1x128x128xf32>
    %28 = vector.shape_cast %27 : vector<1x128x128xf32> to vector<128x128xf32>
    %29 = vector.shape_cast %26 : vector<128x128xf32> to vector<1x128x128xf32>
    tpu.vector_store %arg6[%c0_17, %c0_18, %c0_19], %29 {strides = array<i32>} : memref<1x128x128xf32, #tpu.memory_space<vmem>>, vector<1x128x128xf32>,
    return
  }
  func.func @transform_0(%arg0: i32, %arg1: i32) -> (i32, i32, i32) {
    %c0_i32 = arith.constant 0 : i32
    %c0_i32_0 = arith.constant 0 : i32
    return %arg0, %arg1, %c0_i32 : i32, i32, i32
  }
  func.func @transform_1(%arg0: i32, %arg1: i32) -> (i32, i32, i32) {
    %c0_i32 = arith.constant 0 : i32
    %c0_i32_0 = arith.constant 0 : i32
    return %arg0, %arg1, %c0_i32 : i32, i32, i32
  }
  func.func @transform_2(%arg0: i32, %arg1: i32) -> (i32, i32, i32) {
    %c0_i32 = arith.constant 0 : i32
    %c0_i32_0 = arith.constant 0 : i32
    %c0_i32_1 = arith.constant 0 : i32
    return %c0_i32, %arg1, %c0_i32_0 : i32, i32, i32
  }
  func.func @transform_3(%arg0: i32, %arg1: i32) -> (i32, i32, i32) {
    %c0_i32 = arith.constant 0 : i32
    %c0_i32_0 = arith.constant 0 : i32
    return %arg0, %arg1, %c0_i32 : i32, i32, i32
  }
  func.func @transform_4(%arg0: i32, %arg1: i32) -> (i32, i32, i32) {
    %c0_i32 = arith.constant 0 : i32
    %c0_i32_0 = arith.constant 0 : i32
    return %arg0, %arg1, %c0_i32 : i32, i32, i32
  }
}

module attributes {stable_mosaic.version = 11 : i64} {
  func.func @_flash_kernel(%arg0: i32, %arg1: i32, %arg2: i32, %arg3: memref<1x128x32xf32, #tpu.memory_space<vmem>>, %arg4: memref<1x128x32xf32, #tpu.memory_space<vmem>>, %arg5: memref<1x128x32xf32, #tpu.memory_space<vmem>>, %arg6: memref<1x128x32xf32, #tpu.memory_space<vmem>>, %arg7: memref<128x1xf32, #tpu.memory_space<vmem>>, %arg8: memref<128x1xf32, #tpu.memory_space<vmem>>, %arg9: memref<128x32xf32, #tpu.memory_space<vmem>>) attributes {dimension_semantics = [#tpu.dimension_semantics<parallel>, #tpu.dimension_semantics<parallel>, #tpu.dimension_semantics<arbitrary>], iteration_bounds = array<i64: 8, 1, 1>, scalar_prefetch = 0 : i64, scratch_operands = 3 : i64, tpu.core_type = #tpu.core_type<tc>, window_params = [{transform_indices = @transform_0, window_bounds = array<i64: 1, 128, 32>}, {transform_indices = @transform_1, window_bounds = array<i64: 1, 128, 32>}, {transform_indices = @transform_2, window_bounds = array<i64: 1, 128, 32>}, {transform_indices = @transform_3, window_bounds = array<i64: 1, 128, 32>}]} {
    %c0_i32 = arith.constant 0 : i32
    %0 = arith.cmpi eq, %arg2, %c0_i32 : i32
    %1 = arith.extui %0 : i1 to i32
    %c0_i32_0 = arith.constant 0 : i32
    %2 = arith.cmpi ne, %1, %c0_i32_0 : i32
    scf.if %2 {
      %cst = arith.constant -1.000000e+30 : f32
      %12 = vector.broadcast %cst : f32 to vector<128x1xf32>
      %c0 = arith.constant 0 : index
      %c0_5 = arith.constant 0 : index
      %13 = vector.load %arg7[%c0, %c0_5] : memref<128x1xf32, #tpu.memory_space<vmem>>, vector<128x1xf32>
      tpu.vector_store %arg7[%c0, %c0_5], %12 {strides = array<i32>} : memref<128x1xf32, #tpu.memory_space<vmem>>, vector<128x1xf32>,
      %cst_6 = arith.constant 0.000000e+00 : f32
      %14 = vector.broadcast %cst_6 : f32 to vector<128x1xf32>
      %c0_7 = arith.constant 0 : index
      %c0_8 = arith.constant 0 : index
      %15 = vector.load %arg8[%c0_7, %c0_8] : memref<128x1xf32, #tpu.memory_space<vmem>>, vector<128x1xf32>
      tpu.vector_store %arg8[%c0_7, %c0_8], %14 {strides = array<i32>} : memref<128x1xf32, #tpu.memory_space<vmem>>, vector<128x1xf32>,
      %cst_9 = arith.constant 0.000000e+00 : f32
      %16 = vector.broadcast %cst_9 : f32 to vector<128x32xf32>
      %c0_10 = arith.constant 0 : index
      %c0_11 = arith.constant 0 : index
      %17 = vector.load %arg9[%c0_10, %c0_11] : memref<128x32xf32, #tpu.memory_space<vmem>>, vector<128x32xf32>
      tpu.vector_store %arg9[%c0_10, %c0_11], %16 {strides = array<i32>} : memref<128x32xf32, #tpu.memory_space<vmem>>, vector<128x32xf32>,
    } else {
    }
    %c128_i32 = arith.constant 128 : i32
    %3 = arith.muli %arg2, %c128_i32 : i32
    %c128_i32_1 = arith.constant 128 : i32
    %4 = arith.muli %arg1, %c128_i32_1 : i32
    %c127_i32 = arith.constant 127 : i32
    %5 = arith.addi %4, %c127_i32 : i32
    %6 = arith.cmpi sle, %3, %5 : i32
    %7 = arith.extui %6 : i1 to i32
    %c0_i32_2 = arith.constant 0 : i32
    %8 = arith.cmpi ne, %7, %c0_i32_2 : i32
    scf.if %8 {
      %c0 = arith.constant 0 : index
      %c0_5 = arith.constant 0 : index
      %c0_6 = arith.constant 0 : index
      %12 = vector.load %arg3[%c0, %c0_5, %c0_6] : memref<1x128x32xf32, #tpu.memory_space<vmem>>, vector<1x128x32xf32>
      %13 = vector.shape_cast %12 : vector<1x128x32xf32> to vector<128x32xf32>
      %cst = arith.constant 0.176776692 : f32
      %14 = vector.broadcast %cst : f32 to vector<128x32xf32>
      %15 = arith.mulf %13, %14 : vector<128x32xf32>
      %c0_7 = arith.constant 0 : index
      %c0_8 = arith.constant 0 : index
      %c0_9 = arith.constant 0 : index
      %16 = vector.load %arg4[%c0_7, %c0_8, %c0_9] : memref<1x128x32xf32, #tpu.memory_space<vmem>>, vector<1x128x32xf32>
      %17 = vector.shape_cast %16 : vector<1x128x32xf32> to vector<128x32xf32>
      %cst_10 = arith.constant dense<0.000000e+00> : vector<128x128xf32>
      %18 = tpu.matmul %15, %17, %cst_10 {dimension_numbers = #tpu.dot_dimension_numbers<[1], [1], [0], [0], [0, 0, 1, 0], [], []>, precision = #tpu.contract_precision<fp32>} : vector<128x32xf32>, vector<128x32xf32>, vector<128x128xf32> -> vector<128x128xf32>
      %c128_i32_11 = arith.constant 128 : i32
      %19 = arith.muli %arg1, %c128_i32_11 : i32
      %20 = tpu.iota {dimensions = array<i32: 0>} : vector<128x128xi32>
      %21 = vector.broadcast %19 : i32 to vector<128x128xi32>
      %22 = arith.addi %21, %20 : vector<128x128xi32>
      %c128_i32_12 = arith.constant 128 : i32
      %23 = arith.muli %arg2, %c128_i32_12 : i32
      %24 = tpu.iota {dimensions = array<i32: 1>} : vector<128x128xi32>
      %25 = vector.broadcast %23 : i32 to vector<128x128xi32>
      %26 = arith.addi %25, %24 : vector<128x128xi32>
      %27 = arith.cmpi sge, %22, %26 : vector<128x128xi32>
      %cst_13 = arith.constant -1.000000e+30 : f32
      %28 = vector.broadcast %cst_13 : f32 to vector<128x128xf32>
      %29 = arith.select %27, %18, %28 : vector<128x128xi1>, vector<128x128xf32>
      %c0_14 = arith.constant 0 : index
      %c0_15 = arith.constant 0 : index
      %30 = vector.load %arg7[%c0_14, %c0_15] : memref<128x1xf32, #tpu.memory_space<vmem>>, vector<128x1xf32>
      %cst_16 = arith.constant dense<0xFF800000> : vector<128xf32>
      %31 = vector.multi_reduction <maximumf>, %29, %cst_16 [1] : vector<128x128xf32> to vector<128xf32>
      %32 = vector.shape_cast %31 : vector<128xf32> to vector<128x1xf32>
      %33 = arith.maximumf %30, %32 : vector<128x1xf32>
      %34 = arith.subf %30, %33 : vector<128x1xf32>
      %35 = math.exp %34 : vector<128x1xf32>
      %36 = vector.broadcast %33 : vector<128x1xf32> to vector<128x128xf32>
      %37 = arith.subf %29, %36 : vector<128x128xf32>
      %38 = math.exp %37 : vector<128x128xf32>
      %c0_17 = arith.constant 0 : index
      %c0_18 = arith.constant 0 : index
      %39 = vector.load %arg8[%c0_17, %c0_18] : memref<128x1xf32, #tpu.memory_space<vmem>>, vector<128x1xf32>
      %40 = arith.mulf %35, %39 : vector<128x1xf32>
      %cst_19 = arith.constant dense<0.000000e+00> : vector<128xf32>
      %41 = vector.multi_reduction <add>, %38, %cst_19 [1] : vector<128x128xf32> to vector<128xf32>
      %42 = vector.shape_cast %41 : vector<128xf32> to vector<128x1xf32>
      %43 = arith.addf %40, %42 : vector<128x1xf32>
      %c0_20 = arith.constant 0 : index
      %c0_21 = arith.constant 0 : index
      %44 = vector.load %arg8[%c0_20, %c0_21] : memref<128x1xf32, #tpu.memory_space<vmem>>, vector<128x1xf32>
      tpu.vector_store %arg8[%c0_20, %c0_21], %43 {strides = array<i32>} : memref<128x1xf32, #tpu.memory_space<vmem>>, vector<128x1xf32>,
      %c0_22 = arith.constant 0 : index
      %c0_23 = arith.constant 0 : index
      %45 = vector.load %arg9[%c0_22, %c0_23] : memref<128x32xf32, #tpu.memory_space<vmem>>, vector<128x32xf32>
      %46 = vector.broadcast %35 : vector<128x1xf32> to vector<128x32xf32>
      %47 = arith.mulf %46, %45 : vector<128x32xf32>
      %c0_24 = arith.constant 0 : index
      %c0_25 = arith.constant 0 : index
      %c0_26 = arith.constant 0 : index
      %48 = vector.load %arg5[%c0_24, %c0_25, %c0_26] : memref<1x128x32xf32, #tpu.memory_space<vmem>>, vector<1x128x32xf32>
      %49 = vector.shape_cast %48 : vector<1x128x32xf32> to vector<128x32xf32>
      %cst_27 = arith.constant dense<0.000000e+00> : vector<128x32xf32>
      %50 = tpu.matmul %38, %49, %cst_27 {dimension_numbers = #tpu.dot_dimension_numbers<[1], [0], [0], [1], [0, 0, 1, 1], [], []>, precision = #tpu.contract_precision<fp32>} : vector<128x128xf32>, vector<128x32xf32>, vector<128x32xf32> -> vector<128x32xf32>
      %51 = arith.addf %47, %50 : vector<128x32xf32>
      %c0_28 = arith.constant 0 : index
      %c0_29 = arith.constant 0 : index
      %52 = vector.load %arg9[%c0_28, %c0_29] : memref<128x32xf32, #tpu.memory_space<vmem>>, vector<128x32xf32>
      tpu.vector_store %arg9[%c0_28, %c0_29], %51 {strides = array<i32>} : memref<128x32xf32, #tpu.memory_space<vmem>>, vector<128x32xf32>,
      %c0_30 = arith.constant 0 : index
      %c0_31 = arith.constant 0 : index
      %53 = vector.load %arg7[%c0_30, %c0_31] : memref<128x1xf32, #tpu.memory_space<vmem>>, vector<128x1xf32>
      tpu.vector_store %arg7[%c0_30, %c0_31], %33 {strides = array<i32>} : memref<128x1xf32, #tpu.memory_space<vmem>>, vector<128x1xf32>,
    } else {
    }
    %c0_i32_3 = arith.constant 0 : i32
    %9 = arith.cmpi eq, %arg2, %c0_i32_3 : i32
    %10 = arith.extui %9 : i1 to i32
    %c0_i32_4 = arith.constant 0 : i32
    %11 = arith.cmpi ne, %10, %c0_i32_4 : i32
    scf.if %11 {
      %c0 = arith.constant 0 : index
      %c0_5 = arith.constant 0 : index
      %12 = vector.load %arg8[%c0, %c0_5] : memref<128x1xf32, #tpu.memory_space<vmem>>, vector<128x1xf32>
      %13 = tpu.reciprocal %12 : vector<128x1xf32> -> vector<128x1xf32>
      %c0_6 = arith.constant 0 : index
      %c0_7 = arith.constant 0 : index
      %14 = vector.load %arg9[%c0_6, %c0_7] : memref<128x32xf32, #tpu.memory_space<vmem>>, vector<128x32xf32>
      %15 = vector.broadcast %13 : vector<128x1xf32> to vector<128x32xf32>
      %16 = arith.mulf %14, %15 : vector<128x32xf32>
      %c0_8 = arith.constant 0 : index
      %c0_9 = arith.constant 0 : index
      %c0_10 = arith.constant 0 : index
      %17 = vector.load %arg6[%c0_8, %c0_9, %c0_10] : memref<1x128x32xf32, #tpu.memory_space<vmem>>, vector<1x128x32xf32>
      %18 = vector.shape_cast %17 : vector<1x128x32xf32> to vector<128x32xf32>
      %19 = vector.shape_cast %16 : vector<128x32xf32> to vector<1x128x32xf32>
      tpu.vector_store %arg6[%c0_8, %c0_9, %c0_10], %19 {strides = array<i32>} : memref<1x128x32xf32, #tpu.memory_space<vmem>>, vector<1x128x32xf32>,
    } else {
    }
    return
  }
  func.func @transform_0(%arg0: i32, %arg1: i32, %arg2: i32) -> (i32, i32, i32) {
    %c0_i32 = arith.constant 0 : i32
    %c0_i32_0 = arith.constant 0 : i32
    return %arg0, %arg1, %c0_i32 : i32, i32, i32
  }
  func.func @transform_1(%arg0: i32, %arg1: i32, %arg2: i32) -> (i32, i32, i32) {
    %c0_i32 = arith.constant 0 : i32
    %c0_i32_0 = arith.constant 0 : i32
    return %arg0, %arg2, %c0_i32 : i32, i32, i32
  }
  func.func @transform_2(%arg0: i32, %arg1: i32, %arg2: i32) -> (i32, i32, i32) {
    %c0_i32 = arith.constant 0 : i32
    %c0_i32_0 = arith.constant 0 : i32
    return %arg0, %arg2, %c0_i32 : i32, i32, i32
  }
  func.func @transform_3(%arg0: i32, %arg1: i32, %arg2: i32) -> (i32, i32, i32) {
    %c0_i32 = arith.constant 0 : i32
    %c0_i32_0 = arith.constant 0 : i32
    return %arg0, %arg1, %c0_i32 : i32, i32, i32
  }
}

module attributes {stable_mosaic.version = 11 : i64} {
  func.func @_matmul_kernel(%arg0: i32, %arg1: i32, %arg2: i32, %arg3: memref<128x128xf32, #tpu.memory_space<vmem>>, %arg4: memref<128x128xf32, #tpu.memory_space<vmem>>, %arg5: memref<128x128xf32, #tpu.memory_space<vmem>>, %arg6: memref<128x128xf32, #tpu.memory_space<vmem>>) attributes {dimension_semantics = [#tpu.dimension_semantics<parallel>, #tpu.dimension_semantics<parallel>, #tpu.dimension_semantics<arbitrary>], iteration_bounds = array<i64: 2, 1, 1>, scalar_prefetch = 0 : i64, scratch_operands = 1 : i64, tpu.core_type = #tpu.core_type<tc>, window_params = [{transform_indices = @transform_0, window_bounds = array<i64: 128, 128>}, {transform_indices = @transform_1, window_bounds = array<i64: 128, 128>}, {transform_indices = @transform_2, window_bounds = array<i64: 128, 128>}]} {
    %c0_i32 = arith.constant 0 : i32
    %0 = arith.cmpi eq, %arg2, %c0_i32 : i32
    %1 = arith.extui %0 : i1 to i32
    %c0_i32_0 = arith.constant 0 : i32
    %2 = arith.cmpi ne, %1, %c0_i32_0 : i32
    scf.if %2 {
      %cst_10 = arith.constant 0.000000e+00 : f32
      %12 = vector.broadcast %cst_10 : f32 to vector<128x128xf32>
      %c0_11 = arith.constant 0 : index
      %c0_12 = arith.constant 0 : index
      %13 = vector.load %arg6[%c0_11, %c0_12] : memref<128x128xf32, #tpu.memory_space<vmem>>, vector<128x128xf32>
      tpu.vector_store %arg6[%c0_11, %c0_12], %12 {strides = array<i32>} : memref<128x128xf32, #tpu.memory_space<vmem>>, vector<128x128xf32>,
    } else {
    }
    %c0 = arith.constant 0 : index
    %c0_1 = arith.constant 0 : index
    %3 = vector.load %arg6[%c0, %c0_1] : memref<128x128xf32, #tpu.memory_space<vmem>>, vector<128x128xf32>
    %c0_2 = arith.constant 0 : index
    %c0_3 = arith.constant 0 : index
    %4 = vector.load %arg3[%c0_2, %c0_3] : memref<128x128xf32, #tpu.memory_space<vmem>>, vector<128x128xf32>
    %c0_4 = arith.constant 0 : index
    %c0_5 = arith.constant 0 : index
    %5 = vector.load %arg4[%c0_4, %c0_5] : memref<128x128xf32, #tpu.memory_space<vmem>>, vector<128x128xf32>
    %cst = arith.constant dense<0.000000e+00> : vector<128x128xf32>
    %6 = tpu.matmul %4, %5, %cst {dimension_numbers = #tpu.dot_dimension_numbers<[1], [0], [0], [1], [0, 0, 1, 1], [], []>, precision = #tpu.contract_precision<fp32>} : vector<128x128xf32>, vector<128x128xf32>, vector<128x128xf32> -> vector<128x128xf32>
    %7 = arith.addf %3, %6 : vector<128x128xf32>
    %c0_6 = arith.constant 0 : index
    %c0_7 = arith.constant 0 : index
    %8 = vector.load %arg6[%c0_6, %c0_7] : memref<128x128xf32, #tpu.memory_space<vmem>>, vector<128x128xf32>
    tpu.vector_store %arg6[%c0_6, %c0_7], %7 {strides = array<i32>} : memref<128x128xf32, #tpu.memory_space<vmem>>, vector<128x128xf32>,
    %c0_i32_8 = arith.constant 0 : i32
    %9 = arith.cmpi eq, %arg2, %c0_i32_8 : i32
    %10 = arith.extui %9 : i1 to i32
    %c0_i32_9 = arith.constant 0 : i32
    %11 = arith.cmpi ne, %10, %c0_i32_9 : i32
    scf.if %11 {
      %c0_10 = arith.constant 0 : index
      %c0_11 = arith.constant 0 : index
      %12 = vector.load %arg6[%c0_10, %c0_11] : memref<128x128xf32, #tpu.memory_space<vmem>>, vector<128x128xf32>
      %c0_12 = arith.constant 0 : index
      %c0_13 = arith.constant 0 : index
      %13 = vector.load %arg5[%c0_12, %c0_13] : memref<128x128xf32, #tpu.memory_space<vmem>>, vector<128x128xf32>
      tpu.vector_store %arg5[%c0_12, %c0_13], %12 {strides = array<i32>} : memref<128x128xf32, #tpu.memory_space<vmem>>, vector<128x128xf32>,
    } else {
    }
    return
  }
  func.func @transform_0(%arg0: i32, %arg1: i32, %arg2: i32) -> (i32, i32) {
    %c0_i32 = arith.constant 0 : i32
    return %arg0, %arg2 : i32, i32
  }
  func.func @transform_1(%arg0: i32, %arg1: i32, %arg2: i32) -> (i32, i32) {
    %c0_i32 = arith.constant 0 : i32
    return %arg2, %arg1 : i32, i32
  }
  func.func @transform_2(%arg0: i32, %arg1: i32, %arg2: i32) -> (i32, i32) {
    %c0_i32 = arith.constant 0 : i32
    return %arg0, %arg1 : i32, i32
  }
}

</mosaic_0001>

<llo_original>
// kernel: attention_forward.4
$region0: #{attention_forward.4}
  #allocation0 [shape = 'u32[]', space=smem, size = 0x4, offset = 0x4, fixed_abs, tag = 'smem constant byte address 0x4 - core index']
  #allocation1 [shape = 'u32[72,128]{1,0:T(1,128)}', space=vmem, size = 0x9000, scoped, tag = 'internal scratch']
  #allocation2 [shape = 'f32[128,128]{1,0:T(8,128)}', space=vmem, size = 0x10000, scoped, tag = 'scratch operand']
  %s0 = inlined_call_operand.vmem [shape: f32[256,128], index: 0, kind: input, shape index: {}]
  %s1 = inlined_call_operand.vmem [shape: f32[128,384], index: 1, kind: input, shape index: {}]
  %s2 = inlined_call_operand.vmem [shape: f32[256,384], index: 2, kind: output, shape index: {}]
  %s3 = sld [smem:[#allocation0]]
  $region121: #{attention_forward.4} parent=0
    _
  %s5 = ssub.s32 1, %s3
  %s6 = scalar_select 0, %s5, %s3
  $region1: #{attention_forward.4} parent=0
    #allocation3 [shape = 'u8[131072]{0}', space=vmem, size = 0x20000, scoped, tag = 'input window, operand 1']
    #allocation4 [shape = 'u8[131072]{0}', space=vmem, size = 0x20000, scoped, tag = 'output window, operand 0']
    loop: start=0, step=1, limit=8
    $region2: #{attention_forward.4} parent=1 // loop_pre_header
      _
    $region3: #{attention_forward.4} parent=1 // loop_header
      %s8 = sphi 0, %s12
      %p9 = scmp.ge.s32.totalorder %s8, 8
      %s15 = sphi 0, %s34
      %s16 = sphi 0, %s30
      %s17 = sphi 0, %s26
      %s18 = sphi 0, %s15
      %s19 = sphi 0, %s16
      %s20 = sphi 0, %s17
      %s21 = sphi 0, %s18
      %s22 = sphi 0, %s19
      %s23 = sphi 0, %s20
      %s39 = sphi 0, %s41
      %s42 = sphi 0, %s39
      %s43 = sphi 0, %s42
      %s59 = sphi 0, %s43
      %s67 = sphi 0, %s69
      %s70 = sphi 0, %s67
      %s71 = sphi 0, %s70
      %s87 = sphi 0, %s71
      %s95 = sphi 0, %s97
      %s98 = sphi 0, %s95
      %s99 = sphi 0, %s98
      %s115 = sphi 0, %s99
    $region4: #{attention_forward.4} parent=1 // loop_header_branch
      %11 = sbr.rel (%p9) target = $region8
    $region5: #{attention_forward.4} parent=1 // loop_body
      %s13 = ssub.s32 %s8, 1
      %s14 = ssub.s32 %s8, 2
      %s24 = sadd.s32 1, %s17
      %p25 = scmp.ge.s32.totalorder %s24, 1
      %s26 = scalar_select %p25, 0, %s24
      %s27 = sadd.s32 1, %s16
      %s28 = scalar_select %p25, %s27, %s16
      %p29 = scmp.ge.s32.totalorder %s28, 3
      %s30 = scalar_select %p29, 0, %s28
      %s31 = sadd.s32 1, %s15
      %s32 = scalar_select %p29, %s31, %s15
      %p33 = scmp.ge.s32.totalorder %s32, 2
      %s34 = scalar_select %p33, 0, %s32
      %s35 = ssub.s32 %s15, %s34
      %s36 = ssub.s32 %s17, %s26
      %s37 = sor.u32 %s35, %s36
      %p38 = scmp.eq.s32.totalorder %s37, 0
      %s40 = sadd.s32 %s39, 1
      %s41 = scalar_select %p38, %s39, %s40
      %p44 = pneg %p38
      %p45 = scmp.eq.s32.totalorder %s8, 5
      %p46 = por %p44, %p45
      %p47 = scmp.ne.s32.totalorder %s39, %s42
      %p48 = scmp.eq.s32.totalorder %s8, 0
      %p49 = por %p47, %p48
      %p50 = scmp.ne.s32.totalorder %s39, %s42
      %p51 = scmp.eq.s32.totalorder %s13, 5
      %p52 = por %p50, %p51
      %p53 = scmp.ne.s32.totalorder %s42, %s43
      %p54 = scmp.eq.s32.totalorder %s13, 0
      %p55 = por %p53, %p54
      %p56 = scmp.ne.s32.totalorder %s42, %s43
      %p57 = scmp.eq.s32.totalorder %s14, 5
      %p58 = por %p56, %p57
      %p60 = scmp.ne.s32.totalorder %s43, %s59
      %p61 = scmp.eq.s32.totalorder %s14, 0
      %p62 = por %p60, %p61
      %s63 = ssub.s32 %s17, %s26
      %s64 = ssub.s32 %s16, %s30
      %s65 = sor.u32 %s63, %s64
      %p66 = scmp.eq.s32.totalorder %s65, 0
      %s68 = sadd.s32 %s67, 1
      %s69 = scalar_select %p66, %s67, %s68
      %p72 = pneg %p66
      %p73 = scmp.eq.s32.totalorder %s8, 5
      %p74 = por %p72, %p73
      %p75 = scmp.ne.s32.totalorder %s67, %s70
      %p76 = scmp.eq.s32.totalorder %s8, 0
      %p77 = por %p75, %p76
      %p78 = scmp.ne.s32.totalorder %s67, %s70
      %p79 = scmp.eq.s32.totalorder %s13, 5
      %p80 = por %p78, %p79
      %p81 = scmp.ne.s32.totalorder %s70, %s71
      %p82 = scmp.eq.s32.totalorder %s13, 0
      %p83 = por %p81, %p82
      %p84 = scmp.ne.s32.totalorder %s70, %s71
      %p85 = scmp.eq.s32.totalorder %s14, 5
      %p86 = por %p84, %p85
      %p88 = scmp.ne.s32.totalorder %s71, %s87
      %p89 = scmp.eq.s32.totalorder %s14, 0
      %p90 = por %p88, %p89
      %s91 = ssub.s32 %s15, %s34
      %s92 = ssub.s32 %s16, %s30
      %s93 = sor.u32 %s91, %s92
      %p94 = scmp.eq.s32.totalorder %s93, 0
      %s96 = sadd.s32 %s95, 1
      %s97 = scalar_select %p94, %s95, %s96
      %p100 = pneg %p94
      %p101 = scmp.eq.s32.totalorder %s8, 5
      %p102 = por %p100, %p101
      %p103 = scmp.ne.s32.totalorder %s95, %s98
      %p104 = scmp.eq.s32.totalorder %s8, 0
      %p105 = por %p103, %p104
      %p106 = scmp.ne.s32.totalorder %s95, %s98
      %p107 = scmp.eq.s32.totalorder %s13, 5
      %p108 = por %p106, %p107
      %p109 = scmp.ne.s32.totalorder %s98, %s99
      %p110 = scmp.eq.s32.totalorder %s13, 0
      %p111 = por %p109, %p110
      %p112 = scmp.ne.s32.totalorder %s98, %s99
      %p113 = scmp.eq.s32.totalorder %s14, 5
      %p114 = por %p112, %p113
      %p116 = scmp.ne.s32.totalorder %s99, %s115
      %p117 = scmp.eq.s32.totalorder %s14, 0
      %p118 = por %p116, %p117
      %p119 = scmp.le.s32.totalorder 1, %s8
      %p120 = scmp.lt.s32.totalorder %s8, 7
      %p121 = pnand %p119, %p120
      %p122 = pneg %p121
      // Predicated region
      $region9: #{attention_forward.4} parent=5 // pred_check
        _
      $region10: #{attention_forward.4} parent=5 // pred_check_branch
        %124 = sbr.rel (%p121) target = $region12
      $region11: #{attention_forward.4} parent=5 // pred_region
        %s125 = ssub.s32 %s8, 1
      $region12: #{attention_forward.4} parent=5 // pred_fallthru
        _
      %p126 = scmp.lt.s32.totalorder %s8, 6
      // Predicated region
      $region13: #{attention_forward.4} parent=5 // pred_check
        %p127 = pneg %p126
      $region14: #{attention_forward.4} parent=5 // pred_check_branch
        %129 = sbr.rel (%p127) target = $region16
      $region15: #{attention_forward.4} parent=5 // pred_region
        // Predicated region
        $region17: #{attention_forward.4} parent=15 // pred_check
          %p130 = pneg %p49
        $region18: #{attention_forward.4} parent=15 // pred_check_branch
          %132 = sbr.rel (%p130) target = $region20
        $region19: #{attention_forward.4} parent=15 // pred_region
          %s133 = smul.u32 16, %s15
          %p134 = scmp.lt.s32.totalorder %s133, 31
          %s135 = scalar_select %p134, %s133, 31
          %p136 = scmp.lt.s32.totalorder %s17, 0
          %s137 = scalar_select %p136, %s17, 0
          %s138 = sadd.s32 %s137, %s135
          %s139 = smul.addr %s138, 8
          %s140 = scalar_lea.vmem %s0, %s139
          %s141 = smul.u32 16, %s15
        $region20: #{attention_forward.4} parent=15 // pred_fallthru
          _
        // Predicated region
        $region21: #{attention_forward.4} parent=15 // pred_check
          %p142 = pneg %p77
        $region22: #{attention_forward.4} parent=15 // pred_check_branch
          %144 = sbr.rel (%p142) target = $region24
        $region23: #{attention_forward.4} parent=15 // pred_region
          %s145 = sand.u32 %s67, 1
          %s146 = sand.u32 %s67, 1
          %s147 = smul.addr %s146, 128
          %s148 = scalar_lea.vmem [#allocation3], %s147
          %s149 = smul.u32 16, %s17
          %s150 = smul.addr %s149, 3
          %s151 = sadd.s32 %s16, %s150
          %s152 = smul.addr %s151, 8
          %s153 = scalar_lea.vmem %s1, %s152
          // Predicated region
          $region25: #{attention_forward.4} parent=23 // pred_check
            _
          $region26: #{attention_forward.4} parent=23 // pred_check_branch
            %155 = sbr.rel (0) target = $region28
          $region27: #{attention_forward.4} parent=23 // pred_region
            // Predicated region
            $region29: #{attention_forward.4} parent=27 // pred_check
              _
            $region30: #{attention_forward.4} parent=27 // pred_check_branch
              %157 = sbr.rel (0) target = $region32
            $region31: #{attention_forward.4} parent=27 // pred_region
              // Predicated region
              $region44: #{attention_forward.4} parent=31 // pred_check
                _
              $region45: #{attention_forward.4} parent=31 // pred_check_branch
                %203 = sbr.rel (0) target = $region47
              $region46: #{attention_forward.4} parent=31 // pred_region
                loop: start=0, step=1, limit=1
                $region48: #{attention_forward.4} parent=46 // loop_pre_header
                  _
                $region49: #{attention_forward.4} parent=46 // loop_header
                  %s205 = sphi 0, %s209
                  %p206 = scmp.ge.s32.totalorder %s205, 1
                  %s210 = sphi %s153, %s153
                  %s211 = sphi %s148, %s148
                $region50: #{attention_forward.4} parent=46 // loop_header_branch
                  %208 = sbr.rel (%p206) target = $region54
                $region51: #{attention_forward.4} parent=46 // loop_body
                  %v212 = vld [vmem:[%s210] sm:$0xff]
                  %213 = vst [vmem:[%s211] sm:$0xff] %v212
                  %v214 = vld [vmem:[%s210 + $0x18] sm:$0xff]
                  %215 = vst [vmem:[%s211 + $0x8] sm:$0xff] %v214
                  %v216 = vld [vmem:[%s210 + $0x30] sm:$0xff]
                  %217 = vst [vmem:[%s211 + $0x10] sm:$0xff] %v216
                  %v218 = vld [vmem:[%s210 + $0x48] sm:$0xff]
                  %219 = vst [vmem:[%s211 + $0x18] sm:$0xff] %v218
                  %v220 = vld [vmem:[%s210 + $0x60] sm:$0xff]
                  %221 = vst [vmem:[%s211 + $0x20] sm:$0xff] %v220
                  %v222 = vld [vmem:[%s210 + $0x78] sm:$0xff]
                  %223 = vst [vmem:[%s211 + $0x28] sm:$0xff] %v222
                  %v224 = vld [vmem:[%s210 + $0x90] sm:$0xff]
                  %225 = vst [vmem:[%s211 + $0x30] sm:$0xff] %v224
                  %v226 = vld [vmem:[%s210 + $0xa8] sm:$0xff]
                  %227 = vst [vmem:[%s211 + $0x38] sm:$0xff] %v226
                  %v228 = vld [vmem:[%s210 + $0xc0] sm:$0xff]
                  %229 = vst [vmem:[%s211 + $0x40] sm:$0xff] %v228
                  %v230 = vld [vmem:[%s210 + $0xd8] sm:$0xff]
                  %231 = vst [vmem:[%s211 + $0x48] sm:$0xff] %v230
                  %v232 = vld [vmem:[%s210 + $0xf0] sm:$0xff]
                  %233 = vst [vmem:[%s211 + $0x50] sm:$0xff] %v232
                  %v234 = vld [vmem:[%s210 + $0x108] sm:$0xff]
                  %235 = vst [vmem:[%s211 + $0x58] sm:$0xff] %v234
                  %v236 = vld [vmem:[%s210 + $0x120] sm:$0xff]
                  %237 = vst [vmem:[%s211 + $0x60] sm:$0xff] %v236
                  %v238 = vld [vmem:[%s210 + $0x138] sm:$0xff]
                  %239 = vst [vmem:[%s211 + $0x68] sm:$0xff] %v238
                  %v240 = vld [vmem:[%s210 + $0x150] sm:$0xff]
                  %241 = vst [vmem:[%s211 + $0x70] sm:$0xff] %v240
                  %v242 = vld [vmem:[%s210 + $0x168] sm:$0xff]
                  %243 = vst [vmem:[%s211 + $0x78] sm:$0xff] %v242
                $region52: #{attention_forward.4} parent=46 // loop_footer
                  %s209 = sadd.s32 1, %s205
                $region53: #{attention_forward.4} parent=46 // loop_footer_branch
                  %204 = sbr.rel target = $region49
                $region54: #{attention_forward.4} parent=46 // loop_exit
                  _
              $region47: #{attention_forward.4} parent=31 // pred_fallthru
                _
              // Predicated region
              $region55: #{attention_forward.4} parent=31 // pred_check
                _
              $region56: #{attention_forward.4} parent=31 // pred_check_branch
                %245 = sbr.rel target = $region58
              $region57: #{attention_forward.4} parent=31 // pred_region
                _
              $region58: #{attention_forward.4} parent=31 // pred_fallthru
                _
            $region32: #{attention_forward.4} parent=27 // pred_fallthru
              _
            // Predicated region
            $region33: #{attention_forward.4} parent=27 // pred_check
              _
            $region34: #{attention_forward.4} parent=27 // pred_check_branch
              %159 = sbr.rel target = $region36
            $region35: #{attention_forward.4} parent=27 // pred_region
              %s161 = ssub.s32 256, 1
              loop: start=0, step=1, limit=1
              $region37: #{attention_forward.4} parent=35 // loop_pre_header
                _
              $region38: #{attention_forward.4} parent=35 // loop_header
                %s163 = sphi 0, %s167
                %p164 = scmp.ge.s32.totalorder %s163, 1
                %s168 = sphi %s153, %s153
                %s169 = sphi %s148, %s148
              $region39: #{attention_forward.4} parent=35 // loop_header_branch
                %166 = sbr.rel (%p164) target = $region43
              $region40: #{attention_forward.4} parent=35 // loop_body
                %v170 = vld [vmem:[%s168] sm:%s161]
                %171 = vst [vmem:[%s169] sm:%s161] %v170
                %v172 = vld [vmem:[%s168 + $0x18] sm:%s161]
                %173 = vst [vmem:[%s169 + $0x8] sm:%s161] %v172
                %v174 = vld [vmem:[%s168 + $0x30] sm:%s161]
                %175 = vst [vmem:[%s169 + $0x10] sm:%s161] %v174
                %v176 = vld [vmem:[%s168 + $0x48] sm:%s161]
                %177 = vst [vmem:[%s169 + $0x18] sm:%s161] %v176
                %v178 = vld [vmem:[%s168 + $0x60] sm:%s161]
                %179 = vst [vmem:[%s169 + $0x20] sm:%s161] %v178
                %v180 = vld [vmem:[%s168 + $0x78] sm:%s161]
                %181 = vst [vmem:[%s169 + $0x28] sm:%s161] %v180
                %v182 = vld [vmem:[%s168 + $0x90] sm:%s161]
                %183 = vst [vmem:[%s169 + $0x30] sm:%s161] %v182
                %v184 = vld [vmem:[%s168 + $0xa8] sm:%s161]
                %185 = vst [vmem:[%s169 + $0x38] sm:%s161] %v184
                %v186 = vld [vmem:[%s168 + $0xc0] sm:%s161]
                %187 = vst [vmem:[%s169 + $0x40] sm:%s161] %v186
                %v188 = vld [vmem:[%s168 + $0xd8] sm:%s161]
                %189 = vst [vmem:[%s169 + $0x48] sm:%s161] %v188
                %v190 = vld [vmem:[%s168 + $0xf0] sm:%s161]
                %191 = vst [vmem:[%s169 + $0x50] sm:%s161] %v190
                %v192 = vld [vmem:[%s168 + $0x108] sm:%s161]
                %193 = vst [vmem:[%s169 + $0x58] sm:%s161] %v192
                %v194 = vld [vmem:[%s168 + $0x120] sm:%s161]
                %195 = vst [vmem:[%s169 + $0x60] sm:%s161] %v194
                %v196 = vld [vmem:[%s168 + $0x138] sm:%s161]
                %197 = vst [vmem:[%s169 + $0x68] sm:%s161] %v196
                %v198 = vld [vmem:[%s168 + $0x150] sm:%s161]
                %199 = vst [vmem:[%s169 + $0x70] sm:%s161] %v198
                %v200 = vld [vmem:[%s168 + $0x168] sm:%s161]
                %201 = vst [vmem:[%s169 + $0x78] sm:%s161] %v200
              $region41: #{attention_forward.4} parent=35 // loop_footer
                %s167 = sadd.s32 1, %s163
              $region42: #{attention_forward.4} parent=35 // loop_footer_branch
                %162 = sbr.rel target = $region38
              $region43: #{attention_forward.4} parent=35 // loop_exit
                _
            $region36: #{attention_forward.4} parent=27 // pred_fallthru
              _
          $region28: #{attention_forward.4} parent=23 // pred_fallthru
            _
          %246 = vnop
        $region24: #{attention_forward.4} parent=15 // pred_fallthru
          _
      $region16: #{attention_forward.4} parent=5 // pred_fallthru
        _
      %p247 = scmp.le.s32.totalorder 1, %s8
      %p248 = scmp.lt.s32.totalorder %s8, 7
      %p249 = pnand %p247, %p248
      %p250 = pneg %p249
      // Predicated region
      $region59: #{attention_forward.4} parent=5 // pred_check
        _
      $region60: #{attention_forward.4} parent=5 // pred_check_branch
        %252 = sbr.rel (%p249) target = $region62
      $region61: #{attention_forward.4} parent=5 // pred_region
        %s253 = ssub.s32 %s8, 1
        %s254 = sand.u32 %s70, 1
        %s255 = sand.u32 %s70, 1
        %s256 = smul.addr %s255, 128
        %s257 = scalar_lea.vmem [#allocation3], %s256
        // Predicated region
        $region63: #{attention_forward.4} parent=61 // pred_check
          %p258 = pneg %p83
        $region64: #{attention_forward.4} parent=61 // pred_check_branch
          %260 = sbr.rel (%p258) target = $region66
        $region65: #{attention_forward.4} parent=61 // pred_region
          _
        $region66: #{attention_forward.4} parent=61 // pred_fallthru
          _
        %s261 = smul.u32 16, %s18
        %p262 = scmp.lt.s32.totalorder %s261, 31
        %s263 = scalar_select %p262, %s261, 31
        %p264 = scmp.lt.s32.totalorder %s20, 0
        %s265 = scalar_select %p264, %s20, 0
        %s266 = sadd.s32 %s265, %s263
        %s267 = smul.addr %s266, 8
        %s268 = scalar_lea.vmem %s0, %s267
        %p269 = pneg %p55
        %p270 = pneg %p52
        %s271 = sand.u32 %s70, 1
        %s272 = sand.u32 %s70, 1
        %s273 = smul.addr %s272, 128
        %s274 = scalar_lea.vmem [#allocation3], %s273
        %p275 = pneg %p83
        %p276 = pneg %p80
        %p277 = pneg %p111
        %p278 = pneg %p108
        %s279 = sand.u32 %s98, 1
        %s280 = sand.u32 %s98, 1
        %s281 = smul.addr %s280, 128
        %s282 = scalar_lea.vmem [#allocation4], %s281
        %s283 = smul.u32 16, %s18
        %p284 = scmp.lt.s32.totalorder %s283, 31
        %s285 = scalar_select %p284, %s283, 31
        %p286 = scmp.lt.s32.totalorder %s20, 0
        %s287 = scalar_select %p286, %s20, 0
        %s288 = sadd.s32 %s287, %s285
        %s289 = smul.addr %s288, 8
        %s290 = scalar_lea.vmem %s0, %s289
        %s291 = smul.u32 16, %s18
        %s292 = smul.u32 16, %s20
        %s293 = smul.u32 16, %s18
        %p294 = scmp.eq.s32.totalorder %s20, 0
        // Predicated region
        $region67: #{attention_forward.4} parent=61 // pred_check
          %p295 = pneg %p294
        $region68: #{attention_forward.4} parent=61 // pred_check_branch
          %297 = sbr.rel (%p295) target = $region70
        $region69: #{attention_forward.4} parent=61 // pred_region
          %298 = vst [vmem:[#allocation2] sm:$0xff] 0.0
          %299 = vst [vmem:[#allocation2 + $0x8] sm:$0xff] 0.0
          %300 = vst [vmem:[#allocation2 + $0x10] sm:$0xff] 0.0
          %301 = vst [vmem:[#allocation2 + $0x18] sm:$0xff] 0.0
          %302 = vst [vmem:[#allocation2 + $0x20] sm:$0xff] 0.0
          %303 = vst [vmem:[#allocation2 + $0x28] sm:$0xff] 0.0
          %304 = vst [vmem:[#allocation2 + $0x30] sm:$0xff] 0.0
          %305 = vst [vmem:[#allocation2 + $0x38] sm:$0xff] 0.0
          %306 = vst [vmem:[#allocation2 + $0x40] sm:$0xff] 0.0
          %307 = vst [vmem:[#allocation2 + $0x48] sm:$0xff] 0.0
          %308 = vst [vmem:[#allocation2 + $0x50] sm:$0xff] 0.0
          %309 = vst [vmem:[#allocation2 + $0x58] sm:$0xff] 0.0
          %310 = vst [vmem:[#allocation2 + $0x60] sm:$0xff] 0.0
          %311 = vst [vmem:[#allocation2 + $0x68] sm:$0xff] 0.0
          %312 = vst [vmem:[#allocation2 + $0x70] sm:$0xff] 0.0
          %313 = vst [vmem:[#allocation2 + $0x78] sm:$0xff] 0.0
        $region70: #{attention_forward.4} parent=61 // pred_fallthru
          _
        %v314 = vld [vmem:[#allocation2] sm:$0xff]
        %v315 = vld [vmem:[#allocation2 + $0x8] sm:$0xff]
        %v316 = vld [vmem:[#allocation2 + $0x10] sm:$0xff]
        %v317 = vld [vmem:[#allocation2 + $0x18] sm:$0xff]
        %v318 = vld [vmem:[#allocation2 + $0x20] sm:$0xff]
        %v319 = vld [vmem:[#allocation2 + $0x28] sm:$0xff]
        %v320 = vld [vmem:[#allocation2 + $0x30] sm:$0xff]
        %v321 = vld [vmem:[#allocation2 + $0x38] sm:$0xff]
        %v322 = vld [vmem:[#allocation2 + $0x40] sm:$0xff]
        %v323 = vld [vmem:[#allocation2 + $0x48] sm:$0xff]
        %v324 = vld [vmem:[#allocation2 + $0x50] sm:$0xff]
        %v325 = vld [vmem:[#allocation2 + $0x58] sm:$0xff]
        %v326 = vld [vmem:[#allocation2 + $0x60] sm:$0xff]
        %v327 = vld [vmem:[#allocation2 + $0x68] sm:$0xff]
        %v328 = vld [vmem:[#allocation2 + $0x70] sm:$0xff]
        %v329 = vld [vmem:[#allocation2 + $0x78] sm:$0xff]
        %v330 = vld [vmem:[%s290] sm:$0xff]
        %v331 = vld [vmem:[%s290 + $0x8] sm:$0xff]
        %v332 = vld [vmem:[%s290 + $0x10] sm:$0xff]
        %v333 = vld [vmem:[%s290 + $0x18] sm:$0xff]
        %v334 = vld [vmem:[%s290 + $0x20] sm:$0xff]
        %v335 = vld [vmem:[%s290 + $0x28] sm:$0xff]
        %v336 = vld [vmem:[%s290 + $0x30] sm:$0xff]
        %v337 = vld [vmem:[%s290 + $0x38] sm:$0xff]
        %v338 = vld [vmem:[%s290 + $0x40] sm:$0xff]
        %v339 = vld [vmem:[%s290 + $0x48] sm:$0xff]
        %v340 = vld [vmem:[%s290 + $0x50] sm:$0xff]
        %v341 = vld [vmem:[%s290 + $0x58] sm:$0xff]
        %v342 = vld [vmem:[%s290 + $0x60] sm:$0xff]
        %v343 = vld [vmem:[%s290 + $0x68] sm:$0xff]
        %v344 = vld [vmem:[%s290 + $0x70] sm:$0xff]
        %v345 = vld [vmem:[%s290 + $0x78] sm:$0xff]
        %v346 = vld [vmem:[%s257] sm:$0xff]
        %v347 = vld [vmem:[%s257 + $0x8] sm:$0xff]
        %v348 = vld [vmem:[%s257 + $0x10] sm:$0xff]
        %v349 = vld [vmem:[%s257 + $0x18] sm:$0xff]
        %v350 = vld [vmem:[%s257 + $0x20] sm:$0xff]
        %v351 = vld [vmem:[%s257 + $0x28] sm:$0xff]
        %v352 = vld [vmem:[%s257 + $0x30] sm:$0xff]
        %v353 = vld [vmem:[%s257 + $0x38] sm:$0xff]
        %v354 = vld [vmem:[%s257 + $0x40] sm:$0xff]
        %v355 = vld [vmem:[%s257 + $0x48] sm:$0xff]
        %v356 = vld [vmem:[%s257 + $0x50] sm:$0xff]
        %v357 = vld [vmem:[%s257 + $0x58] sm:$0xff]
        %v358 = vld [vmem:[%s257 + $0x60] sm:$0xff]
        %v359 = vld [vmem:[%s257 + $0x68] sm:$0xff]
        %v360 = vld [vmem:[%s257 + $0x70] sm:$0xff]
        %v361 = vld [vmem:[%s257 + $0x78] sm:$0xff]
        %v362 = vand.u32 %v361, 4294901760
        %363 = vmatpush.msra.mxu0 %v362
        %v364 = vand.u32 %v360, 4294901760
        %365 = vmatpush.msra.mxu0 %v364
        %v366 = vand.u32 %v359, 4294901760
        %367 = vmatpush.msra.mxu0 %v366
        %v368 = vand.u32 %v358, 4294901760
        %369 = vmatpush.msra.mxu0 %v368
        %v370 = vand.u32 %v357, 4294901760
        %371 = vmatpush.msra.mxu0 %v370
        %v372 = vand.u32 %v356, 4294901760
        %373 = vmatpush.msra.mxu0 %v372
        %v374 = vand.u32 %v355, 4294901760
        %375 = vmatpush.msra.mxu0 %v374
        %v376 = vand.u32 %v354, 4294901760
        %377 = vmatpush.msra.mxu0 %v376
        %v378 = vand.u32 %v353, 4294901760
        %379 = vmatpush.msra.mxu0 %v378
        %v380 = vand.u32 %v352, 4294901760
        %381 = vmatpush.msra.mxu0 %v380
        %v382 = vand.u32 %v351, 4294901760
        %383 = vmatpush.msra.mxu0 %v382
        %v384 = vand.u32 %v350, 4294901760
        %385 = vmatpush.msra.mxu0 %v384
        %v386 = vand.u32 %v349, 4294901760
        %387 = vmatpush.msra.mxu0 %v386
        %v388 = vand.u32 %v348, 4294901760
        %389 = vmatpush.msra.mxu0 %v388
        %v390 = vand.u32 %v347, 4294901760
        %391 = vmatpush.msra.mxu0 %v390
        %v392 = vand.u32 %v346, 4294901760
        %393 = vmatpush.msra.mxu0 %v392
        %v394 = vand.u32 %v330, 4294901760
        %v395 = vsub.f32 %v330, %v394
        %v396 = vand.u32 %v395, 4294901760
        %v397 = vsub.f32 %v395, %v396
        %v398 = vand.u32 %v397, 4294901760
        %399 = vmatmul.f32.gmra.mxu0 %v398
        %v400 = vpop.f32.mrf.mxu0
        %v401 = vadd.f32 0.0, %v400
        %v402 = vand.u32 %v331, 4294901760
        %v403 = vsub.f32 %v331, %v402
        %v404 = vand.u32 %v403, 4294901760
        %v405 = vsub.f32 %v403, %v404
        %v406 = vand.u32 %v405, 4294901760
        %407 = vmatmul.f32.gmra.mxu0 %v406
        %v408 = vpop.f32.mrf.mxu0
        %v409 = vadd.f32 0.0, %v408
        %v410 = vand.u32 %v332, 4294901760
        %v411 = vsub.f32 %v332, %v410
        %v412 = vand.u32 %v411, 4294901760
        %v413 = vsub.f32 %v411, %v412
        %v414 = vand.u32 %v413, 4294901760
        %415 = vmatmul.f32.gmra.mxu0 %v414
        %v416 = vpop.f32.mrf.mxu0
        %v417 = vadd.f32 0.0, %v416
        %v418 = vand.u32 %v333, 4294901760
        %v419 = vsub.f32 %v333, %v418
        %v420 = vand.u32 %v419, 4294901760
        %v421 = vsub.f32 %v419, %v420
        %v422 = vand.u32 %v421, 4294901760
        %423 = vmatmul.f32.gmra.mxu0 %v422
        %v424 = vpop.f32.mrf.mxu0
        %v425 = vadd.f32 0.0, %v424
        %v426 = vand.u32 %v334, 4294901760
        %v427 = vsub.f32 %v334, %v426
        %v428 = vand.u32 %v427, 4294901760
        %v429 = vsub.f32 %v427, %v428
        %v430 = vand.u32 %v429, 4294901760
        %431 = vmatmul.f32.gmra.mxu0 %v430
        %v432 = vpop.f32.mrf.mxu0
        %v433 = vadd.f32 0.0, %v432
        %v434 = vand.u32 %v335, 4294901760
        %v435 = vsub.f32 %v335, %v434
        %v436 = vand.u32 %v435, 4294901760
        %v437 = vsub.f32 %v435, %v436
        %v438 = vand.u32 %v437, 4294901760
        %439 = vmatmul.f32.gmra.mxu0 %v438
        %v440 = vpop.f32.mrf.mxu0
        %v441 = vadd.f32 0.0, %v440
        %v442 = vand.u32 %v336, 4294901760
        %v443 = vsub.f32 %v336, %v442
        %v444 = vand.u32 %v443, 4294901760
        %v445 = vsub.f32 %v443, %v444
        %v446 = vand.u32 %v445, 4294901760
        %447 = vmatmul.f32.gmra.mxu0 %v446
        %v448 = vpop.f32.mrf.mxu0
        %v449 = vadd.f32 0.0, %v448
        %v450 = vand.u32 %v337, 4294901760
        %v451 = vsub.f32 %v337, %v450
        %v452 = vand.u32 %v451, 4294901760
        %v453 = vsub.f32 %v451, %v452
        %v454 = vand.u32 %v453, 4294901760
        %455 = vmatmul.f32.gmra.mxu0 %v454
        %v456 = vpop.f32.mrf.mxu0
        %v457 = vadd.f32 0.0, %v456
        %v458 = vand.u32 %v338, 4294901760
        %v459 = vsub.f32 %v338, %v458
        %v460 = vand.u32 %v459, 4294901760
        %v461 = vsub.f32 %v459, %v460
        %v462 = vand.u32 %v461, 4294901760
        %463 = vmatmul.f32.gmra.mxu0 %v462
        %v464 = vpop.f32.mrf.mxu0
        %v465 = vadd.f32 0.0, %v464
        %v466 = vand.u32 %v339, 4294901760
        %v467 = vsub.f32 %v339, %v466
        %v468 = vand.u32 %v467, 4294901760
        %v469 = vsub.f32 %v467, %v468
        %v470 = vand.u32 %v469, 4294901760
        %471 = vmatmul.f32.gmra.mxu0 %v470
        %v472 = vpop.f32.mrf.mxu0
        %v473 = vadd.f32 0.0, %v472
        %v474 = vand.u32 %v340, 4294901760
        %v475 = vsub.f32 %v340, %v474
        %v476 = vand.u32 %v475, 4294901760
        %v477 = vsub.f32 %v475, %v476
        %v478 = vand.u32 %v477, 4294901760
        %479 = vmatmul.f32.gmra.mxu0 %v478
        %v480 = vpop.f32.mrf.mxu0
        %v481 = vadd.f32 0.0, %v480
        %v482 = vand.u32 %v341, 4294901760
        %v483 = vsub.f32 %v341, %v482
        %v484 = vand.u32 %v483, 4294901760
        %v485 = vsub.f32 %v483, %v484
        %v486 = vand.u32 %v485, 4294901760
        %487 = vmatmul.f32.gmra.mxu0 %v486
        %v488 = vpop.f32.mrf.mxu0
        %v489 = vadd.f32 0.0, %v488
        %v490 = vand.u32 %v342, 4294901760
        %v491 = vsub.f32 %v342, %v490
        %v492 = vand.u32 %v491, 4294901760
        %v493 = vsub.f32 %v491, %v492
        %v494 = vand.u32 %v493, 4294901760
        %495 = vmatmul.f32.gmra.mxu0 %v494
        %v496 = vpop.f32.mrf.mxu0
        %v497 = vadd.f32 0.0, %v496
        %v498 = vand.u32 %v343, 4294901760
        %v499 = vsub.f32 %v343, %v498
        %v500 = vand.u32 %v499, 4294901760
        %v501 = vsub.f32 %v499, %v500
        %v502 = vand.u32 %v501, 4294901760
        %503 = vmatmul.f32.gmra.mxu0 %v502
        %v504 = vpop.f32.mrf.mxu0
        %v505 = vadd.f32 0.0, %v504
        %v506 = vand.u32 %v344, 4294901760
        %v507 = vsub.f32 %v344, %v506
        %v508 = vand.u32 %v507, 4294901760
        %v509 = vsub.f32 %v507, %v508
        %v510 = vand.u32 %v509, 4294901760
        %511 = vmatmul.f32.gmra.mxu0 %v510
        %v512 = vpop.f32.mrf.mxu0
        %v513 = vadd.f32 0.0, %v512
        %v514 = vand.u32 %v345, 4294901760
        %v515 = vsub.f32 %v345, %v514
        %v516 = vand.u32 %v515, 4294901760
        %v517 = vsub.f32 %v515, %v516
        %v518 = vand.u32 %v517, 4294901760
        %519 = vmatmul.f32.gmra.mxu0 %v518
        %v520 = vpop.f32.mrf.mxu0
        %v521 = vadd.f32 0.0, %v520
        %522 = vdwg.mxu0
        %v523 = vand.u32 %v361, 4294901760
        %v524 = vsub.f32 %v361, %v523
        %v525 = vand.u32 %v524, 4294901760
        %v526 = vsub.f32 %v524, %v525
        %v527 = vand.u32 %v526, 4294901760
        %528 = vmatpush.msra.mxu0 %v527
        %v529 = vand.u32 %v360, 4294901760
        %v530 = vsub.f32 %v360, %v529
        %v531 = vand.u32 %v530, 4294901760
        %v532 = vsub.f32 %v530, %v531
        %v533 = vand.u32 %v532, 4294901760
        %534 = vmatpush.msra.mxu0 %v533
        %v535 = vand.u32 %v359, 4294901760
        %v536 = vsub.f32 %v359, %v535
        %v537 = vand.u32 %v536, 4294901760
        %v538 = vsub.f32 %v536, %v537
        %v539 = vand.u32 %v538, 4294901760
        %540 = vmatpush.msra.mxu0 %v539
        %v541 = vand.u32 %v358, 4294901760
        %v542 = vsub.f32 %v358, %v541
        %v543 = vand.u32 %v542, 4294901760
        %v544 = vsub.f32 %v542, %v543
        %v545 = vand.u32 %v544, 4294901760
        %546 = vmatpush.msra.mxu0 %v545
        %v547 = vand.u32 %v357, 4294901760
        %v548 = vsub.f32 %v357, %v547
        %v549 = vand.u32 %v548, 4294901760
        %v550 = vsub.f32 %v548, %v549
        %v551 = vand.u32 %v550, 4294901760
        %552 = vmatpush.msra.mxu0 %v551
        %v553 = vand.u32 %v356, 4294901760
        %v554 = vsub.f32 %v356, %v553
        %v555 = vand.u32 %v554, 4294901760
        %v556 = vsub.f32 %v554, %v555
        %v557 = vand.u32 %v556, 4294901760
        %558 = vmatpush.msra.mxu0 %v557
        %v559 = vand.u32 %v355, 4294901760
        %v560 = vsub.f32 %v355, %v559
        %v561 = vand.u32 %v560, 4294901760
        %v562 = vsub.f32 %v560, %v561
        %v563 = vand.u32 %v562, 4294901760
        %564 = vmatpush.msra.mxu0 %v563
        %v565 = vand.u32 %v354, 4294901760
        %v566 = vsub.f32 %v354, %v565
        %v567 = vand.u32 %v566, 4294901760
        %v568 = vsub.f32 %v566, %v567
        %v569 = vand.u32 %v568, 4294901760
        %570 = vmatpush.msra.mxu0 %v569
        %v571 = vand.u32 %v353, 4294901760
        %v572 = vsub.f32 %v353, %v571
        %v573 = vand.u32 %v572, 4294901760
        %v574 = vsub.f32 %v572, %v573
        %v575 = vand.u32 %v574, 4294901760
        %576 = vmatpush.msra.mxu0 %v575
        %v577 = vand.u32 %v352, 4294901760
        %v578 = vsub.f32 %v352, %v577
        %v579 = vand.u32 %v578, 4294901760
        %v580 = vsub.f32 %v578, %v579
        %v581 = vand.u32 %v580, 4294901760
        %582 = vmatpush.msra.mxu0 %v581
        %v583 = vand.u32 %v351, 4294901760
        %v584 = vsub.f32 %v351, %v583
        %v585 = vand.u32 %v584, 4294901760
        %v586 = vsub.f32 %v584, %v585
        %v587 = vand.u32 %v586, 4294901760
        %588 = vmatpush.msra.mxu0 %v587
        %v589 = vand.u32 %v350, 4294901760
        %v590 = vsub.f32 %v350, %v589
        %v591 = vand.u32 %v590, 4294901760
        %v592 = vsub.f32 %v590, %v591
        %v593 = vand.u32 %v592, 4294901760
        %594 = vmatpush.msra.mxu0 %v593
        %v595 = vand.u32 %v349, 4294901760
        %v596 = vsub.f32 %v349, %v595
        %v597 = vand.u32 %v596, 4294901760
        %v598 = vsub.f32 %v596, %v597
        %v599 = vand.u32 %v598, 4294901760
        %600 = vmatpush.msra.mxu0 %v599
        %v601 = vand.u32 %v348, 4294901760
        %v602 = vsub.f32 %v348, %v601
        %v603 = vand.u32 %v602, 4294901760
        %v604 = vsub.f32 %v602, %v603
        %v605 = vand.u32 %v604, 4294901760
        %606 = vmatpush.msra.mxu0 %v605
        %v607 = vand.u32 %v347, 4294901760
        %v608 = vsub.f32 %v347, %v607
        %v609 = vand.u32 %v608, 4294901760
        %v610 = vsub.f32 %v608, %v609
        %v611 = vand.u32 %v610, 4294901760
        %612 = vmatpush.msra.mxu0 %v611
        %v613 = vand.u32 %v346, 4294901760
        %v614 = vsub.f32 %v346, %v613
        %v615 = vand.u32 %v614, 4294901760
        %v616 = vsub.f32 %v614, %v615
        %v617 = vand.u32 %v616, 4294901760
        %618 = vmatpush.msra.mxu0 %v617
        %v619 = vand.u32 %v330, 4294901760
        %620 = vmatmul.f32.gmra.mxu0 %v619
        %v621 = vpop.f32.mrf.mxu0
        %v622 = vadd.f32 %v401, %v621
        %v623 = vand.u32 %v331, 4294901760
        %624 = vmatmul.f32.gmra.mxu0 %v623
        %v625 = vpop.f32.mrf.mxu0
        %v626 = vadd.f32 %v409, %v625
        %v627 = vand.u32 %v332, 4294901760
        %628 = vmatmul.f32.gmra.mxu0 %v627
        %v629 = vpop.f32.mrf.mxu0
        %v630 = vadd.f32 %v417, %v629
        %v631 = vand.u32 %v333, 4294901760
        %632 = vmatmul.f32.gmra.mxu0 %v631
        %v633 = vpop.f32.mrf.mxu0
        %v634 = vadd.f32 %v425, %v633
        %v635 = vand.u32 %v334, 4294901760
        %636 = vmatmul.f32.gmra.mxu0 %v635
        %v637 = vpop.f32.mrf.mxu0
        %v638 = vadd.f32 %v433, %v637
        %v639 = vand.u32 %v335, 4294901760
        %640 = vmatmul.f32.gmra.mxu0 %v639
        %v641 = vpop.f32.mrf.mxu0
        %v642 = vadd.f32 %v441, %v641
        %v643 = vand.u32 %v336, 4294901760
        %644 = vmatmul.f32.gmra.mxu0 %v643
        %v645 = vpop.f32.mrf.mxu0
        %v646 = vadd.f32 %v449, %v645
        %v647 = vand.u32 %v337, 4294901760
        %648 = vmatmul.f32.gmra.mxu0 %v647
        %v649 = vpop.f32.mrf.mxu0
        %v650 = vadd.f32 %v457, %v649
        %v651 = vand.u32 %v338, 4294901760
        %652 = vmatmul.f32.gmra.mxu0 %v651
        %v653 = vpop.f32.mrf.mxu0
        %v654 = vadd.f32 %v465, %v653
        %v655 = vand.u32 %v339, 4294901760
        %656 = vmatmul.f32.gmra.mxu0 %v655
        %v657 = vpop.f32.mrf.mxu0
        %v658 = vadd.f32 %v473, %v657
        %v659 = vand.u32 %v340, 4294901760
        %660 = vmatmul.f32.gmra.mxu0 %v659
        %v661 = vpop.f32.mrf.mxu0
        %v662 = vadd.f32 %v481, %v661
        %v663 = vand.u32 %v341, 4294901760
        %664 = vmatmul.f32.gmra.mxu0 %v663
        %v665 = vpop.f32.mrf.mxu0
        %v666 = vadd.f32 %v489, %v665
        %v667 = vand.u32 %v342, 4294901760
        %668 = vmatmul.f32.gmra.mxu0 %v667
        %v669 = vpop.f32.mrf.mxu0
        %v670 = vadd.f32 %v497, %v669
        %v671 = vand.u32 %v343, 4294901760
        %672 = vmatmul.f32.gmra.mxu0 %v671
        %v673 = vpop.f32.mrf.mxu0
        %v674 = vadd.f32 %v505, %v673
        %v675 = vand.u32 %v344, 4294901760
        %676 = vmatmul.f32.gmra.mxu0 %v675
        %v677 = vpop.f32.mrf.mxu0
        %v678 = vadd.f32 %v513, %v677
        %v679 = vand.u32 %v345, 4294901760
        %680 = vmatmul.f32.gmra.mxu0 %v679
        %v681 = vpop.f32.mrf.mxu0
        %v682 = vadd.f32 %v521, %v681
        %683 = vdwg.mxu0
        %v684 = vand.u32 %v361, 4294901760
        %v685 = vsub.f32 %v361, %v684
        %686 = vmatpush.msra.mxu0 %v685
        %v687 = vand.u32 %v360, 4294901760
        %v688 = vsub.f32 %v360, %v687
        %689 = vmatpush.msra.mxu0 %v688
        %v690 = vand.u32 %v359, 4294901760
        %v691 = vsub.f32 %v359, %v690
        %692 = vmatpush.msra.mxu0 %v691
        %v693 = vand.u32 %v358, 4294901760
        %v694 = vsub.f32 %v358, %v693
        %695 = vmatpush.msra.mxu0 %v694
        %v696 = vand.u32 %v357, 4294901760
        %v697 = vsub.f32 %v357, %v696
        %698 = vmatpush.msra.mxu0 %v697
        %v699 = vand.u32 %v356, 4294901760
        %v700 = vsub.f32 %v356, %v699
        %701 = vmatpush.msra.mxu0 %v700
        %v702 = vand.u32 %v355, 4294901760
        %v703 = vsub.f32 %v355, %v702
        %704 = vmatpush.msra.mxu0 %v703
        %v705 = vand.u32 %v354, 4294901760
        %v706 = vsub.f32 %v354, %v705
        %707 = vmatpush.msra.mxu0 %v706
        %v708 = vand.u32 %v353, 4294901760
        %v709 = vsub.f32 %v353, %v708
        %710 = vmatpush.msra.mxu0 %v709
        %v711 = vand.u32 %v352, 4294901760
        %v712 = vsub.f32 %v352, %v711
        %713 = vmatpush.msra.mxu0 %v712
        %v714 = vand.u32 %v351, 4294901760
        %v715 = vsub.f32 %v351, %v714
        %716 = vmatpush.msra.mxu0 %v715
        %v717 = vand.u32 %v350, 4294901760
        %v718 = vsub.f32 %v350, %v717
        %719 = vmatpush.msra.mxu0 %v718
        %v720 = vand.u32 %v349, 4294901760
        %v721 = vsub.f32 %v349, %v720
        %722 = vmatpush.msra.mxu0 %v721
        %v723 = vand.u32 %v348, 4294901760
        %v724 = vsub.f32 %v348, %v723
        %725 = vmatpush.msra.mxu0 %v724
        %v726 = vand.u32 %v347, 4294901760
        %v727 = vsub.f32 %v347, %v726
        %728 = vmatpush.msra.mxu0 %v727
        %v729 = vand.u32 %v346, 4294901760
        %v730 = vsub.f32 %v346, %v729
        %731 = vmatpush.msra.mxu0 %v730
        %v732 = vand.u32 %v330, 4294901760
        %v733 = vsub.f32 %v330, %v732
        %734 = vmatmul.f32.gmra.mxu0 %v733
        %v735 = vpop.f32.mrf.mxu0
        %v736 = vadd.f32 %v622, %v735
        %v737 = vand.u32 %v331, 4294901760
        %v738 = vsub.f32 %v331, %v737
        %739 = vmatmul.f32.gmra.mxu0 %v738
        %v740 = vpop.f32.mrf.mxu0
        %v741 = vadd.f32 %v626, %v740
        %v742 = vand.u32 %v332, 4294901760
        %v743 = vsub.f32 %v332, %v742
        %744 = vmatmul.f32.gmra.mxu0 %v743
        %v745 = vpop.f32.mrf.mxu0
        %v746 = vadd.f32 %v630, %v745
        %v747 = vand.u32 %v333, 4294901760
        %v748 = vsub.f32 %v333, %v747
        %749 = vmatmul.f32.gmra.mxu0 %v748
        %v750 = vpop.f32.mrf.mxu0
        %v751 = vadd.f32 %v634, %v750
        %v752 = vand.u32 %v334, 4294901760
        %v753 = vsub.f32 %v334, %v752
        %754 = vmatmul.f32.gmra.mxu0 %v753
        %v755 = vpop.f32.mrf.mxu0
        %v756 = vadd.f32 %v638, %v755
        %v757 = vand.u32 %v335, 4294901760
        %v758 = vsub.f32 %v335, %v757
        %759 = vmatmul.f32.gmra.mxu0 %v758
        %v760 = vpop.f32.mrf.mxu0
        %v761 = vadd.f32 %v642, %v760
        %v762 = vand.u32 %v336, 4294901760
        %v763 = vsub.f32 %v336, %v762
        %764 = vmatmul.f32.gmra.mxu0 %v763
        %v765 = vpop.f32.mrf.mxu0
        %v766 = vadd.f32 %v646, %v765
        %v767 = vand.u32 %v337, 4294901760
        %v768 = vsub.f32 %v337, %v767
        %769 = vmatmul.f32.gmra.mxu0 %v768
        %v770 = vpop.f32.mrf.mxu0
        %v771 = vadd.f32 %v650, %v770
        %v772 = vand.u32 %v338, 4294901760
        %v773 = vsub.f32 %v338, %v772
        %774 = vmatmul.f32.gmra.mxu0 %v773
        %v775 = vpop.f32.mrf.mxu0
        %v776 = vadd.f32 %v654, %v775
        %v777 = vand.u32 %v339, 4294901760
        %v778 = vsub.f32 %v339, %v777
        %779 = vmatmul.f32.gmra.mxu0 %v778
        %v780 = vpop.f32.mrf.mxu0
        %v781 = vadd.f32 %v658, %v780
        %v782 = vand.u32 %v340, 4294901760
        %v783 = vsub.f32 %v340, %v782
        %784 = vmatmul.f32.gmra.mxu0 %v783
        %v785 = vpop.f32.mrf.mxu0
        %v786 = vadd.f32 %v662, %v785
        %v787 = vand.u32 %v341, 4294901760
        %v788 = vsub.f32 %v341, %v787
        %789 = vmatmul.f32.gmra.mxu0 %v788
        %v790 = vpop.f32.mrf.mxu0
        %v791 = vadd.f32 %v666, %v790
        %v792 = vand.u32 %v342, 4294901760
        %v793 = vsub.f32 %v342, %v792
        %794 = vmatmul.f32.gmra.mxu0 %v793
        %v795 = vpop.f32.mrf.mxu0
        %v796 = vadd.f32 %v670, %v795
        %v797 = vand.u32 %v343, 4294901760
        %v798 = vsub.f32 %v343, %v797
        %799 = vmatmul.f32.gmra.mxu0 %v798
        %v800 = vpop.f32.mrf.mxu0
        %v801 = vadd.f32 %v674, %v800
        %v802 = vand.u32 %v344, 4294901760
        %v803 = vsub.f32 %v344, %v802
        %804 = vmatmul.f32.gmra.mxu0 %v803
        %v805 = vpop.f32.mrf.mxu0
        %v806 = vadd.f32 %v678, %v805
        %v807 = vand.u32 %v345, 4294901760
        %v808 = vsub.f32 %v345, %v807
        %809 = vmatmul.f32.gmra.mxu0 %v808
        %v810 = vpop.f32.mrf.mxu0
        %v811 = vadd.f32 %v682, %v810
        %812 = vdwg.mxu0
        %v813 = vand.u32 %v361, 4294901760
        %814 = vmatpush.msra.mxu0 %v813
        %v815 = vand.u32 %v360, 4294901760
        %816 = vmatpush.msra.mxu0 %v815
        %v817 = vand.u32 %v359, 4294901760
        %818 = vmatpush.msra.mxu0 %v817
        %v819 = vand.u32 %v358, 4294901760
        %820 = vmatpush.msra.mxu0 %v819
        %v821 = vand.u32 %v357, 4294901760
        %822 = vmatpush.msra.mxu0 %v821
        %v823 = vand.u32 %v356, 4294901760
        %824 = vmatpush.msra.mxu0 %v823
        %v825 = vand.u32 %v355, 4294901760
        %826 = vmatpush.msra.mxu0 %v825
        %v827 = vand.u32 %v354, 4294901760
        %828 = vmatpush.msra.mxu0 %v827
        %v829 = vand.u32 %v353, 4294901760
        %830 = vmatpush.msra.mxu0 %v829
        %v831 = vand.u32 %v352, 4294901760
        %832 = vmatpush.msra.mxu0 %v831
        %v833 = vand.u32 %v351, 4294901760
        %834 = vmatpush.msra.mxu0 %v833
        %v835 = vand.u32 %v350, 4294901760
        %836 = vmatpush.msra.mxu0 %v835
        %v837 = vand.u32 %v349, 4294901760
        %838 = vmatpush.msra.mxu0 %v837
        %v839 = vand.u32 %v348, 4294901760
        %840 = vmatpush.msra.mxu0 %v839
        %v841 = vand.u32 %v347, 4294901760
        %842 = vmatpush.msra.mxu0 %v841
        %v843 = vand.u32 %v346, 4294901760
        %844 = vmatpush.msra.mxu0 %v843
        %v845 = vand.u32 %v330, 4294901760
        %v846 = vsub.f32 %v330, %v845
        %v847 = vand.u32 %v846, 4294901760
        %848 = vmatmul.f32.gmra.mxu0 %v847
        %v849 = vpop.f32.mrf.mxu0
        %v850 = vadd.f32 %v736, %v849
        %v851 = vand.u32 %v331, 4294901760
        %v852 = vsub.f32 %v331, %v851
        %v853 = vand.u32 %v852, 4294901760
        %854 = vmatmul.f32.gmra.mxu0 %v853
        %v855 = vpop.f32.mrf.mxu0
        %v856 = vadd.f32 %v741, %v855
        %v857 = vand.u32 %v332, 4294901760
        %v858 = vsub.f32 %v332, %v857
        %v859 = vand.u32 %v858, 4294901760
        %860 = vmatmul.f32.gmra.mxu0 %v859
        %v861 = vpop.f32.mrf.mxu0
        %v862 = vadd.f32 %v746, %v861
        %v863 = vand.u32 %v333, 4294901760
        %v864 = vsub.f32 %v333, %v863
        %v865 = vand.u32 %v864, 4294901760
        %866 = vmatmul.f32.gmra.mxu0 %v865
        %v867 = vpop.f32.mrf.mxu0
        %v868 = vadd.f32 %v751, %v867
        %v869 = vand.u32 %v334, 4294901760
        %v870 = vsub.f32 %v334, %v869
        %v871 = vand.u32 %v870, 4294901760
        %872 = vmatmul.f32.gmra.mxu0 %v871
        %v873 = vpop.f32.mrf.mxu0
        %v874 = vadd.f32 %v756, %v873
        %v875 = vand.u32 %v335, 4294901760
        %v876 = vsub.f32 %v335, %v875
        %v877 = vand.u32 %v876, 4294901760
        %878 = vmatmul.f32.gmra.mxu0 %v877
        %v879 = vpop.f32.mrf.mxu0
        %v880 = vadd.f32 %v761, %v879
        %v881 = vand.u32 %v336, 4294901760
        %v882 = vsub.f32 %v336, %v881
        %v883 = vand.u32 %v882, 4294901760
        %884 = vmatmul.f32.gmra.mxu0 %v883
        %v885 = vpop.f32.mrf.mxu0
        %v886 = vadd.f32 %v766, %v885
        %v887 = vand.u32 %v337, 4294901760
        %v888 = vsub.f32 %v337, %v887
        %v889 = vand.u32 %v888, 4294901760
        %890 = vmatmul.f32.gmra.mxu0 %v889
        %v891 = vpop.f32.mrf.mxu0
        %v892 = vadd.f32 %v771, %v891
        %v893 = vand.u32 %v338, 4294901760
        %v894 = vsub.f32 %v338, %v893
        %v895 = vand.u32 %v894, 4294901760
        %896 = vmatmul.f32.gmra.mxu0 %v895
        %v897 = vpop.f32.mrf.mxu0
        %v898 = vadd.f32 %v776, %v897
        %v899 = vand.u32 %v339, 4294901760
        %v900 = vsub.f32 %v339, %v899
        %v901 = vand.u32 %v900, 4294901760
        %902 = vmatmul.f32.gmra.mxu0 %v901
        %v903 = vpop.f32.mrf.mxu0
        %v904 = vadd.f32 %v781, %v903
        %v905 = vand.u32 %v340, 4294901760
        %v906 = vsub.f32 %v340, %v905
        %v907 = vand.u32 %v906, 4294901760
        %908 = vmatmul.f32.gmra.mxu0 %v907
        %v909 = vpop.f32.mrf.mxu0
        %v910 = vadd.f32 %v786, %v909
        %v911 = vand.u32 %v341, 4294901760
        %v912 = vsub.f32 %v341, %v911
        %v913 = vand.u32 %v912, 4294901760
        %914 = vmatmul.f32.gmra.mxu0 %v913
        %v915 = vpop.f32.mrf.mxu0
        %v916 = vadd.f32 %v791, %v915
        %v917 = vand.u32 %v342, 4294901760
        %v918 = vsub.f32 %v342, %v917
        %v919 = vand.u32 %v918, 4294901760
        %920 = vmatmul.f32.gmra.mxu0 %v919
        %v921 = vpop.f32.mrf.mxu0
        %v922 = vadd.f32 %v796, %v921
        %v923 = vand.u32 %v343, 4294901760
        %v924 = vsub.f32 %v343, %v923
        %v925 = vand.u32 %v924, 4294901760
        %926 = vmatmul.f32.gmra.mxu0 %v925
        %v927 = vpop.f32.mrf.mxu0
        %v928 = vadd.f32 %v801, %v927
        %v929 = vand.u32 %v344, 4294901760
        %v930 = vsub.f32 %v344, %v929
        %v931 = vand.u32 %v930, 4294901760
        %932 = vmatmul.f32.gmra.mxu0 %v931
        %v933 = vpop.f32.mrf.mxu0
        %v934 = vadd.f32 %v806, %v933
        %v935 = vand.u32 %v345, 4294901760
        %v936 = vsub.f32 %v345, %v935
        %v937 = vand.u32 %v936, 4294901760
        %938 = vmatmul.f32.gmra.mxu0 %v937
        %v939 = vpop.f32.mrf.mxu0
        %v940 = vadd.f32 %v811, %v939
        %941 = vdwg.mxu0
        %v942 = vand.u32 %v361, 4294901760
        %v943 = vsub.f32 %v361, %v942
        %v944 = vand.u32 %v943, 4294901760
        %945 = vmatpush.msra.mxu0 %v944
        %v946 = vand.u32 %v360, 4294901760
        %v947 = vsub.f32 %v360, %v946
        %v948 = vand.u32 %v947, 4294901760
        %949 = vmatpush.msra.mxu0 %v948
        %v950 = vand.u32 %v359, 4294901760
        %v951 = vsub.f32 %v359, %v950
        %v952 = vand.u32 %v951, 4294901760
        %953 = vmatpush.msra.mxu0 %v952
        %v954 = vand.u32 %v358, 4294901760
        %v955 = vsub.f32 %v358, %v954
        %v956 = vand.u32 %v955, 4294901760
        %957 = vmatpush.msra.mxu0 %v956
        %v958 = vand.u32 %v357, 4294901760
        %v959 = vsub.f32 %v357, %v958
        %v960 = vand.u32 %v959, 4294901760
        %961 = vmatpush.msra.mxu0 %v960
        %v962 = vand.u32 %v356, 4294901760
        %v963 = vsub.f32 %v356, %v962
        %v964 = vand.u32 %v963, 4294901760
        %965 = vmatpush.msra.mxu0 %v964
        %v966 = vand.u32 %v355, 4294901760
        %v967 = vsub.f32 %v355, %v966
        %v968 = vand.u32 %v967, 4294901760
        %969 = vmatpush.msra.mxu0 %v968
        %v970 = vand.u32 %v354, 4294901760
        %v971 = vsub.f32 %v354, %v970
        %v972 = vand.u32 %v971, 4294901760
        %973 = vmatpush.msra.mxu0 %v972
        %v974 = vand.u32 %v353, 4294901760
        %v975 = vsub.f32 %v353, %v974
        %v976 = vand.u32 %v975, 4294901760
        %977 = vmatpush.msra.mxu0 %v976
        %v978 = vand.u32 %v352, 4294901760
        %v979 = vsub.f32 %v352, %v978
        %v980 = vand.u32 %v979, 4294901760
        %981 = vmatpush.msra.mxu0 %v980
        %v982 = vand.u32 %v351, 4294901760
        %v983 = vsub.f32 %v351, %v982
        %v984 = vand.u32 %v983, 4294901760
        %985 = vmatpush.msra.mxu0 %v984
        %v986 = vand.u32 %v350, 4294901760
        %v987 = vsub.f32 %v350, %v986
        %v988 = vand.u32 %v987, 4294901760
        %989 = vmatpush.msra.mxu0 %v988
        %v990 = vand.u32 %v349, 4294901760
        %v991 = vsub.f32 %v349, %v990
        %v992 = vand.u32 %v991, 4294901760
        %993 = vmatpush.msra.mxu0 %v992
        %v994 = vand.u32 %v348, 4294901760
        %v995 = vsub.f32 %v348, %v994
        %v996 = vand.u32 %v995, 4294901760
        %997 = vmatpush.msra.mxu0 %v996
        %v998 = vand.u32 %v347, 4294901760
        %v999 = vsub.f32 %v347, %v998
        %v1000 = vand.u32 %v999, 4294901760
        %1001 = vmatpush.msra.mxu0 %v1000
        %v1002 = vand.u32 %v346, 4294901760
        %v1003 = vsub.f32 %v346, %v1002
        %v1004 = vand.u32 %v1003, 4294901760
        %1005 = vmatpush.msra.mxu0 %v1004
        %v1006 = vand.u32 %v330, 4294901760
        %1007 = vmatmul.f32.gmra.mxu0 %v1006
        %v1008 = vpop.f32.mrf.mxu0
        %v1009 = vadd.f32 %v850, %v1008
        %v1010 = vand.u32 %v331, 4294901760
        %1011 = vmatmul.f32.gmra.mxu0 %v1010
        %v1012 = vpop.f32.mrf.mxu0
        %v1013 = vadd.f32 %v856, %v1012
        %v1014 = vand.u32 %v332, 4294901760
        %1015 = vmatmul.f32.gmra.mxu0 %v1014
        %v1016 = vpop.f32.mrf.mxu0
        %v1017 = vadd.f32 %v862, %v1016
        %v1018 = vand.u32 %v333, 4294901760
        %1019 = vmatmul.f32.gmra.mxu0 %v1018
        %v1020 = vpop.f32.mrf.mxu0
        %v1021 = vadd.f32 %v868, %v1020
        %v1022 = vand.u32 %v334, 4294901760
        %1023 = vmatmul.f32.gmra.mxu0 %v1022
        %v1024 = vpop.f32.mrf.mxu0
        %v1025 = vadd.f32 %v874, %v1024
        %v1026 = vand.u32 %v335, 4294901760
        %1027 = vmatmul.f32.gmra.mxu0 %v1026
        %v1028 = vpop.f32.mrf.mxu0
        %v1029 = vadd.f32 %v880, %v1028
        %v1030 = vand.u32 %v336, 4294901760
        %1031 = vmatmul.f32.gmra.mxu0 %v1030
        %v1032 = vpop.f32.mrf.mxu0
        %v1033 = vadd.f32 %v886, %v1032
        %v1034 = vand.u32 %v337, 4294901760
        %1035 = vmatmul.f32.gmra.mxu0 %v1034
        %v1036 = vpop.f32.mrf.mxu0
        %v1037 = vadd.f32 %v892, %v1036
        %v1038 = vand.u32 %v338, 4294901760
        %1039 = vmatmul.f32.gmra.mxu0 %v1038
        %v1040 = vpop.f32.mrf.mxu0
        %v1041 = vadd.f32 %v898, %v1040
        %v1042 = vand.u32 %v339, 4294901760
        %1043 = vmatmul.f32.gmra.mxu0 %v1042
        %v1044 = vpop.f32.mrf.mxu0
        %v1045 = vadd.f32 %v904, %v1044
        %v1046 = vand.u32 %v340, 4294901760
        %1047 = vmatmul.f32.gmra.mxu0 %v1046
        %v1048 = vpop.f32.mrf.mxu0
        %v1049 = vadd.f32 %v910, %v1048
        %v1050 = vand.u32 %v341, 4294901760
        %1051 = vmatmul.f32.gmra.mxu0 %v1050
        %v1052 = vpop.f32.mrf.mxu0
        %v1053 = vadd.f32 %v916, %v1052
        %v1054 = vand.u32 %v342, 4294901760
        %1055 = vmatmul.f32.gmra.mxu0 %v1054
        %v1056 = vpop.f32.mrf.mxu0
        %v1057 = vadd.f32 %v922, %v1056
        %v1058 = vand.u32 %v343, 4294901760
        %1059 = vmatmul.f32.gmra.mxu0 %v1058
        %v1060 = vpop.f32.mrf.mxu0
        %v1061 = vadd.f32 %v928, %v1060
        %v1062 = vand.u32 %v344, 4294901760
        %1063 = vmatmul.f32.gmra.mxu0 %v1062
        %v1064 = vpop.f32.mrf.mxu0
        %v1065 = vadd.f32 %v934, %v1064
        %v1066 = vand.u32 %v345, 4294901760
        %1067 = vmatmul.f32.gmra.mxu0 %v1066
        %v1068 = vpop.f32.mrf.mxu0
        %v1069 = vadd.f32 %v940, %v1068
        %1070 = vdwg.mxu0
        %v1071 = vand.u32 %v361, 4294901760
        %1072 = vmatpush.msra.mxu0 %v1071
        %v1073 = vand.u32 %v360, 4294901760
        %1074 = vmatpush.msra.mxu0 %v1073
        %v1075 = vand.u32 %v359, 4294901760
        %1076 = vmatpush.msra.mxu0 %v1075
        %v1077 = vand.u32 %v358, 4294901760
        %1078 = vmatpush.msra.mxu0 %v1077
        %v1079 = vand.u32 %v357, 4294901760
        %1080 = vmatpush.msra.mxu0 %v1079
        %v1081 = vand.u32 %v356, 4294901760
        %1082 = vmatpush.msra.mxu0 %v1081
        %v1083 = vand.u32 %v355, 4294901760
        %1084 = vmatpush.msra.mxu0 %v1083
        %v1085 = vand.u32 %v354, 4294901760
        %1086 = vmatpush.msra.mxu0 %v1085
        %v1087 = vand.u32 %v353, 4294901760
        %1088 = vmatpush.msra.mxu0 %v1087
        %v1089 = vand.u32 %v352, 4294901760
        %1090 = vmatpush.msra.mxu0 %v1089
        %v1091 = vand.u32 %v351, 4294901760
        %1092 = vmatpush.msra.mxu0 %v1091
        %v1093 = vand.u32 %v350, 4294901760
        %1094 = vmatpush.msra.mxu0 %v1093
        %v1095 = vand.u32 %v349, 4294901760
        %1096 = vmatpush.msra.mxu0 %v1095
        %v1097 = vand.u32 %v348, 4294901760
        %1098 = vmatpush.msra.mxu0 %v1097
        %v1099 = vand.u32 %v347, 4294901760
        %1100 = vmatpush.msra.mxu0 %v1099
        %v1101 = vand.u32 %v346, 4294901760
        %1102 = vmatpush.msra.mxu0 %v1101
        %v1103 = vand.u32 %v330, 4294901760
        %1104 = vmatmul.f32.gmra.mxu0 %v1103
        %v1105 = vpop.f32.mrf.mxu0
        %v1106 = vadd.f32 %v1009, %v1105
        %v1107 = vand.u32 %v331, 4294901760
        %1108 = vmatmul.f32.gmra.mxu0 %v1107
        %v1109 = vpop.f32.mrf.mxu0
        %v1110 = vadd.f32 %v1013, %v1109
        %v1111 = vand.u32 %v332, 4294901760
        %1112 = vmatmul.f32.gmra.mxu0 %v1111
        %v1113 = vpop.f32.mrf.mxu0
        %v1114 = vadd.f32 %v1017, %v1113
        %v1115 = vand.u32 %v333, 4294901760
        %1116 = vmatmul.f32.gmra.mxu0 %v1115
        %v1117 = vpop.f32.mrf.mxu0
        %v1118 = vadd.f32 %v1021, %v1117
        %v1119 = vand.u32 %v334, 4294901760
        %1120 = vmatmul.f32.gmra.mxu0 %v1119
        %v1121 = vpop.f32.mrf.mxu0
        %v1122 = vadd.f32 %v1025, %v1121
        %v1123 = vand.u32 %v335, 4294901760
        %1124 = vmatmul.f32.gmra.mxu0 %v1123
        %v1125 = vpop.f32.mrf.mxu0
        %v1126 = vadd.f32 %v1029, %v1125
        %v1127 = vand.u32 %v336, 4294901760
        %1128 = vmatmul.f32.gmra.mxu0 %v1127
        %v1129 = vpop.f32.mrf.mxu0
        %v1130 = vadd.f32 %v1033, %v1129
        %v1131 = vand.u32 %v337, 4294901760
        %1132 = vmatmul.f32.gmra.mxu0 %v1131
        %v1133 = vpop.f32.mrf.mxu0
        %v1134 = vadd.f32 %v1037, %v1133
        %v1135 = vand.u32 %v338, 4294901760
        %1136 = vmatmul.f32.gmra.mxu0 %v1135
        %v1137 = vpop.f32.mrf.mxu0
        %v1138 = vadd.f32 %v1041, %v1137
        %v1139 = vand.u32 %v339, 4294901760
        %1140 = vmatmul.f32.gmra.mxu0 %v1139
        %v1141 = vpop.f32.mrf.mxu0
        %v1142 = vadd.f32 %v1045, %v1141
        %v1143 = vand.u32 %v340, 4294901760
        %1144 = vmatmul.f32.gmra.mxu0 %v1143
        %v1145 = vpop.f32.mrf.mxu0
        %v1146 = vadd.f32 %v1049, %v1145
        %v1147 = vand.u32 %v341, 4294901760
        %1148 = vmatmul.f32.gmra.mxu0 %v1147
        %v1149 = vpop.f32.mrf.mxu0
        %v1150 = vadd.f32 %v1053, %v1149
        %v1151 = vand.u32 %v342, 4294901760
        %1152 = vmatmul.f32.gmra.mxu0 %v1151
        %v1153 = vpop.f32.mrf.mxu0
        %v1154 = vadd.f32 %v1057, %v1153
        %v1155 = vand.u32 %v343, 4294901760
        %1156 = vmatmul.f32.gmra.mxu0 %v1155
        %v1157 = vpop.f32.mrf.mxu0
        %v1158 = vadd.f32 %v1061, %v1157
        %v1159 = vand.u32 %v344, 4294901760
        %1160 = vmatmul.f32.gmra.mxu0 %v1159
        %v1161 = vpop.f32.mrf.mxu0
        %v1162 = vadd.f32 %v1065, %v1161
        %v1163 = vand.u32 %v345, 4294901760
        %1164 = vmatmul.f32.gmra.mxu0 %v1163
        %v1165 = vpop.f32.mrf.mxu0
        %v1166 = vadd.f32 %v1069, %v1165
        %1167 = vdwg.mxu0
        %v1168 = vadd.f32 %v314, %v1106
        %v1169 = vadd.f32 %v315, %v1110
        %v1170 = vadd.f32 %v316, %v1114
        %v1171 = vadd.f32 %v317, %v1118
        %v1172 = vadd.f32 %v318, %v1122
        %v1173 = vadd.f32 %v319, %v1126
        %v1174 = vadd.f32 %v320, %v1130
        %v1175 = vadd.f32 %v321, %v1134
        %v1176 = vadd.f32 %v322, %v1138
        %v1177 = vadd.f32 %v323, %v1142
        %v1178 = vadd.f32 %v324, %v1146
        %v1179 = vadd.f32 %v325, %v1150
        %v1180 = vadd.f32 %v326, %v1154
        %v1181 = vadd.f32 %v327, %v1158
        %v1182 = vadd.f32 %v328, %v1162
        %v1183 = vadd.f32 %v329, %v1166
        %1184 = vst [vmem:[#allocation2] sm:$0xff] %v1168
        %1185 = vst [vmem:[#allocation2 + $0x8] sm:$0xff] %v1169
        %1186 = vst [vmem:[#allocation2 + $0x10] sm:$0xff] %v1170
        %1187 = vst [vmem:[#allocation2 + $0x18] sm:$0xff] %v1171
        %1188 = vst [vmem:[#allocation2 + $0x20] sm:$0xff] %v1172
        %1189 = vst [vmem:[#allocation2 + $0x28] sm:$0xff] %v1173
        %1190 = vst [vmem:[#allocation2 + $0x30] sm:$0xff] %v1174
        %1191 = vst [vmem:[#allocation2 + $0x38] sm:$0xff] %v1175
        %1192 = vst [vmem:[#allocation2 + $0x40] sm:$0xff] %v1176
        %1193 = vst [vmem:[#allocation2 + $0x48] sm:$0xff] %v1177
        %1194 = vst [vmem:[#allocation2 + $0x50] sm:$0xff] %v1178
        %1195 = vst [vmem:[#allocation2 + $0x58] sm:$0xff] %v1179
        %1196 = vst [vmem:[#allocation2 + $0x60] sm:$0xff] %v1180
        %1197 = vst [vmem:[#allocation2 + $0x68] sm:$0xff] %v1181
        %1198 = vst [vmem:[#allocation2 + $0x70] sm:$0xff] %v1182
        %1199 = vst [vmem:[#allocation2 + $0x78] sm:$0xff] %v1183
        // Predicated region
        $region71: #{attention_forward.4} parent=61 // pred_check
          %p1200 = pneg %p294
        $region72: #{attention_forward.4} parent=61 // pred_check_branch
          %1202 = sbr.rel (%p1200) target = $region74
        $region73: #{attention_forward.4} parent=61 // pred_region
          %v1203 = vld [vmem:[#allocation2] sm:$0xff]
          %v1204 = vld [vmem:[#allocation2 + $0x8] sm:$0xff]
          %v1205 = vld [vmem:[#allocation2 + $0x10] sm:$0xff]
          %v1206 = vld [vmem:[#allocation2 + $0x18] sm:$0xff]
          %v1207 = vld [vmem:[#allocation2 + $0x20] sm:$0xff]
          %v1208 = vld [vmem:[#allocation2 + $0x28] sm:$0xff]
          %v1209 = vld [vmem:[#allocation2 + $0x30] sm:$0xff]
          %v1210 = vld [vmem:[#allocation2 + $0x38] sm:$0xff]
          %v1211 = vld [vmem:[#allocation2 + $0x40] sm:$0xff]
          %v1212 = vld [vmem:[#allocation2 + $0x48] sm:$0xff]
          %v1213 = vld [vmem:[#allocation2 + $0x50] sm:$0xff]
          %v1214 = vld [vmem:[#allocation2 + $0x58] sm:$0xff]
          %v1215 = vld [vmem:[#allocation2 + $0x60] sm:$0xff]
          %v1216 = vld [vmem:[#allocation2 + $0x68] sm:$0xff]
          %v1217 = vld [vmem:[#allocation2 + $0x70] sm:$0xff]
          %v1218 = vld [vmem:[#allocation2 + $0x78] sm:$0xff]
          %1219 = vst [vmem:[%s282] sm:$0xff] %v1203
          %1220 = vst [vmem:[%s282 + $0x8] sm:$0xff] %v1204
          %1221 = vst [vmem:[%s282 + $0x10] sm:$0xff] %v1205
          %1222 = vst [vmem:[%s282 + $0x18] sm:$0xff] %v1206
          %1223 = vst [vmem:[%s282 + $0x20] sm:$0xff] %v1207
          %1224 = vst [vmem:[%s282 + $0x28] sm:$0xff] %v1208
          %1225 = vst [vmem:[%s282 + $0x30] sm:$0xff] %v1209
          %1226 = vst [vmem:[%s282 + $0x38] sm:$0xff] %v1210
          %1227 = vst [vmem:[%s282 + $0x40] sm:$0xff] %v1211
          %1228 = vst [vmem:[%s282 + $0x48] sm:$0xff] %v1212
          %1229 = vst [vmem:[%s282 + $0x50] sm:$0xff] %v1213
          %1230 = vst [vmem:[%s282 + $0x58] sm:$0xff] %v1214
          %1231 = vst [vmem:[%s282 + $0x60] sm:$0xff] %v1215
          %1232 = vst [vmem:[%s282 + $0x68] sm:$0xff] %v1216
          %1233 = vst [vmem:[%s282 + $0x70] sm:$0xff] %v1217
          %1234 = vst [vmem:[%s282 + $0x78] sm:$0xff] %v1218
        $region74: #{attention_forward.4} parent=61 // pred_fallthru
          _
        %s1235 = sand.u32 %s98, 1
        %s1236 = sand.u32 %s98, 1
        %s1237 = smul.addr %s1236, 128
        %s1238 = scalar_lea.vmem [#allocation4], %s1237
        // Predicated region
        $region75: #{attention_forward.4} parent=61 // pred_check
          %p1239 = pneg %p108
        $region76: #{attention_forward.4} parent=61 // pred_check_branch
          %1241 = sbr.rel (%p1239) target = $region78
        $region77: #{attention_forward.4} parent=61 // pred_region
          %s1242 = smul.u32 16, %s18
          %s1243 = smul.addr %s1242, 3
          %s1244 = sadd.s32 %s19, %s1243
          %s1245 = smul.addr %s1244, 8
          %s1246 = scalar_lea.vmem %s2, %s1245
          // Predicated region
          $region79: #{attention_forward.4} parent=77 // pred_check
            _
          $region80: #{attention_forward.4} parent=77 // pred_check_branch
            %1248 = sbr.rel (0) target = $region82
          $region81: #{attention_forward.4} parent=77 // pred_region
            // Predicated region
            $region83: #{attention_forward.4} parent=81 // pred_check
              _
            $region84: #{attention_forward.4} parent=81 // pred_check_branch
              %1250 = sbr.rel (0) target = $region86
            $region85: #{attention_forward.4} parent=81 // pred_region
              // Predicated region
              $region98: #{attention_forward.4} parent=85 // pred_check
                _
              $region99: #{attention_forward.4} parent=85 // pred_check_branch
                %1296 = sbr.rel (0) target = $region101
              $region100: #{attention_forward.4} parent=85 // pred_region
                loop: start=0, step=1, limit=1
                $region102: #{attention_forward.4} parent=100 // loop_pre_header
                  _
                $region103: #{attention_forward.4} parent=100 // loop_header
                  %s1298 = sphi 0, %s1302
                  %p1299 = scmp.ge.s32.totalorder %s1298, 1
                  %s1303 = sphi %s1238, %s1238
                  %s1304 = sphi %s1246, %s1246
                $region104: #{attention_forward.4} parent=100 // loop_header_branch
                  %1301 = sbr.rel (%p1299) target = $region108
                $region105: #{attention_forward.4} parent=100 // loop_body
                  %v1305 = vld [vmem:[%s1303] sm:$0xff]
                  %1306 = vst [vmem:[%s1304] sm:$0xff] %v1305
                  %v1307 = vld [vmem:[%s1303 + $0x8] sm:$0xff]
                  %1308 = vst [vmem:[%s1304 + $0x18] sm:$0xff] %v1307
                  %v1309 = vld [vmem:[%s1303 + $0x10] sm:$0xff]
                  %1310 = vst [vmem:[%s1304 + $0x30] sm:$0xff] %v1309
                  %v1311 = vld [vmem:[%s1303 + $0x18] sm:$0xff]
                  %1312 = vst [vmem:[%s1304 + $0x48] sm:$0xff] %v1311
                  %v1313 = vld [vmem:[%s1303 + $0x20] sm:$0xff]
                  %1314 = vst [vmem:[%s1304 + $0x60] sm:$0xff] %v1313
                  %v1315 = vld [vmem:[%s1303 + $0x28] sm:$0xff]
                  %1316 = vst [vmem:[%s1304 + $0x78] sm:$0xff] %v1315
                  %v1317 = vld [vmem:[%s1303 + $0x30] sm:$0xff]
                  %1318 = vst [vmem:[%s1304 + $0x90] sm:$0xff] %v1317
                  %v1319 = vld [vmem:[%s1303 + $0x38] sm:$0xff]
                  %1320 = vst [vmem:[%s1304 + $0xa8] sm:$0xff] %v1319
                  %v1321 = vld [vmem:[%s1303 + $0x40] sm:$0xff]
                  %1322 = vst [vmem:[%s1304 + $0xc0] sm:$0xff] %v1321
                  %v1323 = vld [vmem:[%s1303 + $0x48] sm:$0xff]
                  %1324 = vst [vmem:[%s1304 + $0xd8] sm:$0xff] %v1323
                  %v1325 = vld [vmem:[%s1303 + $0x50] sm:$0xff]
                  %1326 = vst [vmem:[%s1304 + $0xf0] sm:$0xff] %v1325
                  %v1327 = vld [vmem:[%s1303 + $0x58] sm:$0xff]
                  %1328 = vst [vmem:[%s1304 + $0x108] sm:$0xff] %v1327
                  %v1329 = vld [vmem:[%s1303 + $0x60] sm:$0xff]
                  %1330 = vst [vmem:[%s1304 + $0x120] sm:$0xff] %v1329
                  %v1331 = vld [vmem:[%s1303 + $0x68] sm:$0xff]
                  %1332 = vst [vmem:[%s1304 + $0x138] sm:$0xff] %v1331
                  %v1333 = vld [vmem:[%s1303 + $0x70] sm:$0xff]
                  %1334 = vst [vmem:[%s1304 + $0x150] sm:$0xff] %v1333
                  %v1335 = vld [vmem:[%s1303 + $0x78] sm:$0xff]
                  %1336 = vst [vmem:[%s1304 + $0x168] sm:$0xff] %v1335
                $region106: #{attention_forward.4} parent=100 // loop_footer
                  %s1302 = sadd.s32 1, %s1298
                $region107: #{attention_forward.4} parent=100 // loop_footer_branch
                  %1297 = sbr.rel target = $region103
                $region108: #{attention_forward.4} parent=100 // loop_exit
                  _
              $region101: #{attention_forward.4} parent=85 // pred_fallthru
                _
              // Predicated region
              $region109: #{attention_forward.4} parent=85 // pred_check
                _
              $region110: #{attention_forward.4} parent=85 // pred_check_branch
                %1338 = sbr.rel target = $region112
              $region111: #{attention_forward.4} parent=85 // pred_region
                _
              $region112: #{attention_forward.4} parent=85 // pred_fallthru
                _
            $region86: #{attention_forward.4} parent=81 // pred_fallthru
              _
            // Predicated region
            $region87: #{attention_forward.4} parent=81 // pred_check
              _
            $region88: #{attention_forward.4} parent=81 // pred_check_branch
              %1252 = sbr.rel target = $region90
            $region89: #{attention_forward.4} parent=81 // pred_region
              %s1254 = ssub.s32 256, 1
              loop: start=0, step=1, limit=1
              $region91: #{attention_forward.4} parent=89 // loop_pre_header
                _
              $region92: #{attention_forward.4} parent=89 // loop_header
                %s1256 = sphi 0, %s1260
                %p1257 = scmp.ge.s32.totalorder %s1256, 1
                %s1261 = sphi %s1238, %s1238
                %s1262 = sphi %s1246, %s1246
              $region93: #{attention_forward.4} parent=89 // loop_header_branch
                %1259 = sbr.rel (%p1257) target = $region97
              $region94: #{attention_forward.4} parent=89 // loop_body
                %v1263 = vld [vmem:[%s1261] sm:%s1254]
                %1264 = vst [vmem:[%s1262] sm:%s1254] %v1263
                %v1265 = vld [vmem:[%s1261 + $0x8] sm:%s1254]
                %1266 = vst [vmem:[%s1262 + $0x18] sm:%s1254] %v1265
                %v1267 = vld [vmem:[%s1261 + $0x10] sm:%s1254]
                %1268 = vst [vmem:[%s1262 + $0x30] sm:%s1254] %v1267
                %v1269 = vld [vmem:[%s1261 + $0x18] sm:%s1254]
                %1270 = vst [vmem:[%s1262 + $0x48] sm:%s1254] %v1269
                %v1271 = vld [vmem:[%s1261 + $0x20] sm:%s1254]
                %1272 = vst [vmem:[%s1262 + $0x60] sm:%s1254] %v1271
                %v1273 = vld [vmem:[%s1261 + $0x28] sm:%s1254]
                %1274 = vst [vmem:[%s1262 + $0x78] sm:%s1254] %v1273
                %v1275 = vld [vmem:[%s1261 + $0x30] sm:%s1254]
                %1276 = vst [vmem:[%s1262 + $0x90] sm:%s1254] %v1275
                %v1277 = vld [vmem:[%s1261 + $0x38] sm:%s1254]
                %1278 = vst [vmem:[%s1262 + $0xa8] sm:%s1254] %v1277
                %v1279 = vld [vmem:[%s1261 + $0x40] sm:%s1254]
                %1280 = vst [vmem:[%s1262 + $0xc0] sm:%s1254] %v1279
                %v1281 = vld [vmem:[%s1261 + $0x48] sm:%s1254]
                %1282 = vst [vmem:[%s1262 + $0xd8] sm:%s1254] %v1281
                %v1283 = vld [vmem:[%s1261 + $0x50] sm:%s1254]
                %1284 = vst [vmem:[%s1262 + $0xf0] sm:%s1254] %v1283
                %v1285 = vld [vmem:[%s1261 + $0x58] sm:%s1254]
                %1286 = vst [vmem:[%s1262 + $0x108] sm:%s1254] %v1285
                %v1287 = vld [vmem:[%s1261 + $0x60] sm:%s1254]
                %1288 = vst [vmem:[%s1262 + $0x120] sm:%s1254] %v1287
                %v1289 = vld [vmem:[%s1261 + $0x68] sm:%s1254]
                %1290 = vst [vmem:[%s1262 + $0x138] sm:%s1254] %v1289
                %v1291 = vld [vmem:[%s1261 + $0x70] sm:%s1254]
                %1292 = vst [vmem:[%s1262 + $0x150] sm:%s1254] %v1291
                %v1293 = vld [vmem:[%s1261 + $0x78] sm:%s1254]
                %1294 = vst [vmem:[%s1262 + $0x168] sm:%s1254] %v1293
              $region95: #{attention_forward.4} parent=89 // loop_footer
                %s1260 = sadd.s32 1, %s1256
              $region96: #{attention_forward.4} parent=89 // loop_footer_branch
                %1255 = sbr.rel target = $region92
              $region97: #{attention_forward.4} parent=89 // loop_exit
                _
            $region90: #{attention_forward.4} parent=81 // pred_fallthru
              _
          $region82: #{attention_forward.4} parent=77 // pred_fallthru
            _
          %1339 = vnop
        $region78: #{attention_forward.4} parent=61 // pred_fallthru
          _
      $region62: #{attention_forward.4} parent=5 // pred_fallthru
        _
      %p1340 = scmp.le.s32.totalorder 2, %s8
      // Predicated region
      $region113: #{attention_forward.4} parent=5 // pred_check
        %p1341 = pneg %p1340
      $region114: #{attention_forward.4} parent=5 // pred_check_branch
        %1343 = sbr.rel (%p1341) target = $region116
      $region115: #{attention_forward.4} parent=5 // pred_region
        %s1344 = ssub.s32 %s8, 2
        // Predicated region
        $region117: #{attention_forward.4} parent=115 // pred_check
          %p1345 = pneg %p114
        $region118: #{attention_forward.4} parent=115 // pred_check_branch
          %1347 = sbr.rel (%p1345) target = $region120
        $region119: #{attention_forward.4} parent=115 // pred_region
          %s1348 = sand.u32 %s99, 1
          %s1349 = sand.u32 %s99, 1
          %s1350 = smul.addr %s1349, 128
          %s1351 = scalar_lea.vmem [#allocation4], %s1350
        $region120: #{attention_forward.4} parent=115 // pred_fallthru
          _
      $region116: #{attention_forward.4} parent=5 // pred_fallthru
        _
    $region6: #{attention_forward.4} parent=1 // loop_footer
      %s12 = sadd.s32 1, %s8
    $region7: #{attention_forward.4} parent=1 // loop_footer_branch
      %7 = sbr.rel target = $region3
    $region8: #{attention_forward.4} parent=1 // loop_exit
      _

// kernel: attention_forward.5
$region0: #{attention_forward.5}
  #allocation0 [shape = 'u32[]', space=smem, size = 0x4, offset = 0x4, fixed_abs, tag = 'smem constant byte address 0x4 - core index']
  #allocation1 [shape = 'u32[72,128]{1,0:T(1,128)}', space=vmem, size = 0x9000, scoped, tag = 'internal scratch']
  %s0 = inlined_call_operand.vmem [shape: f32[2,128,128], index: 0, kind: input, shape index: {}]
  %s1 = inlined_call_operand.vmem [shape: f32[2,128,128], index: 1, kind: input, shape index: {}]
  %s2 = inlined_call_operand.vmem [shape: f32[3,128,128], index: 2, kind: input, shape index: {}]
  %s3 = inlined_call_operand.vmem [shape: f32[2,128,128], index: 3, kind: output, shape index: {0}]
  %s4 = inlined_call_operand.vmem [shape: f32[2,128,128], index: 4, kind: output, shape index: {1}]
  %5 = xla_tuple %s3, %s4
  %s6 = sld [smem:[#allocation0]]
  $region53: #{attention_forward.5} parent=0
    _
  %s8 = ssub.s32 1, %s6
  %s9 = scalar_select 0, %s8, %s6
  loop: start=0, step=1, limit=4
  $region2: #{attention_forward.5} parent=0 // loop_pre_header
    _
  $region3: #{attention_forward.5} parent=0 // loop_header
    %s11 = sphi 0, %s15
    %p12 = scmp.ge.s32.totalorder %s11, 4
    %s18 = sphi 0, %s30
    %s19 = sphi 0, %s26
    %s20 = sphi 0, %s18
    %s21 = sphi 0, %s19
    %s22 = sphi 0, %s20
    %s23 = sphi 0, %s21
    %s35 = sphi 0, %s37
    %s38 = sphi 0, %s35
    %s39 = sphi 0, %s38
    %s55 = sphi 0, %s39
    %s63 = sphi 0, %s65
    %s66 = sphi 0, %s63
    %s67 = sphi 0, %s66
    %s83 = sphi 0, %s67
    %s89 = sphi 0, %s91
    %s92 = sphi 0, %s89
    %s93 = sphi 0, %s92
    %s109 = sphi 0, %s93
    %s117 = sphi 0, %s119
    %s120 = sphi 0, %s117
    %s121 = sphi 0, %s120
    %s137 = sphi 0, %s121
    %s145 = sphi 0, %s147
    %s148 = sphi 0, %s145
    %s149 = sphi 0, %s148
    %s165 = sphi 0, %s149
  $region4: #{attention_forward.5} parent=0 // loop_header_branch
    %14 = sbr.rel (%p12) target = $region8
  $region5: #{attention_forward.5} parent=0 // loop_body
    %s16 = ssub.s32 %s11, 1
    %s17 = ssub.s32 %s11, 2
    %s24 = sadd.s32 1, %s19
    %p25 = scmp.ge.s32.totalorder %s24, 1
    %s26 = scalar_select %p25, 0, %s24
    %s27 = sadd.s32 1, %s18
    %s28 = scalar_select %p25, %s27, %s18
    %p29 = scmp.ge.s32.totalorder %s28, 2
    %s30 = scalar_select %p29, 0, %s28
    %s31 = ssub.s32 %s18, %s30
    %s32 = ssub.s32 %s19, %s26
    %s33 = sor.u32 %s31, %s32
    %p34 = scmp.eq.s32.totalorder %s33, 0
    %s36 = sadd.s32 %s35, 1
    %s37 = scalar_select %p34, %s35, %s36
    %p40 = pneg %p34
    %p41 = scmp.eq.s32.totalorder %s11, 1
    %p42 = por %p40, %p41
    %p43 = scmp.ne.s32.totalorder %s35, %s38
    %p44 = scmp.eq.s32.totalorder %s11, 0
    %p45 = por %p43, %p44
    %p46 = scmp.ne.s32.totalorder %s35, %s38
    %p47 = scmp.eq.s32.totalorder %s16, 1
    %p48 = por %p46, %p47
    %p49 = scmp.ne.s32.totalorder %s38, %s39
    %p50 = scmp.eq.s32.totalorder %s16, 0
    %p51 = por %p49, %p50
    %p52 = scmp.ne.s32.totalorder %s38, %s39
    %p53 = scmp.eq.s32.totalorder %s17, 1
    %p54 = por %p52, %p53
    %p56 = scmp.ne.s32.totalorder %s39, %s55
    %p57 = scmp.eq.s32.totalorder %s17, 0
    %p58 = por %p56, %p57
    %s59 = ssub.s32 %s18, %s30
    %s60 = ssub.s32 %s19, %s26
    %s61 = sor.u32 %s59, %s60
    %p62 = scmp.eq.s32.totalorder %s61, 0
    %s64 = sadd.s32 %s63, 1
    %s65 = scalar_select %p62, %s63, %s64
    %p68 = pneg %p62
    %p69 = scmp.eq.s32.totalorder %s11, 1
    %p70 = por %p68, %p69
    %p71 = scmp.ne.s32.totalorder %s63, %s66
    %p72 = scmp.eq.s32.totalorder %s11, 0
    %p73 = por %p71, %p72
    %p74 = scmp.ne.s32.totalorder %s63, %s66
    %p75 = scmp.eq.s32.totalorder %s16, 1
    %p76 = por %p74, %p75
    %p77 = scmp.ne.s32.totalorder %s66, %s67
    %p78 = scmp.eq.s32.totalorder %s16, 0
    %p79 = por %p77, %p78
    %p80 = scmp.ne.s32.totalorder %s66, %s67
    %p81 = scmp.eq.s32.totalorder %s17, 1
    %p82 = por %p80, %p81
    %p84 = scmp.ne.s32.totalorder %s67, %s83
    %p85 = scmp.eq.s32.totalorder %s17, 0
    %p86 = por %p84, %p85
    %s87 = ssub.s32 %s19, %s26
    %p88 = scmp.eq.s32.totalorder %s87, 0
    %s90 = sadd.s32 %s89, 1
    %s91 = scalar_select %p88, %s89, %s90
    %p94 = pneg %p88
    %p95 = scmp.eq.s32.totalorder %s11, 1
    %p96 = por %p94, %p95
    %p97 = scmp.ne.s32.totalorder %s89, %s92
    %p98 = scmp.eq.s32.totalorder %s11, 0
    %p99 = por %p97, %p98
    %p100 = scmp.ne.s32.totalorder %s89, %s92
    %p101 = scmp.eq.s32.totalorder %s16, 1
    %p102 = por %p100, %p101
    %p103 = scmp.ne.s32.totalorder %s92, %s93
    %p104 = scmp.eq.s32.totalorder %s16, 0
    %p105 = por %p103, %p104
    %p106 = scmp.ne.s32.totalorder %s92, %s93
    %p107 = scmp.eq.s32.totalorder %s17, 1
    %p108 = por %p106, %p107
    %p110 = scmp.ne.s32.totalorder %s93, %s109
    %p111 = scmp.eq.s32.totalorder %s17, 0
    %p112 = por %p110, %p111
    %s113 = ssub.s32 %s18, %s30
    %s114 = ssub.s32 %s19, %s26
    %s115 = sor.u32 %s113, %s114
    %p116 = scmp.eq.s32.totalorder %s115, 0
    %s118 = sadd.s32 %s117, 1
    %s119 = scalar_select %p116, %s117, %s118
    %p122 = pneg %p116
    %p123 = scmp.eq.s32.totalorder %s11, 1
    %p124 = por %p122, %p123
    %p125 = scmp.ne.s32.totalorder %s117, %s120
    %p126 = scmp.eq.s32.totalorder %s11, 0
    %p127 = por %p125, %p126
    %p128 = scmp.ne.s32.totalorder %s117, %s120
    %p129 = scmp.eq.s32.totalorder %s16, 1
    %p130 = por %p128, %p129
    %p131 = scmp.ne.s32.totalorder %s120, %s121
    %p132 = scmp.eq.s32.totalorder %s16, 0
    %p133 = por %p131, %p132
    %p134 = scmp.ne.s32.totalorder %s120, %s121
    %p135 = scmp.eq.s32.totalorder %s17, 1
    %p136 = por %p134, %p135
    %p138 = scmp.ne.s32.totalorder %s121, %s137
    %p139 = scmp.eq.s32.totalorder %s17, 0
    %p140 = por %p138, %p139
    %s141 = ssub.s32 %s18, %s30
    %s142 = ssub.s32 %s19, %s26
    %s143 = sor.u32 %s141, %s142
    %p144 = scmp.eq.s32.totalorder %s143, 0
    %s146 = sadd.s32 %s145, 1
    %s147 = scalar_select %p144, %s145, %s146
    %p150 = pneg %p144
    %p151 = scmp.eq.s32.totalorder %s11, 1
    %p152 = por %p150, %p151
    %p153 = scmp.ne.s32.totalorder %s145, %s148
    %p154 = scmp.eq.s32.totalorder %s11, 0
    %p155 = por %p153, %p154
    %p156 = scmp.ne.s32.totalorder %s145, %s148
    %p157 = scmp.eq.s32.totalorder %s16, 1
    %p158 = por %p156, %p157
    %p159 = scmp.ne.s32.totalorder %s148, %s149
    %p160 = scmp.eq.s32.totalorder %s16, 0
    %p161 = por %p159, %p160
    %p162 = scmp.ne.s32.totalorder %s148, %s149
    %p163 = scmp.eq.s32.totalorder %s17, 1
    %p164 = por %p162, %p163
    %p166 = scmp.ne.s32.totalorder %s149, %s165
    %p167 = scmp.eq.s32.totalorder %s17, 0
    %p168 = por %p166, %p167
    %p169 = scmp.le.s32.totalorder 1, %s11
    %p170 = scmp.lt.s32.totalorder %s11, 3
    %p171 = pnand %p169, %p170
    %p172 = pneg %p171
    // Predicated region
    $region9: #{attention_forward.5} parent=5 // pred_check
      _
    $region10: #{attention_forward.5} parent=5 // pred_check_branch
      %174 = sbr.rel (%p171) target = $region12
    $region11: #{attention_forward.5} parent=5 // pred_region
      %s175 = ssub.s32 %s11, 1
      // Predicated region
      $region13: #{attention_forward.5} parent=11 // pred_check
        %p176 = pneg %p105
      $region14: #{attention_forward.5} parent=11 // pred_check_branch
        %178 = sbr.rel (%p176) target = $region16
      $region15: #{attention_forward.5} parent=11 // pred_region
        %s179 = smul.u32 16, %s21
        %p180 = scmp.lt.s32.totalorder %s179, 15
        %s181 = scalar_select %p180, %s179, 15
        %s182 = smul.addr %s181, 8
        %s183 = scalar_lea.vmem %s2, %s182
        %s184 = smul.u32 16, %s21
      $region16: #{attention_forward.5} parent=11 // pred_fallthru
        _
    $region12: #{attention_forward.5} parent=5 // pred_fallthru
      _
    %p185 = scmp.lt.s32.totalorder %s11, 2
    // Predicated region
    $region17: #{attention_forward.5} parent=5 // pred_check
      %p186 = pneg %p185
    $region18: #{attention_forward.5} parent=5 // pred_check_branch
      %188 = sbr.rel (%p186) target = $region20
    $region19: #{attention_forward.5} parent=5 // pred_region
      // Predicated region
      $region21: #{attention_forward.5} parent=19 // pred_check
        %p189 = pneg %p45
      $region22: #{attention_forward.5} parent=19 // pred_check_branch
        %191 = sbr.rel (%p189) target = $region24
      $region23: #{attention_forward.5} parent=19 // pred_region
        %s192 = smul.u32 16, %s19
        %p193 = scmp.lt.s32.totalorder %s18, 1
        %s194 = scalar_select %p193, %s18, 1
        %p195 = scmp.lt.s32.totalorder %s192, 15
        %s196 = scalar_select %p195, %s192, 15
        %s197 = smul.addr %s194, 16
        %s198 = sadd.s32 %s196, %s197
        %s199 = smul.addr %s198, 8
        %s200 = scalar_lea.vmem %s0, %s199
        %s201 = smul.u32 16, %s19
      $region24: #{attention_forward.5} parent=19 // pred_fallthru
        _
      // Predicated region
      $region25: #{attention_forward.5} parent=19 // pred_check
        %p202 = pneg %p73
      $region26: #{attention_forward.5} parent=19 // pred_check_branch
        %204 = sbr.rel (%p202) target = $region28
      $region27: #{attention_forward.5} parent=19 // pred_region
        %s205 = smul.u32 16, %s19
        %p206 = scmp.lt.s32.totalorder %s18, 1
        %s207 = scalar_select %p206, %s18, 1
        %p208 = scmp.lt.s32.totalorder %s205, 15
        %s209 = scalar_select %p208, %s205, 15
        %s210 = smul.addr %s207, 16
        %s211 = sadd.s32 %s209, %s210
        %s212 = smul.addr %s211, 8
        %s213 = scalar_lea.vmem %s1, %s212
        %s214 = smul.u32 16, %s19
      $region28: #{attention_forward.5} parent=19 // pred_fallthru
        _
    $region20: #{attention_forward.5} parent=5 // pred_fallthru
      _
    %p215 = scmp.le.s32.totalorder 1, %s11
    %p216 = scmp.lt.s32.totalorder %s11, 3
    %p217 = pnand %p215, %p216
    %p218 = pneg %p217
    // Predicated region
    $region29: #{attention_forward.5} parent=5 // pred_check
      _
    $region30: #{attention_forward.5} parent=5 // pred_check_branch
      %220 = sbr.rel (%p217) target = $region32
    $region31: #{attention_forward.5} parent=5 // pred_region
      %s221 = ssub.s32 %s11, 1
      %s222 = smul.u32 16, %s21
      %p223 = scmp.lt.s32.totalorder %s20, 1
      %s224 = scalar_select %p223, %s20, 1
      %p225 = scmp.lt.s32.totalorder %s222, 15
      %s226 = scalar_select %p225, %s222, 15
      %s227 = smul.addr %s224, 16
      %s228 = sadd.s32 %s226, %s227
      %s229 = smul.addr %s228, 8
      %s230 = scalar_lea.vmem %s0, %s229
      %p231 = pneg %p51
      %p232 = pneg %p48
      %s233 = smul.u32 16, %s21
      %p234 = scmp.lt.s32.totalorder %s20, 1
      %s235 = scalar_select %p234, %s20, 1
      %p236 = scmp.lt.s32.totalorder %s233, 15
      %s237 = scalar_select %p236, %s233, 15
      %s238 = smul.addr %s235, 16
      %s239 = sadd.s32 %s237, %s238
      %s240 = smul.addr %s239, 8
      %s241 = scalar_lea.vmem %s1, %s240
      %p242 = pneg %p79
      %p243 = pneg %p76
      %s244 = smul.u32 16, %s21
      %p245 = scmp.lt.s32.totalorder %s244, 15
      %s246 = scalar_select %p245, %s244, 15
      %s247 = smul.addr %s246, 8
      %s248 = scalar_lea.vmem %s2, %s247
      %p249 = pneg %p105
      %p250 = pneg %p102
      %p251 = pneg %p133
      %p252 = pneg %p130
      %s253 = smul.u32 16, %s21
      %p254 = scmp.lt.s32.totalorder %s20, 1
      %s255 = scalar_select %p254, %s20, 1
      %p256 = scmp.lt.s32.totalorder %s253, 15
      %s257 = scalar_select %p256, %s253, 15
      %s258 = smul.addr %s255, 16
      %s259 = sadd.s32 %s257, %s258
      %s260 = smul.addr %s259, 8
      %s261 = scalar_lea.vmem %s3, %s260
      %p262 = pneg %p161
      %p263 = pneg %p158
      %s264 = smul.u32 16, %s21
      %p265 = scmp.lt.s32.totalorder %s20, 1
      %s266 = scalar_select %p265, %s20, 1
      %p267 = scmp.lt.s32.totalorder %s264, 15
      %s268 = scalar_select %p267, %s264, 15
      %s269 = smul.addr %s266, 16
      %s270 = sadd.s32 %s268, %s269
      %s271 = smul.addr %s270, 8
      %s272 = scalar_lea.vmem %s4, %s271
      %s273 = smul.u32 16, %s21
      %p274 = scmp.lt.s32.totalorder %s20, 1
      %s275 = scalar_select %p274, %s20, 1
      %p276 = scmp.lt.s32.totalorder %s273, 15
      %s277 = scalar_select %p276, %s273, 15
      %s278 = smul.addr %s275, 16
      %s279 = sadd.s32 %s277, %s278
      %s280 = smul.addr %s279, 8
      %s281 = scalar_lea.vmem %s0, %s280
      %s282 = smul.u32 16, %s21
      %s283 = smul.u32 16, %s21
      %p284 = scmp.lt.s32.totalorder %s20, 1
      %s285 = scalar_select %p284, %s20, 1
      %p286 = scmp.lt.s32.totalorder %s283, 15
      %s287 = scalar_select %p286, %s283, 15
      %s288 = smul.addr %s285, 16
      %s289 = sadd.s32 %s287, %s288
      %s290 = smul.addr %s289, 8
      %s291 = scalar_lea.vmem %s1, %s290
      %s292 = smul.u32 16, %s21
      %s293 = smul.u32 16, %s21
      %p294 = scmp.lt.s32.totalorder %s293, 15
      %s295 = scalar_select %p294, %s293, 15
      %s296 = smul.addr %s295, 8
      %s297 = scalar_lea.vmem %s2, %s296
      %s298 = smul.u32 16, %s21
      %s299 = smul.u32 16, %s21
      %p300 = scmp.lt.s32.totalorder %s20, 1
      %s301 = scalar_select %p300, %s20, 1
      %p302 = scmp.lt.s32.totalorder %s299, 15
      %s303 = scalar_select %p302, %s299, 15
      %s304 = smul.addr %s301, 16
      %s305 = sadd.s32 %s303, %s304
      %s306 = smul.addr %s305, 8
      %s307 = scalar_lea.vmem %s3, %s306
      %s308 = smul.u32 16, %s21
      %s309 = smul.u32 16, %s21
      %p310 = scmp.lt.s32.totalorder %s20, 1
      %s311 = scalar_select %p310, %s20, 1
      %p312 = scmp.lt.s32.totalorder %s309, 15
      %s313 = scalar_select %p312, %s309, 15
      %s314 = smul.addr %s311, 16
      %s315 = sadd.s32 %s313, %s314
      %s316 = smul.addr %s315, 8
      %s317 = scalar_lea.vmem %s4, %s316
      %s318 = smul.u32 16, %s21
      %v319 = vld [vmem:[%s297] sm:$0xff]
      %v320 = vld [vmem:[%s297 + $0x8] sm:$0xff]
      %v321 = vld [vmem:[%s297 + $0x10] sm:$0xff]
      %v322 = vld [vmem:[%s297 + $0x18] sm:$0xff]
      %v323 = vld [vmem:[%s297 + $0x20] sm:$0xff]
      %v324 = vld [vmem:[%s297 + $0x28] sm:$0xff]
      %v325 = vld [vmem:[%s297 + $0x30] sm:$0xff]
      %v326 = vld [vmem:[%s297 + $0x38] sm:$0xff]
      %v327 = vld [vmem:[%s297 + $0x40] sm:$0xff]
      %v328 = vld [vmem:[%s297 + $0x48] sm:$0xff]
      %v329 = vld [vmem:[%s297 + $0x50] sm:$0xff]
      %v330 = vld [vmem:[%s297 + $0x58] sm:$0xff]
      %v331 = vld [vmem:[%s297 + $0x60] sm:$0xff]
      %v332 = vld [vmem:[%s297 + $0x68] sm:$0xff]
      %v333 = vld [vmem:[%s297 + $0x70] sm:$0xff]
      %v334 = vld [vmem:[%s297 + $0x78] sm:$0xff]
      %s335 = scalar_lea.vmem %s297, 128
      %v336 = vld [vmem:[%s335] sm:$0xff]
      %v337 = vld [vmem:[%s335 + $0x8] sm:$0xff]
      %v338 = vld [vmem:[%s335 + $0x10] sm:$0xff]
      %v339 = vld [vmem:[%s335 + $0x18] sm:$0xff]
      %v340 = vld [vmem:[%s335 + $0x20] sm:$0xff]
      %v341 = vld [vmem:[%s335 + $0x28] sm:$0xff]
      %v342 = vld [vmem:[%s335 + $0x30] sm:$0xff]
      %v343 = vld [vmem:[%s335 + $0x38] sm:$0xff]
      %v344 = vld [vmem:[%s335 + $0x40] sm:$0xff]
      %v345 = vld [vmem:[%s335 + $0x48] sm:$0xff]
      %v346 = vld [vmem:[%s335 + $0x50] sm:$0xff]
      %v347 = vld [vmem:[%s335 + $0x58] sm:$0xff]
      %v348 = vld [vmem:[%s335 + $0x60] sm:$0xff]
      %v349 = vld [vmem:[%s335 + $0x68] sm:$0xff]
      %v350 = vld [vmem:[%s335 + $0x70] sm:$0xff]
      %v351 = vld [vmem:[%s335 + $0x78] sm:$0xff]
      %s352 = scalar_lea.vmem %s297, 256
      %v353 = vld [vmem:[%s352] sm:$0xff]
      %v354 = vld [vmem:[%s352 + $0x8] sm:$0xff]
      %v355 = vld [vmem:[%s352 + $0x10] sm:$0xff]
      %v356 = vld [vmem:[%s352 + $0x18] sm:$0xff]
      %v357 = vld [vmem:[%s352 + $0x20] sm:$0xff]
      %v358 = vld [vmem:[%s352 + $0x28] sm:$0xff]
      %v359 = vld [vmem:[%s352 + $0x30] sm:$0xff]
      %v360 = vld [vmem:[%s352 + $0x38] sm:$0xff]
      %v361 = vld [vmem:[%s352 + $0x40] sm:$0xff]
      %v362 = vld [vmem:[%s352 + $0x48] sm:$0xff]
      %v363 = vld [vmem:[%s352 + $0x50] sm:$0xff]
      %v364 = vld [vmem:[%s352 + $0x58] sm:$0xff]
      %v365 = vld [vmem:[%s352 + $0x60] sm:$0xff]
      %v366 = vld [vmem:[%s352 + $0x68] sm:$0xff]
      %v367 = vld [vmem:[%s352 + $0x70] sm:$0xff]
      %v368 = vld [vmem:[%s352 + $0x78] sm:$0xff]
      %v369 = vld [vmem:[%s281] sm:$0xff]
      %v370 = vld [vmem:[%s281 + $0x8] sm:$0xff]
      %v371 = vld [vmem:[%s281 + $0x10] sm:$0xff]
      %v372 = vld [vmem:[%s281 + $0x18] sm:$0xff]
      %v373 = vld [vmem:[%s281 + $0x20] sm:$0xff]
      %v374 = vld [vmem:[%s281 + $0x28] sm:$0xff]
      %v375 = vld [vmem:[%s281 + $0x30] sm:$0xff]
      %v376 = vld [vmem:[%s281 + $0x38] sm:$0xff]
      %v377 = vld [vmem:[%s281 + $0x40] sm:$0xff]
      %v378 = vld [vmem:[%s281 + $0x48] sm:$0xff]
      %v379 = vld [vmem:[%s281 + $0x50] sm:$0xff]
      %v380 = vld [vmem:[%s281 + $0x58] sm:$0xff]
      %v381 = vld [vmem:[%s281 + $0x60] sm:$0xff]
      %v382 = vld [vmem:[%s281 + $0x68] sm:$0xff]
      %v383 = vld [vmem:[%s281 + $0x70] sm:$0xff]
      %v384 = vld [vmem:[%s281 + $0x78] sm:$0xff]
      %385 = vrot.lane.b32.xlu0 %v369, 112
      %v386 = vpop.permute.xlu0 %385
      %387 = vrot.lane.b32.xlu0 %v370, 112
      %v388 = vpop.permute.xlu0 %387
      %389 = vrot.lane.b32.xlu0 %v371, 112
      %v390 = vpop.permute.xlu0 %389
      %391 = vrot.lane.b32.xlu0 %v372, 112
      %v392 = vpop.permute.xlu0 %391
      %393 = vrot.lane.b32.xlu0 %v373, 112
      %v394 = vpop.permute.xlu0 %393
      %395 = vrot.lane.b32.xlu0 %v374, 112
      %v396 = vpop.permute.xlu0 %395
      %397 = vrot.lane.b32.xlu0 %v375, 112
      %v398 = vpop.permute.xlu0 %397
      %399 = vrot.lane.b32.xlu0 %v376, 112
      %v400 = vpop.permute.xlu0 %399
      %401 = vrot.lane.b32.xlu0 %v377, 112
      %v402 = vpop.permute.xlu0 %401
      %403 = vrot.lane.b32.xlu0 %v378, 112
      %v404 = vpop.permute.xlu0 %403
      %405 = vrot.lane.b32.xlu0 %v379, 112
      %v406 = vpop.permute.xlu0 %405
      %407 = vrot.lane.b32.xlu0 %v380, 112
      %v408 = vpop.permute.xlu0 %407
      %409 = vrot.lane.b32.xlu0 %v381, 112
      %v410 = vpop.permute.xlu0 %409
      %411 = vrot.lane.b32.xlu0 %v382, 112
      %v412 = vpop.permute.xlu0 %411
      %413 = vrot.lane.b32.xlu0 %v383, 112
      %v414 = vpop.permute.xlu0 %413
      %415 = vrot.lane.b32.xlu0 %v384, 112
      %v416 = vpop.permute.xlu0 %415
      %417 = vrot.lane.b32.xlu0 %v369, 16
      %v418 = vpop.permute.xlu0 %417
      %419 = vrot.lane.b32.xlu0 %v370, 16
      %v420 = vpop.permute.xlu0 %419
      %421 = vrot.lane.b32.xlu0 %v371, 16
      %v422 = vpop.permute.xlu0 %421
      %423 = vrot.lane.b32.xlu0 %v372, 16
      %v424 = vpop.permute.xlu0 %423
      %425 = vrot.lane.b32.xlu0 %v373, 16
      %v426 = vpop.permute.xlu0 %425
      %427 = vrot.lane.b32.xlu0 %v374, 16
      %v428 = vpop.permute.xlu0 %427
      %429 = vrot.lane.b32.xlu0 %v375, 16
      %v430 = vpop.permute.xlu0 %429
      %431 = vrot.lane.b32.xlu0 %v376, 16
      %v432 = vpop.permute.xlu0 %431
      %433 = vrot.lane.b32.xlu0 %v377, 16
      %v434 = vpop.permute.xlu0 %433
      %435 = vrot.lane.b32.xlu0 %v378, 16
      %v436 = vpop.permute.xlu0 %435
      %437 = vrot.lane.b32.xlu0 %v379, 16
      %v438 = vpop.permute.xlu0 %437
      %439 = vrot.lane.b32.xlu0 %v380, 16
      %v440 = vpop.permute.xlu0 %439
      %441 = vrot.lane.b32.xlu0 %v381, 16
      %v442 = vpop.permute.xlu0 %441
      %443 = vrot.lane.b32.xlu0 %v382, 16
      %v444 = vpop.permute.xlu0 %443
      %445 = vrot.lane.b32.xlu0 %v383, 16
      %v446 = vpop.permute.xlu0 %445
      %447 = vrot.lane.b32.xlu0 %v384, 16
      %v448 = vpop.permute.xlu0 %447
      %v449 = vmul.f32 %v369, %v319
      %v450 = vmul.f32 %v370, %v320
      %v451 = vmul.f32 %v371, %v321
      %v452 = vmul.f32 %v372, %v322
      %v453 = vmul.f32 %v373, %v323
      %v454 = vmul.f32 %v374, %v324
      %v455 = vmul.f32 %v375, %v325
      %v456 = vmul.f32 %v376, %v326
      %v457 = vmul.f32 %v377, %v327
      %v458 = vmul.f32 %v378, %v328
      %v459 = vmul.f32 %v379, %v329
      %v460 = vmul.f32 %v380, %v330
      %v461 = vmul.f32 %v381, %v331
      %v462 = vmul.f32 %v382, %v332
      %v463 = vmul.f32 %v383, %v333
      %v464 = vmul.f32 %v384, %v334
      %v465 = vmul.f32 %v386, %v336
      %v466 = vmul.f32 %v388, %v337
      %v467 = vmul.f32 %v390, %v338
      %v468 = vmul.f32 %v392, %v339
      %v469 = vmul.f32 %v394, %v340
      %v470 = vmul.f32 %v396, %v341
      %v471 = vmul.f32 %v398, %v342
      %v472 = vmul.f32 %v400, %v343
      %v473 = vmul.f32 %v402, %v344
      %v474 = vmul.f32 %v404, %v345
      %v475 = vmul.f32 %v406, %v346
      %v476 = vmul.f32 %v408, %v347
      %v477 = vmul.f32 %v410, %v348
      %v478 = vmul.f32 %v412, %v349
      %v479 = vmul.f32 %v414, %v350
      %v480 = vmul.f32 %v416, %v351
      %v481 = vadd.f32 %v449, %v465
      %v482 = vadd.f32 %v450, %v466
      %v483 = vadd.f32 %v451, %v467
      %v484 = vadd.f32 %v452, %v468
      %v485 = vadd.f32 %v453, %v469
      %v486 = vadd.f32 %v454, %v470
      %v487 = vadd.f32 %v455, %v471
      %v488 = vadd.f32 %v456, %v472
      %v489 = vadd.f32 %v457, %v473
      %v490 = vadd.f32 %v458, %v474
      %v491 = vadd.f32 %v459, %v475
      %v492 = vadd.f32 %v460, %v476
      %v493 = vadd.f32 %v461, %v477
      %v494 = vadd.f32 %v462, %v478
      %v495 = vadd.f32 %v463, %v479
      %v496 = vadd.f32 %v464, %v480
      %v497 = vmul.f32 %v418, %v353
      %v498 = vmul.f32 %v420, %v354
      %v499 = vmul.f32 %v422, %v355
      %v500 = vmul.f32 %v424, %v356
      %v501 = vmul.f32 %v426, %v357
      %v502 = vmul.f32 %v428, %v358
      %v503 = vmul.f32 %v430, %v359
      %v504 = vmul.f32 %v432, %v360
      %v505 = vmul.f32 %v434, %v361
      %v506 = vmul.f32 %v436, %v362
      %v507 = vmul.f32 %v438, %v363
      %v508 = vmul.f32 %v440, %v364
      %v509 = vmul.f32 %v442, %v365
      %v510 = vmul.f32 %v444, %v366
      %v511 = vmul.f32 %v446, %v367
      %v512 = vmul.f32 %v448, %v368
      %v513 = vadd.f32 %v481, %v497
      %v514 = vadd.f32 %v482, %v498
      %v515 = vadd.f32 %v483, %v499
      %v516 = vadd.f32 %v484, %v500
      %v517 = vadd.f32 %v485, %v501
      %v518 = vadd.f32 %v486, %v502
      %v519 = vadd.f32 %v487, %v503
      %v520 = vadd.f32 %v488, %v504
      %v521 = vadd.f32 %v489, %v505
      %v522 = vadd.f32 %v490, %v506
      %v523 = vadd.f32 %v491, %v507
      %v524 = vadd.f32 %v492, %v508
      %v525 = vadd.f32 %v493, %v509
      %v526 = vadd.f32 %v494, %v510
      %v527 = vadd.f32 %v495, %v511
      %v528 = vadd.f32 %v496, %v512
      %529 = vst [vmem:[%s307] sm:$0xff] %v513
      %530 = vst [vmem:[%s307 + $0x8] sm:$0xff] %v514
      %531 = vst [vmem:[%s307 + $0x10] sm:$0xff] %v515
      %532 = vst [vmem:[%s307 + $0x18] sm:$0xff] %v516
      %533 = vst [vmem:[%s307 + $0x20] sm:$0xff] %v517
      %534 = vst [vmem:[%s307 + $0x28] sm:$0xff] %v518
      %535 = vst [vmem:[%s307 + $0x30] sm:$0xff] %v519
      %536 = vst [vmem:[%s307 + $0x38] sm:$0xff] %v520
      %537 = vst [vmem:[%s307 + $0x40] sm:$0xff] %v521
      %538 = vst [vmem:[%s307 + $0x48] sm:$0xff] %v522
      %539 = vst [vmem:[%s307 + $0x50] sm:$0xff] %v523
      %540 = vst [vmem:[%s307 + $0x58] sm:$0xff] %v524
      %541 = vst [vmem:[%s307 + $0x60] sm:$0xff] %v525
      %542 = vst [vmem:[%s307 + $0x68] sm:$0xff] %v526
      %543 = vst [vmem:[%s307 + $0x70] sm:$0xff] %v527
      %544 = vst [vmem:[%s307 + $0x78] sm:$0xff] %v528
      %v545 = vld [vmem:[%s291] sm:$0xff]
      %v546 = vld [vmem:[%s291 + $0x8] sm:$0xff]
      %v547 = vld [vmem:[%s291 + $0x10] sm:$0xff]
      %v548 = vld [vmem:[%s291 + $0x18] sm:$0xff]
      %v549 = vld [vmem:[%s291 + $0x20] sm:$0xff]
      %v550 = vld [vmem:[%s291 + $0x28] sm:$0xff]
      %v551 = vld [vmem:[%s291 + $0x30] sm:$0xff]
      %v552 = vld [vmem:[%s291 + $0x38] sm:$0xff]
      %v553 = vld [vmem:[%s291 + $0x40] sm:$0xff]
      %v554 = vld [vmem:[%s291 + $0x48] sm:$0xff]
      %v555 = vld [vmem:[%s291 + $0x50] sm:$0xff]
      %v556 = vld [vmem:[%s291 + $0x58] sm:$0xff]
      %v557 = vld [vmem:[%s291 + $0x60] sm:$0xff]
      %v558 = vld [vmem:[%s291 + $0x68] sm:$0xff]
      %v559 = vld [vmem:[%s291 + $0x70] sm:$0xff]
      %v560 = vld [vmem:[%s291 + $0x78] sm:$0xff]
      %561 = vrot.lane.b32.xlu0 %v545, 112
      %v562 = vpop.permute.xlu0 %561
      %563 = vrot.lane.b32.xlu0 %v546, 112
      %v564 = vpop.permute.xlu0 %563
      %565 = vrot.lane.b32.xlu0 %v547, 112
      %v566 = vpop.permute.xlu0 %565
      %567 = vrot.lane.b32.xlu0 %v548, 112
      %v568 = vpop.permute.xlu0 %567
      %569 = vrot.lane.b32.xlu0 %v549, 112
      %v570 = vpop.permute.xlu0 %569
      %571 = vrot.lane.b32.xlu0 %v550, 112
      %v572 = vpop.permute.xlu0 %571
      %573 = vrot.lane.b32.xlu0 %v551, 112
      %v574 = vpop.permute.xlu0 %573
      %575 = vrot.lane.b32.xlu0 %v552, 112
      %v576 = vpop.permute.xlu0 %575
      %577 = vrot.lane.b32.xlu0 %v553, 112
      %v578 = vpop.permute.xlu0 %577
      %579 = vrot.lane.b32.xlu0 %v554, 112
      %v580 = vpop.permute.xlu0 %579
      %581 = vrot.lane.b32.xlu0 %v555, 112
      %v582 = vpop.permute.xlu0 %581
      %583 = vrot.lane.b32.xlu0 %v556, 112
      %v584 = vpop.permute.xlu0 %583
      %585 = vrot.lane.b32.xlu0 %v557, 112
      %v586 = vpop.permute.xlu0 %585
      %587 = vrot.lane.b32.xlu0 %v558, 112
      %v588 = vpop.permute.xlu0 %587
      %589 = vrot.lane.b32.xlu0 %v559, 112
      %v590 = vpop.permute.xlu0 %589
      %591 = vrot.lane.b32.xlu0 %v560, 112
      %v592 = vpop.permute.xlu0 %591
      %593 = vrot.lane.b32.xlu0 %v545, 16
      %v594 = vpop.permute.xlu0 %593
      %595 = vrot.lane.b32.xlu0 %v546, 16
      %v596 = vpop.permute.xlu0 %595
      %597 = vrot.lane.b32.xlu0 %v547, 16
      %v598 = vpop.permute.xlu0 %597
      %599 = vrot.lane.b32.xlu0 %v548, 16
      %v600 = vpop.permute.xlu0 %599
      %601 = vrot.lane.b32.xlu0 %v549, 16
      %v602 = vpop.permute.xlu0 %601
      %603 = vrot.lane.b32.xlu0 %v550, 16
      %v604 = vpop.permute.xlu0 %603
      %605 = vrot.lane.b32.xlu0 %v551, 16
      %v606 = vpop.permute.xlu0 %605
      %607 = vrot.lane.b32.xlu0 %v552, 16
      %v608 = vpop.permute.xlu0 %607
      %609 = vrot.lane.b32.xlu0 %v553, 16
      %v610 = vpop.permute.xlu0 %609
      %611 = vrot.lane.b32.xlu0 %v554, 16
      %v612 = vpop.permute.xlu0 %611
      %613 = vrot.lane.b32.xlu0 %v555, 16
      %v614 = vpop.permute.xlu0 %613
      %615 = vrot.lane.b32.xlu0 %v556, 16
      %v616 = vpop.permute.xlu0 %615
      %617 = vrot.lane.b32.xlu0 %v557, 16
      %v618 = vpop.permute.xlu0 %617
      %619 = vrot.lane.b32.xlu0 %v558, 16
      %v620 = vpop.permute.xlu0 %619
      %621 = vrot.lane.b32.xlu0 %v559, 16
      %v622 = vpop.permute.xlu0 %621
      %623 = vrot.lane.b32.xlu0 %v560, 16
      %v624 = vpop.permute.xlu0 %623
      %v625 = vmul.f32 %v545, %v319
      %v626 = vmul.f32 %v546, %v320
      %v627 = vmul.f32 %v547, %v321
      %v628 = vmul.f32 %v548, %v322
      %v629 = vmul.f32 %v549, %v323
      %v630 = vmul.f32 %v550, %v324
      %v631 = vmul.f32 %v551, %v325
      %v632 = vmul.f32 %v552, %v326
      %v633 = vmul.f32 %v553, %v327
      %v634 = vmul.f32 %v554, %v328
      %v635 = vmul.f32 %v555, %v329
      %v636 = vmul.f32 %v556, %v330
      %v637 = vmul.f32 %v557, %v331
      %v638 = vmul.f32 %v558, %v332
      %v639 = vmul.f32 %v559, %v333
      %v640 = vmul.f32 %v560, %v334
      %v641 = vmul.f32 %v562, %v336
      %v642 = vmul.f32 %v564, %v337
      %v643 = vmul.f32 %v566, %v338
      %v644 = vmul.f32 %v568, %v339
      %v645 = vmul.f32 %v570, %v340
      %v646 = vmul.f32 %v572, %v341
      %v647 = vmul.f32 %v574, %v342
      %v648 = vmul.f32 %v576, %v343
      %v649 = vmul.f32 %v578, %v344
      %v650 = vmul.f32 %v580, %v345
      %v651 = vmul.f32 %v582, %v346
      %v652 = vmul.f32 %v584, %v347
      %v653 = vmul.f32 %v586, %v348
      %v654 = vmul.f32 %v588, %v349
      %v655 = vmul.f32 %v590, %v350
      %v656 = vmul.f32 %v592, %v351
      %v657 = vadd.f32 %v625, %v641
      %v658 = vadd.f32 %v626, %v642
      %v659 = vadd.f32 %v627, %v643
      %v660 = vadd.f32 %v628, %v644
      %v661 = vadd.f32 %v629, %v645
      %v662 = vadd.f32 %v630, %v646
      %v663 = vadd.f32 %v631, %v647
      %v664 = vadd.f32 %v632, %v648
      %v665 = vadd.f32 %v633, %v649
      %v666 = vadd.f32 %v634, %v650
      %v667 = vadd.f32 %v635, %v651
      %v668 = vadd.f32 %v636, %v652
      %v669 = vadd.f32 %v637, %v653
      %v670 = vadd.f32 %v638, %v654
      %v671 = vadd.f32 %v639, %v655
      %v672 = vadd.f32 %v640, %v656
      %v673 = vmul.f32 %v594, %v353
      %v674 = vmul.f32 %v596, %v354
      %v675 = vmul.f32 %v598, %v355
      %v676 = vmul.f32 %v600, %v356
      %v677 = vmul.f32 %v602, %v357
      %v678 = vmul.f32 %v604, %v358
      %v679 = vmul.f32 %v606, %v359
      %v680 = vmul.f32 %v608, %v360
      %v681 = vmul.f32 %v610, %v361
      %v682 = vmul.f32 %v612, %v362
      %v683 = vmul.f32 %v614, %v363
      %v684 = vmul.f32 %v616, %v364
      %v685 = vmul.f32 %v618, %v365
      %v686 = vmul.f32 %v620, %v366
      %v687 = vmul.f32 %v622, %v367
      %v688 = vmul.f32 %v624, %v368
      %v689 = vadd.f32 %v657, %v673
      %v690 = vadd.f32 %v658, %v674
      %v691 = vadd.f32 %v659, %v675
      %v692 = vadd.f32 %v660, %v676
      %v693 = vadd.f32 %v661, %v677
      %v694 = vadd.f32 %v662, %v678
      %v695 = vadd.f32 %v663, %v679
      %v696 = vadd.f32 %v664, %v680
      %v697 = vadd.f32 %v665, %v681
      %v698 = vadd.f32 %v666, %v682
      %v699 = vadd.f32 %v667, %v683
      %v700 = vadd.f32 %v668, %v684
      %v701 = vadd.f32 %v669, %v685
      %v702 = vadd.f32 %v670, %v686
      %v703 = vadd.f32 %v671, %v687
      %v704 = vadd.f32 %v672, %v688
      %705 = vst [vmem:[%s317] sm:$0xff] %v689
      %706 = vst [vmem:[%s317 + $0x8] sm:$0xff] %v690
      %707 = vst [vmem:[%s317 + $0x10] sm:$0xff] %v691
      %708 = vst [vmem:[%s317 + $0x18] sm:$0xff] %v692
      %709 = vst [vmem:[%s317 + $0x20] sm:$0xff] %v693
      %710 = vst [vmem:[%s317 + $0x28] sm:$0xff] %v694
      %711 = vst [vmem:[%s317 + $0x30] sm:$0xff] %v695
      %712 = vst [vmem:[%s317 + $0x38] sm:$0xff] %v696
      %713 = vst [vmem:[%s317 + $0x40] sm:$0xff] %v697
      %714 = vst [vmem:[%s317 + $0x48] sm:$0xff] %v698
      %715 = vst [vmem:[%s317 + $0x50] sm:$0xff] %v699
      %716 = vst [vmem:[%s317 + $0x58] sm:$0xff] %v700
      %717 = vst [vmem:[%s317 + $0x60] sm:$0xff] %v701
      %718 = vst [vmem:[%s317 + $0x68] sm:$0xff] %v702
      %719 = vst [vmem:[%s317 + $0x70] sm:$0xff] %v703
      %720 = vst [vmem:[%s317 + $0x78] sm:$0xff] %v704
      %s721 = smul.u32 16, %s21
      %p722 = scmp.lt.s32.totalorder %s20, 1
      %s723 = scalar_select %p722, %s20, 1
      %p724 = scmp.lt.s32.totalorder %s721, 15
      %s725 = scalar_select %p724, %s721, 15
      %s726 = smul.addr %s723, 16
      %s727 = sadd.s32 %s725, %s726
      %s728 = smul.addr %s727, 8
      %s729 = scalar_lea.vmem %s3, %s728
      %s730 = smul.u32 16, %s21
      %p731 = scmp.lt.s32.totalorder %s20, 1
      %s732 = scalar_select %p731, %s20, 1
      %p733 = scmp.lt.s32.totalorder %s730, 15
      %s734 = scalar_select %p733, %s730, 15
      %s735 = smul.addr %s732, 16
      %s736 = sadd.s32 %s734, %s735
      %s737 = smul.addr %s736, 8
      %s738 = scalar_lea.vmem %s4, %s737
      // Predicated region
      $region33: #{attention_forward.5} parent=31 // pred_check
        %p739 = pneg %p130
      $region34: #{attention_forward.5} parent=31 // pred_check_branch
        %741 = sbr.rel (%p739) target = $region36
      $region35: #{attention_forward.5} parent=31 // pred_region
        %s742 = smul.u32 16, %s21
      $region36: #{attention_forward.5} parent=31 // pred_fallthru
        _
      // Predicated region
      $region37: #{attention_forward.5} parent=31 // pred_check
        %p743 = pneg %p158
      $region38: #{attention_forward.5} parent=31 // pred_check_branch
        %745 = sbr.rel (%p743) target = $region40
      $region39: #{attention_forward.5} parent=31 // pred_region
        %s746 = smul.u32 16, %s21
      $region40: #{attention_forward.5} parent=31 // pred_fallthru
        _
    $region32: #{attention_forward.5} parent=5 // pred_fallthru
      _
    %p747 = scmp.le.s32.totalorder 2, %s11
    // Predicated region
    $region41: #{attention_forward.5} parent=5 // pred_check
      %p748 = pneg %p747
    $region42: #{attention_forward.5} parent=5 // pred_check_branch
      %750 = sbr.rel (%p748) target = $region44
    $region43: #{attention_forward.5} parent=5 // pred_region
      %s751 = ssub.s32 %s11, 2
      // Predicated region
      $region45: #{attention_forward.5} parent=43 // pred_check
        %p752 = pneg %p136
      $region46: #{attention_forward.5} parent=43 // pred_check_branch
        %754 = sbr.rel (%p752) target = $region48
      $region47: #{attention_forward.5} parent=43 // pred_region
        %s755 = smul.u32 16, %s23
        %p756 = scmp.lt.s32.totalorder %s22, 1
        %s757 = scalar_select %p756, %s22, 1
        %p758 = scmp.lt.s32.totalorder %s755, 15
        %s759 = scalar_select %p758, %s755, 15
        %s760 = smul.addr %s757, 16
        %s761 = sadd.s32 %s759, %s760
        %s762 = smul.addr %s761, 8
        %s763 = scalar_lea.vmem %s3, %s762
      $region48: #{attention_forward.5} parent=43 // pred_fallthru
        _
      // Predicated region
      $region49: #{attention_forward.5} parent=43 // pred_check
        %p764 = pneg %p164
      $region50: #{attention_forward.5} parent=43 // pred_check_branch
        %766 = sbr.rel (%p764) target = $region52
      $region51: #{attention_forward.5} parent=43 // pred_region
        %s767 = smul.u32 16, %s23
        %p768 = scmp.lt.s32.totalorder %s22, 1
        %s769 = scalar_select %p768, %s22, 1
        %p770 = scmp.lt.s32.totalorder %s767, 15
        %s771 = scalar_select %p770, %s767, 15
        %s772 = smul.addr %s769, 16
        %s773 = sadd.s32 %s771, %s772
        %s774 = smul.addr %s773, 8
        %s775 = scalar_lea.vmem %s4, %s774
      $region52: #{attention_forward.5} parent=43 // pred_fallthru
        _
    $region44: #{attention_forward.5} parent=5 // pred_fallthru
      _
  $region6: #{attention_forward.5} parent=0 // loop_footer
    %s15 = sadd.s32 1, %s11
  $region7: #{attention_forward.5} parent=0 // loop_footer_branch
    %10 = sbr.rel target = $region3
  $region8: #{attention_forward.5} parent=0 // loop_exit
    _

// kernel: attention_forward.7
$region0: #{attention_forward.7}
  #allocation0 [shape = 'u32[]', space=smem, size = 0x4, offset = 0x4, fixed_abs, tag = 'smem constant byte address 0x4 - core index']
  #allocation1 [shape = 'u32[72,128]{1,0:T(1,128)}', space=vmem, size = 0x9000, scoped, tag = 'internal scratch']
  #allocation2 [shape = 'f32[128,128]{1,0:T(8,128)}', space=vmem, size = 0x10000, scoped, tag = 'scratch operand']
  %s0 = inlined_call_operand.vmem [shape: f32[256,128], index: 0, kind: input, shape index: {}]
  %s1 = inlined_call_operand.vmem [shape: f32[128,128], index: 1, kind: input, shape index: {}]
  %s2 = inlined_call_operand.hbm [shape: f32[256,128], index: 2, kind: output, shape index: {}]
  %s3 = sld [smem:[#allocation0]]
  $region49: #{attention_forward.7} parent=0
    _
  %s5 = ssub.s32 1, %s3
  %s6 = scalar_select 0, %s5, %s3
  $region1: #{attention_forward.7} parent=0
    #allocation3 [shape = 'u8[131072]{0}', space=vmem, size = 0x20000, scoped, tag = 'output window, operand 0']
    #allocation4 [shape = 's32[2]{0}', space=sflag, size = 0x8, scoped, tag = 'scoped memory for attention_forward.7']
    %7 = vsyncpa [#allocation4], 0
    %s8 = scalar_lea.sflag [#allocation4], 1
    %9 = vsyncpa %s8, 0
    loop: start=0, step=1, limit=4
    $region2: #{attention_forward.7} parent=1 // loop_pre_header
      _
    $region3: #{attention_forward.7} parent=1 // loop_header
      %s11 = sphi 0, %s15
      %p12 = scmp.ge.s32.totalorder %s11, 4
      %s18 = sphi 0, %s37
      %s19 = sphi 0, %s33
      %s20 = sphi 0, %s29
      %s21 = sphi 0, %s18
      %s22 = sphi 0, %s19
      %s23 = sphi 0, %s20
      %s24 = sphi 0, %s21
      %s25 = sphi 0, %s22
      %s26 = sphi 0, %s23
      %s42 = sphi 0, %s44
      %s45 = sphi 0, %s42
      %s46 = sphi 0, %s45
      %s62 = sphi 0, %s46
      %s70 = sphi 0, %s72
      %s73 = sphi 0, %s70
      %s74 = sphi 0, %s73
      %s90 = sphi 0, %s74
      %s98 = sphi 0, %s100
      %s101 = sphi 0, %s98
      %s102 = sphi 0, %s101
      %s118 = sphi 0, %s102
    $region4: #{attention_forward.7} parent=1 // loop_header_branch
      %14 = sbr.rel (%p12) target = $region8
    $region5: #{attention_forward.7} parent=1 // loop_body
      %s16 = ssub.s32 %s11, 1
      %s17 = ssub.s32 %s11, 2
      %s27 = sadd.s32 1, %s20
      %p28 = scmp.ge.s32.totalorder %s27, 1
      %s29 = scalar_select %p28, 0, %s27
      %s30 = sadd.s32 1, %s19
      %s31 = scalar_select %p28, %s30, %s19
      %p32 = scmp.ge.s32.totalorder %s31, 1
      %s33 = scalar_select %p32, 0, %s31
      %s34 = sadd.s32 1, %s18
      %s35 = scalar_select %p32, %s34, %s18
      %p36 = scmp.ge.s32.totalorder %s35, 2
      %s37 = scalar_select %p36, 0, %s35
      %s38 = ssub.s32 %s18, %s37
      %s39 = ssub.s32 %s20, %s29
      %s40 = sor.u32 %s38, %s39
      %p41 = scmp.eq.s32.totalorder %s40, 0
      %s43 = sadd.s32 %s42, 1
      %s44 = scalar_select %p41, %s42, %s43
      %p47 = pneg %p41
      %p48 = scmp.eq.s32.totalorder %s11, 1
      %p49 = por %p47, %p48
      %p50 = scmp.ne.s32.totalorder %s42, %s45
      %p51 = scmp.eq.s32.totalorder %s11, 0
      %p52 = por %p50, %p51
      %p53 = scmp.ne.s32.totalorder %s42, %s45
      %p54 = scmp.eq.s32.totalorder %s16, 1
      %p55 = por %p53, %p54
      %p56 = scmp.ne.s32.totalorder %s45, %s46
      %p57 = scmp.eq.s32.totalorder %s16, 0
      %p58 = por %p56, %p57
      %p59 = scmp.ne.s32.totalorder %s45, %s46
      %p60 = scmp.eq.s32.totalorder %s17, 1
      %p61 = por %p59, %p60
      %p63 = scmp.ne.s32.totalorder %s46, %s62
      %p64 = scmp.eq.s32.totalorder %s17, 0
      %p65 = por %p63, %p64
      %s66 = ssub.s32 %s20, %s29
      %s67 = ssub.s32 %s19, %s33
      %s68 = sor.u32 %s66, %s67
      %p69 = scmp.eq.s32.totalorder %s68, 0
      %s71 = sadd.s32 %s70, 1
      %s72 = scalar_select %p69, %s70, %s71
      %p75 = pneg %p69
      %p76 = scmp.eq.s32.totalorder %s11, 1
      %p77 = por %p75, %p76
      %p78 = scmp.ne.s32.totalorder %s70, %s73
      %p79 = scmp.eq.s32.totalorder %s11, 0
      %p80 = por %p78, %p79
      %p81 = scmp.ne.s32.totalorder %s70, %s73
      %p82 = scmp.eq.s32.totalorder %s16, 1
      %p83 = por %p81, %p82
      %p84 = scmp.ne.s32.totalorder %s73, %s74
      %p85 = scmp.eq.s32.totalorder %s16, 0
      %p86 = por %p84, %p85
      %p87 = scmp.ne.s32.totalorder %s73, %s74
      %p88 = scmp.eq.s32.totalorder %s17, 1
      %p89 = por %p87, %p88
      %p91 = scmp.ne.s32.totalorder %s74, %s90
      %p92 = scmp.eq.s32.totalorder %s17, 0
      %p93 = por %p91, %p92
      %s94 = ssub.s32 %s18, %s37
      %s95 = ssub.s32 %s19, %s33
      %s96 = sor.u32 %s94, %s95
      %p97 = scmp.eq.s32.totalorder %s96, 0
      %s99 = sadd.s32 %s98, 1
      %s100 = scalar_select %p97, %s98, %s99
      %p103 = pneg %p97
      %p104 = scmp.eq.s32.totalorder %s11, 1
      %p105 = por %p103, %p104
      %p106 = scmp.ne.s32.totalorder %s98, %s101
      %p107 = scmp.eq.s32.totalorder %s11, 0
      %p108 = por %p106, %p107
      %p109 = scmp.ne.s32.totalorder %s98, %s101
      %p110 = scmp.eq.s32.totalorder %s16, 1
      %p111 = por %p109, %p110
      %p112 = scmp.ne.s32.totalorder %s101, %s102
      %p113 = scmp.eq.s32.totalorder %s16, 0
      %p114 = por %p112, %p113
      %p115 = scmp.ne.s32.totalorder %s101, %s102
      %p116 = scmp.eq.s32.totalorder %s17, 1
      %p117 = por %p115, %p116
      %p119 = scmp.ne.s32.totalorder %s102, %s118
      %p120 = scmp.eq.s32.totalorder %s17, 0
      %p121 = por %p119, %p120
      %p122 = scmp.le.s32.totalorder 1, %s11
      %p123 = scmp.lt.s32.totalorder %s11, 3
      %p124 = pnand %p122, %p123
      %p125 = pneg %p124
      // Predicated region
      $region9: #{attention_forward.7} parent=5 // pred_check
        _
      $region10: #{attention_forward.7} parent=5 // pred_check_branch
        %127 = sbr.rel (%p124) target = $region12
      $region11: #{attention_forward.7} parent=5 // pred_region
        %s128 = ssub.s32 %s11, 1
        // Predicated region
        $region13: #{attention_forward.7} parent=11 // pred_check
          %p129 = pneg %p86
        $region14: #{attention_forward.7} parent=11 // pred_check_branch
          %131 = sbr.rel (%p129) target = $region16
        $region15: #{attention_forward.7} parent=11 // pred_region
          %s132 = smul.u32 16, %s23
          %p133 = scmp.lt.s32.totalorder %s132, 15
          %s134 = scalar_select %p133, %s132, 15
          %p135 = scmp.lt.s32.totalorder %s22, 0
          %s136 = scalar_select %p135, %s22, 0
          %s137 = sadd.s32 %s136, %s134
          %s138 = smul.addr %s137, 8
          %s139 = scalar_lea.vmem %s1, %s138
          %s140 = smul.u32 16, %s23
        $region16: #{attention_forward.7} parent=11 // pred_fallthru
          _
      $region12: #{attention_forward.7} parent=5 // pred_fallthru
        _
      %p141 = scmp.lt.s32.totalorder %s11, 2
      // Predicated region
      $region17: #{attention_forward.7} parent=5 // pred_check
        %p142 = pneg %p141
      $region18: #{attention_forward.7} parent=5 // pred_check_branch
        %144 = sbr.rel (%p142) target = $region20
      $region19: #{attention_forward.7} parent=5 // pred_region
        // Predicated region
        $region21: #{attention_forward.7} parent=19 // pred_check
          %p145 = pneg %p52
        $region22: #{attention_forward.7} parent=19 // pred_check_branch
          %147 = sbr.rel (%p145) target = $region24
        $region23: #{attention_forward.7} parent=19 // pred_region
          %s148 = smul.u32 16, %s18
          %p149 = scmp.lt.s32.totalorder %s148, 31
          %s150 = scalar_select %p149, %s148, 31
          %p151 = scmp.lt.s32.totalorder %s20, 0
          %s152 = scalar_select %p151, %s20, 0
          %s153 = sadd.s32 %s152, %s150
          %s154 = smul.addr %s153, 8
          %s155 = scalar_lea.vmem %s0, %s154
          %s156 = smul.u32 16, %s18
        $region24: #{attention_forward.7} parent=19 // pred_fallthru
          _
      $region20: #{attention_forward.7} parent=5 // pred_fallthru
        _
      %p157 = scmp.le.s32.totalorder 1, %s11
      %p158 = scmp.lt.s32.totalorder %s11, 3
      %p159 = pnand %p157, %p158
      %p160 = pneg %p159
      // Predicated region
      $region25: #{attention_forward.7} parent=5 // pred_check
        _
      $region26: #{attention_forward.7} parent=5 // pred_check_branch
        %162 = sbr.rel (%p159) target = $region28
      $region27: #{attention_forward.7} parent=5 // pred_region
        %s163 = ssub.s32 %s11, 1
        %s164 = smul.u32 16, %s21
        %p165 = scmp.lt.s32.totalorder %s164, 31
        %s166 = scalar_select %p165, %s164, 31
        %p167 = scmp.lt.s32.totalorder %s23, 0
        %s168 = scalar_select %p167, %s23, 0
        %s169 = sadd.s32 %s168, %s166
        %s170 = smul.addr %s169, 8
        %s171 = scalar_lea.vmem %s0, %s170
        %p172 = pneg %p58
        %p173 = pneg %p55
        %s174 = smul.u32 16, %s23
        %p175 = scmp.lt.s32.totalorder %s174, 15
        %s176 = scalar_select %p175, %s174, 15
        %p177 = scmp.lt.s32.totalorder %s22, 0
        %s178 = scalar_select %p177, %s22, 0
        %s179 = sadd.s32 %s178, %s176
        %s180 = smul.addr %s179, 8
        %s181 = scalar_lea.vmem %s1, %s180
        %p182 = pneg %p86
        %p183 = pneg %p83
        %p184 = pneg %p114
        %p185 = pneg %p111
        %s186 = sand.u32 %s101, 1
        %s187 = scalar_lea.sflag [#allocation4], %s186
        %s188 = sand.u32 %s101, 1
        %s189 = smul.addr %s188, 128
        %s190 = scalar_lea.vmem [#allocation3], %s189
        %s191 = smul.u32 16, %s21
        %p192 = scmp.lt.s32.totalorder %s191, 31
        %s193 = scalar_select %p192, %s191, 31
        %p194 = scmp.lt.s32.totalorder %s23, 0
        %s195 = scalar_select %p194, %s23, 0
        %s196 = sadd.s32 %s195, %s193
        %s197 = smul.addr %s196, 8
        %s198 = scalar_lea.vmem %s0, %s197
        %s199 = smul.u32 16, %s21
        %s200 = smul.u32 16, %s23
        %p201 = scmp.lt.s32.totalorder %s200, 15
        %s202 = scalar_select %p201, %s200, 15
        %p203 = scmp.lt.s32.totalorder %s22, 0
        %s204 = scalar_select %p203, %s22, 0
        %s205 = sadd.s32 %s204, %s202
        %s206 = smul.addr %s205, 8
        %s207 = scalar_lea.vmem %s1, %s206
        %s208 = smul.u32 16, %s23
        %s209 = smul.u32 16, %s21
        %p210 = scmp.eq.s32.totalorder %s23, 0
        // Predicated region
        $region29: #{attention_forward.7} parent=27 // pred_check
          %p211 = pneg %p210
        $region30: #{attention_forward.7} parent=27 // pred_check_branch
          %213 = sbr.rel (%p211) target = $region32
        $region31: #{attention_forward.7} parent=27 // pred_region
          %214 = vst [vmem:[#allocation2] sm:$0xff] 0.0
          %215 = vst [vmem:[#allocation2 + $0x8] sm:$0xff] 0.0
          %216 = vst [vmem:[#allocation2 + $0x10] sm:$0xff] 0.0
          %217 = vst [vmem:[#allocation2 + $0x18] sm:$0xff] 0.0
          %218 = vst [vmem:[#allocation2 + $0x20] sm:$0xff] 0.0
          %219 = vst [vmem:[#allocation2 + $0x28] sm:$0xff] 0.0
          %220 = vst [vmem:[#allocation2 + $0x30] sm:$0xff] 0.0
          %221 = vst [vmem:[#allocation2 + $0x38] sm:$0xff] 0.0
          %222 = vst [vmem:[#allocation2 + $0x40] sm:$0xff] 0.0
          %223 = vst [vmem:[#allocation2 + $0x48] sm:$0xff] 0.0
          %224 = vst [vmem:[#allocation2 + $0x50] sm:$0xff] 0.0
          %225 = vst [vmem:[#allocation2 + $0x58] sm:$0xff] 0.0
          %226 = vst [vmem:[#allocation2 + $0x60] sm:$0xff] 0.0
          %227 = vst [vmem:[#allocation2 + $0x68] sm:$0xff] 0.0
          %228 = vst [vmem:[#allocation2 + $0x70] sm:$0xff] 0.0
          %229 = vst [vmem:[#allocation2 + $0x78] sm:$0xff] 0.0
        $region32: #{attention_forward.7} parent=27 // pred_fallthru
          _
        %v230 = vld [vmem:[#allocation2] sm:$0xff]
        %v231 = vld [vmem:[#allocation2 + $0x8] sm:$0xff]
        %v232 = vld [vmem:[#allocation2 + $0x10] sm:$0xff]
        %v233 = vld [vmem:[#allocation2 + $0x18] sm:$0xff]
        %v234 = vld [vmem:[#allocation2 + $0x20] sm:$0xff]
        %v235 = vld [vmem:[#allocation2 + $0x28] sm:$0xff]
        %v236 = vld [vmem:[#allocation2 + $0x30] sm:$0xff]
        %v237 = vld [vmem:[#allocation2 + $0x38] sm:$0xff]
        %v238 = vld [vmem:[#allocation2 + $0x40] sm:$0xff]
        %v239 = vld [vmem:[#allocation2 + $0x48] sm:$0xff]
        %v240 = vld [vmem:[#allocation2 + $0x50] sm:$0xff]
        %v241 = vld [vmem:[#allocation2 + $0x58] sm:$0xff]
        %v242 = vld [vmem:[#allocation2 + $0x60] sm:$0xff]
        %v243 = vld [vmem:[#allocation2 + $0x68] sm:$0xff]
        %v244 = vld [vmem:[#allocation2 + $0x70] sm:$0xff]
        %v245 = vld [vmem:[#allocation2 + $0x78] sm:$0xff]
        %v246 = vld [vmem:[%s198] sm:$0xff]
        %v247 = vld [vmem:[%s198 + $0x8] sm:$0xff]
        %v248 = vld [vmem:[%s198 + $0x10] sm:$0xff]
        %v249 = vld [vmem:[%s198 + $0x18] sm:$0xff]
        %v250 = vld [vmem:[%s198 + $0x20] sm:$0xff]
        %v251 = vld [vmem:[%s198 + $0x28] sm:$0xff]
        %v252 = vld [vmem:[%s198 + $0x30] sm:$0xff]
        %v253 = vld [vmem:[%s198 + $0x38] sm:$0xff]
        %v254 = vld [vmem:[%s198 + $0x40] sm:$0xff]
        %v255 = vld [vmem:[%s198 + $0x48] sm:$0xff]
        %v256 = vld [vmem:[%s198 + $0x50] sm:$0xff]
        %v257 = vld [vmem:[%s198 + $0x58] sm:$0xff]
        %v258 = vld [vmem:[%s198 + $0x60] sm:$0xff]
        %v259 = vld [vmem:[%s198 + $0x68] sm:$0xff]
        %v260 = vld [vmem:[%s198 + $0x70] sm:$0xff]
        %v261 = vld [vmem:[%s198 + $0x78] sm:$0xff]
        %v262 = vld [vmem:[%s207] sm:$0xff]
        %v263 = vld [vmem:[%s207 + $0x8] sm:$0xff]
        %v264 = vld [vmem:[%s207 + $0x10] sm:$0xff]
        %v265 = vld [vmem:[%s207 + $0x18] sm:$0xff]
        %v266 = vld [vmem:[%s207 + $0x20] sm:$0xff]
        %v267 = vld [vmem:[%s207 + $0x28] sm:$0xff]
        %v268 = vld [vmem:[%s207 + $0x30] sm:$0xff]
        %v269 = vld [vmem:[%s207 + $0x38] sm:$0xff]
        %v270 = vld [vmem:[%s207 + $0x40] sm:$0xff]
        %v271 = vld [vmem:[%s207 + $0x48] sm:$0xff]
        %v272 = vld [vmem:[%s207 + $0x50] sm:$0xff]
        %v273 = vld [vmem:[%s207 + $0x58] sm:$0xff]
        %v274 = vld [vmem:[%s207 + $0x60] sm:$0xff]
        %v275 = vld [vmem:[%s207 + $0x68] sm:$0xff]
        %v276 = vld [vmem:[%s207 + $0x70] sm:$0xff]
        %v277 = vld [vmem:[%s207 + $0x78] sm:$0xff]
        %v278 = vand.u32 %v277, 4294901760
        %279 = vmatpush.msra.mxu0 %v278
        %v280 = vand.u32 %v276, 4294901760
        %281 = vmatpush.msra.mxu0 %v280
        %v282 = vand.u32 %v275, 4294901760
        %283 = vmatpush.msra.mxu0 %v282
        %v284 = vand.u32 %v274, 4294901760
        %285 = vmatpush.msra.mxu0 %v284
        %v286 = vand.u32 %v273, 4294901760
        %287 = vmatpush.msra.mxu0 %v286
        %v288 = vand.u32 %v272, 4294901760
        %289 = vmatpush.msra.mxu0 %v288
        %v290 = vand.u32 %v271, 4294901760
        %291 = vmatpush.msra.mxu0 %v290
        %v292 = vand.u32 %v270, 4294901760
        %293 = vmatpush.msra.mxu0 %v292
        %v294 = vand.u32 %v269, 4294901760
        %295 = vmatpush.msra.mxu0 %v294
        %v296 = vand.u32 %v268, 4294901760
        %297 = vmatpush.msra.mxu0 %v296
        %v298 = vand.u32 %v267, 4294901760
        %299 = vmatpush.msra.mxu0 %v298
        %v300 = vand.u32 %v266, 4294901760
        %301 = vmatpush.msra.mxu0 %v300
        %v302 = vand.u32 %v265, 4294901760
        %303 = vmatpush.msra.mxu0 %v302
        %v304 = vand.u32 %v264, 4294901760
        %305 = vmatpush.msra.mxu0 %v304
        %v306 = vand.u32 %v263, 4294901760
        %307 = vmatpush.msra.mxu0 %v306
        %v308 = vand.u32 %v262, 4294901760
        %309 = vmatpush.msra.mxu0 %v308
        %v310 = vand.u32 %v246, 4294901760
        %v311 = vsub.f32 %v246, %v310
        %v312 = vand.u32 %v311, 4294901760
        %v313 = vsub.f32 %v311, %v312
        %v314 = vand.u32 %v313, 4294901760
        %315 = vmatmul.f32.gmra.mxu0 %v314
        %v316 = vpop.f32.mrf.mxu0
        %v317 = vadd.f32 0.0, %v316
        %v318 = vand.u32 %v247, 4294901760
        %v319 = vsub.f32 %v247, %v318
        %v320 = vand.u32 %v319, 4294901760
        %v321 = vsub.f32 %v319, %v320
        %v322 = vand.u32 %v321, 4294901760
        %323 = vmatmul.f32.gmra.mxu0 %v322
        %v324 = vpop.f32.mrf.mxu0
        %v325 = vadd.f32 0.0, %v324
        %v326 = vand.u32 %v248, 4294901760
        %v327 = vsub.f32 %v248, %v326
        %v328 = vand.u32 %v327, 4294901760
        %v329 = vsub.f32 %v327, %v328
        %v330 = vand.u32 %v329, 4294901760
        %331 = vmatmul.f32.gmra.mxu0 %v330
        %v332 = vpop.f32.mrf.mxu0
        %v333 = vadd.f32 0.0, %v332
        %v334 = vand.u32 %v249, 4294901760
        %v335 = vsub.f32 %v249, %v334
        %v336 = vand.u32 %v335, 4294901760
        %v337 = vsub.f32 %v335, %v336
        %v338 = vand.u32 %v337, 4294901760
        %339 = vmatmul.f32.gmra.mxu0 %v338
        %v340 = vpop.f32.mrf.mxu0
        %v341 = vadd.f32 0.0, %v340
        %v342 = vand.u32 %v250, 4294901760
        %v343 = vsub.f32 %v250, %v342
        %v344 = vand.u32 %v343, 4294901760
        %v345 = vsub.f32 %v343, %v344
        %v346 = vand.u32 %v345, 4294901760
        %347 = vmatmul.f32.gmra.mxu0 %v346
        %v348 = vpop.f32.mrf.mxu0
        %v349 = vadd.f32 0.0, %v348
        %v350 = vand.u32 %v251, 4294901760
        %v351 = vsub.f32 %v251, %v350
        %v352 = vand.u32 %v351, 4294901760
        %v353 = vsub.f32 %v351, %v352
        %v354 = vand.u32 %v353, 4294901760
        %355 = vmatmul.f32.gmra.mxu0 %v354
        %v356 = vpop.f32.mrf.mxu0
        %v357 = vadd.f32 0.0, %v356
        %v358 = vand.u32 %v252, 4294901760
        %v359 = vsub.f32 %v252, %v358
        %v360 = vand.u32 %v359, 4294901760
        %v361 = vsub.f32 %v359, %v360
        %v362 = vand.u32 %v361, 4294901760
        %363 = vmatmul.f32.gmra.mxu0 %v362
        %v364 = vpop.f32.mrf.mxu0
        %v365 = vadd.f32 0.0, %v364
        %v366 = vand.u32 %v253, 4294901760
        %v367 = vsub.f32 %v253, %v366
        %v368 = vand.u32 %v367, 4294901760
        %v369 = vsub.f32 %v367, %v368
        %v370 = vand.u32 %v369, 4294901760
        %371 = vmatmul.f32.gmra.mxu0 %v370
        %v372 = vpop.f32.mrf.mxu0
        %v373 = vadd.f32 0.0, %v372
        %v374 = vand.u32 %v254, 4294901760
        %v375 = vsub.f32 %v254, %v374
        %v376 = vand.u32 %v375, 4294901760
        %v377 = vsub.f32 %v375, %v376
        %v378 = vand.u32 %v377, 4294901760
        %379 = vmatmul.f32.gmra.mxu0 %v378
        %v380 = vpop.f32.mrf.mxu0
        %v381 = vadd.f32 0.0, %v380
        %v382 = vand.u32 %v255, 4294901760
        %v383 = vsub.f32 %v255, %v382
        %v384 = vand.u32 %v383, 4294901760
        %v385 = vsub.f32 %v383, %v384
        %v386 = vand.u32 %v385, 4294901760
        %387 = vmatmul.f32.gmra.mxu0 %v386
        %v388 = vpop.f32.mrf.mxu0
        %v389 = vadd.f32 0.0, %v388
        %v390 = vand.u32 %v256, 4294901760
        %v391 = vsub.f32 %v256, %v390
        %v392 = vand.u32 %v391, 4294901760
        %v393 = vsub.f32 %v391, %v392
        %v394 = vand.u32 %v393, 4294901760
        %395 = vmatmul.f32.gmra.mxu0 %v394
        %v396 = vpop.f32.mrf.mxu0
        %v397 = vadd.f32 0.0, %v396
        %v398 = vand.u32 %v257, 4294901760
        %v399 = vsub.f32 %v257, %v398
        %v400 = vand.u32 %v399, 4294901760
        %v401 = vsub.f32 %v399, %v400
        %v402 = vand.u32 %v401, 4294901760
        %403 = vmatmul.f32.gmra.mxu0 %v402
        %v404 = vpop.f32.mrf.mxu0
        %v405 = vadd.f32 0.0, %v404
        %v406 = vand.u32 %v258, 4294901760
        %v407 = vsub.f32 %v258, %v406
        %v408 = vand.u32 %v407, 4294901760
        %v409 = vsub.f32 %v407, %v408
        %v410 = vand.u32 %v409, 4294901760
        %411 = vmatmul.f32.gmra.mxu0 %v410
        %v412 = vpop.f32.mrf.mxu0
        %v413 = vadd.f32 0.0, %v412
        %v414 = vand.u32 %v259, 4294901760
        %v415 = vsub.f32 %v259, %v414
        %v416 = vand.u32 %v415, 4294901760
        %v417 = vsub.f32 %v415, %v416
        %v418 = vand.u32 %v417, 4294901760
        %419 = vmatmul.f32.gmra.mxu0 %v418
        %v420 = vpop.f32.mrf.mxu0
        %v421 = vadd.f32 0.0, %v420
        %v422 = vand.u32 %v260, 4294901760
        %v423 = vsub.f32 %v260, %v422
        %v424 = vand.u32 %v423, 4294901760
        %v425 = vsub.f32 %v423, %v424
        %v426 = vand.u32 %v425, 4294901760
        %427 = vmatmul.f32.gmra.mxu0 %v426
        %v428 = vpop.f32.mrf.mxu0
        %v429 = vadd.f32 0.0, %v428
        %v430 = vand.u32 %v261, 4294901760
        %v431 = vsub.f32 %v261, %v430
        %v432 = vand.u32 %v431, 4294901760
        %v433 = vsub.f32 %v431, %v432
        %v434 = vand.u32 %v433, 4294901760
        %435 = vmatmul.f32.gmra.mxu0 %v434
        %v436 = vpop.f32.mrf.mxu0
        %v437 = vadd.f32 0.0, %v436
        %438 = vdwg.mxu0
        %v439 = vand.u32 %v277, 4294901760
        %v440 = vsub.f32 %v277, %v439
        %v441 = vand.u32 %v440, 4294901760
        %v442 = vsub.f32 %v440, %v441
        %v443 = vand.u32 %v442, 4294901760
        %444 = vmatpush.msra.mxu0 %v443
        %v445 = vand.u32 %v276, 4294901760
        %v446 = vsub.f32 %v276, %v445
        %v447 = vand.u32 %v446, 4294901760
        %v448 = vsub.f32 %v446, %v447
        %v449 = vand.u32 %v448, 4294901760
        %450 = vmatpush.msra.mxu0 %v449
        %v451 = vand.u32 %v275, 4294901760
        %v452 = vsub.f32 %v275, %v451
        %v453 = vand.u32 %v452, 4294901760
        %v454 = vsub.f32 %v452, %v453
        %v455 = vand.u32 %v454, 4294901760
        %456 = vmatpush.msra.mxu0 %v455
        %v457 = vand.u32 %v274, 4294901760
        %v458 = vsub.f32 %v274, %v457
        %v459 = vand.u32 %v458, 4294901760
        %v460 = vsub.f32 %v458, %v459
        %v461 = vand.u32 %v460, 4294901760
        %462 = vmatpush.msra.mxu0 %v461
        %v463 = vand.u32 %v273, 4294901760
        %v464 = vsub.f32 %v273, %v463
        %v465 = vand.u32 %v464, 4294901760
        %v466 = vsub.f32 %v464, %v465
        %v467 = vand.u32 %v466, 4294901760
        %468 = vmatpush.msra.mxu0 %v467
        %v469 = vand.u32 %v272, 4294901760
        %v470 = vsub.f32 %v272, %v469
        %v471 = vand.u32 %v470, 4294901760
        %v472 = vsub.f32 %v470, %v471
        %v473 = vand.u32 %v472, 4294901760
        %474 = vmatpush.msra.mxu0 %v473
        %v475 = vand.u32 %v271, 4294901760
        %v476 = vsub.f32 %v271, %v475
        %v477 = vand.u32 %v476, 4294901760
        %v478 = vsub.f32 %v476, %v477
        %v479 = vand.u32 %v478, 4294901760
        %480 = vmatpush.msra.mxu0 %v479
        %v481 = vand.u32 %v270, 4294901760
        %v482 = vsub.f32 %v270, %v481
        %v483 = vand.u32 %v482, 4294901760
        %v484 = vsub.f32 %v482, %v483
        %v485 = vand.u32 %v484, 4294901760
        %486 = vmatpush.msra.mxu0 %v485
        %v487 = vand.u32 %v269, 4294901760
        %v488 = vsub.f32 %v269, %v487
        %v489 = vand.u32 %v488, 4294901760
        %v490 = vsub.f32 %v488, %v489
        %v491 = vand.u32 %v490, 4294901760
        %492 = vmatpush.msra.mxu0 %v491
        %v493 = vand.u32 %v268, 4294901760
        %v494 = vsub.f32 %v268, %v493
        %v495 = vand.u32 %v494, 4294901760
        %v496 = vsub.f32 %v494, %v495
        %v497 = vand.u32 %v496, 4294901760
        %498 = vmatpush.msra.mxu0 %v497
        %v499 = vand.u32 %v267, 4294901760
        %v500 = vsub.f32 %v267, %v499
        %v501 = vand.u32 %v500, 4294901760
        %v502 = vsub.f32 %v500, %v501
        %v503 = vand.u32 %v502, 4294901760
        %504 = vmatpush.msra.mxu0 %v503
        %v505 = vand.u32 %v266, 4294901760
        %v506 = vsub.f32 %v266, %v505
        %v507 = vand.u32 %v506, 4294901760
        %v508 = vsub.f32 %v506, %v507
        %v509 = vand.u32 %v508, 4294901760
        %510 = vmatpush.msra.mxu0 %v509
        %v511 = vand.u32 %v265, 4294901760
        %v512 = vsub.f32 %v265, %v511
        %v513 = vand.u32 %v512, 4294901760
        %v514 = vsub.f32 %v512, %v513
        %v515 = vand.u32 %v514, 4294901760
        %516 = vmatpush.msra.mxu0 %v515
        %v517 = vand.u32 %v264, 4294901760
        %v518 = vsub.f32 %v264, %v517
        %v519 = vand.u32 %v518, 4294901760
        %v520 = vsub.f32 %v518, %v519
        %v521 = vand.u32 %v520, 4294901760
        %522 = vmatpush.msra.mxu0 %v521
        %v523 = vand.u32 %v263, 4294901760
        %v524 = vsub.f32 %v263, %v523
        %v525 = vand.u32 %v524, 4294901760
        %v526 = vsub.f32 %v524, %v525
        %v527 = vand.u32 %v526, 4294901760
        %528 = vmatpush.msra.mxu0 %v527
        %v529 = vand.u32 %v262, 4294901760
        %v530 = vsub.f32 %v262, %v529
        %v531 = vand.u32 %v530, 4294901760
        %v532 = vsub.f32 %v530, %v531
        %v533 = vand.u32 %v532, 4294901760
        %534 = vmatpush.msra.mxu0 %v533
        %v535 = vand.u32 %v246, 4294901760
        %536 = vmatmul.f32.gmra.mxu0 %v535
        %v537 = vpop.f32.mrf.mxu0
        %v538 = vadd.f32 %v317, %v537
        %v539 = vand.u32 %v247, 4294901760
        %540 = vmatmul.f32.gmra.mxu0 %v539
        %v541 = vpop.f32.mrf.mxu0
        %v542 = vadd.f32 %v325, %v541
        %v543 = vand.u32 %v248, 4294901760
        %544 = vmatmul.f32.gmra.mxu0 %v543
        %v545 = vpop.f32.mrf.mxu0
        %v546 = vadd.f32 %v333, %v545
        %v547 = vand.u32 %v249, 4294901760
        %548 = vmatmul.f32.gmra.mxu0 %v547
        %v549 = vpop.f32.mrf.mxu0
        %v550 = vadd.f32 %v341, %v549
        %v551 = vand.u32 %v250, 4294901760
        %552 = vmatmul.f32.gmra.mxu0 %v551
        %v553 = vpop.f32.mrf.mxu0
        %v554 = vadd.f32 %v349, %v553
        %v555 = vand.u32 %v251, 4294901760
        %556 = vmatmul.f32.gmra.mxu0 %v555
        %v557 = vpop.f32.mrf.mxu0
        %v558 = vadd.f32 %v357, %v557
        %v559 = vand.u32 %v252, 4294901760
        %560 = vmatmul.f32.gmra.mxu0 %v559
        %v561 = vpop.f32.mrf.mxu0
        %v562 = vadd.f32 %v365, %v561
        %v563 = vand.u32 %v253, 4294901760
        %564 = vmatmul.f32.gmra.mxu0 %v563
        %v565 = vpop.f32.mrf.mxu0
        %v566 = vadd.f32 %v373, %v565
        %v567 = vand.u32 %v254, 4294901760
        %568 = vmatmul.f32.gmra.mxu0 %v567
        %v569 = vpop.f32.mrf.mxu0
        %v570 = vadd.f32 %v381, %v569
        %v571 = vand.u32 %v255, 4294901760
        %572 = vmatmul.f32.gmra.mxu0 %v571
        %v573 = vpop.f32.mrf.mxu0
        %v574 = vadd.f32 %v389, %v573
        %v575 = vand.u32 %v256, 4294901760
        %576 = vmatmul.f32.gmra.mxu0 %v575
        %v577 = vpop.f32.mrf.mxu0
        %v578 = vadd.f32 %v397, %v577
        %v579 = vand.u32 %v257, 4294901760
        %580 = vmatmul.f32.gmra.mxu0 %v579
        %v581 = vpop.f32.mrf.mxu0
        %v582 = vadd.f32 %v405, %v581
        %v583 = vand.u32 %v258, 4294901760
        %584 = vmatmul.f32.gmra.mxu0 %v583
        %v585 = vpop.f32.mrf.mxu0
        %v586 = vadd.f32 %v413, %v585
        %v587 = vand.u32 %v259, 4294901760
        %588 = vmatmul.f32.gmra.mxu0 %v587
        %v589 = vpop.f32.mrf.mxu0
        %v590 = vadd.f32 %v421, %v589
        %v591 = vand.u32 %v260, 4294901760
        %592 = vmatmul.f32.gmra.mxu0 %v591
        %v593 = vpop.f32.mrf.mxu0
        %v594 = vadd.f32 %v429, %v593
        %v595 = vand.u32 %v261, 4294901760
        %596 = vmatmul.f32.gmra.mxu0 %v595
        %v597 = vpop.f32.mrf.mxu0
        %v598 = vadd.f32 %v437, %v597
        %599 = vdwg.mxu0
        %v600 = vand.u32 %v277, 4294901760
        %v601 = vsub.f32 %v277, %v600
        %602 = vmatpush.msra.mxu0 %v601
        %v603 = vand.u32 %v276, 4294901760
        %v604 = vsub.f32 %v276, %v603
        %605 = vmatpush.msra.mxu0 %v604
        %v606 = vand.u32 %v275, 4294901760
        %v607 = vsub.f32 %v275, %v606
        %608 = vmatpush.msra.mxu0 %v607
        %v609 = vand.u32 %v274, 4294901760
        %v610 = vsub.f32 %v274, %v609
        %611 = vmatpush.msra.mxu0 %v610
        %v612 = vand.u32 %v273, 4294901760
        %v613 = vsub.f32 %v273, %v612
        %614 = vmatpush.msra.mxu0 %v613
        %v615 = vand.u32 %v272, 4294901760
        %v616 = vsub.f32 %v272, %v615
        %617 = vmatpush.msra.mxu0 %v616
        %v618 = vand.u32 %v271, 4294901760
        %v619 = vsub.f32 %v271, %v618
        %620 = vmatpush.msra.mxu0 %v619
        %v621 = vand.u32 %v270, 4294901760
        %v622 = vsub.f32 %v270, %v621
        %623 = vmatpush.msra.mxu0 %v622
        %v624 = vand.u32 %v269, 4294901760
        %v625 = vsub.f32 %v269, %v624
        %626 = vmatpush.msra.mxu0 %v625
        %v627 = vand.u32 %v268, 4294901760
        %v628 = vsub.f32 %v268, %v627
        %629 = vmatpush.msra.mxu0 %v628
        %v630 = vand.u32 %v267, 4294901760
        %v631 = vsub.f32 %v267, %v630
        %632 = vmatpush.msra.mxu0 %v631
        %v633 = vand.u32 %v266, 4294901760
        %v634 = vsub.f32 %v266, %v633
        %635 = vmatpush.msra.mxu0 %v634
        %v636 = vand.u32 %v265, 4294901760
        %v637 = vsub.f32 %v265, %v636
        %638 = vmatpush.msra.mxu0 %v637
        %v639 = vand.u32 %v264, 4294901760
        %v640 = vsub.f32 %v264, %v639
        %641 = vmatpush.msra.mxu0 %v640
        %v642 = vand.u32 %v263, 4294901760
        %v643 = vsub.f32 %v263, %v642
        %644 = vmatpush.msra.mxu0 %v643
        %v645 = vand.u32 %v262, 4294901760
        %v646 = vsub.f32 %v262, %v645
        %647 = vmatpush.msra.mxu0 %v646
        %v648 = vand.u32 %v246, 4294901760
        %v649 = vsub.f32 %v246, %v648
        %650 = vmatmul.f32.gmra.mxu0 %v649
        %v651 = vpop.f32.mrf.mxu0
        %v652 = vadd.f32 %v538, %v651
        %v653 = vand.u32 %v247, 4294901760
        %v654 = vsub.f32 %v247, %v653
        %655 = vmatmul.f32.gmra.mxu0 %v654
        %v656 = vpop.f32.mrf.mxu0
        %v657 = vadd.f32 %v542, %v656
        %v658 = vand.u32 %v248, 4294901760
        %v659 = vsub.f32 %v248, %v658
        %660 = vmatmul.f32.gmra.mxu0 %v659
        %v661 = vpop.f32.mrf.mxu0
        %v662 = vadd.f32 %v546, %v661
        %v663 = vand.u32 %v249, 4294901760
        %v664 = vsub.f32 %v249, %v663
        %665 = vmatmul.f32.gmra.mxu0 %v664
        %v666 = vpop.f32.mrf.mxu0
        %v667 = vadd.f32 %v550, %v666
        %v668 = vand.u32 %v250, 4294901760
        %v669 = vsub.f32 %v250, %v668
        %670 = vmatmul.f32.gmra.mxu0 %v669
        %v671 = vpop.f32.mrf.mxu0
        %v672 = vadd.f32 %v554, %v671
        %v673 = vand.u32 %v251, 4294901760
        %v674 = vsub.f32 %v251, %v673
        %675 = vmatmul.f32.gmra.mxu0 %v674
        %v676 = vpop.f32.mrf.mxu0
        %v677 = vadd.f32 %v558, %v676
        %v678 = vand.u32 %v252, 4294901760
        %v679 = vsub.f32 %v252, %v678
        %680 = vmatmul.f32.gmra.mxu0 %v679
        %v681 = vpop.f32.mrf.mxu0
        %v682 = vadd.f32 %v562, %v681
        %v683 = vand.u32 %v253, 4294901760
        %v684 = vsub.f32 %v253, %v683
        %685 = vmatmul.f32.gmra.mxu0 %v684
        %v686 = vpop.f32.mrf.mxu0
        %v687 = vadd.f32 %v566, %v686
        %v688 = vand.u32 %v254, 4294901760
        %v689 = vsub.f32 %v254, %v688
        %690 = vmatmul.f32.gmra.mxu0 %v689
        %v691 = vpop.f32.mrf.mxu0
        %v692 = vadd.f32 %v570, %v691
        %v693 = vand.u32 %v255, 4294901760
        %v694 = vsub.f32 %v255, %v693
        %695 = vmatmul.f32.gmra.mxu0 %v694
        %v696 = vpop.f32.mrf.mxu0
        %v697 = vadd.f32 %v574, %v696
        %v698 = vand.u32 %v256, 4294901760
        %v699 = vsub.f32 %v256, %v698
        %700 = vmatmul.f32.gmra.mxu0 %v699
        %v701 = vpop.f32.mrf.mxu0
        %v702 = vadd.f32 %v578, %v701
        %v703 = vand.u32 %v257, 4294901760
        %v704 = vsub.f32 %v257, %v703
        %705 = vmatmul.f32.gmra.mxu0 %v704
        %v706 = vpop.f32.mrf.mxu0
        %v707 = vadd.f32 %v582, %v706
        %v708 = vand.u32 %v258, 4294901760
        %v709 = vsub.f32 %v258, %v708
        %710 = vmatmul.f32.gmra.mxu0 %v709
        %v711 = vpop.f32.mrf.mxu0
        %v712 = vadd.f32 %v586, %v711
        %v713 = vand.u32 %v259, 4294901760
        %v714 = vsub.f32 %v259, %v713
        %715 = vmatmul.f32.gmra.mxu0 %v714
        %v716 = vpop.f32.mrf.mxu0
        %v717 = vadd.f32 %v590, %v716
        %v718 = vand.u32 %v260, 4294901760
        %v719 = vsub.f32 %v260, %v718
        %720 = vmatmul.f32.gmra.mxu0 %v719
        %v721 = vpop.f32.mrf.mxu0
        %v722 = vadd.f32 %v594, %v721
        %v723 = vand.u32 %v261, 4294901760
        %v724 = vsub.f32 %v261, %v723
        %725 = vmatmul.f32.gmra.mxu0 %v724
        %v726 = vpop.f32.mrf.mxu0
        %v727 = vadd.f32 %v598, %v726
        %728 = vdwg.mxu0
        %v729 = vand.u32 %v277, 4294901760
        %730 = vmatpush.msra.mxu0 %v729
        %v731 = vand.u32 %v276, 4294901760
        %732 = vmatpush.msra.mxu0 %v731
        %v733 = vand.u32 %v275, 4294901760
        %734 = vmatpush.msra.mxu0 %v733
        %v735 = vand.u32 %v274, 4294901760
        %736 = vmatpush.msra.mxu0 %v735
        %v737 = vand.u32 %v273, 4294901760
        %738 = vmatpush.msra.mxu0 %v737
        %v739 = vand.u32 %v272, 4294901760
        %740 = vmatpush.msra.mxu0 %v739
        %v741 = vand.u32 %v271, 4294901760
        %742 = vmatpush.msra.mxu0 %v741
        %v743 = vand.u32 %v270, 4294901760
        %744 = vmatpush.msra.mxu0 %v743
        %v745 = vand.u32 %v269, 4294901760
        %746 = vmatpush.msra.mxu0 %v745
        %v747 = vand.u32 %v268, 4294901760
        %748 = vmatpush.msra.mxu0 %v747
        %v749 = vand.u32 %v267, 4294901760
        %750 = vmatpush.msra.mxu0 %v749
        %v751 = vand.u32 %v266, 4294901760
        %752 = vmatpush.msra.mxu0 %v751
        %v753 = vand.u32 %v265, 4294901760
        %754 = vmatpush.msra.mxu0 %v753
        %v755 = vand.u32 %v264, 4294901760
        %756 = vmatpush.msra.mxu0 %v755
        %v757 = vand.u32 %v263, 4294901760
        %758 = vmatpush.msra.mxu0 %v757
        %v759 = vand.u32 %v262, 4294901760
        %760 = vmatpush.msra.mxu0 %v759
        %v761 = vand.u32 %v246, 4294901760
        %v762 = vsub.f32 %v246, %v761
        %v763 = vand.u32 %v762, 4294901760
        %764 = vmatmul.f32.gmra.mxu0 %v763
        %v765 = vpop.f32.mrf.mxu0
        %v766 = vadd.f32 %v652, %v765
        %v767 = vand.u32 %v247, 4294901760
        %v768 = vsub.f32 %v247, %v767
        %v769 = vand.u32 %v768, 4294901760
        %770 = vmatmul.f32.gmra.mxu0 %v769
        %v771 = vpop.f32.mrf.mxu0
        %v772 = vadd.f32 %v657, %v771
        %v773 = vand.u32 %v248, 4294901760
        %v774 = vsub.f32 %v248, %v773
        %v775 = vand.u32 %v774, 4294901760
        %776 = vmatmul.f32.gmra.mxu0 %v775
        %v777 = vpop.f32.mrf.mxu0
        %v778 = vadd.f32 %v662, %v777
        %v779 = vand.u32 %v249, 4294901760
        %v780 = vsub.f32 %v249, %v779
        %v781 = vand.u32 %v780, 4294901760
        %782 = vmatmul.f32.gmra.mxu0 %v781
        %v783 = vpop.f32.mrf.mxu0
        %v784 = vadd.f32 %v667, %v783
        %v785 = vand.u32 %v250, 4294901760
        %v786 = vsub.f32 %v250, %v785
        %v787 = vand.u32 %v786, 4294901760
        %788 = vmatmul.f32.gmra.mxu0 %v787
        %v789 = vpop.f32.mrf.mxu0
        %v790 = vadd.f32 %v672, %v789
        %v791 = vand.u32 %v251, 4294901760
        %v792 = vsub.f32 %v251, %v791
        %v793 = vand.u32 %v792, 4294901760
        %794 = vmatmul.f32.gmra.mxu0 %v793
        %v795 = vpop.f32.mrf.mxu0
        %v796 = vadd.f32 %v677, %v795
        %v797 = vand.u32 %v252, 4294901760
        %v798 = vsub.f32 %v252, %v797
        %v799 = vand.u32 %v798, 4294901760
        %800 = vmatmul.f32.gmra.mxu0 %v799
        %v801 = vpop.f32.mrf.mxu0
        %v802 = vadd.f32 %v682, %v801
        %v803 = vand.u32 %v253, 4294901760
        %v804 = vsub.f32 %v253, %v803
        %v805 = vand.u32 %v804, 4294901760
        %806 = vmatmul.f32.gmra.mxu0 %v805
        %v807 = vpop.f32.mrf.mxu0
        %v808 = vadd.f32 %v687, %v807
        %v809 = vand.u32 %v254, 4294901760
        %v810 = vsub.f32 %v254, %v809
        %v811 = vand.u32 %v810, 4294901760
        %812 = vmatmul.f32.gmra.mxu0 %v811
        %v813 = vpop.f32.mrf.mxu0
        %v814 = vadd.f32 %v692, %v813
        %v815 = vand.u32 %v255, 4294901760
        %v816 = vsub.f32 %v255, %v815
        %v817 = vand.u32 %v816, 4294901760
        %818 = vmatmul.f32.gmra.mxu0 %v817
        %v819 = vpop.f32.mrf.mxu0
        %v820 = vadd.f32 %v697, %v819
        %v821 = vand.u32 %v256, 4294901760
        %v822 = vsub.f32 %v256, %v821
        %v823 = vand.u32 %v822, 4294901760
        %824 = vmatmul.f32.gmra.mxu0 %v823
        %v825 = vpop.f32.mrf.mxu0
        %v826 = vadd.f32 %v702, %v825
        %v827 = vand.u32 %v257, 4294901760
        %v828 = vsub.f32 %v257, %v827
        %v829 = vand.u32 %v828, 4294901760
        %830 = vmatmul.f32.gmra.mxu0 %v829
        %v831 = vpop.f32.mrf.mxu0
        %v832 = vadd.f32 %v707, %v831
        %v833 = vand.u32 %v258, 4294901760
        %v834 = vsub.f32 %v258, %v833
        %v835 = vand.u32 %v834, 4294901760
        %836 = vmatmul.f32.gmra.mxu0 %v835
        %v837 = vpop.f32.mrf.mxu0
        %v838 = vadd.f32 %v712, %v837
        %v839 = vand.u32 %v259, 4294901760
        %v840 = vsub.f32 %v259, %v839
        %v841 = vand.u32 %v840, 4294901760
        %842 = vmatmul.f32.gmra.mxu0 %v841
        %v843 = vpop.f32.mrf.mxu0
        %v844 = vadd.f32 %v717, %v843
        %v845 = vand.u32 %v260, 4294901760
        %v846 = vsub.f32 %v260, %v845
        %v847 = vand.u32 %v846, 4294901760
        %848 = vmatmul.f32.gmra.mxu0 %v847
        %v849 = vpop.f32.mrf.mxu0
        %v850 = vadd.f32 %v722, %v849
        %v851 = vand.u32 %v261, 4294901760
        %v852 = vsub.f32 %v261, %v851
        %v853 = vand.u32 %v852, 4294901760
        %854 = vmatmul.f32.gmra.mxu0 %v853
        %v855 = vpop.f32.mrf.mxu0
        %v856 = vadd.f32 %v727, %v855
        %857 = vdwg.mxu0
        %v858 = vand.u32 %v277, 4294901760
        %v859 = vsub.f32 %v277, %v858
        %v860 = vand.u32 %v859, 4294901760
        %861 = vmatpush.msra.mxu0 %v860
        %v862 = vand.u32 %v276, 4294901760
        %v863 = vsub.f32 %v276, %v862
        %v864 = vand.u32 %v863, 4294901760
        %865 = vmatpush.msra.mxu0 %v864
        %v866 = vand.u32 %v275, 4294901760
        %v867 = vsub.f32 %v275, %v866
        %v868 = vand.u32 %v867, 4294901760
        %869 = vmatpush.msra.mxu0 %v868
        %v870 = vand.u32 %v274, 4294901760
        %v871 = vsub.f32 %v274, %v870
        %v872 = vand.u32 %v871, 4294901760
        %873 = vmatpush.msra.mxu0 %v872
        %v874 = vand.u32 %v273, 4294901760
        %v875 = vsub.f32 %v273, %v874
        %v876 = vand.u32 %v875, 4294901760
        %877 = vmatpush.msra.mxu0 %v876
        %v878 = vand.u32 %v272, 4294901760
        %v879 = vsub.f32 %v272, %v878
        %v880 = vand.u32 %v879, 4294901760
        %881 = vmatpush.msra.mxu0 %v880
        %v882 = vand.u32 %v271, 4294901760
        %v883 = vsub.f32 %v271, %v882
        %v884 = vand.u32 %v883, 4294901760
        %885 = vmatpush.msra.mxu0 %v884
        %v886 = vand.u32 %v270, 4294901760
        %v887 = vsub.f32 %v270, %v886
        %v888 = vand.u32 %v887, 4294901760
        %889 = vmatpush.msra.mxu0 %v888
        %v890 = vand.u32 %v269, 4294901760
        %v891 = vsub.f32 %v269, %v890
        %v892 = vand.u32 %v891, 4294901760
        %893 = vmatpush.msra.mxu0 %v892
        %v894 = vand.u32 %v268, 4294901760
        %v895 = vsub.f32 %v268, %v894
        %v896 = vand.u32 %v895, 4294901760
        %897 = vmatpush.msra.mxu0 %v896
        %v898 = vand.u32 %v267, 4294901760
        %v899 = vsub.f32 %v267, %v898
        %v900 = vand.u32 %v899, 4294901760
        %901 = vmatpush.msra.mxu0 %v900
        %v902 = vand.u32 %v266, 4294901760
        %v903 = vsub.f32 %v266, %v902
        %v904 = vand.u32 %v903, 4294901760
        %905 = vmatpush.msra.mxu0 %v904
        %v906 = vand.u32 %v265, 4294901760
        %v907 = vsub.f32 %v265, %v906
        %v908 = vand.u32 %v907, 4294901760
        %909 = vmatpush.msra.mxu0 %v908
        %v910 = vand.u32 %v264, 4294901760
        %v911 = vsub.f32 %v264, %v910
        %v912 = vand.u32 %v911, 4294901760
        %913 = vmatpush.msra.mxu0 %v912
        %v914 = vand.u32 %v263, 4294901760
        %v915 = vsub.f32 %v263, %v914
        %v916 = vand.u32 %v915, 4294901760
        %917 = vmatpush.msra.mxu0 %v916
        %v918 = vand.u32 %v262, 4294901760
        %v919 = vsub.f32 %v262, %v918
        %v920 = vand.u32 %v919, 4294901760
        %921 = vmatpush.msra.mxu0 %v920
        %v922 = vand.u32 %v246, 4294901760
        %923 = vmatmul.f32.gmra.mxu0 %v922
        %v924 = vpop.f32.mrf.mxu0
        %v925 = vadd.f32 %v766, %v924
        %v926 = vand.u32 %v247, 4294901760
        %927 = vmatmul.f32.gmra.mxu0 %v926
        %v928 = vpop.f32.mrf.mxu0
        %v929 = vadd.f32 %v772, %v928
        %v930 = vand.u32 %v248, 4294901760
        %931 = vmatmul.f32.gmra.mxu0 %v930
        %v932 = vpop.f32.mrf.mxu0
        %v933 = vadd.f32 %v778, %v932
        %v934 = vand.u32 %v249, 4294901760
        %935 = vmatmul.f32.gmra.mxu0 %v934
        %v936 = vpop.f32.mrf.mxu0
        %v937 = vadd.f32 %v784, %v936
        %v938 = vand.u32 %v250, 4294901760
        %939 = vmatmul.f32.gmra.mxu0 %v938
        %v940 = vpop.f32.mrf.mxu0
        %v941 = vadd.f32 %v790, %v940
        %v942 = vand.u32 %v251, 4294901760
        %943 = vmatmul.f32.gmra.mxu0 %v942
        %v944 = vpop.f32.mrf.mxu0
        %v945 = vadd.f32 %v796, %v944
        %v946 = vand.u32 %v252, 4294901760
        %947 = vmatmul.f32.gmra.mxu0 %v946
        %v948 = vpop.f32.mrf.mxu0
        %v949 = vadd.f32 %v802, %v948
        %v950 = vand.u32 %v253, 4294901760
        %951 = vmatmul.f32.gmra.mxu0 %v950
        %v952 = vpop.f32.mrf.mxu0
        %v953 = vadd.f32 %v808, %v952
        %v954 = vand.u32 %v254, 4294901760
        %955 = vmatmul.f32.gmra.mxu0 %v954
        %v956 = vpop.f32.mrf.mxu0
        %v957 = vadd.f32 %v814, %v956
        %v958 = vand.u32 %v255, 4294901760
        %959 = vmatmul.f32.gmra.mxu0 %v958
        %v960 = vpop.f32.mrf.mxu0
        %v961 = vadd.f32 %v820, %v960
        %v962 = vand.u32 %v256, 4294901760
        %963 = vmatmul.f32.gmra.mxu0 %v962
        %v964 = vpop.f32.mrf.mxu0
        %v965 = vadd.f32 %v826, %v964
        %v966 = vand.u32 %v257, 4294901760
        %967 = vmatmul.f32.gmra.mxu0 %v966
        %v968 = vpop.f32.mrf.mxu0
        %v969 = vadd.f32 %v832, %v968
        %v970 = vand.u32 %v258, 4294901760
        %971 = vmatmul.f32.gmra.mxu0 %v970
        %v972 = vpop.f32.mrf.mxu0
        %v973 = vadd.f32 %v838, %v972
        %v974 = vand.u32 %v259, 4294901760
        %975 = vmatmul.f32.gmra.mxu0 %v974
        %v976 = vpop.f32.mrf.mxu0
        %v977 = vadd.f32 %v844, %v976
        %v978 = vand.u32 %v260, 4294901760
        %979 = vmatmul.f32.gmra.mxu0 %v978
        %v980 = vpop.f32.mrf.mxu0
        %v981 = vadd.f32 %v850, %v980
        %v982 = vand.u32 %v261, 4294901760
        %983 = vmatmul.f32.gmra.mxu0 %v982
        %v984 = vpop.f32.mrf.mxu0
        %v985 = vadd.f32 %v856, %v984
        %986 = vdwg.mxu0
        %v987 = vand.u32 %v277, 4294901760
        %988 = vmatpush.msra.mxu0 %v987
        %v989 = vand.u32 %v276, 4294901760
        %990 = vmatpush.msra.mxu0 %v989
        %v991 = vand.u32 %v275, 4294901760
        %992 = vmatpush.msra.mxu0 %v991
        %v993 = vand.u32 %v274, 4294901760
        %994 = vmatpush.msra.mxu0 %v993
        %v995 = vand.u32 %v273, 4294901760
        %996 = vmatpush.msra.mxu0 %v995
        %v997 = vand.u32 %v272, 4294901760
        %998 = vmatpush.msra.mxu0 %v997
        %v999 = vand.u32 %v271, 4294901760
        %1000 = vmatpush.msra.mxu0 %v999
        %v1001 = vand.u32 %v270, 4294901760
        %1002 = vmatpush.msra.mxu0 %v1001
        %v1003 = vand.u32 %v269, 4294901760
        %1004 = vmatpush.msra.mxu0 %v1003
        %v1005 = vand.u32 %v268, 4294901760
        %1006 = vmatpush.msra.mxu0 %v1005
        %v1007 = vand.u32 %v267, 4294901760
        %1008 = vmatpush.msra.mxu0 %v1007
        %v1009 = vand.u32 %v266, 4294901760
        %1010 = vmatpush.msra.mxu0 %v1009
        %v1011 = vand.u32 %v265, 4294901760
        %1012 = vmatpush.msra.mxu0 %v1011
        %v1013 = vand.u32 %v264, 4294901760
        %1014 = vmatpush.msra.mxu0 %v1013
        %v1015 = vand.u32 %v263, 4294901760
        %1016 = vmatpush.msra.mxu0 %v1015
        %v1017 = vand.u32 %v262, 4294901760
        %1018 = vmatpush.msra.mxu0 %v1017
        %v1019 = vand.u32 %v246, 4294901760
        %1020 = vmatmul.f32.gmra.mxu0 %v1019
        %v1021 = vpop.f32.mrf.mxu0
        %v1022 = vadd.f32 %v925, %v1021
        %v1023 = vand.u32 %v247, 4294901760
        %1024 = vmatmul.f32.gmra.mxu0 %v1023
        %v1025 = vpop.f32.mrf.mxu0
        %v1026 = vadd.f32 %v929, %v1025
        %v1027 = vand.u32 %v248, 4294901760
        %1028 = vmatmul.f32.gmra.mxu0 %v1027
        %v1029 = vpop.f32.mrf.mxu0
        %v1030 = vadd.f32 %v933, %v1029
        %v1031 = vand.u32 %v249, 4294901760
        %1032 = vmatmul.f32.gmra.mxu0 %v1031
        %v1033 = vpop.f32.mrf.mxu0
        %v1034 = vadd.f32 %v937, %v1033
        %v1035 = vand.u32 %v250, 4294901760
        %1036 = vmatmul.f32.gmra.mxu0 %v1035
        %v1037 = vpop.f32.mrf.mxu0
        %v1038 = vadd.f32 %v941, %v1037
        %v1039 = vand.u32 %v251, 4294901760
        %1040 = vmatmul.f32.gmra.mxu0 %v1039
        %v1041 = vpop.f32.mrf.mxu0
        %v1042 = vadd.f32 %v945, %v1041
        %v1043 = vand.u32 %v252, 4294901760
        %1044 = vmatmul.f32.gmra.mxu0 %v1043
        %v1045 = vpop.f32.mrf.mxu0
        %v1046 = vadd.f32 %v949, %v1045
        %v1047 = vand.u32 %v253, 4294901760
        %1048 = vmatmul.f32.gmra.mxu0 %v1047
        %v1049 = vpop.f32.mrf.mxu0
        %v1050 = vadd.f32 %v953, %v1049
        %v1051 = vand.u32 %v254, 4294901760
        %1052 = vmatmul.f32.gmra.mxu0 %v1051
        %v1053 = vpop.f32.mrf.mxu0
        %v1054 = vadd.f32 %v957, %v1053
        %v1055 = vand.u32 %v255, 4294901760
        %1056 = vmatmul.f32.gmra.mxu0 %v1055
        %v1057 = vpop.f32.mrf.mxu0
        %v1058 = vadd.f32 %v961, %v1057
        %v1059 = vand.u32 %v256, 4294901760
        %1060 = vmatmul.f32.gmra.mxu0 %v1059
        %v1061 = vpop.f32.mrf.mxu0
        %v1062 = vadd.f32 %v965, %v1061
        %v1063 = vand.u32 %v257, 4294901760
        %1064 = vmatmul.f32.gmra.mxu0 %v1063
        %v1065 = vpop.f32.mrf.mxu0
        %v1066 = vadd.f32 %v969, %v1065
        %v1067 = vand.u32 %v258, 4294901760
        %1068 = vmatmul.f32.gmra.mxu0 %v1067
        %v1069 = vpop.f32.mrf.mxu0
        %v1070 = vadd.f32 %v973, %v1069
        %v1071 = vand.u32 %v259, 4294901760
        %1072 = vmatmul.f32.gmra.mxu0 %v1071
        %v1073 = vpop.f32.mrf.mxu0
        %v1074 = vadd.f32 %v977, %v1073
        %v1075 = vand.u32 %v260, 4294901760
        %1076 = vmatmul.f32.gmra.mxu0 %v1075
        %v1077 = vpop.f32.mrf.mxu0
        %v1078 = vadd.f32 %v981, %v1077
        %v1079 = vand.u32 %v261, 4294901760
        %1080 = vmatmul.f32.gmra.mxu0 %v1079
        %v1081 = vpop.f32.mrf.mxu0
        %v1082 = vadd.f32 %v985, %v1081
        %1083 = vdwg.mxu0
        %v1084 = vadd.f32 %v230, %v1022
        %v1085 = vadd.f32 %v231, %v1026
        %v1086 = vadd.f32 %v232, %v1030
        %v1087 = vadd.f32 %v233, %v1034
        %v1088 = vadd.f32 %v234, %v1038
        %v1089 = vadd.f32 %v235, %v1042
        %v1090 = vadd.f32 %v236, %v1046
        %v1091 = vadd.f32 %v237, %v1050
        %v1092 = vadd.f32 %v238, %v1054
        %v1093 = vadd.f32 %v239, %v1058
        %v1094 = vadd.f32 %v240, %v1062
        %v1095 = vadd.f32 %v241, %v1066
        %v1096 = vadd.f32 %v242, %v1070
        %v1097 = vadd.f32 %v243, %v1074
        %v1098 = vadd.f32 %v244, %v1078
        %v1099 = vadd.f32 %v245, %v1082
        %1100 = vst [vmem:[#allocation2] sm:$0xff] %v1084
        %1101 = vst [vmem:[#allocation2 + $0x8] sm:$0xff] %v1085
        %1102 = vst [vmem:[#allocation2 + $0x10] sm:$0xff] %v1086
        %1103 = vst [vmem:[#allocation2 + $0x18] sm:$0xff] %v1087
        %1104 = vst [vmem:[#allocation2 + $0x20] sm:$0xff] %v1088
        %1105 = vst [vmem:[#allocation2 + $0x28] sm:$0xff] %v1089
        %1106 = vst [vmem:[#allocation2 + $0x30] sm:$0xff] %v1090
        %1107 = vst [vmem:[#allocation2 + $0x38] sm:$0xff] %v1091
        %1108 = vst [vmem:[#allocation2 + $0x40] sm:$0xff] %v1092
        %1109 = vst [vmem:[#allocation2 + $0x48] sm:$0xff] %v1093
        %1110 = vst [vmem:[#allocation2 + $0x50] sm:$0xff] %v1094
        %1111 = vst [vmem:[#allocation2 + $0x58] sm:$0xff] %v1095
        %1112 = vst [vmem:[#allocation2 + $0x60] sm:$0xff] %v1096
        %1113 = vst [vmem:[#allocation2 + $0x68] sm:$0xff] %v1097
        %1114 = vst [vmem:[#allocation2 + $0x70] sm:$0xff] %v1098
        %1115 = vst [vmem:[#allocation2 + $0x78] sm:$0xff] %v1099
        // Predicated region
        $region33: #{attention_forward.7} parent=27 // pred_check
          %p1116 = pneg %p210
        $region34: #{attention_forward.7} parent=27 // pred_check_branch
          %1118 = sbr.rel (%p1116) target = $region36
        $region35: #{attention_forward.7} parent=27 // pred_region
          %v1119 = vld [vmem:[#allocation2] sm:$0xff]
          %v1120 = vld [vmem:[#allocation2 + $0x8] sm:$0xff]
          %v1121 = vld [vmem:[#allocation2 + $0x10] sm:$0xff]
          %v1122 = vld [vmem:[#allocation2 + $0x18] sm:$0xff]
          %v1123 = vld [vmem:[#allocation2 + $0x20] sm:$0xff]
          %v1124 = vld [vmem:[#allocation2 + $0x28] sm:$0xff]
          %v1125 = vld [vmem:[#allocation2 + $0x30] sm:$0xff]
          %v1126 = vld [vmem:[#allocation2 + $0x38] sm:$0xff]
          %v1127 = vld [vmem:[#allocation2 + $0x40] sm:$0xff]
          %v1128 = vld [vmem:[#allocation2 + $0x48] sm:$0xff]
          %v1129 = vld [vmem:[#allocation2 + $0x50] sm:$0xff]
          %v1130 = vld [vmem:[#allocation2 + $0x58] sm:$0xff]
          %v1131 = vld [vmem:[#allocation2 + $0x60] sm:$0xff]
          %v1132 = vld [vmem:[#allocation2 + $0x68] sm:$0xff]
          %v1133 = vld [vmem:[#allocation2 + $0x70] sm:$0xff]
          %v1134 = vld [vmem:[#allocation2 + $0x78] sm:$0xff]
          %1135 = vst [vmem:[%s190] sm:$0xff] %v1119
          %1136 = vst [vmem:[%s190 + $0x8] sm:$0xff] %v1120
          %1137 = vst [vmem:[%s190 + $0x10] sm:$0xff] %v1121
          %1138 = vst [vmem:[%s190 + $0x18] sm:$0xff] %v1122
          %1139 = vst [vmem:[%s190 + $0x20] sm:$0xff] %v1123
          %1140 = vst [vmem:[%s190 + $0x28] sm:$0xff] %v1124
          %1141 = vst [vmem:[%s190 + $0x30] sm:$0xff] %v1125
          %1142 = vst [vmem:[%s190 + $0x38] sm:$0xff] %v1126
          %1143 = vst [vmem:[%s190 + $0x40] sm:$0xff] %v1127
          %1144 = vst [vmem:[%s190 + $0x48] sm:$0xff] %v1128
          %1145 = vst [vmem:[%s190 + $0x50] sm:$0xff] %v1129
          %1146 = vst [vmem:[%s190 + $0x58] sm:$0xff] %v1130
          %1147 = vst [vmem:[%s190 + $0x60] sm:$0xff] %v1131
          %1148 = vst [vmem:[%s190 + $0x68] sm:$0xff] %v1132
          %1149 = vst [vmem:[%s190 + $0x70] sm:$0xff] %v1133
          %1150 = vst [vmem:[%s190 + $0x78] sm:$0xff] %v1134
        $region36: #{attention_forward.7} parent=27 // pred_fallthru
          _
        %s1151 = sand.u32 %s101, 1
        %s1152 = scalar_lea.sflag [#allocation4], %s1151
        %s1153 = sand.u32 %s101, 1
        %s1154 = smul.addr %s1153, 128
        %s1155 = scalar_lea.vmem [#allocation3], %s1154
        // Predicated region
        $region37: #{attention_forward.7} parent=27 // pred_check
          %p1156 = pneg %p111
        $region38: #{attention_forward.7} parent=27 // pred_check_branch
          %1158 = sbr.rel (%p1156) target = $region40
        $region39: #{attention_forward.7} parent=27 // pred_region
          %s1159 = smul.u32 16, %s21
          %1161 = vsyncadd %s1152, 0
          %s1162 = sadd.s32 %s22, %s1159
          %s1163 = smul.addr %s1162, 8
          %s1164 = scalar_lea.hbm %s2, %s1163
          %s1165 = sshll.u32 %s1155, 4
          %s1166 = int_to_ptr.vmem [resolvable:$true] %s1165
          %s1167 = sshll.u32 %s1164, 4
          %s1168 = int_to_ptr.hbm [resolvable:$true] %s1167
          %1173 = dma.vmem_to_hbm [thread:$0]  %s1166, 2048, %s1168, %s1152, 128, 128, 8
        $region40: #{attention_forward.7} parent=27 // pred_fallthru
          _
      $region28: #{attention_forward.7} parent=5 // pred_fallthru
        _
      %p1174 = scmp.le.s32.totalorder 2, %s11
      // Predicated region
      $region41: #{attention_forward.7} parent=5 // pred_check
        %p1175 = pneg %p1174
      $region42: #{attention_forward.7} parent=5 // pred_check_branch
        %1177 = sbr.rel (%p1175) target = $region44
      $region43: #{attention_forward.7} parent=5 // pred_region
        %s1178 = ssub.s32 %s11, 2
        // Predicated region
        $region45: #{attention_forward.7} parent=43 // pred_check
          %p1179 = pneg %p117
        $region46: #{attention_forward.7} parent=43 // pred_check_branch
          %1181 = sbr.rel (%p1179) target = $region48
        $region47: #{attention_forward.7} parent=43 // pred_region
          %s1182 = sand.u32 %s102, 1
          %s1183 = scalar_lea.sflag [#allocation4], %s1182
          %s1184 = sand.u32 %s102, 1
          %s1185 = smul.addr %s1184, 128
          %s1186 = scalar_lea.vmem [#allocation3], %s1185
          %1188 = dma.done %s1183, 2048
        $region48: #{attention_forward.7} parent=43 // pred_fallthru
          _
      $region44: #{attention_forward.7} parent=5 // pred_fallthru
        _
    $region6: #{attention_forward.7} parent=1 // loop_footer
      %s15 = sadd.s32 1, %s11
    $region7: #{attention_forward.7} parent=1 // loop_footer_branch
      %10 = sbr.rel target = $region3
    $region8: #{attention_forward.7} parent=1 // loop_exit
      _
    %1189 = vsyncpa [#allocation4], 1
    %s1190 = scalar_lea.sflag [#allocation4], 1
    %1191 = vsyncpa %s1190, 1

// kernel: attention_forward.6
$region0: #{attention_forward.6}
  #allocation0 [shape = 'u32[]', space=smem, size = 0x4, offset = 0x4, fixed_abs, tag = 'smem constant byte address 0x4 - core index']
  #allocation1 [shape = 'u32[72,128]{1,0:T(1,128)}', space=vmem, size = 0x9000, scoped, tag = 'internal scratch']
  #allocation2 [shape = 'f32[128,1]{1,0:T(8,128)}', space=vmem, size = 0x10000, scoped, tag = 'scratch operand']
  #allocation3 [shape = 'f32[128,1]{1,0:T(8,128)}', space=vmem, size = 0x10000, scoped, tag = 'scratch operand']
  #allocation4 [shape = 'f32[128,32]{1,0:T(8,128)}', space=vmem, size = 0x10000, scoped, tag = 'scratch operand']
  %s0 = inlined_call_operand.vmem [shape: f32[8,128,32], index: 0, kind: input, shape index: {}]
  %s1 = inlined_call_operand.vmem [shape: f32[8,128,32], index: 1, kind: input, shape index: {}]
  %s2 = inlined_call_operand.vmem [shape: f32[8,128,32], index: 2, kind: input, shape index: {}]
  %s3 = inlined_call_operand.vmem [shape: f32[8,128,32], index: 3, kind: output, shape index: {}]
  %s4 = sld [smem:[#allocation0]]
  $region57: #{attention_forward.6} parent=0
    _
  %s6 = ssub.s32 1, %s4
  %s7 = scalar_select 0, %s6, %s4
  loop: start=0, step=1, limit=10
  $region2: #{attention_forward.6} parent=0 // loop_pre_header
    _
  $region3: #{attention_forward.6} parent=0 // loop_header
    %s9 = sphi 0, %s13
    %p10 = scmp.ge.s32.totalorder %s9, 10
    %s16 = sphi 0, %s35
    %s17 = sphi 0, %s31
    %s18 = sphi 0, %s27
    %s19 = sphi 0, %s16
    %s20 = sphi 0, %s17
    %s21 = sphi 0, %s18
    %s22 = sphi 0, %s19
    %s23 = sphi 0, %s20
    %s24 = sphi 0, %s21
    %s40 = sphi 0, %s42
    %s43 = sphi 0, %s40
    %s44 = sphi 0, %s43
    %s60 = sphi 0, %s44
    %s68 = sphi 0, %s70
    %s71 = sphi 0, %s68
    %s72 = sphi 0, %s71
    %s88 = sphi 0, %s72
    %s96 = sphi 0, %s98
    %s99 = sphi 0, %s96
    %s100 = sphi 0, %s99
    %s116 = sphi 0, %s100
    %s124 = sphi 0, %s126
    %s127 = sphi 0, %s124
    %s128 = sphi 0, %s127
    %s144 = sphi 0, %s128
  $region4: #{attention_forward.6} parent=0 // loop_header_branch
    %12 = sbr.rel (%p10) target = $region8
  $region5: #{attention_forward.6} parent=0 // loop_body
    %s14 = ssub.s32 %s9, 1
    %s15 = ssub.s32 %s9, 2
    %s25 = sadd.s32 1, %s18
    %p26 = scmp.ge.s32.totalorder %s25, 1
    %s27 = scalar_select %p26, 0, %s25
    %s28 = sadd.s32 1, %s17
    %s29 = scalar_select %p26, %s28, %s17
    %p30 = scmp.ge.s32.totalorder %s29, 1
    %s31 = scalar_select %p30, 0, %s29
    %s32 = sadd.s32 1, %s16
    %s33 = scalar_select %p30, %s32, %s16
    %p34 = scmp.ge.s32.totalorder %s33, 8
    %s35 = scalar_select %p34, 0, %s33
    %s36 = ssub.s32 %s16, %s35
    %s37 = ssub.s32 %s17, %s31
    %s38 = sor.u32 %s36, %s37
    %p39 = scmp.eq.s32.totalorder %s38, 0
    %s41 = sadd.s32 %s40, 1
    %s42 = scalar_select %p39, %s40, %s41
    %p45 = pneg %p39
    %p46 = scmp.eq.s32.totalorder %s9, 7
    %p47 = por %p45, %p46
    %p48 = scmp.ne.s32.totalorder %s40, %s43
    %p49 = scmp.eq.s32.totalorder %s9, 0
    %p50 = por %p48, %p49
    %p51 = scmp.ne.s32.totalorder %s40, %s43
    %p52 = scmp.eq.s32.totalorder %s14, 7
    %p53 = por %p51, %p52
    %p54 = scmp.ne.s32.totalorder %s43, %s44
    %p55 = scmp.eq.s32.totalorder %s14, 0
    %p56 = por %p54, %p55
    %p57 = scmp.ne.s32.totalorder %s43, %s44
    %p58 = scmp.eq.s32.totalorder %s15, 7
    %p59 = por %p57, %p58
    %p61 = scmp.ne.s32.totalorder %s44, %s60
    %p62 = scmp.eq.s32.totalorder %s15, 0
    %p63 = por %p61, %p62
    %s64 = ssub.s32 %s16, %s35
    %s65 = ssub.s32 %s18, %s27
    %s66 = sor.u32 %s64, %s65
    %p67 = scmp.eq.s32.totalorder %s66, 0
    %s69 = sadd.s32 %s68, 1
    %s70 = scalar_select %p67, %s68, %s69
    %p73 = pneg %p67
    %p74 = scmp.eq.s32.totalorder %s9, 7
    %p75 = por %p73, %p74
    %p76 = scmp.ne.s32.totalorder %s68, %s71
    %p77 = scmp.eq.s32.totalorder %s9, 0
    %p78 = por %p76, %p77
    %p79 = scmp.ne.s32.totalorder %s68, %s71
    %p80 = scmp.eq.s32.totalorder %s14, 7
    %p81 = por %p79, %p80
    %p82 = scmp.ne.s32.totalorder %s71, %s72
    %p83 = scmp.eq.s32.totalorder %s14, 0
    %p84 = por %p82, %p83
    %p85 = scmp.ne.s32.totalorder %s71, %s72
    %p86 = scmp.eq.s32.totalorder %s15, 7
    %p87 = por %p85, %p86
    %p89 = scmp.ne.s32.totalorder %s72, %s88
    %p90 = scmp.eq.s32.totalorder %s15, 0
    %p91 = por %p89, %p90
    %s92 = ssub.s32 %s16, %s35
    %s93 = ssub.s32 %s18, %s27
    %s94 = sor.u32 %s92, %s93
    %p95 = scmp.eq.s32.totalorder %s94, 0
    %s97 = sadd.s32 %s96, 1
    %s98 = scalar_select %p95, %s96, %s97
    %p101 = pneg %p95
    %p102 = scmp.eq.s32.totalorder %s9, 7
    %p103 = por %p101, %p102
    %p104 = scmp.ne.s32.totalorder %s96, %s99
    %p105 = scmp.eq.s32.totalorder %s9, 0
    %p106 = por %p104, %p105
    %p107 = scmp.ne.s32.totalorder %s96, %s99
    %p108 = scmp.eq.s32.totalorder %s14, 7
    %p109 = por %p107, %p108
    %p110 = scmp.ne.s32.totalorder %s99, %s100
    %p111 = scmp.eq.s32.totalorder %s14, 0
    %p112 = por %p110, %p111
    %p113 = scmp.ne.s32.totalorder %s99, %s100
    %p114 = scmp.eq.s32.totalorder %s15, 7
    %p115 = por %p113, %p114
    %p117 = scmp.ne.s32.totalorder %s100, %s116
    %p118 = scmp.eq.s32.totalorder %s15, 0
    %p119 = por %p117, %p118
    %s120 = ssub.s32 %s16, %s35
    %s121 = ssub.s32 %s17, %s31
    %s122 = sor.u32 %s120, %s121
    %p123 = scmp.eq.s32.totalorder %s122, 0
    %s125 = sadd.s32 %s124, 1
    %s126 = scalar_select %p123, %s124, %s125
    %p129 = pneg %p123
    %p130 = scmp.eq.s32.totalorder %s9, 7
    %p131 = por %p129, %p130
    %p132 = scmp.ne.s32.totalorder %s124, %s127
    %p133 = scmp.eq.s32.totalorder %s9, 0
    %p134 = por %p132, %p133
    %p135 = scmp.ne.s32.totalorder %s124, %s127
    %p136 = scmp.eq.s32.totalorder %s14, 7
    %p137 = por %p135, %p136
    %p138 = scmp.ne.s32.totalorder %s127, %s128
    %p139 = scmp.eq.s32.totalorder %s14, 0
    %p140 = por %p138, %p139
    %p141 = scmp.ne.s32.totalorder %s127, %s128
    %p142 = scmp.eq.s32.totalorder %s15, 7
    %p143 = por %p141, %p142
    %p145 = scmp.ne.s32.totalorder %s128, %s144
    %p146 = scmp.eq.s32.totalorder %s15, 0
    %p147 = por %p145, %p146
    %p148 = scmp.le.s32.totalorder 1, %s9
    %p149 = scmp.lt.s32.totalorder %s9, 9
    %p150 = pnand %p148, %p149
    %p151 = pneg %p150
    // Predicated region
    $region9: #{attention_forward.6} parent=5 // pred_check
      _
    $region10: #{attention_forward.6} parent=5 // pred_check_branch
      %153 = sbr.rel (%p150) target = $region12
    $region11: #{attention_forward.6} parent=5 // pred_region
      %s154 = ssub.s32 %s9, 1
    $region12: #{attention_forward.6} parent=5 // pred_fallthru
      _
    %p155 = scmp.lt.s32.totalorder %s9, 8
    // Predicated region
    $region13: #{attention_forward.6} parent=5 // pred_check
      %p156 = pneg %p155
    $region14: #{attention_forward.6} parent=5 // pred_check_branch
      %158 = sbr.rel (%p156) target = $region16
    $region15: #{attention_forward.6} parent=5 // pred_region
      // Predicated region
      $region17: #{attention_forward.6} parent=15 // pred_check
        %p159 = pneg %p50
      $region18: #{attention_forward.6} parent=15 // pred_check_branch
        %161 = sbr.rel (%p159) target = $region20
      $region19: #{attention_forward.6} parent=15 // pred_region
        %s162 = smul.u32 16, %s17
        %p163 = scmp.lt.s32.totalorder %s16, 7
        %s164 = scalar_select %p163, %s16, 7
        %p165 = scmp.lt.s32.totalorder %s162, 15
        %s166 = scalar_select %p165, %s162, 15
        %s167 = smul.addr %s164, 16
        %s168 = sadd.s32 %s166, %s167
        %s169 = smul.addr %s168, 8
        %s170 = scalar_lea.vmem %s0, %s169
        %s171 = smul.u32 16, %s17
      $region20: #{attention_forward.6} parent=15 // pred_fallthru
        _
      // Predicated region
      $region21: #{attention_forward.6} parent=15 // pred_check
        %p172 = pneg %p78
      $region22: #{attention_forward.6} parent=15 // pred_check_branch
        %174 = sbr.rel (%p172) target = $region24
      $region23: #{attention_forward.6} parent=15 // pred_region
        %s175 = smul.u32 16, %s18
        %p176 = scmp.lt.s32.totalorder %s16, 7
        %s177 = scalar_select %p176, %s16, 7
        %p178 = scmp.lt.s32.totalorder %s175, 15
        %s179 = scalar_select %p178, %s175, 15
        %s180 = smul.addr %s177, 16
        %s181 = sadd.s32 %s179, %s180
        %s182 = smul.addr %s181, 8
        %s183 = scalar_lea.vmem %s1, %s182
        %s184 = smul.u32 16, %s18
      $region24: #{attention_forward.6} parent=15 // pred_fallthru
        _
      // Predicated region
      $region25: #{attention_forward.6} parent=15 // pred_check
        %p185 = pneg %p106
      $region26: #{attention_forward.6} parent=15 // pred_check_branch
        %187 = sbr.rel (%p185) target = $region28
      $region27: #{attention_forward.6} parent=15 // pred_region
        %s188 = smul.u32 16, %s18
        %p189 = scmp.lt.s32.totalorder %s16, 7
        %s190 = scalar_select %p189, %s16, 7
        %p191 = scmp.lt.s32.totalorder %s188, 15
        %s192 = scalar_select %p191, %s188, 15
        %s193 = smul.addr %s190, 16
        %s194 = sadd.s32 %s192, %s193
        %s195 = smul.addr %s194, 8
        %s196 = scalar_lea.vmem %s2, %s195
        %s197 = smul.u32 16, %s18
      $region28: #{attention_forward.6} parent=15 // pred_fallthru
        _
    $region16: #{attention_forward.6} parent=5 // pred_fallthru
      _
    %p198 = scmp.le.s32.totalorder 1, %s9
    %p199 = scmp.lt.s32.totalorder %s9, 9
    %p200 = pnand %p198, %p199
    %p201 = pneg %p200
    // Predicated region
    $region29: #{attention_forward.6} parent=5 // pred_check
      _
    $region30: #{attention_forward.6} parent=5 // pred_check_branch
      %203 = sbr.rel (%p200) target = $region32
    $region31: #{attention_forward.6} parent=5 // pred_region
      %s204 = ssub.s32 %s9, 1
      %s205 = smul.u32 16, %s20
      %p206 = scmp.lt.s32.totalorder %s19, 7
      %s207 = scalar_select %p206, %s19, 7
      %p208 = scmp.lt.s32.totalorder %s205, 15
      %s209 = scalar_select %p208, %s205, 15
      %s210 = smul.addr %s207, 16
      %s211 = sadd.s32 %s209, %s210
      %s212 = smul.addr %s211, 8
      %s213 = scalar_lea.vmem %s0, %s212
      %p214 = pneg %p56
      %p215 = pneg %p53
      %s216 = smul.u32 16, %s21
      %p217 = scmp.lt.s32.totalorder %s19, 7
      %s218 = scalar_select %p217, %s19, 7
      %p219 = scmp.lt.s32.totalorder %s216, 15
      %s220 = scalar_select %p219, %s216, 15
      %s221 = smul.addr %s218, 16
      %s222 = sadd.s32 %s220, %s221
      %s223 = smul.addr %s222, 8
      %s224 = scalar_lea.vmem %s1, %s223
      %p225 = pneg %p84
      %p226 = pneg %p81
      %s227 = smul.u32 16, %s21
      %p228 = scmp.lt.s32.totalorder %s19, 7
      %s229 = scalar_select %p228, %s19, 7
      %p230 = scmp.lt.s32.totalorder %s227, 15
      %s231 = scalar_select %p230, %s227, 15
      %s232 = smul.addr %s229, 16
      %s233 = sadd.s32 %s231, %s232
      %s234 = smul.addr %s233, 8
      %s235 = scalar_lea.vmem %s2, %s234
      %p236 = pneg %p112
      %p237 = pneg %p109
      %p238 = pneg %p140
      %p239 = pneg %p137
      %s240 = smul.u32 16, %s20
      %p241 = scmp.lt.s32.totalorder %s19, 7
      %s242 = scalar_select %p241, %s19, 7
      %p243 = scmp.lt.s32.totalorder %s240, 15
      %s244 = scalar_select %p243, %s240, 15
      %s245 = smul.addr %s242, 16
      %s246 = sadd.s32 %s244, %s245
      %s247 = smul.addr %s246, 8
      %s248 = scalar_lea.vmem %s3, %s247
      %s249 = smul.u32 16, %s20
      %p250 = scmp.lt.s32.totalorder %s19, 7
      %s251 = scalar_select %p250, %s19, 7
      %p252 = scmp.lt.s32.totalorder %s249, 15
      %s253 = scalar_select %p252, %s249, 15
      %s254 = smul.addr %s251, 16
      %s255 = sadd.s32 %s253, %s254
      %s256 = smul.addr %s255, 8
      %s257 = scalar_lea.vmem %s0, %s256
      %s258 = smul.u32 16, %s20
      %s259 = smul.u32 16, %s21
      %p260 = scmp.lt.s32.totalorder %s19, 7
      %s261 = scalar_select %p260, %s19, 7
      %p262 = scmp.lt.s32.totalorder %s259, 15
      %s263 = scalar_select %p262, %s259, 15
      %s264 = smul.addr %s261, 16
      %s265 = sadd.s32 %s263, %s264
      %s266 = smul.addr %s265, 8
      %s267 = scalar_lea.vmem %s1, %s266
      %s268 = smul.u32 16, %s21
      %s269 = smul.u32 16, %s21
      %p270 = scmp.lt.s32.totalorder %s19, 7
      %s271 = scalar_select %p270, %s19, 7
      %p272 = scmp.lt.s32.totalorder %s269, 15
      %s273 = scalar_select %p272, %s269, 15
      %s274 = smul.addr %s271, 16
      %s275 = sadd.s32 %s273, %s274
      %s276 = smul.addr %s275, 8
      %s277 = scalar_lea.vmem %s2, %s276
      %s278 = smul.u32 16, %s21
      %s279 = smul.u32 16, %s20
      %p280 = scmp.lt.s32.totalorder %s19, 7
      %s281 = scalar_select %p280, %s19, 7
      %p282 = scmp.lt.s32.totalorder %s279, 15
      %s283 = scalar_select %p282, %s279, 15
      %s284 = smul.addr %s281, 16
      %s285 = sadd.s32 %s283, %s284
      %s286 = smul.addr %s285, 8
      %s287 = scalar_lea.vmem %s3, %s286
      %s288 = smul.u32 16, %s20
      %p289 = scmp.eq.s32.totalorder %s21, 0
      // Predicated region
      $region33: #{attention_forward.6} parent=31 // pred_check
        %p290 = pneg %p289
      $region34: #{attention_forward.6} parent=31 // pred_check_branch
        %292 = sbr.rel (%p290) target = $region36
      $region35: #{attention_forward.6} parent=31 // pred_region
        %vm293 = vcmask 7168
        %294 = vst.msk [vmem:[#allocation2] sm:$0xff] %vm293, -1e+30
        %295 = vst.msk [vmem:[#allocation2 + $0x8] sm:$0xff] %vm293, -1e+30
        %296 = vst.msk [vmem:[#allocation2 + $0x10] sm:$0xff] %vm293, -1e+30
        %297 = vst.msk [vmem:[#allocation2 + $0x18] sm:$0xff] %vm293, -1e+30
        %298 = vst.msk [vmem:[#allocation2 + $0x20] sm:$0xff] %vm293, -1e+30
        %299 = vst.msk [vmem:[#allocation2 + $0x28] sm:$0xff] %vm293, -1e+30
        %300 = vst.msk [vmem:[#allocation2 + $0x30] sm:$0xff] %vm293, -1e+30
        %301 = vst.msk [vmem:[#allocation2 + $0x38] sm:$0xff] %vm293, -1e+30
        %302 = vst.msk [vmem:[#allocation2 + $0x40] sm:$0xff] %vm293, -1e+30
        %303 = vst.msk [vmem:[#allocation2 + $0x48] sm:$0xff] %vm293, -1e+30
        %304 = vst.msk [vmem:[#allocation2 + $0x50] sm:$0xff] %vm293, -1e+30
        %305 = vst.msk [vmem:[#allocation2 + $0x58] sm:$0xff] %vm293, -1e+30
        %306 = vst.msk [vmem:[#allocation2 + $0x60] sm:$0xff] %vm293, -1e+30
        %307 = vst.msk [vmem:[#allocation2 + $0x68] sm:$0xff] %vm293, -1e+30
        %308 = vst.msk [vmem:[#allocation2 + $0x70] sm:$0xff] %vm293, -1e+30
        %309 = vst.msk [vmem:[#allocation2 + $0x78] sm:$0xff] %vm293, -1e+30
        %310 = vst.msk [vmem:[#allocation3] sm:$0xff] %vm293, 0.0
        %311 = vst.msk [vmem:[#allocation3 + $0x8] sm:$0xff] %vm293, 0.0
        %312 = vst.msk [vmem:[#allocation3 + $0x10] sm:$0xff] %vm293, 0.0
        %313 = vst.msk [vmem:[#allocation3 + $0x18] sm:$0xff] %vm293, 0.0
        %314 = vst.msk [vmem:[#allocation3 + $0x20] sm:$0xff] %vm293, 0.0
        %315 = vst.msk [vmem:[#allocation3 + $0x28] sm:$0xff] %vm293, 0.0
        %316 = vst.msk [vmem:[#allocation3 + $0x30] sm:$0xff] %vm293, 0.0
        %317 = vst.msk [vmem:[#allocation3 + $0x38] sm:$0xff] %vm293, 0.0
        %318 = vst.msk [vmem:[#allocation3 + $0x40] sm:$0xff] %vm293, 0.0
        %319 = vst.msk [vmem:[#allocation3 + $0x48] sm:$0xff] %vm293, 0.0
        %320 = vst.msk [vmem:[#allocation3 + $0x50] sm:$0xff] %vm293, 0.0
        %321 = vst.msk [vmem:[#allocation3 + $0x58] sm:$0xff] %vm293, 0.0
        %322 = vst.msk [vmem:[#allocation3 + $0x60] sm:$0xff] %vm293, 0.0
        %323 = vst.msk [vmem:[#allocation3 + $0x68] sm:$0xff] %vm293, 0.0
        %324 = vst.msk [vmem:[#allocation3 + $0x70] sm:$0xff] %vm293, 0.0
        %325 = vst.msk [vmem:[#allocation3 + $0x78] sm:$0xff] %vm293, 0.0
        %vm326 = vcmask 261120
        %327 = vst.msk [vmem:[#allocation4] sm:$0xff] %vm326, 0.0
        %328 = vst.msk [vmem:[#allocation4 + $0x8] sm:$0xff] %vm326, 0.0
        %329 = vst.msk [vmem:[#allocation4 + $0x10] sm:$0xff] %vm326, 0.0
        %330 = vst.msk [vmem:[#allocation4 + $0x18] sm:$0xff] %vm326, 0.0
        %331 = vst.msk [vmem:[#allocation4 + $0x20] sm:$0xff] %vm326, 0.0
        %332 = vst.msk [vmem:[#allocation4 + $0x28] sm:$0xff] %vm326, 0.0
        %333 = vst.msk [vmem:[#allocation4 + $0x30] sm:$0xff] %vm326, 0.0
        %334 = vst.msk [vmem:[#allocation4 + $0x38] sm:$0xff] %vm326, 0.0
        %335 = vst.msk [vmem:[#allocation4 + $0x40] sm:$0xff] %vm326, 0.0
        %336 = vst.msk [vmem:[#allocation4 + $0x48] sm:$0xff] %vm326, 0.0
        %337 = vst.msk [vmem:[#allocation4 + $0x50] sm:$0xff] %vm326, 0.0
        %338 = vst.msk [vmem:[#allocation4 + $0x58] sm:$0xff] %vm326, 0.0
        %339 = vst.msk [vmem:[#allocation4 + $0x60] sm:$0xff] %vm326, 0.0
        %340 = vst.msk [vmem:[#allocation4 + $0x68] sm:$0xff] %vm326, 0.0
        %341 = vst.msk [vmem:[#allocation4 + $0x70] sm:$0xff] %vm326, 0.0
        %342 = vst.msk [vmem:[#allocation4 + $0x78] sm:$0xff] %vm326, 0.0
      $region36: #{attention_forward.6} parent=31 // pred_fallthru
        _
      %s343 = smul.u32 %s21, 128
      %s344 = smul.u32 %s20, 128
      %s345 = sadd.s32 %s344, 127
      %p346 = scmp.le.s32.totalorder %s343, %s345
      // Predicated region
      $region37: #{attention_forward.6} parent=31 // pred_check
        %p347 = pneg %p346
      $region38: #{attention_forward.6} parent=31 // pred_check_branch
        %349 = sbr.rel (%p347) target = $region40
      $region39: #{attention_forward.6} parent=31 // pred_region
        %v350 = vld [vmem:[%s257] sm:$0xff]
        %v351 = vld [vmem:[%s257 + $0x8] sm:$0xff]
        %v352 = vld [vmem:[%s257 + $0x10] sm:$0xff]
        %v353 = vld [vmem:[%s257 + $0x18] sm:$0xff]
        %v354 = vld [vmem:[%s257 + $0x20] sm:$0xff]
        %v355 = vld [vmem:[%s257 + $0x28] sm:$0xff]
        %v356 = vld [vmem:[%s257 + $0x30] sm:$0xff]
        %v357 = vld [vmem:[%s257 + $0x38] sm:$0xff]
        %v358 = vld [vmem:[%s257 + $0x40] sm:$0xff]
        %v359 = vld [vmem:[%s257 + $0x48] sm:$0xff]
        %v360 = vld [vmem:[%s257 + $0x50] sm:$0xff]
        %v361 = vld [vmem:[%s257 + $0x58] sm:$0xff]
        %v362 = vld [vmem:[%s257 + $0x60] sm:$0xff]
        %v363 = vld [vmem:[%s257 + $0x68] sm:$0xff]
        %v364 = vld [vmem:[%s257 + $0x70] sm:$0xff]
        %v365 = vld [vmem:[%s257 + $0x78] sm:$0xff]
        %v366 = vmul.f32 %v350, 0.17677669
        %v367 = vmul.f32 %v351, 0.17677669
        %v368 = vmul.f32 %v352, 0.17677669
        %v369 = vmul.f32 %v353, 0.17677669
        %v370 = vmul.f32 %v354, 0.17677669
        %v371 = vmul.f32 %v355, 0.17677669
        %v372 = vmul.f32 %v356, 0.17677669
        %v373 = vmul.f32 %v357, 0.17677669
        %v374 = vmul.f32 %v358, 0.17677669
        %v375 = vmul.f32 %v359, 0.17677669
        %v376 = vmul.f32 %v360, 0.17677669
        %v377 = vmul.f32 %v361, 0.17677669
        %v378 = vmul.f32 %v362, 0.17677669
        %v379 = vmul.f32 %v363, 0.17677669
        %v380 = vmul.f32 %v364, 0.17677669
        %v381 = vmul.f32 %v365, 0.17677669
        %v382 = vld [vmem:[%s267] sm:$0xff]
        %v383 = vld [vmem:[%s267 + $0x8] sm:$0xff]
        %v384 = vld [vmem:[%s267 + $0x10] sm:$0xff]
        %v385 = vld [vmem:[%s267 + $0x18] sm:$0xff]
        %v386 = vld [vmem:[%s267 + $0x20] sm:$0xff]
        %v387 = vld [vmem:[%s267 + $0x28] sm:$0xff]
        %v388 = vld [vmem:[%s267 + $0x30] sm:$0xff]
        %v389 = vld [vmem:[%s267 + $0x38] sm:$0xff]
        %v390 = vld [vmem:[%s267 + $0x40] sm:$0xff]
        %v391 = vld [vmem:[%s267 + $0x48] sm:$0xff]
        %v392 = vld [vmem:[%s267 + $0x50] sm:$0xff]
        %v393 = vld [vmem:[%s267 + $0x58] sm:$0xff]
        %v394 = vld [vmem:[%s267 + $0x60] sm:$0xff]
        %v395 = vld [vmem:[%s267 + $0x68] sm:$0xff]
        %v396 = vld [vmem:[%s267 + $0x70] sm:$0xff]
        %v397 = vld [vmem:[%s267 + $0x78] sm:$0xff]
        %vm398 = vcmask 261120
        %v400 = vsel %vm398, %v366, 0
        %v403 = vsel %vm398, %v367, 0
        %v406 = vsel %vm398, %v368, 0
        %v409 = vsel %vm398, %v369, 0
        %v412 = vsel %vm398, %v370, 0
        %v415 = vsel %vm398, %v371, 0
        %v418 = vsel %vm398, %v372, 0
        %v421 = vsel %vm398, %v373, 0
        %v424 = vsel %vm398, %v374, 0
        %v427 = vsel %vm398, %v375, 0
        %v430 = vsel %vm398, %v376, 0
        %v433 = vsel %vm398, %v377, 0
        %v436 = vsel %vm398, %v378, 0
        %v439 = vsel %vm398, %v379, 0
        %v442 = vsel %vm398, %v380, 0
        %v445 = vsel %vm398, %v381, 0
        %v448 = vsel %vm398, %v382, 0
        %v451 = vsel %vm398, %v383, 0
        %v454 = vsel %vm398, %v384, 0
        %v457 = vsel %vm398, %v385, 0
        %v460 = vsel %vm398, %v386, 0
        %v463 = vsel %vm398, %v387, 0
        %v466 = vsel %vm398, %v388, 0
        %v469 = vsel %vm398, %v389, 0
        %v472 = vsel %vm398, %v390, 0
        %v475 = vsel %vm398, %v391, 0
        %v478 = vsel %vm398, %v392, 0
        %v481 = vsel %vm398, %v393, 0
        %v484 = vsel %vm398, %v394, 0
        %v487 = vsel %vm398, %v395, 0
        %v490 = vsel %vm398, %v396, 0
        %v493 = vsel %vm398, %v397, 0
        %v495 = vand.u32 %v493, 4294901760
        %496 = vmatpush.xpose.msra.mxu0 %v495
        %v497 = vand.u32 %v490, 4294901760
        %498 = vmatpush.xpose.msra.mxu0 %v497
        %v499 = vand.u32 %v487, 4294901760
        %500 = vmatpush.xpose.msra.mxu0 %v499
        %v501 = vand.u32 %v484, 4294901760
        %502 = vmatpush.xpose.msra.mxu0 %v501
        %v503 = vand.u32 %v481, 4294901760
        %504 = vmatpush.xpose.msra.mxu0 %v503
        %v505 = vand.u32 %v478, 4294901760
        %506 = vmatpush.xpose.msra.mxu0 %v505
        %v507 = vand.u32 %v475, 4294901760
        %508 = vmatpush.xpose.msra.mxu0 %v507
        %v509 = vand.u32 %v472, 4294901760
        %510 = vmatpush.xpose.msra.mxu0 %v509
        %v511 = vand.u32 %v469, 4294901760
        %512 = vmatpush.xpose.msra.mxu0 %v511
        %v513 = vand.u32 %v466, 4294901760
        %514 = vmatpush.xpose.msra.mxu0 %v513
        %v515 = vand.u32 %v463, 4294901760
        %516 = vmatpush.xpose.msra.mxu0 %v515
        %v517 = vand.u32 %v460, 4294901760
        %518 = vmatpush.xpose.msra.mxu0 %v517
        %v519 = vand.u32 %v457, 4294901760
        %520 = vmatpush.xpose.msra.mxu0 %v519
        %v521 = vand.u32 %v454, 4294901760
        %522 = vmatpush.xpose.msra.mxu0 %v521
        %v523 = vand.u32 %v451, 4294901760
        %524 = vmatpush.xpose.msra.mxu0 %v523
        %v525 = vand.u32 %v448, 4294901760
        %526 = vmatpush.xpose.msra.mxu0 %v525
        %v527 = vand.u32 %v400, 4294901760
        %v528 = vsub.f32 %v400, %v527
        %v529 = vand.u32 %v528, 4294901760
        %v530 = vsub.f32 %v528, %v529
        %v531 = vand.u32 %v530, 4294901760
        %532 = vmatmul.f32.gmra.mxu0 %v531
        %v533 = vpop.f32.mrf.mxu0
        %v534 = vadd.f32 0.0, %v533
        %v535 = vand.u32 %v403, 4294901760
        %v536 = vsub.f32 %v403, %v535
        %v537 = vand.u32 %v536, 4294901760
        %v538 = vsub.f32 %v536, %v537
        %v539 = vand.u32 %v538, 4294901760
        %540 = vmatmul.f32.gmra.mxu0 %v539
        %v541 = vpop.f32.mrf.mxu0
        %v542 = vadd.f32 0.0, %v541
        %v543 = vand.u32 %v406, 4294901760
        %v544 = vsub.f32 %v406, %v543
        %v545 = vand.u32 %v544, 4294901760
        %v546 = vsub.f32 %v544, %v545
        %v547 = vand.u32 %v546, 4294901760
        %548 = vmatmul.f32.gmra.mxu0 %v547
        %v549 = vpop.f32.mrf.mxu0
        %v550 = vadd.f32 0.0, %v549
        %v551 = vand.u32 %v409, 4294901760
        %v552 = vsub.f32 %v409, %v551
        %v553 = vand.u32 %v552, 4294901760
        %v554 = vsub.f32 %v552, %v553
        %v555 = vand.u32 %v554, 4294901760
        %556 = vmatmul.f32.gmra.mxu0 %v555
        %v557 = vpop.f32.mrf.mxu0
        %v558 = vadd.f32 0.0, %v557
        %v559 = vand.u32 %v412, 4294901760
        %v560 = vsub.f32 %v412, %v559
        %v561 = vand.u32 %v560, 4294901760
        %v562 = vsub.f32 %v560, %v561
        %v563 = vand.u32 %v562, 4294901760
        %564 = vmatmul.f32.gmra.mxu0 %v563
        %v565 = vpop.f32.mrf.mxu0
        %v566 = vadd.f32 0.0, %v565
        %v567 = vand.u32 %v415, 4294901760
        %v568 = vsub.f32 %v415, %v567
        %v569 = vand.u32 %v568, 4294901760
        %v570 = vsub.f32 %v568, %v569
        %v571 = vand.u32 %v570, 4294901760
        %572 = vmatmul.f32.gmra.mxu0 %v571
        %v573 = vpop.f32.mrf.mxu0
        %v574 = vadd.f32 0.0, %v573
        %v575 = vand.u32 %v418, 4294901760
        %v576 = vsub.f32 %v418, %v575
        %v577 = vand.u32 %v576, 4294901760
        %v578 = vsub.f32 %v576, %v577
        %v579 = vand.u32 %v578, 4294901760
        %580 = vmatmul.f32.gmra.mxu0 %v579
        %v581 = vpop.f32.mrf.mxu0
        %v582 = vadd.f32 0.0, %v581
        %v583 = vand.u32 %v421, 4294901760
        %v584 = vsub.f32 %v421, %v583
        %v585 = vand.u32 %v584, 4294901760
        %v586 = vsub.f32 %v584, %v585
        %v587 = vand.u32 %v586, 4294901760
        %588 = vmatmul.f32.gmra.mxu0 %v587
        %v589 = vpop.f32.mrf.mxu0
        %v590 = vadd.f32 0.0, %v589
        %v591 = vand.u32 %v424, 4294901760
        %v592 = vsub.f32 %v424, %v591
        %v593 = vand.u32 %v592, 4294901760
        %v594 = vsub.f32 %v592, %v593
        %v595 = vand.u32 %v594, 4294901760
        %596 = vmatmul.f32.gmra.mxu0 %v595
        %v597 = vpop.f32.mrf.mxu0
        %v598 = vadd.f32 0.0, %v597
        %v599 = vand.u32 %v427, 4294901760
        %v600 = vsub.f32 %v427, %v599
        %v601 = vand.u32 %v600, 4294901760
        %v602 = vsub.f32 %v600, %v601
        %v603 = vand.u32 %v602, 4294901760
        %604 = vmatmul.f32.gmra.mxu0 %v603
        %v605 = vpop.f32.mrf.mxu0
        %v606 = vadd.f32 0.0, %v605
        %v607 = vand.u32 %v430, 4294901760
        %v608 = vsub.f32 %v430, %v607
        %v609 = vand.u32 %v608, 4294901760
        %v610 = vsub.f32 %v608, %v609
        %v611 = vand.u32 %v610, 4294901760
        %612 = vmatmul.f32.gmra.mxu0 %v611
        %v613 = vpop.f32.mrf.mxu0
        %v614 = vadd.f32 0.0, %v613
        %v615 = vand.u32 %v433, 4294901760
        %v616 = vsub.f32 %v433, %v615
        %v617 = vand.u32 %v616, 4294901760
        %v618 = vsub.f32 %v616, %v617
        %v619 = vand.u32 %v618, 4294901760
        %620 = vmatmul.f32.gmra.mxu0 %v619
        %v621 = vpop.f32.mrf.mxu0
        %v622 = vadd.f32 0.0, %v621
        %v623 = vand.u32 %v436, 4294901760
        %v624 = vsub.f32 %v436, %v623
        %v625 = vand.u32 %v624, 4294901760
        %v626 = vsub.f32 %v624, %v625
        %v627 = vand.u32 %v626, 4294901760
        %628 = vmatmul.f32.gmra.mxu0 %v627
        %v629 = vpop.f32.mrf.mxu0
        %v630 = vadd.f32 0.0, %v629
        %v631 = vand.u32 %v439, 4294901760
        %v632 = vsub.f32 %v439, %v631
        %v633 = vand.u32 %v632, 4294901760
        %v634 = vsub.f32 %v632, %v633
        %v635 = vand.u32 %v634, 4294901760
        %636 = vmatmul.f32.gmra.mxu0 %v635
        %v637 = vpop.f32.mrf.mxu0
        %v638 = vadd.f32 0.0, %v637
        %v639 = vand.u32 %v442, 4294901760
        %v640 = vsub.f32 %v442, %v639
        %v641 = vand.u32 %v640, 4294901760
        %v642 = vsub.f32 %v640, %v641
        %v643 = vand.u32 %v642, 4294901760
        %644 = vmatmul.f32.gmra.mxu0 %v643
        %v645 = vpop.f32.mrf.mxu0
        %v646 = vadd.f32 0.0, %v645
        %v647 = vand.u32 %v445, 4294901760
        %v648 = vsub.f32 %v445, %v647
        %v649 = vand.u32 %v648, 4294901760
        %v650 = vsub.f32 %v648, %v649
        %v651 = vand.u32 %v650, 4294901760
        %652 = vmatmul.f32.gmra.mxu0 %v651
        %v653 = vpop.f32.mrf.mxu0
        %v654 = vadd.f32 0.0, %v653
        %655 = vdwg.mxu0
        %v656 = vand.u32 %v493, 4294901760
        %v657 = vsub.f32 %v493, %v656
        %v658 = vand.u32 %v657, 4294901760
        %v659 = vsub.f32 %v657, %v658
        %v660 = vand.u32 %v659, 4294901760
        %661 = vmatpush.xpose.msra.mxu0 %v660
        %v662 = vand.u32 %v490, 4294901760
        %v663 = vsub.f32 %v490, %v662
        %v664 = vand.u32 %v663, 4294901760
        %v665 = vsub.f32 %v663, %v664
        %v666 = vand.u32 %v665, 4294901760
        %667 = vmatpush.xpose.msra.mxu0 %v666
        %v668 = vand.u32 %v487, 4294901760
        %v669 = vsub.f32 %v487, %v668
        %v670 = vand.u32 %v669, 4294901760
        %v671 = vsub.f32 %v669, %v670
        %v672 = vand.u32 %v671, 4294901760
        %673 = vmatpush.xpose.msra.mxu0 %v672
        %v674 = vand.u32 %v484, 4294901760
        %v675 = vsub.f32 %v484, %v674
        %v676 = vand.u32 %v675, 4294901760
        %v677 = vsub.f32 %v675, %v676
        %v678 = vand.u32 %v677, 4294901760
        %679 = vmatpush.xpose.msra.mxu0 %v678
        %v680 = vand.u32 %v481, 4294901760
        %v681 = vsub.f32 %v481, %v680
        %v682 = vand.u32 %v681, 4294901760
        %v683 = vsub.f32 %v681, %v682
        %v684 = vand.u32 %v683, 4294901760
        %685 = vmatpush.xpose.msra.mxu0 %v684
        %v686 = vand.u32 %v478, 4294901760
        %v687 = vsub.f32 %v478, %v686
        %v688 = vand.u32 %v687, 4294901760
        %v689 = vsub.f32 %v687, %v688
        %v690 = vand.u32 %v689, 4294901760
        %691 = vmatpush.xpose.msra.mxu0 %v690
        %v692 = vand.u32 %v475, 4294901760
        %v693 = vsub.f32 %v475, %v692
        %v694 = vand.u32 %v693, 4294901760
        %v695 = vsub.f32 %v693, %v694
        %v696 = vand.u32 %v695, 4294901760
        %697 = vmatpush.xpose.msra.mxu0 %v696
        %v698 = vand.u32 %v472, 4294901760
        %v699 = vsub.f32 %v472, %v698
        %v700 = vand.u32 %v699, 4294901760
        %v701 = vsub.f32 %v699, %v700
        %v702 = vand.u32 %v701, 4294901760
        %703 = vmatpush.xpose.msra.mxu0 %v702
        %v704 = vand.u32 %v469, 4294901760
        %v705 = vsub.f32 %v469, %v704
        %v706 = vand.u32 %v705, 4294901760
        %v707 = vsub.f32 %v705, %v706
        %v708 = vand.u32 %v707, 4294901760
        %709 = vmatpush.xpose.msra.mxu0 %v708
        %v710 = vand.u32 %v466, 4294901760
        %v711 = vsub.f32 %v466, %v710
        %v712 = vand.u32 %v711, 4294901760
        %v713 = vsub.f32 %v711, %v712
        %v714 = vand.u32 %v713, 4294901760
        %715 = vmatpush.xpose.msra.mxu0 %v714
        %v716 = vand.u32 %v463, 4294901760
        %v717 = vsub.f32 %v463, %v716
        %v718 = vand.u32 %v717, 4294901760
        %v719 = vsub.f32 %v717, %v718
        %v720 = vand.u32 %v719, 4294901760
        %721 = vmatpush.xpose.msra.mxu0 %v720
        %v722 = vand.u32 %v460, 4294901760
        %v723 = vsub.f32 %v460, %v722
        %v724 = vand.u32 %v723, 4294901760
        %v725 = vsub.f32 %v723, %v724
        %v726 = vand.u32 %v725, 4294901760
        %727 = vmatpush.xpose.msra.mxu0 %v726
        %v728 = vand.u32 %v457, 4294901760
        %v729 = vsub.f32 %v457, %v728
        %v730 = vand.u32 %v729, 4294901760
        %v731 = vsub.f32 %v729, %v730
        %v732 = vand.u32 %v731, 4294901760
        %733 = vmatpush.xpose.msra.mxu0 %v732
        %v734 = vand.u32 %v454, 4294901760
        %v735 = vsub.f32 %v454, %v734
        %v736 = vand.u32 %v735, 4294901760
        %v737 = vsub.f32 %v735, %v736
        %v738 = vand.u32 %v737, 4294901760
        %739 = vmatpush.xpose.msra.mxu0 %v738
        %v740 = vand.u32 %v451, 4294901760
        %v741 = vsub.f32 %v451, %v740
        %v742 = vand.u32 %v741, 4294901760
        %v743 = vsub.f32 %v741, %v742
        %v744 = vand.u32 %v743, 4294901760
        %745 = vmatpush.xpose.msra.mxu0 %v744
        %v746 = vand.u32 %v448, 4294901760
        %v747 = vsub.f32 %v448, %v746
        %v748 = vand.u32 %v747, 4294901760
        %v749 = vsub.f32 %v747, %v748
        %v750 = vand.u32 %v749, 4294901760
        %751 = vmatpush.xpose.msra.mxu0 %v750
        %v752 = vand.u32 %v400, 4294901760
        %753 = vmatmul.f32.gmra.mxu0 %v752
        %v754 = vpop.f32.mrf.mxu0
        %v755 = vadd.f32 %v534, %v754
        %v756 = vand.u32 %v403, 4294901760
        %757 = vmatmul.f32.gmra.mxu0 %v756
        %v758 = vpop.f32.mrf.mxu0
        %v759 = vadd.f32 %v542, %v758
        %v760 = vand.u32 %v406, 4294901760
        %761 = vmatmul.f32.gmra.mxu0 %v760
        %v762 = vpop.f32.mrf.mxu0
        %v763 = vadd.f32 %v550, %v762
        %v764 = vand.u32 %v409, 4294901760
        %765 = vmatmul.f32.gmra.mxu0 %v764
        %v766 = vpop.f32.mrf.mxu0
        %v767 = vadd.f32 %v558, %v766
        %v768 = vand.u32 %v412, 4294901760
        %769 = vmatmul.f32.gmra.mxu0 %v768
        %v770 = vpop.f32.mrf.mxu0
        %v771 = vadd.f32 %v566, %v770
        %v772 = vand.u32 %v415, 4294901760
        %773 = vmatmul.f32.gmra.mxu0 %v772
        %v774 = vpop.f32.mrf.mxu0
        %v775 = vadd.f32 %v574, %v774
        %v776 = vand.u32 %v418, 4294901760
        %777 = vmatmul.f32.gmra.mxu0 %v776
        %v778 = vpop.f32.mrf.mxu0
        %v779 = vadd.f32 %v582, %v778
        %v780 = vand.u32 %v421, 4294901760
        %781 = vmatmul.f32.gmra.mxu0 %v780
        %v782 = vpop.f32.mrf.mxu0
        %v783 = vadd.f32 %v590, %v782
        %v784 = vand.u32 %v424, 4294901760
        %785 = vmatmul.f32.gmra.mxu0 %v784
        %v786 = vpop.f32.mrf.mxu0
        %v787 = vadd.f32 %v598, %v786
        %v788 = vand.u32 %v427, 4294901760
        %789 = vmatmul.f32.gmra.mxu0 %v788
        %v790 = vpop.f32.mrf.mxu0
        %v791 = vadd.f32 %v606, %v790
        %v792 = vand.u32 %v430, 4294901760
        %793 = vmatmul.f32.gmra.mxu0 %v792
        %v794 = vpop.f32.mrf.mxu0
        %v795 = vadd.f32 %v614, %v794
        %v796 = vand.u32 %v433, 4294901760
        %797 = vmatmul.f32.gmra.mxu0 %v796
        %v798 = vpop.f32.mrf.mxu0
        %v799 = vadd.f32 %v622, %v798
        %v800 = vand.u32 %v436, 4294901760
        %801 = vmatmul.f32.gmra.mxu0 %v800
        %v802 = vpop.f32.mrf.mxu0
        %v803 = vadd.f32 %v630, %v802
        %v804 = vand.u32 %v439, 4294901760
        %805 = vmatmul.f32.gmra.mxu0 %v804
        %v806 = vpop.f32.mrf.mxu0
        %v807 = vadd.f32 %v638, %v806
        %v808 = vand.u32 %v442, 4294901760
        %809 = vmatmul.f32.gmra.mxu0 %v808
        %v810 = vpop.f32.mrf.mxu0
        %v811 = vadd.f32 %v646, %v810
        %v812 = vand.u32 %v445, 4294901760
        %813 = vmatmul.f32.gmra.mxu0 %v812
        %v814 = vpop.f32.mrf.mxu0
        %v815 = vadd.f32 %v654, %v814
        %816 = vdwg.mxu0
        %v817 = vand.u32 %v493, 4294901760
        %v818 = vsub.f32 %v493, %v817
        %819 = vmatpush.xpose.msra.mxu0 %v818
        %v820 = vand.u32 %v490, 4294901760
        %v821 = vsub.f32 %v490, %v820
        %822 = vmatpush.xpose.msra.mxu0 %v821
        %v823 = vand.u32 %v487, 4294901760
        %v824 = vsub.f32 %v487, %v823
        %825 = vmatpush.xpose.msra.mxu0 %v824
        %v826 = vand.u32 %v484, 4294901760
        %v827 = vsub.f32 %v484, %v826
        %828 = vmatpush.xpose.msra.mxu0 %v827
        %v829 = vand.u32 %v481, 4294901760
        %v830 = vsub.f32 %v481, %v829
        %831 = vmatpush.xpose.msra.mxu0 %v830
        %v832 = vand.u32 %v478, 4294901760
        %v833 = vsub.f32 %v478, %v832
        %834 = vmatpush.xpose.msra.mxu0 %v833
        %v835 = vand.u32 %v475, 4294901760
        %v836 = vsub.f32 %v475, %v835
        %837 = vmatpush.xpose.msra.mxu0 %v836
        %v838 = vand.u32 %v472, 4294901760
        %v839 = vsub.f32 %v472, %v838
        %840 = vmatpush.xpose.msra.mxu0 %v839
        %v841 = vand.u32 %v469, 4294901760
        %v842 = vsub.f32 %v469, %v841
        %843 = vmatpush.xpose.msra.mxu0 %v842
        %v844 = vand.u32 %v466, 4294901760
        %v845 = vsub.f32 %v466, %v844
        %846 = vmatpush.xpose.msra.mxu0 %v845
        %v847 = vand.u32 %v463, 4294901760
        %v848 = vsub.f32 %v463, %v847
        %849 = vmatpush.xpose.msra.mxu0 %v848
        %v850 = vand.u32 %v460, 4294901760
        %v851 = vsub.f32 %v460, %v850
        %852 = vmatpush.xpose.msra.mxu0 %v851
        %v853 = vand.u32 %v457, 4294901760
        %v854 = vsub.f32 %v457, %v853
        %855 = vmatpush.xpose.msra.mxu0 %v854
        %v856 = vand.u32 %v454, 4294901760
        %v857 = vsub.f32 %v454, %v856
        %858 = vmatpush.xpose.msra.mxu0 %v857
        %v859 = vand.u32 %v451, 4294901760
        %v860 = vsub.f32 %v451, %v859
        %861 = vmatpush.xpose.msra.mxu0 %v860
        %v862 = vand.u32 %v448, 4294901760
        %v863 = vsub.f32 %v448, %v862
        %864 = vmatpush.xpose.msra.mxu0 %v863
        %v865 = vand.u32 %v400, 4294901760
        %v866 = vsub.f32 %v400, %v865
        %867 = vmatmul.f32.gmra.mxu0 %v866
        %v868 = vpop.f32.mrf.mxu0
        %v869 = vadd.f32 %v755, %v868
        %v870 = vand.u32 %v403, 4294901760
        %v871 = vsub.f32 %v403, %v870
        %872 = vmatmul.f32.gmra.mxu0 %v871
        %v873 = vpop.f32.mrf.mxu0
        %v874 = vadd.f32 %v759, %v873
        %v875 = vand.u32 %v406, 4294901760
        %v876 = vsub.f32 %v406, %v875
        %877 = vmatmul.f32.gmra.mxu0 %v876
        %v878 = vpop.f32.mrf.mxu0
        %v879 = vadd.f32 %v763, %v878
        %v880 = vand.u32 %v409, 4294901760
        %v881 = vsub.f32 %v409, %v880
        %882 = vmatmul.f32.gmra.mxu0 %v881
        %v883 = vpop.f32.mrf.mxu0
        %v884 = vadd.f32 %v767, %v883
        %v885 = vand.u32 %v412, 4294901760
        %v886 = vsub.f32 %v412, %v885
        %887 = vmatmul.f32.gmra.mxu0 %v886
        %v888 = vpop.f32.mrf.mxu0
        %v889 = vadd.f32 %v771, %v888
        %v890 = vand.u32 %v415, 4294901760
        %v891 = vsub.f32 %v415, %v890
        %892 = vmatmul.f32.gmra.mxu0 %v891
        %v893 = vpop.f32.mrf.mxu0
        %v894 = vadd.f32 %v775, %v893
        %v895 = vand.u32 %v418, 4294901760
        %v896 = vsub.f32 %v418, %v895
        %897 = vmatmul.f32.gmra.mxu0 %v896
        %v898 = vpop.f32.mrf.mxu0
        %v899 = vadd.f32 %v779, %v898
        %v900 = vand.u32 %v421, 4294901760
        %v901 = vsub.f32 %v421, %v900
        %902 = vmatmul.f32.gmra.mxu0 %v901
        %v903 = vpop.f32.mrf.mxu0
        %v904 = vadd.f32 %v783, %v903
        %v905 = vand.u32 %v424, 4294901760
        %v906 = vsub.f32 %v424, %v905
        %907 = vmatmul.f32.gmra.mxu0 %v906
        %v908 = vpop.f32.mrf.mxu0
        %v909 = vadd.f32 %v787, %v908
        %v910 = vand.u32 %v427, 4294901760
        %v911 = vsub.f32 %v427, %v910
        %912 = vmatmul.f32.gmra.mxu0 %v911
        %v913 = vpop.f32.mrf.mxu0
        %v914 = vadd.f32 %v791, %v913
        %v915 = vand.u32 %v430, 4294901760
        %v916 = vsub.f32 %v430, %v915
        %917 = vmatmul.f32.gmra.mxu0 %v916
        %v918 = vpop.f32.mrf.mxu0
        %v919 = vadd.f32 %v795, %v918
        %v920 = vand.u32 %v433, 4294901760
        %v921 = vsub.f32 %v433, %v920
        %922 = vmatmul.f32.gmra.mxu0 %v921
        %v923 = vpop.f32.mrf.mxu0
        %v924 = vadd.f32 %v799, %v923
        %v925 = vand.u32 %v436, 4294901760
        %v926 = vsub.f32 %v436, %v925
        %927 = vmatmul.f32.gmra.mxu0 %v926
        %v928 = vpop.f32.mrf.mxu0
        %v929 = vadd.f32 %v803, %v928
        %v930 = vand.u32 %v439, 4294901760
        %v931 = vsub.f32 %v439, %v930
        %932 = vmatmul.f32.gmra.mxu0 %v931
        %v933 = vpop.f32.mrf.mxu0
        %v934 = vadd.f32 %v807, %v933
        %v935 = vand.u32 %v442, 4294901760
        %v936 = vsub.f32 %v442, %v935
        %937 = vmatmul.f32.gmra.mxu0 %v936
        %v938 = vpop.f32.mrf.mxu0
        %v939 = vadd.f32 %v811, %v938
        %v940 = vand.u32 %v445, 4294901760
        %v941 = vsub.f32 %v445, %v940
        %942 = vmatmul.f32.gmra.mxu0 %v941
        %v943 = vpop.f32.mrf.mxu0
        %v944 = vadd.f32 %v815, %v943
        %945 = vdwg.mxu0
        %v946 = vand.u32 %v493, 4294901760
        %947 = vmatpush.xpose.msra.mxu0 %v946
        %v948 = vand.u32 %v490, 4294901760
        %949 = vmatpush.xpose.msra.mxu0 %v948
        %v950 = vand.u32 %v487, 4294901760
        %951 = vmatpush.xpose.msra.mxu0 %v950
        %v952 = vand.u32 %v484, 4294901760
        %953 = vmatpush.xpose.msra.mxu0 %v952
        %v954 = vand.u32 %v481, 4294901760
        %955 = vmatpush.xpose.msra.mxu0 %v954
        %v956 = vand.u32 %v478, 4294901760
        %957 = vmatpush.xpose.msra.mxu0 %v956
        %v958 = vand.u32 %v475, 4294901760
        %959 = vmatpush.xpose.msra.mxu0 %v958
        %v960 = vand.u32 %v472, 4294901760
        %961 = vmatpush.xpose.msra.mxu0 %v960
        %v962 = vand.u32 %v469, 4294901760
        %963 = vmatpush.xpose.msra.mxu0 %v962
        %v964 = vand.u32 %v466, 4294901760
        %965 = vmatpush.xpose.msra.mxu0 %v964
        %v966 = vand.u32 %v463, 4294901760
        %967 = vmatpush.xpose.msra.mxu0 %v966
        %v968 = vand.u32 %v460, 4294901760
        %969 = vmatpush.xpose.msra.mxu0 %v968
        %v970 = vand.u32 %v457, 4294901760
        %971 = vmatpush.xpose.msra.mxu0 %v970
        %v972 = vand.u32 %v454, 4294901760
        %973 = vmatpush.xpose.msra.mxu0 %v972
        %v974 = vand.u32 %v451, 4294901760
        %975 = vmatpush.xpose.msra.mxu0 %v974
        %v976 = vand.u32 %v448, 4294901760
        %977 = vmatpush.xpose.msra.mxu0 %v976
        %v978 = vand.u32 %v400, 4294901760
        %v979 = vsub.f32 %v400, %v978
        %v980 = vand.u32 %v979, 4294901760
        %981 = vmatmul.f32.gmra.mxu0 %v980
        %v982 = vpop.f32.mrf.mxu0
        %v983 = vadd.f32 %v869, %v982
        %v984 = vand.u32 %v403, 4294901760
        %v985 = vsub.f32 %v403, %v984
        %v986 = vand.u32 %v985, 4294901760
        %987 = vmatmul.f32.gmra.mxu0 %v986
        %v988 = vpop.f32.mrf.mxu0
        %v989 = vadd.f32 %v874, %v988
        %v990 = vand.u32 %v406, 4294901760
        %v991 = vsub.f32 %v406, %v990
        %v992 = vand.u32 %v991, 4294901760
        %993 = vmatmul.f32.gmra.mxu0 %v992
        %v994 = vpop.f32.mrf.mxu0
        %v995 = vadd.f32 %v879, %v994
        %v996 = vand.u32 %v409, 4294901760
        %v997 = vsub.f32 %v409, %v996
        %v998 = vand.u32 %v997, 4294901760
        %999 = vmatmul.f32.gmra.mxu0 %v998
        %v1000 = vpop.f32.mrf.mxu0
        %v1001 = vadd.f32 %v884, %v1000
        %v1002 = vand.u32 %v412, 4294901760
        %v1003 = vsub.f32 %v412, %v1002
        %v1004 = vand.u32 %v1003, 4294901760
        %1005 = vmatmul.f32.gmra.mxu0 %v1004
        %v1006 = vpop.f32.mrf.mxu0
        %v1007 = vadd.f32 %v889, %v1006
        %v1008 = vand.u32 %v415, 4294901760
        %v1009 = vsub.f32 %v415, %v1008
        %v1010 = vand.u32 %v1009, 4294901760
        %1011 = vmatmul.f32.gmra.mxu0 %v1010
        %v1012 = vpop.f32.mrf.mxu0
        %v1013 = vadd.f32 %v894, %v1012
        %v1014 = vand.u32 %v418, 4294901760
        %v1015 = vsub.f32 %v418, %v1014
        %v1016 = vand.u32 %v1015, 4294901760
        %1017 = vmatmul.f32.gmra.mxu0 %v1016
        %v1018 = vpop.f32.mrf.mxu0
        %v1019 = vadd.f32 %v899, %v1018
        %v1020 = vand.u32 %v421, 4294901760
        %v1021 = vsub.f32 %v421, %v1020
        %v1022 = vand.u32 %v1021, 4294901760
        %1023 = vmatmul.f32.gmra.mxu0 %v1022
        %v1024 = vpop.f32.mrf.mxu0
        %v1025 = vadd.f32 %v904, %v1024
        %v1026 = vand.u32 %v424, 4294901760
        %v1027 = vsub.f32 %v424, %v1026
        %v1028 = vand.u32 %v1027, 4294901760
        %1029 = vmatmul.f32.gmra.mxu0 %v1028
        %v1030 = vpop.f32.mrf.mxu0
        %v1031 = vadd.f32 %v909, %v1030
        %v1032 = vand.u32 %v427, 4294901760
        %v1033 = vsub.f32 %v427, %v1032
        %v1034 = vand.u32 %v1033, 4294901760
        %1035 = vmatmul.f32.gmra.mxu0 %v1034
        %v1036 = vpop.f32.mrf.mxu0
        %v1037 = vadd.f32 %v914, %v1036
        %v1038 = vand.u32 %v430, 4294901760
        %v1039 = vsub.f32 %v430, %v1038
        %v1040 = vand.u32 %v1039, 4294901760
        %1041 = vmatmul.f32.gmra.mxu0 %v1040
        %v1042 = vpop.f32.mrf.mxu0
        %v1043 = vadd.f32 %v919, %v1042
        %v1044 = vand.u32 %v433, 4294901760
        %v1045 = vsub.f32 %v433, %v1044
        %v1046 = vand.u32 %v1045, 4294901760
        %1047 = vmatmul.f32.gmra.mxu0 %v1046
        %v1048 = vpop.f32.mrf.mxu0
        %v1049 = vadd.f32 %v924, %v1048
        %v1050 = vand.u32 %v436, 4294901760
        %v1051 = vsub.f32 %v436, %v1050
        %v1052 = vand.u32 %v1051, 4294901760
        %1053 = vmatmul.f32.gmra.mxu0 %v1052
        %v1054 = vpop.f32.mrf.mxu0
        %v1055 = vadd.f32 %v929, %v1054
        %v1056 = vand.u32 %v439, 4294901760
        %v1057 = vsub.f32 %v439, %v1056
        %v1058 = vand.u32 %v1057, 4294901760
        %1059 = vmatmul.f32.gmra.mxu0 %v1058
        %v1060 = vpop.f32.mrf.mxu0
        %v1061 = vadd.f32 %v934, %v1060
        %v1062 = vand.u32 %v442, 4294901760
        %v1063 = vsub.f32 %v442, %v1062
        %v1064 = vand.u32 %v1063, 4294901760
        %1065 = vmatmul.f32.gmra.mxu0 %v1064
        %v1066 = vpop.f32.mrf.mxu0
        %v1067 = vadd.f32 %v939, %v1066
        %v1068 = vand.u32 %v445, 4294901760
        %v1069 = vsub.f32 %v445, %v1068
        %v1070 = vand.u32 %v1069, 4294901760
        %1071 = vmatmul.f32.gmra.mxu0 %v1070
        %v1072 = vpop.f32.mrf.mxu0
        %v1073 = vadd.f32 %v944, %v1072
        %1074 = vdwg.mxu0
        %v1075 = vand.u32 %v493, 4294901760
        %v1076 = vsub.f32 %v493, %v1075
        %v1077 = vand.u32 %v1076, 4294901760
        %1078 = vmatpush.xpose.msra.mxu0 %v1077
        %v1079 = vand.u32 %v490, 4294901760
        %v1080 = vsub.f32 %v490, %v1079
        %v1081 = vand.u32 %v1080, 4294901760
        %1082 = vmatpush.xpose.msra.mxu0 %v1081
        %v1083 = vand.u32 %v487, 4294901760
        %v1084 = vsub.f32 %v487, %v1083
        %v1085 = vand.u32 %v1084, 4294901760
        %1086 = vmatpush.xpose.msra.mxu0 %v1085
        %v1087 = vand.u32 %v484, 4294901760
        %v1088 = vsub.f32 %v484, %v1087
        %v1089 = vand.u32 %v1088, 4294901760
        %1090 = vmatpush.xpose.msra.mxu0 %v1089
        %v1091 = vand.u32 %v481, 4294901760
        %v1092 = vsub.f32 %v481, %v1091
        %v1093 = vand.u32 %v1092, 4294901760
        %1094 = vmatpush.xpose.msra.mxu0 %v1093
        %v1095 = vand.u32 %v478, 4294901760
        %v1096 = vsub.f32 %v478, %v1095
        %v1097 = vand.u32 %v1096, 4294901760
        %1098 = vmatpush.xpose.msra.mxu0 %v1097
        %v1099 = vand.u32 %v475, 4294901760
        %v1100 = vsub.f32 %v475, %v1099
        %v1101 = vand.u32 %v1100, 4294901760
        %1102 = vmatpush.xpose.msra.mxu0 %v1101
        %v1103 = vand.u32 %v472, 4294901760
        %v1104 = vsub.f32 %v472, %v1103
        %v1105 = vand.u32 %v1104, 4294901760
        %1106 = vmatpush.xpose.msra.mxu0 %v1105
        %v1107 = vand.u32 %v469, 4294901760
        %v1108 = vsub.f32 %v469, %v1107
        %v1109 = vand.u32 %v1108, 4294901760
        %1110 = vmatpush.xpose.msra.mxu0 %v1109
        %v1111 = vand.u32 %v466, 4294901760
        %v1112 = vsub.f32 %v466, %v1111
        %v1113 = vand.u32 %v1112, 4294901760
        %1114 = vmatpush.xpose.msra.mxu0 %v1113
        %v1115 = vand.u32 %v463, 4294901760
        %v1116 = vsub.f32 %v463, %v1115
        %v1117 = vand.u32 %v1116, 4294901760
        %1118 = vmatpush.xpose.msra.mxu0 %v1117
        %v1119 = vand.u32 %v460, 4294901760
        %v1120 = vsub.f32 %v460, %v1119
        %v1121 = vand.u32 %v1120, 4294901760
        %1122 = vmatpush.xpose.msra.mxu0 %v1121
        %v1123 = vand.u32 %v457, 4294901760
        %v1124 = vsub.f32 %v457, %v1123
        %v1125 = vand.u32 %v1124, 4294901760
        %1126 = vmatpush.xpose.msra.mxu0 %v1125
        %v1127 = vand.u32 %v454, 4294901760
        %v1128 = vsub.f32 %v454, %v1127
        %v1129 = vand.u32 %v1128, 4294901760
        %1130 = vmatpush.xpose.msra.mxu0 %v1129
        %v1131 = vand.u32 %v451, 4294901760
        %v1132 = vsub.f32 %v451, %v1131
        %v1133 = vand.u32 %v1132, 4294901760
        %1134 = vmatpush.xpose.msra.mxu0 %v1133
        %v1135 = vand.u32 %v448, 4294901760
        %v1136 = vsub.f32 %v448, %v1135
        %v1137 = vand.u32 %v1136, 4294901760
        %1138 = vmatpush.xpose.msra.mxu0 %v1137
        %v1139 = vand.u32 %v400, 4294901760
        %1140 = vmatmul.f32.gmra.mxu0 %v1139
        %v1141 = vpop.f32.mrf.mxu0
        %v1142 = vadd.f32 %v983, %v1141
        %v1143 = vand.u32 %v403, 4294901760
        %1144 = vmatmul.f32.gmra.mxu0 %v1143
        %v1145 = vpop.f32.mrf.mxu0
        %v1146 = vadd.f32 %v989, %v1145
        %v1147 = vand.u32 %v406, 4294901760
        %1148 = vmatmul.f32.gmra.mxu0 %v1147
        %v1149 = vpop.f32.mrf.mxu0
        %v1150 = vadd.f32 %v995, %v1149
        %v1151 = vand.u32 %v409, 4294901760
        %1152 = vmatmul.f32.gmra.mxu0 %v1151
        %v1153 = vpop.f32.mrf.mxu0
        %v1154 = vadd.f32 %v1001, %v1153
        %v1155 = vand.u32 %v412, 4294901760
        %1156 = vmatmul.f32.gmra.mxu0 %v1155
        %v1157 = vpop.f32.mrf.mxu0
        %v1158 = vadd.f32 %v1007, %v1157
        %v1159 = vand.u32 %v415, 4294901760
        %1160 = vmatmul.f32.gmra.mxu0 %v1159
        %v1161 = vpop.f32.mrf.mxu0
        %v1162 = vadd.f32 %v1013, %v1161
        %v1163 = vand.u32 %v418, 4294901760
        %1164 = vmatmul.f32.gmra.mxu0 %v1163
        %v1165 = vpop.f32.mrf.mxu0
        %v1166 = vadd.f32 %v1019, %v1165
        %v1167 = vand.u32 %v421, 4294901760
        %1168 = vmatmul.f32.gmra.mxu0 %v1167
        %v1169 = vpop.f32.mrf.mxu0
        %v1170 = vadd.f32 %v1025, %v1169
        %v1171 = vand.u32 %v424, 4294901760
        %1172 = vmatmul.f32.gmra.mxu0 %v1171
        %v1173 = vpop.f32.mrf.mxu0
        %v1174 = vadd.f32 %v1031, %v1173
        %v1175 = vand.u32 %v427, 4294901760
        %1176 = vmatmul.f32.gmra.mxu0 %v1175
        %v1177 = vpop.f32.mrf.mxu0
        %v1178 = vadd.f32 %v1037, %v1177
        %v1179 = vand.u32 %v430, 4294901760
        %1180 = vmatmul.f32.gmra.mxu0 %v1179
        %v1181 = vpop.f32.mrf.mxu0
        %v1182 = vadd.f32 %v1043, %v1181
        %v1183 = vand.u32 %v433, 4294901760
        %1184 = vmatmul.f32.gmra.mxu0 %v1183
        %v1185 = vpop.f32.mrf.mxu0
        %v1186 = vadd.f32 %v1049, %v1185
        %v1187 = vand.u32 %v436, 4294901760
        %1188 = vmatmul.f32.gmra.mxu0 %v1187
        %v1189 = vpop.f32.mrf.mxu0
        %v1190 = vadd.f32 %v1055, %v1189
        %v1191 = vand.u32 %v439, 4294901760
        %1192 = vmatmul.f32.gmra.mxu0 %v1191
        %v1193 = vpop.f32.mrf.mxu0
        %v1194 = vadd.f32 %v1061, %v1193
        %v1195 = vand.u32 %v442, 4294901760
        %1196 = vmatmul.f32.gmra.mxu0 %v1195
        %v1197 = vpop.f32.mrf.mxu0
        %v1198 = vadd.f32 %v1067, %v1197
        %v1199 = vand.u32 %v445, 4294901760
        %1200 = vmatmul.f32.gmra.mxu0 %v1199
        %v1201 = vpop.f32.mrf.mxu0
        %v1202 = vadd.f32 %v1073, %v1201
        %1203 = vdwg.mxu0
        %v1204 = vand.u32 %v493, 4294901760
        %1205 = vmatpush.xpose.msra.mxu0 %v1204
        %v1206 = vand.u32 %v490, 4294901760
        %1207 = vmatpush.xpose.msra.mxu0 %v1206
        %v1208 = vand.u32 %v487, 4294901760
        %1209 = vmatpush.xpose.msra.mxu0 %v1208
        %v1210 = vand.u32 %v484, 4294901760
        %1211 = vmatpush.xpose.msra.mxu0 %v1210
        %v1212 = vand.u32 %v481, 4294901760
        %1213 = vmatpush.xpose.msra.mxu0 %v1212
        %v1214 = vand.u32 %v478, 4294901760
        %1215 = vmatpush.xpose.msra.mxu0 %v1214
        %v1216 = vand.u32 %v475, 4294901760
        %1217 = vmatpush.xpose.msra.mxu0 %v1216
        %v1218 = vand.u32 %v472, 4294901760
        %1219 = vmatpush.xpose.msra.mxu0 %v1218
        %v1220 = vand.u32 %v469, 4294901760
        %1221 = vmatpush.xpose.msra.mxu0 %v1220
        %v1222 = vand.u32 %v466, 4294901760
        %1223 = vmatpush.xpose.msra.mxu0 %v1222
        %v1224 = vand.u32 %v463, 4294901760
        %1225 = vmatpush.xpose.msra.mxu0 %v1224
        %v1226 = vand.u32 %v460, 4294901760
        %1227 = vmatpush.xpose.msra.mxu0 %v1226
        %v1228 = vand.u32 %v457, 4294901760
        %1229 = vmatpush.xpose.msra.mxu0 %v1228
        %v1230 = vand.u32 %v454, 4294901760
        %1231 = vmatpush.xpose.msra.mxu0 %v1230
        %v1232 = vand.u32 %v451, 4294901760
        %1233 = vmatpush.xpose.msra.mxu0 %v1232
        %v1234 = vand.u32 %v448, 4294901760
        %1235 = vmatpush.xpose.msra.mxu0 %v1234
        %v1236 = vand.u32 %v400, 4294901760
        %1237 = vmatmul.f32.gmra.mxu0 %v1236
        %v1238 = vpop.f32.mrf.mxu0
        %v1239 = vadd.f32 %v1142, %v1238
        %v1240 = vand.u32 %v403, 4294901760
        %1241 = vmatmul.f32.gmra.mxu0 %v1240
        %v1242 = vpop.f32.mrf.mxu0
        %v1243 = vadd.f32 %v1146, %v1242
        %v1244 = vand.u32 %v406, 4294901760
        %1245 = vmatmul.f32.gmra.mxu0 %v1244
        %v1246 = vpop.f32.mrf.mxu0
        %v1247 = vadd.f32 %v1150, %v1246
        %v1248 = vand.u32 %v409, 4294901760
        %1249 = vmatmul.f32.gmra.mxu0 %v1248
        %v1250 = vpop.f32.mrf.mxu0
        %v1251 = vadd.f32 %v1154, %v1250
        %v1252 = vand.u32 %v412, 4294901760
        %1253 = vmatmul.f32.gmra.mxu0 %v1252
        %v1254 = vpop.f32.mrf.mxu0
        %v1255 = vadd.f32 %v1158, %v1254
        %v1256 = vand.u32 %v415, 4294901760
        %1257 = vmatmul.f32.gmra.mxu0 %v1256
        %v1258 = vpop.f32.mrf.mxu0
        %v1259 = vadd.f32 %v1162, %v1258
        %v1260 = vand.u32 %v418, 4294901760
        %1261 = vmatmul.f32.gmra.mxu0 %v1260
        %v1262 = vpop.f32.mrf.mxu0
        %v1263 = vadd.f32 %v1166, %v1262
        %v1264 = vand.u32 %v421, 4294901760
        %1265 = vmatmul.f32.gmra.mxu0 %v1264
        %v1266 = vpop.f32.mrf.mxu0
        %v1267 = vadd.f32 %v1170, %v1266
        %v1268 = vand.u32 %v424, 4294901760
        %1269 = vmatmul.f32.gmra.mxu0 %v1268
        %v1270 = vpop.f32.mrf.mxu0
        %v1271 = vadd.f32 %v1174, %v1270
        %v1272 = vand.u32 %v427, 4294901760
        %1273 = vmatmul.f32.gmra.mxu0 %v1272
        %v1274 = vpop.f32.mrf.mxu0
        %v1275 = vadd.f32 %v1178, %v1274
        %v1276 = vand.u32 %v430, 4294901760
        %1277 = vmatmul.f32.gmra.mxu0 %v1276
        %v1278 = vpop.f32.mrf.mxu0
        %v1279 = vadd.f32 %v1182, %v1278
        %v1280 = vand.u32 %v433, 4294901760
        %1281 = vmatmul.f32.gmra.mxu0 %v1280
        %v1282 = vpop.f32.mrf.mxu0
        %v1283 = vadd.f32 %v1186, %v1282
        %v1284 = vand.u32 %v436, 4294901760
        %1285 = vmatmul.f32.gmra.mxu0 %v1284
        %v1286 = vpop.f32.mrf.mxu0
        %v1287 = vadd.f32 %v1190, %v1286
        %v1288 = vand.u32 %v439, 4294901760
        %1289 = vmatmul.f32.gmra.mxu0 %v1288
        %v1290 = vpop.f32.mrf.mxu0
        %v1291 = vadd.f32 %v1194, %v1290
        %v1292 = vand.u32 %v442, 4294901760
        %1293 = vmatmul.f32.gmra.mxu0 %v1292
        %v1294 = vpop.f32.mrf.mxu0
        %v1295 = vadd.f32 %v1198, %v1294
        %v1296 = vand.u32 %v445, 4294901760
        %1297 = vmatmul.f32.gmra.mxu0 %v1296
        %v1298 = vpop.f32.mrf.mxu0
        %v1299 = vadd.f32 %v1202, %v1298
        %1300 = vdwg.mxu0
        %v1301 = vlaneseq
        %v1302 = vshrl.u32 %v1301, 7
        %v1303 = vadd.s32 %v1302, 8
        %v1304 = vadd.s32 %v1302, 16
        %v1305 = vadd.s32 %v1302, 24
        %v1306 = vadd.s32 %v1302, 32
        %v1307 = vadd.s32 %v1302, 40
        %v1308 = vadd.s32 %v1302, 48
        %v1309 = vadd.s32 %v1302, 56
        %v1310 = vadd.s32 %v1302, 64
        %v1311 = vadd.s32 %v1302, 72
        %v1312 = vadd.s32 %v1302, 80
        %v1313 = vadd.s32 %v1302, 88
        %v1314 = vadd.s32 %v1302, 96
        %v1315 = vadd.s32 %v1302, 104
        %v1316 = vadd.s32 %v1302, 112
        %v1317 = vadd.s32 %v1302, 120
        %v1318 = vstv %s344
        %v1319 = vadd.s32 %v1318, %v1302
        %v1320 = vadd.s32 %v1318, %v1303
        %v1321 = vadd.s32 %v1318, %v1304
        %v1322 = vadd.s32 %v1318, %v1305
        %v1323 = vadd.s32 %v1318, %v1306
        %v1324 = vadd.s32 %v1318, %v1307
        %v1325 = vadd.s32 %v1318, %v1308
        %v1326 = vadd.s32 %v1318, %v1309
        %v1327 = vadd.s32 %v1318, %v1310
        %v1328 = vadd.s32 %v1318, %v1311
        %v1329 = vadd.s32 %v1318, %v1312
        %v1330 = vadd.s32 %v1318, %v1313
        %v1331 = vadd.s32 %v1318, %v1314
        %v1332 = vadd.s32 %v1318, %v1315
        %v1333 = vadd.s32 %v1318, %v1316
        %v1334 = vadd.s32 %v1318, %v1317
        %v1335 = vlaneseq
        %v1336 = vand.u32 %v1335, 127
        %v1337 = vstv %s343
        %v1338 = vadd.s32 %v1337, %v1336
        %vm1339 = vcmp.ge.s32.totalorder %v1319, %v1338
        %vm1340 = vcmp.ge.s32.totalorder %v1320, %v1338
        %vm1341 = vcmp.ge.s32.totalorder %v1321, %v1338
        %vm1342 = vcmp.ge.s32.totalorder %v1322, %v1338
        %vm1343 = vcmp.ge.s32.totalorder %v1323, %v1338
        %vm1344 = vcmp.ge.s32.totalorder %v1324, %v1338
        %vm1345 = vcmp.ge.s32.totalorder %v1325, %v1338
        %vm1346 = vcmp.ge.s32.totalorder %v1326, %v1338
        %vm1347 = vcmp.ge.s32.totalorder %v1327, %v1338
        %vm1348 = vcmp.ge.s32.totalorder %v1328, %v1338
        %vm1349 = vcmp.ge.s32.totalorder %v1329, %v1338
        %vm1350 = vcmp.ge.s32.totalorder %v1330, %v1338
        %vm1351 = vcmp.ge.s32.totalorder %v1331, %v1338
        %vm1352 = vcmp.ge.s32.totalorder %v1332, %v1338
        %vm1353 = vcmp.ge.s32.totalorder %v1333, %v1338
        %vm1354 = vcmp.ge.s32.totalorder %v1334, %v1338
        %v1355 = vsel %vm1339, %v1239, -1e+30
        %v1356 = vsel %vm1340, %v1243, -1e+30
        %v1357 = vsel %vm1341, %v1247, -1e+30
        %v1358 = vsel %vm1342, %v1251, -1e+30
        %v1359 = vsel %vm1343, %v1255, -1e+30
        %v1360 = vsel %vm1344, %v1259, -1e+30
        %v1361 = vsel %vm1345, %v1263, -1e+30
        %v1362 = vsel %vm1346, %v1267, -1e+30
        %v1363 = vsel %vm1347, %v1271, -1e+30
        %v1364 = vsel %vm1348, %v1275, -1e+30
        %v1365 = vsel %vm1349, %v1279, -1e+30
        %v1366 = vsel %vm1350, %v1283, -1e+30
        %v1367 = vsel %vm1351, %v1287, -1e+30
        %v1368 = vsel %vm1352, %v1291, -1e+30
        %v1369 = vsel %vm1353, %v1295, -1e+30
        %v1370 = vsel %vm1354, %v1299, -1e+30
        %v1371 = vld [vmem:[#allocation2] sm:$0xff]
        %v1372 = vld [vmem:[#allocation2 + $0x8] sm:$0xff]
        %v1373 = vld [vmem:[#allocation2 + $0x10] sm:$0xff]
        %v1374 = vld [vmem:[#allocation2 + $0x18] sm:$0xff]
        %v1375 = vld [vmem:[#allocation2 + $0x20] sm:$0xff]
        %v1376 = vld [vmem:[#allocation2 + $0x28] sm:$0xff]
        %v1377 = vld [vmem:[#allocation2 + $0x30] sm:$0xff]
        %v1378 = vld [vmem:[#allocation2 + $0x38] sm:$0xff]
        %v1379 = vld [vmem:[#allocation2 + $0x40] sm:$0xff]
        %v1380 = vld [vmem:[#allocation2 + $0x48] sm:$0xff]
        %v1381 = vld [vmem:[#allocation2 + $0x50] sm:$0xff]
        %v1382 = vld [vmem:[#allocation2 + $0x58] sm:$0xff]
        %v1383 = vld [vmem:[#allocation2 + $0x60] sm:$0xff]
        %v1384 = vld [vmem:[#allocation2 + $0x68] sm:$0xff]
        %v1385 = vld [vmem:[#allocation2 + $0x70] sm:$0xff]
        %v1386 = vld [vmem:[#allocation2 + $0x78] sm:$0xff]
        %1387 = vmax.xlane.f32.xlu0 %v1355
        %v1388 = vpop.xlane.xlu0 %1387
        %1389 = vmax.xlane.f32.xlu0 %v1356
        %v1390 = vpop.xlane.xlu0 %1389
        %1391 = vmax.xlane.f32.xlu0 %v1357
        %v1392 = vpop.xlane.xlu0 %1391
        %1393 = vmax.xlane.f32.xlu0 %v1358
        %v1394 = vpop.xlane.xlu0 %1393
        %1395 = vmax.xlane.f32.xlu0 %v1359
        %v1396 = vpop.xlane.xlu0 %1395
        %1397 = vmax.xlane.f32.xlu0 %v1360
        %v1398 = vpop.xlane.xlu0 %1397
        %1399 = vmax.xlane.f32.xlu0 %v1361
        %v1400 = vpop.xlane.xlu0 %1399
        %1401 = vmax.xlane.f32.xlu0 %v1362
        %v1402 = vpop.xlane.xlu0 %1401
        %1403 = vmax.xlane.f32.xlu0 %v1363
        %v1404 = vpop.xlane.xlu0 %1403
        %1405 = vmax.xlane.f32.xlu0 %v1364
        %v1406 = vpop.xlane.xlu0 %1405
        %1407 = vmax.xlane.f32.xlu0 %v1365
        %v1408 = vpop.xlane.xlu0 %1407
        %1409 = vmax.xlane.f32.xlu0 %v1366
        %v1410 = vpop.xlane.xlu0 %1409
        %1411 = vmax.xlane.f32.xlu0 %v1367
        %v1412 = vpop.xlane.xlu0 %1411
        %1413 = vmax.xlane.f32.xlu0 %v1368
        %v1414 = vpop.xlane.xlu0 %1413
        %1415 = vmax.xlane.f32.xlu0 %v1369
        %v1416 = vpop.xlane.xlu0 %1415
        %1417 = vmax.xlane.f32.xlu0 %v1370
        %v1418 = vpop.xlane.xlu0 %1417
        %v1419 = vmax.f32 %v1371, %v1388
        %v1420 = vmax.f32 %v1372, %v1390
        %v1421 = vmax.f32 %v1373, %v1392
        %v1422 = vmax.f32 %v1374, %v1394
        %v1423 = vmax.f32 %v1375, %v1396
        %v1424 = vmax.f32 %v1376, %v1398
        %v1425 = vmax.f32 %v1377, %v1400
        %v1426 = vmax.f32 %v1378, %v1402
        %v1427 = vmax.f32 %v1379, %v1404
        %v1428 = vmax.f32 %v1380, %v1406
        %v1429 = vmax.f32 %v1381, %v1408
        %v1430 = vmax.f32 %v1382, %v1410
        %v1431 = vmax.f32 %v1383, %v1412
        %v1432 = vmax.f32 %v1384, %v1414
        %v1433 = vmax.f32 %v1385, %v1416
        %v1434 = vmax.f32 %v1386, %v1418
        %v1435 = vsub.f32 %v1371, %v1419
        %v1436 = vsub.f32 %v1372, %v1420
        %v1437 = vsub.f32 %v1373, %v1421
        %v1438 = vsub.f32 %v1374, %v1422
        %v1439 = vsub.f32 %v1375, %v1423
        %v1440 = vsub.f32 %v1376, %v1424
        %v1441 = vsub.f32 %v1377, %v1425
        %v1442 = vsub.f32 %v1378, %v1426
        %v1443 = vsub.f32 %v1379, %v1427
        %v1444 = vsub.f32 %v1380, %v1428
        %v1445 = vsub.f32 %v1381, %v1429
        %v1446 = vsub.f32 %v1382, %v1430
        %v1447 = vsub.f32 %v1383, %v1431
        %v1448 = vsub.f32 %v1384, %v1432
        %v1449 = vsub.f32 %v1385, %v1433
        %v1450 = vsub.f32 %v1386, %v1434
        %v1451 = vmul.f32 %v1435, 1.442695
        %v1452 = vpow.pop %v1451
        %v1453 = vmul.f32 %v1436, 1.442695
        %v1454 = vpow.pop %v1453
        %v1455 = vmul.f32 %v1437, 1.442695
        %v1456 = vpow.pop %v1455
        %v1457 = vmul.f32 %v1438, 1.442695
        %v1458 = vpow.pop %v1457
        %v1459 = vmul.f32 %v1439, 1.442695
        %v1460 = vpow.pop %v1459
        %v1461 = vmul.f32 %v1440, 1.442695
        %v1462 = vpow.pop %v1461
        %v1463 = vmul.f32 %v1441, 1.442695
        %v1464 = vpow.pop %v1463
        %v1465 = vmul.f32 %v1442, 1.442695
        %v1466 = vpow.pop %v1465
        %v1467 = vmul.f32 %v1443, 1.442695
        %v1468 = vpow.pop %v1467
        %v1469 = vmul.f32 %v1444, 1.442695
        %v1470 = vpow.pop %v1469
        %v1471 = vmul.f32 %v1445, 1.442695
        %v1472 = vpow.pop %v1471
        %v1473 = vmul.f32 %v1446, 1.442695
        %v1474 = vpow.pop %v1473
        %v1475 = vmul.f32 %v1447, 1.442695
        %v1476 = vpow.pop %v1475
        %v1477 = vmul.f32 %v1448, 1.442695
        %v1478 = vpow.pop %v1477
        %v1479 = vmul.f32 %v1449, 1.442695
        %v1480 = vpow.pop %v1479
        %v1481 = vmul.f32 %v1450, 1.442695
        %v1482 = vpow.pop %v1481
        %1484 = vset.pattern.permute.xlu0 0
        %1485 = vperm.xlu0 %1484, %v1419
        %v1486 = vpop.permute.xlu0 %1485
        %1489 = vset.pattern.permute.xlu0 0
        %1490 = vperm.xlu0 %1489, %v1420
        %v1491 = vpop.permute.xlu0 %1490
        %1494 = vset.pattern.permute.xlu0 0
        %1495 = vperm.xlu0 %1494, %v1421
        %v1496 = vpop.permute.xlu0 %1495
        %1499 = vset.pattern.permute.xlu0 0
        %1500 = vperm.xlu0 %1499, %v1422
        %v1501 = vpop.permute.xlu0 %1500
        %1504 = vset.pattern.permute.xlu0 0
        %1505 = vperm.xlu0 %1504, %v1423
        %v1506 = vpop.permute.xlu0 %1505
        %1509 = vset.pattern.permute.xlu0 0
        %1510 = vperm.xlu0 %1509, %v1424
        %v1511 = vpop.permute.xlu0 %1510
        %1514 = vset.pattern.permute.xlu0 0
        %1515 = vperm.xlu0 %1514, %v1425
        %v1516 = vpop.permute.xlu0 %1515
        %1519 = vset.pattern.permute.xlu0 0
        %1520 = vperm.xlu0 %1519, %v1426
        %v1521 = vpop.permute.xlu0 %1520
        %1524 = vset.pattern.permute.xlu0 0
        %1525 = vperm.xlu0 %1524, %v1427
        %v1526 = vpop.permute.xlu0 %1525
        %1529 = vset.pattern.permute.xlu0 0
        %1530 = vperm.xlu0 %1529, %v1428
        %v1531 = vpop.permute.xlu0 %1530
        %1534 = vset.pattern.permute.xlu0 0
        %1535 = vperm.xlu0 %1534, %v1429
        %v1536 = vpop.permute.xlu0 %1535
        %1539 = vset.pattern.permute.xlu0 0
        %1540 = vperm.xlu0 %1539, %v1430
        %v1541 = vpop.permute.xlu0 %1540
        %1544 = vset.pattern.permute.xlu0 0
        %1545 = vperm.xlu0 %1544, %v1431
        %v1546 = vpop.permute.xlu0 %1545
        %1549 = vset.pattern.permute.xlu0 0
        %1550 = vperm.xlu0 %1549, %v1432
        %v1551 = vpop.permute.xlu0 %1550
        %1554 = vset.pattern.permute.xlu0 0
        %1555 = vperm.xlu0 %1554, %v1433
        %v1556 = vpop.permute.xlu0 %1555
        %1559 = vset.pattern.permute.xlu0 0
        %1560 = vperm.xlu0 %1559, %v1434
        %v1561 = vpop.permute.xlu0 %1560
        %v1563 = vsub.f32 %v1355, %v1486
        %v1564 = vsub.f32 %v1356, %v1491
        %v1565 = vsub.f32 %v1357, %v1496
        %v1566 = vsub.f32 %v1358, %v1501
        %v1567 = vsub.f32 %v1359, %v1506
        %v1568 = vsub.f32 %v1360, %v1511
        %v1569 = vsub.f32 %v1361, %v1516
        %v1570 = vsub.f32 %v1362, %v1521
        %v1571 = vsub.f32 %v1363, %v1526
        %v1572 = vsub.f32 %v1364, %v1531
        %v1573 = vsub.f32 %v1365, %v1536
        %v1574 = vsub.f32 %v1366, %v1541
        %v1575 = vsub.f32 %v1367, %v1546
        %v1576 = vsub.f32 %v1368, %v1551
        %v1577 = vsub.f32 %v1369, %v1556
        %v1578 = vsub.f32 %v1370, %v1561
        %v1579 = vmul.f32 %v1563, 1.442695
        %v1580 = vpow.pop %v1579
        %v1581 = vmul.f32 %v1564, 1.442695
        %v1582 = vpow.pop %v1581
        %v1583 = vmul.f32 %v1565, 1.442695
        %v1584 = vpow.pop %v1583
        %v1585 = vmul.f32 %v1566, 1.442695
        %v1586 = vpow.pop %v1585
        %v1587 = vmul.f32 %v1567, 1.442695
        %v1588 = vpow.pop %v1587
        %v1589 = vmul.f32 %v1568, 1.442695
        %v1590 = vpow.pop %v1589
        %v1591 = vmul.f32 %v1569, 1.442695
        %v1592 = vpow.pop %v1591
        %v1593 = vmul.f32 %v1570, 1.442695
        %v1594 = vpow.pop %v1593
        %v1595 = vmul.f32 %v1571, 1.442695
        %v1596 = vpow.pop %v1595
        %v1597 = vmul.f32 %v1572, 1.442695
        %v1598 = vpow.pop %v1597
        %v1599 = vmul.f32 %v1573, 1.442695
        %v1600 = vpow.pop %v1599
        %v1601 = vmul.f32 %v1574, 1.442695
        %v1602 = vpow.pop %v1601
        %v1603 = vmul.f32 %v1575, 1.442695
        %v1604 = vpow.pop %v1603
        %v1605 = vmul.f32 %v1576, 1.442695
        %v1606 = vpow.pop %v1605
        %v1607 = vmul.f32 %v1577, 1.442695
        %v1608 = vpow.pop %v1607
        %v1609 = vmul.f32 %v1578, 1.442695
        %v1610 = vpow.pop %v1609
        %v1611 = vld [vmem:[#allocation3] sm:$0xff]
        %v1612 = vld [vmem:[#allocation3 + $0x8] sm:$0xff]
        %v1613 = vld [vmem:[#allocation3 + $0x10] sm:$0xff]
        %v1614 = vld [vmem:[#allocation3 + $0x18] sm:$0xff]
        %v1615 = vld [vmem:[#allocation3 + $0x20] sm:$0xff]
        %v1616 = vld [vmem:[#allocation3 + $0x28] sm:$0xff]
        %v1617 = vld [vmem:[#allocation3 + $0x30] sm:$0xff]
        %v1618 = vld [vmem:[#allocation3 + $0x38] sm:$0xff]
        %v1619 = vld [vmem:[#allocation3 + $0x40] sm:$0xff]
        %v1620 = vld [vmem:[#allocation3 + $0x48] sm:$0xff]
        %v1621 = vld [vmem:[#allocation3 + $0x50] sm:$0xff]
        %v1622 = vld [vmem:[#allocation3 + $0x58] sm:$0xff]
        %v1623 = vld [vmem:[#allocation3 + $0x60] sm:$0xff]
        %v1624 = vld [vmem:[#allocation3 + $0x68] sm:$0xff]
        %v1625 = vld [vmem:[#allocation3 + $0x70] sm:$0xff]
        %v1626 = vld [vmem:[#allocation3 + $0x78] sm:$0xff]
        %v1627 = vmul.f32 %v1452, %v1611
        %v1628 = vmul.f32 %v1454, %v1612
        %v1629 = vmul.f32 %v1456, %v1613
        %v1630 = vmul.f32 %v1458, %v1614
        %v1631 = vmul.f32 %v1460, %v1615
        %v1632 = vmul.f32 %v1462, %v1616
        %v1633 = vmul.f32 %v1464, %v1617
        %v1634 = vmul.f32 %v1466, %v1618
        %v1635 = vmul.f32 %v1468, %v1619
        %v1636 = vmul.f32 %v1470, %v1620
        %v1637 = vmul.f32 %v1472, %v1621
        %v1638 = vmul.f32 %v1474, %v1622
        %v1639 = vmul.f32 %v1476, %v1623
        %v1640 = vmul.f32 %v1478, %v1624
        %v1641 = vmul.f32 %v1480, %v1625
        %v1642 = vmul.f32 %v1482, %v1626
        %1643 = vadd.xlane.f32.xlu0 %v1580
        %v1644 = vpop.xlane.xlu0 %1643
        %1645 = vadd.xlane.f32.xlu0 %v1582
        %v1646 = vpop.xlane.xlu0 %1645
        %1647 = vadd.xlane.f32.xlu0 %v1584
        %v1648 = vpop.xlane.xlu0 %1647
        %1649 = vadd.xlane.f32.xlu0 %v1586
        %v1650 = vpop.xlane.xlu0 %1649
        %1651 = vadd.xlane.f32.xlu0 %v1588
        %v1652 = vpop.xlane.xlu0 %1651
        %1653 = vadd.xlane.f32.xlu0 %v1590
        %v1654 = vpop.xlane.xlu0 %1653
        %1655 = vadd.xlane.f32.xlu0 %v1592
        %v1656 = vpop.xlane.xlu0 %1655
        %1657 = vadd.xlane.f32.xlu0 %v1594
        %v1658 = vpop.xlane.xlu0 %1657
        %1659 = vadd.xlane.f32.xlu0 %v1596
        %v1660 = vpop.xlane.xlu0 %1659
        %1661 = vadd.xlane.f32.xlu0 %v1598
        %v1662 = vpop.xlane.xlu0 %1661
        %1663 = vadd.xlane.f32.xlu0 %v1600
        %v1664 = vpop.xlane.xlu0 %1663
        %1665 = vadd.xlane.f32.xlu0 %v1602
        %v1666 = vpop.xlane.xlu0 %1665
        %1667 = vadd.xlane.f32.xlu0 %v1604
        %v1668 = vpop.xlane.xlu0 %1667
        %1669 = vadd.xlane.f32.xlu0 %v1606
        %v1670 = vpop.xlane.xlu0 %1669
        %1671 = vadd.xlane.f32.xlu0 %v1608
        %v1672 = vpop.xlane.xlu0 %1671
        %1673 = vadd.xlane.f32.xlu0 %v1610
        %v1674 = vpop.xlane.xlu0 %1673
        %v1675 = vadd.f32 %v1627, %v1644
        %v1676 = vadd.f32 %v1628, %v1646
        %v1677 = vadd.f32 %v1629, %v1648
        %v1678 = vadd.f32 %v1630, %v1650
        %v1679 = vadd.f32 %v1631, %v1652
        %v1680 = vadd.f32 %v1632, %v1654
        %v1681 = vadd.f32 %v1633, %v1656
        %v1682 = vadd.f32 %v1634, %v1658
        %v1683 = vadd.f32 %v1635, %v1660
        %v1684 = vadd.f32 %v1636, %v1662
        %v1685 = vadd.f32 %v1637, %v1664
        %v1686 = vadd.f32 %v1638, %v1666
        %v1687 = vadd.f32 %v1639, %v1668
        %v1688 = vadd.f32 %v1640, %v1670
        %v1689 = vadd.f32 %v1641, %v1672
        %v1690 = vadd.f32 %v1642, %v1674
        %vm1691 = vcmask 7168
        %1692 = vst.msk [vmem:[#allocation3] sm:$0xff] %vm1691, %v1675
        %1693 = vst.msk [vmem:[#allocation3 + $0x8] sm:$0xff] %vm1691, %v1676
        %1694 = vst.msk [vmem:[#allocation3 + $0x10] sm:$0xff] %vm1691, %v1677
        %1695 = vst.msk [vmem:[#allocation3 + $0x18] sm:$0xff] %vm1691, %v1678
        %1696 = vst.msk [vmem:[#allocation3 + $0x20] sm:$0xff] %vm1691, %v1679
        %1697 = vst.msk [vmem:[#allocation3 + $0x28] sm:$0xff] %vm1691, %v1680
        %1698 = vst.msk [vmem:[#allocation3 + $0x30] sm:$0xff] %vm1691, %v1681
        %1699 = vst.msk [vmem:[#allocation3 + $0x38] sm:$0xff] %vm1691, %v1682
        %1700 = vst.msk [vmem:[#allocation3 + $0x40] sm:$0xff] %vm1691, %v1683
        %1701 = vst.msk [vmem:[#allocation3 + $0x48] sm:$0xff] %vm1691, %v1684
        %1702 = vst.msk [vmem:[#allocation3 + $0x50] sm:$0xff] %vm1691, %v1685
        %1703 = vst.msk [vmem:[#allocation3 + $0x58] sm:$0xff] %vm1691, %v1686
        %1704 = vst.msk [vmem:[#allocation3 + $0x60] sm:$0xff] %vm1691, %v1687
        %1705 = vst.msk [vmem:[#allocation3 + $0x68] sm:$0xff] %vm1691, %v1688
        %1706 = vst.msk [vmem:[#allocation3 + $0x70] sm:$0xff] %vm1691, %v1689
        %1707 = vst.msk [vmem:[#allocation3 + $0x78] sm:$0xff] %vm1691, %v1690
        %v1708 = vld [vmem:[#allocation4] sm:$0xff]
        %v1709 = vld [vmem:[#allocation4 + $0x8] sm:$0xff]
        %v1710 = vld [vmem:[#allocation4 + $0x10] sm:$0xff]
        %v1711 = vld [vmem:[#allocation4 + $0x18] sm:$0xff]
        %v1712 = vld [vmem:[#allocation4 + $0x20] sm:$0xff]
        %v1713 = vld [vmem:[#allocation4 + $0x28] sm:$0xff]
        %v1714 = vld [vmem:[#allocation4 + $0x30] sm:$0xff]
        %v1715 = vld [vmem:[#allocation4 + $0x38] sm:$0xff]
        %v1716 = vld [vmem:[#allocation4 + $0x40] sm:$0xff]
        %v1717 = vld [vmem:[#allocation4 + $0x48] sm:$0xff]
        %v1718 = vld [vmem:[#allocation4 + $0x50] sm:$0xff]
        %v1719 = vld [vmem:[#allocation4 + $0x58] sm:$0xff]
        %v1720 = vld [vmem:[#allocation4 + $0x60] sm:$0xff]
        %v1721 = vld [vmem:[#allocation4 + $0x68] sm:$0xff]
        %v1722 = vld [vmem:[#allocation4 + $0x70] sm:$0xff]
        %v1723 = vld [vmem:[#allocation4 + $0x78] sm:$0xff]
        %1725 = vset.pattern.permute.xlu0 0
        %1726 = vperm.xlu0 %1725, %v1452
        %v1727 = vpop.permute.xlu0 %1726
        %1730 = vset.pattern.permute.xlu0 0
        %1731 = vperm.xlu0 %1730, %v1454
        %v1732 = vpop.permute.xlu0 %1731
        %1735 = vset.pattern.permute.xlu0 0
        %1736 = vperm.xlu0 %1735, %v1456
        %v1737 = vpop.permute.xlu0 %1736
        %1740 = vset.pattern.permute.xlu0 0
        %1741 = vperm.xlu0 %1740, %v1458
        %v1742 = vpop.permute.xlu0 %1741
        %1745 = vset.pattern.permute.xlu0 0
        %1746 = vperm.xlu0 %1745, %v1460
        %v1747 = vpop.permute.xlu0 %1746
        %1750 = vset.pattern.permute.xlu0 0
        %1751 = vperm.xlu0 %1750, %v1462
        %v1752 = vpop.permute.xlu0 %1751
        %1755 = vset.pattern.permute.xlu0 0
        %1756 = vperm.xlu0 %1755, %v1464
        %v1757 = vpop.permute.xlu0 %1756
        %1760 = vset.pattern.permute.xlu0 0
        %1761 = vperm.xlu0 %1760, %v1466
        %v1762 = vpop.permute.xlu0 %1761
        %1765 = vset.pattern.permute.xlu0 0
        %1766 = vperm.xlu0 %1765, %v1468
        %v1767 = vpop.permute.xlu0 %1766
        %1770 = vset.pattern.permute.xlu0 0
        %1771 = vperm.xlu0 %1770, %v1470
        %v1772 = vpop.permute.xlu0 %1771
        %1775 = vset.pattern.permute.xlu0 0
        %1776 = vperm.xlu0 %1775, %v1472
        %v1777 = vpop.permute.xlu0 %1776
        %1780 = vset.pattern.permute.xlu0 0
        %1781 = vperm.xlu0 %1780, %v1474
        %v1782 = vpop.permute.xlu0 %1781
        %1785 = vset.pattern.permute.xlu0 0
        %1786 = vperm.xlu0 %1785, %v1476
        %v1787 = vpop.permute.xlu0 %1786
        %1790 = vset.pattern.permute.xlu0 0
        %1791 = vperm.xlu0 %1790, %v1478
        %v1792 = vpop.permute.xlu0 %1791
        %1795 = vset.pattern.permute.xlu0 0
        %1796 = vperm.xlu0 %1795, %v1480
        %v1797 = vpop.permute.xlu0 %1796
        %1800 = vset.pattern.permute.xlu0 0
        %1801 = vperm.xlu0 %1800, %v1482
        %v1802 = vpop.permute.xlu0 %1801
        %v1804 = vmul.f32 %v1727, %v1708
        %v1805 = vmul.f32 %v1732, %v1709
        %v1806 = vmul.f32 %v1737, %v1710
        %v1807 = vmul.f32 %v1742, %v1711
        %v1808 = vmul.f32 %v1747, %v1712
        %v1809 = vmul.f32 %v1752, %v1713
        %v1810 = vmul.f32 %v1757, %v1714
        %v1811 = vmul.f32 %v1762, %v1715
        %v1812 = vmul.f32 %v1767, %v1716
        %v1813 = vmul.f32 %v1772, %v1717
        %v1814 = vmul.f32 %v1777, %v1718
        %v1815 = vmul.f32 %v1782, %v1719
        %v1816 = vmul.f32 %v1787, %v1720
        %v1817 = vmul.f32 %v1792, %v1721
        %v1818 = vmul.f32 %v1797, %v1722
        %v1819 = vmul.f32 %v1802, %v1723
        %v1820 = vld [vmem:[%s277] sm:$0xff]
        %v1821 = vld [vmem:[%s277 + $0x8] sm:$0xff]
        %v1822 = vld [vmem:[%s277 + $0x10] sm:$0xff]
        %v1823 = vld [vmem:[%s277 + $0x18] sm:$0xff]
        %v1824 = vld [vmem:[%s277 + $0x20] sm:$0xff]
        %v1825 = vld [vmem:[%s277 + $0x28] sm:$0xff]
        %v1826 = vld [vmem:[%s277 + $0x30] sm:$0xff]
        %v1827 = vld [vmem:[%s277 + $0x38] sm:$0xff]
        %v1828 = vld [vmem:[%s277 + $0x40] sm:$0xff]
        %v1829 = vld [vmem:[%s277 + $0x48] sm:$0xff]
        %v1830 = vld [vmem:[%s277 + $0x50] sm:$0xff]
        %v1831 = vld [vmem:[%s277 + $0x58] sm:$0xff]
        %v1832 = vld [vmem:[%s277 + $0x60] sm:$0xff]
        %v1833 = vld [vmem:[%s277 + $0x68] sm:$0xff]
        %v1834 = vld [vmem:[%s277 + $0x70] sm:$0xff]
        %v1835 = vld [vmem:[%s277 + $0x78] sm:$0xff]
        %v1836 = vand.u32 %v1835, 4294901760
        %1837 = vmatpush.msra.mxu0 %v1836
        %v1838 = vand.u32 %v1834, 4294901760
        %1839 = vmatpush.msra.mxu0 %v1838
        %v1840 = vand.u32 %v1833, 4294901760
        %1841 = vmatpush.msra.mxu0 %v1840
        %v1842 = vand.u32 %v1832, 4294901760
        %1843 = vmatpush.msra.mxu0 %v1842
        %v1844 = vand.u32 %v1831, 4294901760
        %1845 = vmatpush.msra.mxu0 %v1844
        %v1846 = vand.u32 %v1830, 4294901760
        %1847 = vmatpush.msra.mxu0 %v1846
        %v1848 = vand.u32 %v1829, 4294901760
        %1849 = vmatpush.msra.mxu0 %v1848
        %v1850 = vand.u32 %v1828, 4294901760
        %1851 = vmatpush.msra.mxu0 %v1850
        %v1852 = vand.u32 %v1827, 4294901760
        %1853 = vmatpush.msra.mxu0 %v1852
        %v1854 = vand.u32 %v1826, 4294901760
        %1855 = vmatpush.msra.mxu0 %v1854
        %v1856 = vand.u32 %v1825, 4294901760
        %1857 = vmatpush.msra.mxu0 %v1856
        %v1858 = vand.u32 %v1824, 4294901760
        %1859 = vmatpush.msra.mxu0 %v1858
        %v1860 = vand.u32 %v1823, 4294901760
        %1861 = vmatpush.msra.mxu0 %v1860
        %v1862 = vand.u32 %v1822, 4294901760
        %1863 = vmatpush.msra.mxu0 %v1862
        %v1864 = vand.u32 %v1821, 4294901760
        %1865 = vmatpush.msra.mxu0 %v1864
        %v1866 = vand.u32 %v1820, 4294901760
        %1867 = vmatpush.msra.mxu0 %v1866
        %v1868 = vand.u32 %v1580, 4294901760
        %v1869 = vsub.f32 %v1580, %v1868
        %v1870 = vand.u32 %v1869, 4294901760
        %v1871 = vsub.f32 %v1869, %v1870
        %v1872 = vand.u32 %v1871, 4294901760
        %1873 = vmatmul.f32.gmra.mxu0 %v1872
        %v1874 = vpop.f32.mrf.mxu0
        %v1875 = vadd.f32 0.0, %v1874
        %v1876 = vand.u32 %v1582, 4294901760
        %v1877 = vsub.f32 %v1582, %v1876
        %v1878 = vand.u32 %v1877, 4294901760
        %v1879 = vsub.f32 %v1877, %v1878
        %v1880 = vand.u32 %v1879, 4294901760
        %1881 = vmatmul.f32.gmra.mxu0 %v1880
        %v1882 = vpop.f32.mrf.mxu0
        %v1883 = vadd.f32 0.0, %v1882
        %v1884 = vand.u32 %v1584, 4294901760
        %v1885 = vsub.f32 %v1584, %v1884
        %v1886 = vand.u32 %v1885, 4294901760
        %v1887 = vsub.f32 %v1885, %v1886
        %v1888 = vand.u32 %v1887, 4294901760
        %1889 = vmatmul.f32.gmra.mxu0 %v1888
        %v1890 = vpop.f32.mrf.mxu0
        %v1891 = vadd.f32 0.0, %v1890
        %v1892 = vand.u32 %v1586, 4294901760
        %v1893 = vsub.f32 %v1586, %v1892
        %v1894 = vand.u32 %v1893, 4294901760
        %v1895 = vsub.f32 %v1893, %v1894
        %v1896 = vand.u32 %v1895, 4294901760
        %1897 = vmatmul.f32.gmra.mxu0 %v1896
        %v1898 = vpop.f32.mrf.mxu0
        %v1899 = vadd.f32 0.0, %v1898
        %v1900 = vand.u32 %v1588, 4294901760
        %v1901 = vsub.f32 %v1588, %v1900
        %v1902 = vand.u32 %v1901, 4294901760
        %v1903 = vsub.f32 %v1901, %v1902
        %v1904 = vand.u32 %v1903, 4294901760
        %1905 = vmatmul.f32.gmra.mxu0 %v1904
        %v1906 = vpop.f32.mrf.mxu0
        %v1907 = vadd.f32 0.0, %v1906
        %v1908 = vand.u32 %v1590, 4294901760
        %v1909 = vsub.f32 %v1590, %v1908
        %v1910 = vand.u32 %v1909, 4294901760
        %v1911 = vsub.f32 %v1909, %v1910
        %v1912 = vand.u32 %v1911, 4294901760
        %1913 = vmatmul.f32.gmra.mxu0 %v1912
        %v1914 = vpop.f32.mrf.mxu0
        %v1915 = vadd.f32 0.0, %v1914
        %v1916 = vand.u32 %v1592, 4294901760
        %v1917 = vsub.f32 %v1592, %v1916
        %v1918 = vand.u32 %v1917, 4294901760
        %v1919 = vsub.f32 %v1917, %v1918
        %v1920 = vand.u32 %v1919, 4294901760
        %1921 = vmatmul.f32.gmra.mxu0 %v1920
        %v1922 = vpop.f32.mrf.mxu0
        %v1923 = vadd.f32 0.0, %v1922
        %v1924 = vand.u32 %v1594, 4294901760
        %v1925 = vsub.f32 %v1594, %v1924
        %v1926 = vand.u32 %v1925, 4294901760
        %v1927 = vsub.f32 %v1925, %v1926
        %v1928 = vand.u32 %v1927, 4294901760
        %1929 = vmatmul.f32.gmra.mxu0 %v1928
        %v1930 = vpop.f32.mrf.mxu0
        %v1931 = vadd.f32 0.0, %v1930
        %v1932 = vand.u32 %v1596, 4294901760
        %v1933 = vsub.f32 %v1596, %v1932
        %v1934 = vand.u32 %v1933, 4294901760
        %v1935 = vsub.f32 %v1933, %v1934
        %v1936 = vand.u32 %v1935, 4294901760
        %1937 = vmatmul.f32.gmra.mxu0 %v1936
        %v1938 = vpop.f32.mrf.mxu0
        %v1939 = vadd.f32 0.0, %v1938
        %v1940 = vand.u32 %v1598, 4294901760
        %v1941 = vsub.f32 %v1598, %v1940
        %v1942 = vand.u32 %v1941, 4294901760
        %v1943 = vsub.f32 %v1941, %v1942
        %v1944 = vand.u32 %v1943, 4294901760
        %1945 = vmatmul.f32.gmra.mxu0 %v1944
        %v1946 = vpop.f32.mrf.mxu0
        %v1947 = vadd.f32 0.0, %v1946
        %v1948 = vand.u32 %v1600, 4294901760
        %v1949 = vsub.f32 %v1600, %v1948
        %v1950 = vand.u32 %v1949, 4294901760
        %v1951 = vsub.f32 %v1949, %v1950
        %v1952 = vand.u32 %v1951, 4294901760
        %1953 = vmatmul.f32.gmra.mxu0 %v1952
        %v1954 = vpop.f32.mrf.mxu0
        %v1955 = vadd.f32 0.0, %v1954
        %v1956 = vand.u32 %v1602, 4294901760
        %v1957 = vsub.f32 %v1602, %v1956
        %v1958 = vand.u32 %v1957, 4294901760
        %v1959 = vsub.f32 %v1957, %v1958
        %v1960 = vand.u32 %v1959, 4294901760
        %1961 = vmatmul.f32.gmra.mxu0 %v1960
        %v1962 = vpop.f32.mrf.mxu0
        %v1963 = vadd.f32 0.0, %v1962
        %v1964 = vand.u32 %v1604, 4294901760
        %v1965 = vsub.f32 %v1604, %v1964
        %v1966 = vand.u32 %v1965, 4294901760
        %v1967 = vsub.f32 %v1965, %v1966
        %v1968 = vand.u32 %v1967, 4294901760
        %1969 = vmatmul.f32.gmra.mxu0 %v1968
        %v1970 = vpop.f32.mrf.mxu0
        %v1971 = vadd.f32 0.0, %v1970
        %v1972 = vand.u32 %v1606, 4294901760
        %v1973 = vsub.f32 %v1606, %v1972
        %v1974 = vand.u32 %v1973, 4294901760
        %v1975 = vsub.f32 %v1973, %v1974
        %v1976 = vand.u32 %v1975, 4294901760
        %1977 = vmatmul.f32.gmra.mxu0 %v1976
        %v1978 = vpop.f32.mrf.mxu0
        %v1979 = vadd.f32 0.0, %v1978
        %v1980 = vand.u32 %v1608, 4294901760
        %v1981 = vsub.f32 %v1608, %v1980
        %v1982 = vand.u32 %v1981, 4294901760
        %v1983 = vsub.f32 %v1981, %v1982
        %v1984 = vand.u32 %v1983, 4294901760
        %1985 = vmatmul.f32.gmra.mxu0 %v1984
        %v1986 = vpop.f32.mrf.mxu0
        %v1987 = vadd.f32 0.0, %v1986
        %v1988 = vand.u32 %v1610, 4294901760
        %v1989 = vsub.f32 %v1610, %v1988
        %v1990 = vand.u32 %v1989, 4294901760
        %v1991 = vsub.f32 %v1989, %v1990
        %v1992 = vand.u32 %v1991, 4294901760
        %1993 = vmatmul.f32.gmra.mxu0 %v1992
        %v1994 = vpop.f32.mrf.mxu0
        %v1995 = vadd.f32 0.0, %v1994
        %1996 = vdwg.mxu0
        %v1997 = vand.u32 %v1835, 4294901760
        %v1998 = vsub.f32 %v1835, %v1997
        %v1999 = vand.u32 %v1998, 4294901760
        %v2000 = vsub.f32 %v1998, %v1999
        %v2001 = vand.u32 %v2000, 4294901760
        %2002 = vmatpush.msra.mxu0 %v2001
        %v2003 = vand.u32 %v1834, 4294901760
        %v2004 = vsub.f32 %v1834, %v2003
        %v2005 = vand.u32 %v2004, 4294901760
        %v2006 = vsub.f32 %v2004, %v2005
        %v2007 = vand.u32 %v2006, 4294901760
        %2008 = vmatpush.msra.mxu0 %v2007
        %v2009 = vand.u32 %v1833, 4294901760
        %v2010 = vsub.f32 %v1833, %v2009
        %v2011 = vand.u32 %v2010, 4294901760
        %v2012 = vsub.f32 %v2010, %v2011
        %v2013 = vand.u32 %v2012, 4294901760
        %2014 = vmatpush.msra.mxu0 %v2013
        %v2015 = vand.u32 %v1832, 4294901760
        %v2016 = vsub.f32 %v1832, %v2015
        %v2017 = vand.u32 %v2016, 4294901760
        %v2018 = vsub.f32 %v2016, %v2017
        %v2019 = vand.u32 %v2018, 4294901760
        %2020 = vmatpush.msra.mxu0 %v2019
        %v2021 = vand.u32 %v1831, 4294901760
        %v2022 = vsub.f32 %v1831, %v2021
        %v2023 = vand.u32 %v2022, 4294901760
        %v2024 = vsub.f32 %v2022, %v2023
        %v2025 = vand.u32 %v2024, 4294901760
        %2026 = vmatpush.msra.mxu0 %v2025
        %v2027 = vand.u32 %v1830, 4294901760
        %v2028 = vsub.f32 %v1830, %v2027
        %v2029 = vand.u32 %v2028, 4294901760
        %v2030 = vsub.f32 %v2028, %v2029
        %v2031 = vand.u32 %v2030, 4294901760
        %2032 = vmatpush.msra.mxu0 %v2031
        %v2033 = vand.u32 %v1829, 4294901760
        %v2034 = vsub.f32 %v1829, %v2033
        %v2035 = vand.u32 %v2034, 4294901760
        %v2036 = vsub.f32 %v2034, %v2035
        %v2037 = vand.u32 %v2036, 4294901760
        %2038 = vmatpush.msra.mxu0 %v2037
        %v2039 = vand.u32 %v1828, 4294901760
        %v2040 = vsub.f32 %v1828, %v2039
        %v2041 = vand.u32 %v2040, 4294901760
        %v2042 = vsub.f32 %v2040, %v2041
        %v2043 = vand.u32 %v2042, 4294901760
        %2044 = vmatpush.msra.mxu0 %v2043
        %v2045 = vand.u32 %v1827, 4294901760
        %v2046 = vsub.f32 %v1827, %v2045
        %v2047 = vand.u32 %v2046, 4294901760
        %v2048 = vsub.f32 %v2046, %v2047
        %v2049 = vand.u32 %v2048, 4294901760
        %2050 = vmatpush.msra.mxu0 %v2049
        %v2051 = vand.u32 %v1826, 4294901760
        %v2052 = vsub.f32 %v1826, %v2051
        %v2053 = vand.u32 %v2052, 4294901760
        %v2054 = vsub.f32 %v2052, %v2053
        %v2055 = vand.u32 %v2054, 4294901760
        %2056 = vmatpush.msra.mxu0 %v2055
        %v2057 = vand.u32 %v1825, 4294901760
        %v2058 = vsub.f32 %v1825, %v2057
        %v2059 = vand.u32 %v2058, 4294901760
        %v2060 = vsub.f32 %v2058, %v2059
        %v2061 = vand.u32 %v2060, 4294901760
        %2062 = vmatpush.msra.mxu0 %v2061
        %v2063 = vand.u32 %v1824, 4294901760
        %v2064 = vsub.f32 %v1824, %v2063
        %v2065 = vand.u32 %v2064, 4294901760
        %v2066 = vsub.f32 %v2064, %v2065
        %v2067 = vand.u32 %v2066, 4294901760
        %2068 = vmatpush.msra.mxu0 %v2067
        %v2069 = vand.u32 %v1823, 4294901760
        %v2070 = vsub.f32 %v1823, %v2069
        %v2071 = vand.u32 %v2070, 4294901760
        %v2072 = vsub.f32 %v2070, %v2071
        %v2073 = vand.u32 %v2072, 4294901760
        %2074 = vmatpush.msra.mxu0 %v2073
        %v2075 = vand.u32 %v1822, 4294901760
        %v2076 = vsub.f32 %v1822, %v2075
        %v2077 = vand.u32 %v2076, 4294901760
        %v2078 = vsub.f32 %v2076, %v2077
        %v2079 = vand.u32 %v2078, 4294901760
        %2080 = vmatpush.msra.mxu0 %v2079
        %v2081 = vand.u32 %v1821, 4294901760
        %v2082 = vsub.f32 %v1821, %v2081
        %v2083 = vand.u32 %v2082, 4294901760
        %v2084 = vsub.f32 %v2082, %v2083
        %v2085 = vand.u32 %v2084, 4294901760
        %2086 = vmatpush.msra.mxu0 %v2085
        %v2087 = vand.u32 %v1820, 4294901760
        %v2088 = vsub.f32 %v1820, %v2087
        %v2089 = vand.u32 %v2088, 4294901760
        %v2090 = vsub.f32 %v2088, %v2089
        %v2091 = vand.u32 %v2090, 4294901760
        %2092 = vmatpush.msra.mxu0 %v2091
        %v2093 = vand.u32 %v1580, 4294901760
        %2094 = vmatmul.f32.gmra.mxu0 %v2093
        %v2095 = vpop.f32.mrf.mxu0
        %v2096 = vadd.f32 %v1875, %v2095
        %v2097 = vand.u32 %v1582, 4294901760
        %2098 = vmatmul.f32.gmra.mxu0 %v2097
        %v2099 = vpop.f32.mrf.mxu0
        %v2100 = vadd.f32 %v1883, %v2099
        %v2101 = vand.u32 %v1584, 4294901760
        %2102 = vmatmul.f32.gmra.mxu0 %v2101
        %v2103 = vpop.f32.mrf.mxu0
        %v2104 = vadd.f32 %v1891, %v2103
        %v2105 = vand.u32 %v1586, 4294901760
        %2106 = vmatmul.f32.gmra.mxu0 %v2105
        %v2107 = vpop.f32.mrf.mxu0
        %v2108 = vadd.f32 %v1899, %v2107
        %v2109 = vand.u32 %v1588, 4294901760
        %2110 = vmatmul.f32.gmra.mxu0 %v2109
        %v2111 = vpop.f32.mrf.mxu0
        %v2112 = vadd.f32 %v1907, %v2111
        %v2113 = vand.u32 %v1590, 4294901760
        %2114 = vmatmul.f32.gmra.mxu0 %v2113
        %v2115 = vpop.f32.mrf.mxu0
        %v2116 = vadd.f32 %v1915, %v2115
        %v2117 = vand.u32 %v1592, 4294901760
        %2118 = vmatmul.f32.gmra.mxu0 %v2117
        %v2119 = vpop.f32.mrf.mxu0
        %v2120 = vadd.f32 %v1923, %v2119
        %v2121 = vand.u32 %v1594, 4294901760
        %2122 = vmatmul.f32.gmra.mxu0 %v2121
        %v2123 = vpop.f32.mrf.mxu0
        %v2124 = vadd.f32 %v1931, %v2123
        %v2125 = vand.u32 %v1596, 4294901760
        %2126 = vmatmul.f32.gmra.mxu0 %v2125
        %v2127 = vpop.f32.mrf.mxu0
        %v2128 = vadd.f32 %v1939, %v2127
        %v2129 = vand.u32 %v1598, 4294901760
        %2130 = vmatmul.f32.gmra.mxu0 %v2129
        %v2131 = vpop.f32.mrf.mxu0
        %v2132 = vadd.f32 %v1947, %v2131
        %v2133 = vand.u32 %v1600, 4294901760
        %2134 = vmatmul.f32.gmra.mxu0 %v2133
        %v2135 = vpop.f32.mrf.mxu0
        %v2136 = vadd.f32 %v1955, %v2135
        %v2137 = vand.u32 %v1602, 4294901760
        %2138 = vmatmul.f32.gmra.mxu0 %v2137
        %v2139 = vpop.f32.mrf.mxu0
        %v2140 = vadd.f32 %v1963, %v2139
        %v2141 = vand.u32 %v1604, 4294901760
        %2142 = vmatmul.f32.gmra.mxu0 %v2141
        %v2143 = vpop.f32.mrf.mxu0
        %v2144 = vadd.f32 %v1971, %v2143
        %v2145 = vand.u32 %v1606, 4294901760
        %2146 = vmatmul.f32.gmra.mxu0 %v2145
        %v2147 = vpop.f32.mrf.mxu0
        %v2148 = vadd.f32 %v1979, %v2147
        %v2149 = vand.u32 %v1608, 4294901760
        %2150 = vmatmul.f32.gmra.mxu0 %v2149
        %v2151 = vpop.f32.mrf.mxu0
        %v2152 = vadd.f32 %v1987, %v2151
        %v2153 = vand.u32 %v1610, 4294901760
        %2154 = vmatmul.f32.gmra.mxu0 %v2153
        %v2155 = vpop.f32.mrf.mxu0
        %v2156 = vadd.f32 %v1995, %v2155
        %2157 = vdwg.mxu0
        %v2158 = vand.u32 %v1835, 4294901760
        %v2159 = vsub.f32 %v1835, %v2158
        %2160 = vmatpush.msra.mxu0 %v2159
        %v2161 = vand.u32 %v1834, 4294901760
        %v2162 = vsub.f32 %v1834, %v2161
        %2163 = vmatpush.msra.mxu0 %v2162
        %v2164 = vand.u32 %v1833, 4294901760
        %v2165 = vsub.f32 %v1833, %v2164
        %2166 = vmatpush.msra.mxu0 %v2165
        %v2167 = vand.u32 %v1832, 4294901760
        %v2168 = vsub.f32 %v1832, %v2167
        %2169 = vmatpush.msra.mxu0 %v2168
        %v2170 = vand.u32 %v1831, 4294901760
        %v2171 = vsub.f32 %v1831, %v2170
        %2172 = vmatpush.msra.mxu0 %v2171
        %v2173 = vand.u32 %v1830, 4294901760
        %v2174 = vsub.f32 %v1830, %v2173
        %2175 = vmatpush.msra.mxu0 %v2174
        %v2176 = vand.u32 %v1829, 4294901760
        %v2177 = vsub.f32 %v1829, %v2176
        %2178 = vmatpush.msra.mxu0 %v2177
        %v2179 = vand.u32 %v1828, 4294901760
        %v2180 = vsub.f32 %v1828, %v2179
        %2181 = vmatpush.msra.mxu0 %v2180
        %v2182 = vand.u32 %v1827, 4294901760
        %v2183 = vsub.f32 %v1827, %v2182
        %2184 = vmatpush.msra.mxu0 %v2183
        %v2185 = vand.u32 %v1826, 4294901760
        %v2186 = vsub.f32 %v1826, %v2185
        %2187 = vmatpush.msra.mxu0 %v2186
        %v2188 = vand.u32 %v1825, 4294901760
        %v2189 = vsub.f32 %v1825, %v2188
        %2190 = vmatpush.msra.mxu0 %v2189
        %v2191 = vand.u32 %v1824, 4294901760
        %v2192 = vsub.f32 %v1824, %v2191
        %2193 = vmatpush.msra.mxu0 %v2192
        %v2194 = vand.u32 %v1823, 4294901760
        %v2195 = vsub.f32 %v1823, %v2194
        %2196 = vmatpush.msra.mxu0 %v2195
        %v2197 = vand.u32 %v1822, 4294901760
        %v2198 = vsub.f32 %v1822, %v2197
        %2199 = vmatpush.msra.mxu0 %v2198
        %v2200 = vand.u32 %v1821, 4294901760
        %v2201 = vsub.f32 %v1821, %v2200
        %2202 = vmatpush.msra.mxu0 %v2201
        %v2203 = vand.u32 %v1820, 4294901760
        %v2204 = vsub.f32 %v1820, %v2203
        %2205 = vmatpush.msra.mxu0 %v2204
        %v2206 = vand.u32 %v1580, 4294901760
        %v2207 = vsub.f32 %v1580, %v2206
        %2208 = vmatmul.f32.gmra.mxu0 %v2207
        %v2209 = vpop.f32.mrf.mxu0
        %v2210 = vadd.f32 %v2096, %v2209
        %v2211 = vand.u32 %v1582, 4294901760
        %v2212 = vsub.f32 %v1582, %v2211
        %2213 = vmatmul.f32.gmra.mxu0 %v2212
        %v2214 = vpop.f32.mrf.mxu0
        %v2215 = vadd.f32 %v2100, %v2214
        %v2216 = vand.u32 %v1584, 4294901760
        %v2217 = vsub.f32 %v1584, %v2216
        %2218 = vmatmul.f32.gmra.mxu0 %v2217
        %v2219 = vpop.f32.mrf.mxu0
        %v2220 = vadd.f32 %v2104, %v2219
        %v2221 = vand.u32 %v1586, 4294901760
        %v2222 = vsub.f32 %v1586, %v2221
        %2223 = vmatmul.f32.gmra.mxu0 %v2222
        %v2224 = vpop.f32.mrf.mxu0
        %v2225 = vadd.f32 %v2108, %v2224
        %v2226 = vand.u32 %v1588, 4294901760
        %v2227 = vsub.f32 %v1588, %v2226
        %2228 = vmatmul.f32.gmra.mxu0 %v2227
        %v2229 = vpop.f32.mrf.mxu0
        %v2230 = vadd.f32 %v2112, %v2229
        %v2231 = vand.u32 %v1590, 4294901760
        %v2232 = vsub.f32 %v1590, %v2231
        %2233 = vmatmul.f32.gmra.mxu0 %v2232
        %v2234 = vpop.f32.mrf.mxu0
        %v2235 = vadd.f32 %v2116, %v2234
        %v2236 = vand.u32 %v1592, 4294901760
        %v2237 = vsub.f32 %v1592, %v2236
        %2238 = vmatmul.f32.gmra.mxu0 %v2237
        %v2239 = vpop.f32.mrf.mxu0
        %v2240 = vadd.f32 %v2120, %v2239
        %v2241 = vand.u32 %v1594, 4294901760
        %v2242 = vsub.f32 %v1594, %v2241
        %2243 = vmatmul.f32.gmra.mxu0 %v2242
        %v2244 = vpop.f32.mrf.mxu0
        %v2245 = vadd.f32 %v2124, %v2244
        %v2246 = vand.u32 %v1596, 4294901760
        %v2247 = vsub.f32 %v1596, %v2246
        %2248 = vmatmul.f32.gmra.mxu0 %v2247
        %v2249 = vpop.f32.mrf.mxu0
        %v2250 = vadd.f32 %v2128, %v2249
        %v2251 = vand.u32 %v1598, 4294901760
        %v2252 = vsub.f32 %v1598, %v2251
        %2253 = vmatmul.f32.gmra.mxu0 %v2252
        %v2254 = vpop.f32.mrf.mxu0
        %v2255 = vadd.f32 %v2132, %v2254
        %v2256 = vand.u32 %v1600, 4294901760
        %v2257 = vsub.f32 %v1600, %v2256
        %2258 = vmatmul.f32.gmra.mxu0 %v2257
        %v2259 = vpop.f32.mrf.mxu0
        %v2260 = vadd.f32 %v2136, %v2259
        %v2261 = vand.u32 %v1602, 4294901760
        %v2262 = vsub.f32 %v1602, %v2261
        %2263 = vmatmul.f32.gmra.mxu0 %v2262
        %v2264 = vpop.f32.mrf.mxu0
        %v2265 = vadd.f32 %v2140, %v2264
        %v2266 = vand.u32 %v1604, 4294901760
        %v2267 = vsub.f32 %v1604, %v2266
        %2268 = vmatmul.f32.gmra.mxu0 %v2267
        %v2269 = vpop.f32.mrf.mxu0
        %v2270 = vadd.f32 %v2144, %v2269
        %v2271 = vand.u32 %v1606, 4294901760
        %v2272 = vsub.f32 %v1606, %v2271
        %2273 = vmatmul.f32.gmra.mxu0 %v2272
        %v2274 = vpop.f32.mrf.mxu0
        %v2275 = vadd.f32 %v2148, %v2274
        %v2276 = vand.u32 %v1608, 4294901760
        %v2277 = vsub.f32 %v1608, %v2276
        %2278 = vmatmul.f32.gmra.mxu0 %v2277
        %v2279 = vpop.f32.mrf.mxu0
        %v2280 = vadd.f32 %v2152, %v2279
        %v2281 = vand.u32 %v1610, 4294901760
        %v2282 = vsub.f32 %v1610, %v2281
        %2283 = vmatmul.f32.gmra.mxu0 %v2282
        %v2284 = vpop.f32.mrf.mxu0
        %v2285 = vadd.f32 %v2156, %v2284
        %2286 = vdwg.mxu0
        %v2287 = vand.u32 %v1835, 4294901760
        %2288 = vmatpush.msra.mxu0 %v2287
        %v2289 = vand.u32 %v1834, 4294901760
        %2290 = vmatpush.msra.mxu0 %v2289
        %v2291 = vand.u32 %v1833, 4294901760
        %2292 = vmatpush.msra.mxu0 %v2291
        %v2293 = vand.u32 %v1832, 4294901760
        %2294 = vmatpush.msra.mxu0 %v2293
        %v2295 = vand.u32 %v1831, 4294901760
        %2296 = vmatpush.msra.mxu0 %v2295
        %v2297 = vand.u32 %v1830, 4294901760
        %2298 = vmatpush.msra.mxu0 %v2297
        %v2299 = vand.u32 %v1829, 4294901760
        %2300 = vmatpush.msra.mxu0 %v2299
        %v2301 = vand.u32 %v1828, 4294901760
        %2302 = vmatpush.msra.mxu0 %v2301
        %v2303 = vand.u32 %v1827, 4294901760
        %2304 = vmatpush.msra.mxu0 %v2303
        %v2305 = vand.u32 %v1826, 4294901760
        %2306 = vmatpush.msra.mxu0 %v2305
        %v2307 = vand.u32 %v1825, 4294901760
        %2308 = vmatpush.msra.mxu0 %v2307
        %v2309 = vand.u32 %v1824, 4294901760
        %2310 = vmatpush.msra.mxu0 %v2309
        %v2311 = vand.u32 %v1823, 4294901760
        %2312 = vmatpush.msra.mxu0 %v2311
        %v2313 = vand.u32 %v1822, 4294901760
        %2314 = vmatpush.msra.mxu0 %v2313
        %v2315 = vand.u32 %v1821, 4294901760
        %2316 = vmatpush.msra.mxu0 %v2315
        %v2317 = vand.u32 %v1820, 4294901760
        %2318 = vmatpush.msra.mxu0 %v2317
        %v2319 = vand.u32 %v1580, 4294901760
        %v2320 = vsub.f32 %v1580, %v2319
        %v2321 = vand.u32 %v2320, 4294901760
        %2322 = vmatmul.f32.gmra.mxu0 %v2321
        %v2323 = vpop.f32.mrf.mxu0
        %v2324 = vadd.f32 %v2210, %v2323
        %v2325 = vand.u32 %v1582, 4294901760
        %v2326 = vsub.f32 %v1582, %v2325
        %v2327 = vand.u32 %v2326, 4294901760
        %2328 = vmatmul.f32.gmra.mxu0 %v2327
        %v2329 = vpop.f32.mrf.mxu0
        %v2330 = vadd.f32 %v2215, %v2329
        %v2331 = vand.u32 %v1584, 4294901760
        %v2332 = vsub.f32 %v1584, %v2331
        %v2333 = vand.u32 %v2332, 4294901760
        %2334 = vmatmul.f32.gmra.mxu0 %v2333
        %v2335 = vpop.f32.mrf.mxu0
        %v2336 = vadd.f32 %v2220, %v2335
        %v2337 = vand.u32 %v1586, 4294901760
        %v2338 = vsub.f32 %v1586, %v2337
        %v2339 = vand.u32 %v2338, 4294901760
        %2340 = vmatmul.f32.gmra.mxu0 %v2339
        %v2341 = vpop.f32.mrf.mxu0
        %v2342 = vadd.f32 %v2225, %v2341
        %v2343 = vand.u32 %v1588, 4294901760
        %v2344 = vsub.f32 %v1588, %v2343
        %v2345 = vand.u32 %v2344, 4294901760
        %2346 = vmatmul.f32.gmra.mxu0 %v2345
        %v2347 = vpop.f32.mrf.mxu0
        %v2348 = vadd.f32 %v2230, %v2347
        %v2349 = vand.u32 %v1590, 4294901760
        %v2350 = vsub.f32 %v1590, %v2349
        %v2351 = vand.u32 %v2350, 4294901760
        %2352 = vmatmul.f32.gmra.mxu0 %v2351
        %v2353 = vpop.f32.mrf.mxu0
        %v2354 = vadd.f32 %v2235, %v2353
        %v2355 = vand.u32 %v1592, 4294901760
        %v2356 = vsub.f32 %v1592, %v2355
        %v2357 = vand.u32 %v2356, 4294901760
        %2358 = vmatmul.f32.gmra.mxu0 %v2357
        %v2359 = vpop.f32.mrf.mxu0
        %v2360 = vadd.f32 %v2240, %v2359
        %v2361 = vand.u32 %v1594, 4294901760
        %v2362 = vsub.f32 %v1594, %v2361
        %v2363 = vand.u32 %v2362, 4294901760
        %2364 = vmatmul.f32.gmra.mxu0 %v2363
        %v2365 = vpop.f32.mrf.mxu0
        %v2366 = vadd.f32 %v2245, %v2365
        %v2367 = vand.u32 %v1596, 4294901760
        %v2368 = vsub.f32 %v1596, %v2367
        %v2369 = vand.u32 %v2368, 4294901760
        %2370 = vmatmul.f32.gmra.mxu0 %v2369
        %v2371 = vpop.f32.mrf.mxu0
        %v2372 = vadd.f32 %v2250, %v2371
        %v2373 = vand.u32 %v1598, 4294901760
        %v2374 = vsub.f32 %v1598, %v2373
        %v2375 = vand.u32 %v2374, 4294901760
        %2376 = vmatmul.f32.gmra.mxu0 %v2375
        %v2377 = vpop.f32.mrf.mxu0
        %v2378 = vadd.f32 %v2255, %v2377
        %v2379 = vand.u32 %v1600, 4294901760
        %v2380 = vsub.f32 %v1600, %v2379
        %v2381 = vand.u32 %v2380, 4294901760
        %2382 = vmatmul.f32.gmra.mxu0 %v2381
        %v2383 = vpop.f32.mrf.mxu0
        %v2384 = vadd.f32 %v2260, %v2383
        %v2385 = vand.u32 %v1602, 4294901760
        %v2386 = vsub.f32 %v1602, %v2385
        %v2387 = vand.u32 %v2386, 4294901760
        %2388 = vmatmul.f32.gmra.mxu0 %v2387
        %v2389 = vpop.f32.mrf.mxu0
        %v2390 = vadd.f32 %v2265, %v2389
        %v2391 = vand.u32 %v1604, 4294901760
        %v2392 = vsub.f32 %v1604, %v2391
        %v2393 = vand.u32 %v2392, 4294901760
        %2394 = vmatmul.f32.gmra.mxu0 %v2393
        %v2395 = vpop.f32.mrf.mxu0
        %v2396 = vadd.f32 %v2270, %v2395
        %v2397 = vand.u32 %v1606, 4294901760
        %v2398 = vsub.f32 %v1606, %v2397
        %v2399 = vand.u32 %v2398, 4294901760
        %2400 = vmatmul.f32.gmra.mxu0 %v2399
        %v2401 = vpop.f32.mrf.mxu0
        %v2402 = vadd.f32 %v2275, %v2401
        %v2403 = vand.u32 %v1608, 4294901760
        %v2404 = vsub.f32 %v1608, %v2403
        %v2405 = vand.u32 %v2404, 4294901760
        %2406 = vmatmul.f32.gmra.mxu0 %v2405
        %v2407 = vpop.f32.mrf.mxu0
        %v2408 = vadd.f32 %v2280, %v2407
        %v2409 = vand.u32 %v1610, 4294901760
        %v2410 = vsub.f32 %v1610, %v2409
        %v2411 = vand.u32 %v2410, 4294901760
        %2412 = vmatmul.f32.gmra.mxu0 %v2411
        %v2413 = vpop.f32.mrf.mxu0
        %v2414 = vadd.f32 %v2285, %v2413
        %2415 = vdwg.mxu0
        %v2416 = vand.u32 %v1835, 4294901760
        %v2417 = vsub.f32 %v1835, %v2416
        %v2418 = vand.u32 %v2417, 4294901760
        %2419 = vmatpush.msra.mxu0 %v2418
        %v2420 = vand.u32 %v1834, 4294901760
        %v2421 = vsub.f32 %v1834, %v2420
        %v2422 = vand.u32 %v2421, 4294901760
        %2423 = vmatpush.msra.mxu0 %v2422
        %v2424 = vand.u32 %v1833, 4294901760
        %v2425 = vsub.f32 %v1833, %v2424
        %v2426 = vand.u32 %v2425, 4294901760
        %2427 = vmatpush.msra.mxu0 %v2426
        %v2428 = vand.u32 %v1832, 4294901760
        %v2429 = vsub.f32 %v1832, %v2428
        %v2430 = vand.u32 %v2429, 4294901760
        %2431 = vmatpush.msra.mxu0 %v2430
        %v2432 = vand.u32 %v1831, 4294901760
        %v2433 = vsub.f32 %v1831, %v2432
        %v2434 = vand.u32 %v2433, 4294901760
        %2435 = vmatpush.msra.mxu0 %v2434
        %v2436 = vand.u32 %v1830, 4294901760
        %v2437 = vsub.f32 %v1830, %v2436
        %v2438 = vand.u32 %v2437, 4294901760
        %2439 = vmatpush.msra.mxu0 %v2438
        %v2440 = vand.u32 %v1829, 4294901760
        %v2441 = vsub.f32 %v1829, %v2440
        %v2442 = vand.u32 %v2441, 4294901760
        %2443 = vmatpush.msra.mxu0 %v2442
        %v2444 = vand.u32 %v1828, 4294901760
        %v2445 = vsub.f32 %v1828, %v2444
        %v2446 = vand.u32 %v2445, 4294901760
        %2447 = vmatpush.msra.mxu0 %v2446
        %v2448 = vand.u32 %v1827, 4294901760
        %v2449 = vsub.f32 %v1827, %v2448
        %v2450 = vand.u32 %v2449, 4294901760
        %2451 = vmatpush.msra.mxu0 %v2450
        %v2452 = vand.u32 %v1826, 4294901760
        %v2453 = vsub.f32 %v1826, %v2452
        %v2454 = vand.u32 %v2453, 4294901760
        %2455 = vmatpush.msra.mxu0 %v2454
        %v2456 = vand.u32 %v1825, 4294901760
        %v2457 = vsub.f32 %v1825, %v2456
        %v2458 = vand.u32 %v2457, 4294901760
        %2459 = vmatpush.msra.mxu0 %v2458
        %v2460 = vand.u32 %v1824, 4294901760
        %v2461 = vsub.f32 %v1824, %v2460
        %v2462 = vand.u32 %v2461, 4294901760
        %2463 = vmatpush.msra.mxu0 %v2462
        %v2464 = vand.u32 %v1823, 4294901760
        %v2465 = vsub.f32 %v1823, %v2464
        %v2466 = vand.u32 %v2465, 4294901760
        %2467 = vmatpush.msra.mxu0 %v2466
        %v2468 = vand.u32 %v1822, 4294901760
        %v2469 = vsub.f32 %v1822, %v2468
        %v2470 = vand.u32 %v2469, 4294901760
        %2471 = vmatpush.msra.mxu0 %v2470
        %v2472 = vand.u32 %v1821, 4294901760
        %v2473 = vsub.f32 %v1821, %v2472
        %v2474 = vand.u32 %v2473, 4294901760
        %2475 = vmatpush.msra.mxu0 %v2474
        %v2476 = vand.u32 %v1820, 4294901760
        %v2477 = vsub.f32 %v1820, %v2476
        %v2478 = vand.u32 %v2477, 4294901760
        %2479 = vmatpush.msra.mxu0 %v2478
        %v2480 = vand.u32 %v1580, 4294901760
        %2481 = vmatmul.f32.gmra.mxu0 %v2480
        %v2482 = vpop.f32.mrf.mxu0
        %v2483 = vadd.f32 %v2324, %v2482
        %v2484 = vand.u32 %v1582, 4294901760
        %2485 = vmatmul.f32.gmra.mxu0 %v2484
        %v2486 = vpop.f32.mrf.mxu0
        %v2487 = vadd.f32 %v2330, %v2486
        %v2488 = vand.u32 %v1584, 4294901760
        %2489 = vmatmul.f32.gmra.mxu0 %v2488
        %v2490 = vpop.f32.mrf.mxu0
        %v2491 = vadd.f32 %v2336, %v2490
        %v2492 = vand.u32 %v1586, 4294901760
        %2493 = vmatmul.f32.gmra.mxu0 %v2492
        %v2494 = vpop.f32.mrf.mxu0
        %v2495 = vadd.f32 %v2342, %v2494
        %v2496 = vand.u32 %v1588, 4294901760
        %2497 = vmatmul.f32.gmra.mxu0 %v2496
        %v2498 = vpop.f32.mrf.mxu0
        %v2499 = vadd.f32 %v2348, %v2498
        %v2500 = vand.u32 %v1590, 4294901760
        %2501 = vmatmul.f32.gmra.mxu0 %v2500
        %v2502 = vpop.f32.mrf.mxu0
        %v2503 = vadd.f32 %v2354, %v2502
        %v2504 = vand.u32 %v1592, 4294901760
        %2505 = vmatmul.f32.gmra.mxu0 %v2504
        %v2506 = vpop.f32.mrf.mxu0
        %v2507 = vadd.f32 %v2360, %v2506
        %v2508 = vand.u32 %v1594, 4294901760
        %2509 = vmatmul.f32.gmra.mxu0 %v2508
        %v2510 = vpop.f32.mrf.mxu0
        %v2511 = vadd.f32 %v2366, %v2510
        %v2512 = vand.u32 %v1596, 4294901760
        %2513 = vmatmul.f32.gmra.mxu0 %v2512
        %v2514 = vpop.f32.mrf.mxu0
        %v2515 = vadd.f32 %v2372, %v2514
        %v2516 = vand.u32 %v1598, 4294901760
        %2517 = vmatmul.f32.gmra.mxu0 %v2516
        %v2518 = vpop.f32.mrf.mxu0
        %v2519 = vadd.f32 %v2378, %v2518
        %v2520 = vand.u32 %v1600, 4294901760
        %2521 = vmatmul.f32.gmra.mxu0 %v2520
        %v2522 = vpop.f32.mrf.mxu0
        %v2523 = vadd.f32 %v2384, %v2522
        %v2524 = vand.u32 %v1602, 4294901760
        %2525 = vmatmul.f32.gmra.mxu0 %v2524
        %v2526 = vpop.f32.mrf.mxu0
        %v2527 = vadd.f32 %v2390, %v2526
        %v2528 = vand.u32 %v1604, 4294901760
        %2529 = vmatmul.f32.gmra.mxu0 %v2528
        %v2530 = vpop.f32.mrf.mxu0
        %v2531 = vadd.f32 %v2396, %v2530
        %v2532 = vand.u32 %v1606, 4294901760
        %2533 = vmatmul.f32.gmra.mxu0 %v2532
        %v2534 = vpop.f32.mrf.mxu0
        %v2535 = vadd.f32 %v2402, %v2534
        %v2536 = vand.u32 %v1608, 4294901760
        %2537 = vmatmul.f32.gmra.mxu0 %v2536
        %v2538 = vpop.f32.mrf.mxu0
        %v2539 = vadd.f32 %v2408, %v2538
        %v2540 = vand.u32 %v1610, 4294901760
        %2541 = vmatmul.f32.gmra.mxu0 %v2540
        %v2542 = vpop.f32.mrf.mxu0
        %v2543 = vadd.f32 %v2414, %v2542
        %2544 = vdwg.mxu0
        %v2545 = vand.u32 %v1835, 4294901760
        %2546 = vmatpush.msra.mxu0 %v2545
        %v2547 = vand.u32 %v1834, 4294901760
        %2548 = vmatpush.msra.mxu0 %v2547
        %v2549 = vand.u32 %v1833, 4294901760
        %2550 = vmatpush.msra.mxu0 %v2549
        %v2551 = vand.u32 %v1832, 4294901760
        %2552 = vmatpush.msra.mxu0 %v2551
        %v2553 = vand.u32 %v1831, 4294901760
        %2554 = vmatpush.msra.mxu0 %v2553
        %v2555 = vand.u32 %v1830, 4294901760
        %2556 = vmatpush.msra.mxu0 %v2555
        %v2557 = vand.u32 %v1829, 4294901760
        %2558 = vmatpush.msra.mxu0 %v2557
        %v2559 = vand.u32 %v1828, 4294901760
        %2560 = vmatpush.msra.mxu0 %v2559
        %v2561 = vand.u32 %v1827, 4294901760
        %2562 = vmatpush.msra.mxu0 %v2561
        %v2563 = vand.u32 %v1826, 4294901760
        %2564 = vmatpush.msra.mxu0 %v2563
        %v2565 = vand.u32 %v1825, 4294901760
        %2566 = vmatpush.msra.mxu0 %v2565
        %v2567 = vand.u32 %v1824, 4294901760
        %2568 = vmatpush.msra.mxu0 %v2567
        %v2569 = vand.u32 %v1823, 4294901760
        %2570 = vmatpush.msra.mxu0 %v2569
        %v2571 = vand.u32 %v1822, 4294901760
        %2572 = vmatpush.msra.mxu0 %v2571
        %v2573 = vand.u32 %v1821, 4294901760
        %2574 = vmatpush.msra.mxu0 %v2573
        %v2575 = vand.u32 %v1820, 4294901760
        %2576 = vmatpush.msra.mxu0 %v2575
        %v2577 = vand.u32 %v1580, 4294901760
        %2578 = vmatmul.f32.gmra.mxu0 %v2577
        %v2579 = vpop.f32.mrf.mxu0
        %v2580 = vadd.f32 %v2483, %v2579
        %v2581 = vand.u32 %v1582, 4294901760
        %2582 = vmatmul.f32.gmra.mxu0 %v2581
        %v2583 = vpop.f32.mrf.mxu0
        %v2584 = vadd.f32 %v2487, %v2583
        %v2585 = vand.u32 %v1584, 4294901760
        %2586 = vmatmul.f32.gmra.mxu0 %v2585
        %v2587 = vpop.f32.mrf.mxu0
        %v2588 = vadd.f32 %v2491, %v2587
        %v2589 = vand.u32 %v1586, 4294901760
        %2590 = vmatmul.f32.gmra.mxu0 %v2589
        %v2591 = vpop.f32.mrf.mxu0
        %v2592 = vadd.f32 %v2495, %v2591
        %v2593 = vand.u32 %v1588, 4294901760
        %2594 = vmatmul.f32.gmra.mxu0 %v2593
        %v2595 = vpop.f32.mrf.mxu0
        %v2596 = vadd.f32 %v2499, %v2595
        %v2597 = vand.u32 %v1590, 4294901760
        %2598 = vmatmul.f32.gmra.mxu0 %v2597
        %v2599 = vpop.f32.mrf.mxu0
        %v2600 = vadd.f32 %v2503, %v2599
        %v2601 = vand.u32 %v1592, 4294901760
        %2602 = vmatmul.f32.gmra.mxu0 %v2601
        %v2603 = vpop.f32.mrf.mxu0
        %v2604 = vadd.f32 %v2507, %v2603
        %v2605 = vand.u32 %v1594, 4294901760
        %2606 = vmatmul.f32.gmra.mxu0 %v2605
        %v2607 = vpop.f32.mrf.mxu0
        %v2608 = vadd.f32 %v2511, %v2607
        %v2609 = vand.u32 %v1596, 4294901760
        %2610 = vmatmul.f32.gmra.mxu0 %v2609
        %v2611 = vpop.f32.mrf.mxu0
        %v2612 = vadd.f32 %v2515, %v2611
        %v2613 = vand.u32 %v1598, 4294901760
        %2614 = vmatmul.f32.gmra.mxu0 %v2613
        %v2615 = vpop.f32.mrf.mxu0
        %v2616 = vadd.f32 %v2519, %v2615
        %v2617 = vand.u32 %v1600, 4294901760
        %2618 = vmatmul.f32.gmra.mxu0 %v2617
        %v2619 = vpop.f32.mrf.mxu0
        %v2620 = vadd.f32 %v2523, %v2619
        %v2621 = vand.u32 %v1602, 4294901760
        %2622 = vmatmul.f32.gmra.mxu0 %v2621
        %v2623 = vpop.f32.mrf.mxu0
        %v2624 = vadd.f32 %v2527, %v2623
        %v2625 = vand.u32 %v1604, 4294901760
        %2626 = vmatmul.f32.gmra.mxu0 %v2625
        %v2627 = vpop.f32.mrf.mxu0
        %v2628 = vadd.f32 %v2531, %v2627
        %v2629 = vand.u32 %v1606, 4294901760
        %2630 = vmatmul.f32.gmra.mxu0 %v2629
        %v2631 = vpop.f32.mrf.mxu0
        %v2632 = vadd.f32 %v2535, %v2631
        %v2633 = vand.u32 %v1608, 4294901760
        %2634 = vmatmul.f32.gmra.mxu0 %v2633
        %v2635 = vpop.f32.mrf.mxu0
        %v2636 = vadd.f32 %v2539, %v2635
        %v2637 = vand.u32 %v1610, 4294901760
        %2638 = vmatmul.f32.gmra.mxu0 %v2637
        %v2639 = vpop.f32.mrf.mxu0
        %v2640 = vadd.f32 %v2543, %v2639
        %2641 = vdwg.mxu0
        %v2642 = vadd.f32 %v1804, %v2580
        %v2643 = vadd.f32 %v1805, %v2584
        %v2644 = vadd.f32 %v1806, %v2588
        %v2645 = vadd.f32 %v1807, %v2592
        %v2646 = vadd.f32 %v1808, %v2596
        %v2647 = vadd.f32 %v1809, %v2600
        %v2648 = vadd.f32 %v1810, %v2604
        %v2649 = vadd.f32 %v1811, %v2608
        %v2650 = vadd.f32 %v1812, %v2612
        %v2651 = vadd.f32 %v1813, %v2616
        %v2652 = vadd.f32 %v1814, %v2620
        %v2653 = vadd.f32 %v1815, %v2624
        %v2654 = vadd.f32 %v1816, %v2628
        %v2655 = vadd.f32 %v1817, %v2632
        %v2656 = vadd.f32 %v1818, %v2636
        %v2657 = vadd.f32 %v1819, %v2640
        %2658 = vst.msk [vmem:[#allocation4] sm:$0xff] %vm398, %v2642
        %2659 = vst.msk [vmem:[#allocation4 + $0x8] sm:$0xff] %vm398, %v2643
        %2660 = vst.msk [vmem:[#allocation4 + $0x10] sm:$0xff] %vm398, %v2644
        %2661 = vst.msk [vmem:[#allocation4 + $0x18] sm:$0xff] %vm398, %v2645
        %2662 = vst.msk [vmem:[#allocation4 + $0x20] sm:$0xff] %vm398, %v2646
        %2663 = vst.msk [vmem:[#allocation4 + $0x28] sm:$0xff] %vm398, %v2647
        %2664 = vst.msk [vmem:[#allocation4 + $0x30] sm:$0xff] %vm398, %v2648
        %2665 = vst.msk [vmem:[#allocation4 + $0x38] sm:$0xff] %vm398, %v2649
        %2666 = vst.msk [vmem:[#allocation4 + $0x40] sm:$0xff] %vm398, %v2650
        %2667 = vst.msk [vmem:[#allocation4 + $0x48] sm:$0xff] %vm398, %v2651
        %2668 = vst.msk [vmem:[#allocation4 + $0x50] sm:$0xff] %vm398, %v2652
        %2669 = vst.msk [vmem:[#allocation4 + $0x58] sm:$0xff] %vm398, %v2653
        %2670 = vst.msk [vmem:[#allocation4 + $0x60] sm:$0xff] %vm398, %v2654
        %2671 = vst.msk [vmem:[#allocation4 + $0x68] sm:$0xff] %vm398, %v2655
        %2672 = vst.msk [vmem:[#allocation4 + $0x70] sm:$0xff] %vm398, %v2656
        %2673 = vst.msk [vmem:[#allocation4 + $0x78] sm:$0xff] %vm398, %v2657
        %2674 = vst.msk [vmem:[#allocation2] sm:$0xff] %vm1691, %v1419
        %2675 = vst.msk [vmem:[#allocation2 + $0x8] sm:$0xff] %vm1691, %v1420
        %2676 = vst.msk [vmem:[#allocation2 + $0x10] sm:$0xff] %vm1691, %v1421
        %2677 = vst.msk [vmem:[#allocation2 + $0x18] sm:$0xff] %vm1691, %v1422
        %2678 = vst.msk [vmem:[#allocation2 + $0x20] sm:$0xff] %vm1691, %v1423
        %2679 = vst.msk [vmem:[#allocation2 + $0x28] sm:$0xff] %vm1691, %v1424
        %2680 = vst.msk [vmem:[#allocation2 + $0x30] sm:$0xff] %vm1691, %v1425
        %2681 = vst.msk [vmem:[#allocation2 + $0x38] sm:$0xff] %vm1691, %v1426
        %2682 = vst.msk [vmem:[#allocation2 + $0x40] sm:$0xff] %vm1691, %v1427
        %2683 = vst.msk [vmem:[#allocation2 + $0x48] sm:$0xff] %vm1691, %v1428
        %2684 = vst.msk [vmem:[#allocation2 + $0x50] sm:$0xff] %vm1691, %v1429
        %2685 = vst.msk [vmem:[#allocation2 + $0x58] sm:$0xff] %vm1691, %v1430
        %2686 = vst.msk [vmem:[#allocation2 + $0x60] sm:$0xff] %vm1691, %v1431
        %2687 = vst.msk [vmem:[#allocation2 + $0x68] sm:$0xff] %vm1691, %v1432
        %2688 = vst.msk [vmem:[#allocation2 + $0x70] sm:$0xff] %vm1691, %v1433
        %2689 = vst.msk [vmem:[#allocation2 + $0x78] sm:$0xff] %vm1691, %v1434
      $region40: #{attention_forward.6} parent=31 // pred_fallthru
        _
      // Predicated region
      $region41: #{attention_forward.6} parent=31 // pred_check
        %p2690 = pneg %p289
      $region42: #{attention_forward.6} parent=31 // pred_check_branch
        %2692 = sbr.rel (%p2690) target = $region44
      $region43: #{attention_forward.6} parent=31 // pred_region
        %v2693 = vld [vmem:[#allocation3] sm:$0xff]
        %v2694 = vld [vmem:[#allocation3 + $0x8] sm:$0xff]
        %v2695 = vld [vmem:[#allocation3 + $0x10] sm:$0xff]
        %v2696 = vld [vmem:[#allocation3 + $0x18] sm:$0xff]
        %v2697 = vld [vmem:[#allocation3 + $0x20] sm:$0xff]
        %v2698 = vld [vmem:[#allocation3 + $0x28] sm:$0xff]
        %v2699 = vld [vmem:[#allocation3 + $0x30] sm:$0xff]
        %v2700 = vld [vmem:[#allocation3 + $0x38] sm:$0xff]
        %v2701 = vld [vmem:[#allocation3 + $0x40] sm:$0xff]
        %v2702 = vld [vmem:[#allocation3 + $0x48] sm:$0xff]
        %v2703 = vld [vmem:[#allocation3 + $0x50] sm:$0xff]
        %v2704 = vld [vmem:[#allocation3 + $0x58] sm:$0xff]
        %v2705 = vld [vmem:[#allocation3 + $0x60] sm:$0xff]
        %v2706 = vld [vmem:[#allocation3 + $0x68] sm:$0xff]
        %v2707 = vld [vmem:[#allocation3 + $0x70] sm:$0xff]
        %v2708 = vld [vmem:[#allocation3 + $0x78] sm:$0xff]
        %v2709 = vrcp.pop %v2693
        %v2710 = vmul.f32 %v2693, %v2709
        %v2711 = vsub.f32 1.0, %v2710
        %v2712 = vmul.f32 %v2709, %v2711
        %v2713 = vadd.f32 %v2709, %v2712
        %vm2714 = vweird.f32 %v2693
        %vm2715 = vweird.f32 %v2709
        %vm2716 = vmor %vm2714, %vm2715
        %v2717 = vsel %vm2716, %v2709, %v2713
        %v2718 = vand.u32 2147483647, %v2693
        %vm2719 = vcmp.eq.f32.partialorder %v2718, 8.507059e+37
        %v2720 = vand.u32 %v2693, 2147483648
        %v2721 = vor.u32 1.1754944e-38, %v2720
        %v2722 = vsel %vm2719, %v2721, %v2717
        %v2723 = vrcp.pop %v2694
        %v2724 = vmul.f32 %v2694, %v2723
        %v2725 = vsub.f32 1.0, %v2724
        %v2726 = vmul.f32 %v2723, %v2725
        %v2727 = vadd.f32 %v2723, %v2726
        %vm2728 = vweird.f32 %v2694
        %vm2729 = vweird.f32 %v2723
        %vm2730 = vmor %vm2728, %vm2729
        %v2731 = vsel %vm2730, %v2723, %v2727
        %v2732 = vand.u32 2147483647, %v2694
        %vm2733 = vcmp.eq.f32.partialorder %v2732, 8.507059e+37
        %v2734 = vand.u32 %v2694, 2147483648
        %v2735 = vor.u32 1.1754944e-38, %v2734
        %v2736 = vsel %vm2733, %v2735, %v2731
        %v2737 = vrcp.pop %v2695
        %v2738 = vmul.f32 %v2695, %v2737
        %v2739 = vsub.f32 1.0, %v2738
        %v2740 = vmul.f32 %v2737, %v2739
        %v2741 = vadd.f32 %v2737, %v2740
        %vm2742 = vweird.f32 %v2695
        %vm2743 = vweird.f32 %v2737
        %vm2744 = vmor %vm2742, %vm2743
        %v2745 = vsel %vm2744, %v2737, %v2741
        %v2746 = vand.u32 2147483647, %v2695
        %vm2747 = vcmp.eq.f32.partialorder %v2746, 8.507059e+37
        %v2748 = vand.u32 %v2695, 2147483648
        %v2749 = vor.u32 1.1754944e-38, %v2748
        %v2750 = vsel %vm2747, %v2749, %v2745
        %v2751 = vrcp.pop %v2696
        %v2752 = vmul.f32 %v2696, %v2751
        %v2753 = vsub.f32 1.0, %v2752
        %v2754 = vmul.f32 %v2751, %v2753
        %v2755 = vadd.f32 %v2751, %v2754
        %vm2756 = vweird.f32 %v2696
        %vm2757 = vweird.f32 %v2751
        %vm2758 = vmor %vm2756, %vm2757
        %v2759 = vsel %vm2758, %v2751, %v2755
        %v2760 = vand.u32 2147483647, %v2696
        %vm2761 = vcmp.eq.f32.partialorder %v2760, 8.507059e+37
        %v2762 = vand.u32 %v2696, 2147483648
        %v2763 = vor.u32 1.1754944e-38, %v2762
        %v2764 = vsel %vm2761, %v2763, %v2759
        %v2765 = vrcp.pop %v2697
        %v2766 = vmul.f32 %v2697, %v2765
        %v2767 = vsub.f32 1.0, %v2766
        %v2768 = vmul.f32 %v2765, %v2767
        %v2769 = vadd.f32 %v2765, %v2768
        %vm2770 = vweird.f32 %v2697
        %vm2771 = vweird.f32 %v2765
        %vm2772 = vmor %vm2770, %vm2771
        %v2773 = vsel %vm2772, %v2765, %v2769
        %v2774 = vand.u32 2147483647, %v2697
        %vm2775 = vcmp.eq.f32.partialorder %v2774, 8.507059e+37
        %v2776 = vand.u32 %v2697, 2147483648
        %v2777 = vor.u32 1.1754944e-38, %v2776
        %v2778 = vsel %vm2775, %v2777, %v2773
        %v2779 = vrcp.pop %v2698
        %v2780 = vmul.f32 %v2698, %v2779
        %v2781 = vsub.f32 1.0, %v2780
        %v2782 = vmul.f32 %v2779, %v2781
        %v2783 = vadd.f32 %v2779, %v2782
        %vm2784 = vweird.f32 %v2698
        %vm2785 = vweird.f32 %v2779
        %vm2786 = vmor %vm2784, %vm2785
        %v2787 = vsel %vm2786, %v2779, %v2783
        %v2788 = vand.u32 2147483647, %v2698
        %vm2789 = vcmp.eq.f32.partialorder %v2788, 8.507059e+37
        %v2790 = vand.u32 %v2698, 2147483648
        %v2791 = vor.u32 1.1754944e-38, %v2790
        %v2792 = vsel %vm2789, %v2791, %v2787
        %v2793 = vrcp.pop %v2699
        %v2794 = vmul.f32 %v2699, %v2793
        %v2795 = vsub.f32 1.0, %v2794
        %v2796 = vmul.f32 %v2793, %v2795
        %v2797 = vadd.f32 %v2793, %v2796
        %vm2798 = vweird.f32 %v2699
        %vm2799 = vweird.f32 %v2793
        %vm2800 = vmor %vm2798, %vm2799
        %v2801 = vsel %vm2800, %v2793, %v2797
        %v2802 = vand.u32 2147483647, %v2699
        %vm2803 = vcmp.eq.f32.partialorder %v2802, 8.507059e+37
        %v2804 = vand.u32 %v2699, 2147483648
        %v2805 = vor.u32 1.1754944e-38, %v2804
        %v2806 = vsel %vm2803, %v2805, %v2801
        %v2807 = vrcp.pop %v2700
        %v2808 = vmul.f32 %v2700, %v2807
        %v2809 = vsub.f32 1.0, %v2808
        %v2810 = vmul.f32 %v2807, %v2809
        %v2811 = vadd.f32 %v2807, %v2810
        %vm2812 = vweird.f32 %v2700
        %vm2813 = vweird.f32 %v2807
        %vm2814 = vmor %vm2812, %vm2813
        %v2815 = vsel %vm2814, %v2807, %v2811
        %v2816 = vand.u32 2147483647, %v2700
        %vm2817 = vcmp.eq.f32.partialorder %v2816, 8.507059e+37
        %v2818 = vand.u32 %v2700, 2147483648
        %v2819 = vor.u32 1.1754944e-38, %v2818
        %v2820 = vsel %vm2817, %v2819, %v2815
        %v2821 = vrcp.pop %v2701
        %v2822 = vmul.f32 %v2701, %v2821
        %v2823 = vsub.f32 1.0, %v2822
        %v2824 = vmul.f32 %v2821, %v2823
        %v2825 = vadd.f32 %v2821, %v2824
        %vm2826 = vweird.f32 %v2701
        %vm2827 = vweird.f32 %v2821
        %vm2828 = vmor %vm2826, %vm2827
        %v2829 = vsel %vm2828, %v2821, %v2825
        %v2830 = vand.u32 2147483647, %v2701
        %vm2831 = vcmp.eq.f32.partialorder %v2830, 8.507059e+37
        %v2832 = vand.u32 %v2701, 2147483648
        %v2833 = vor.u32 1.1754944e-38, %v2832
        %v2834 = vsel %vm2831, %v2833, %v2829
        %v2835 = vrcp.pop %v2702
        %v2836 = vmul.f32 %v2702, %v2835
        %v2837 = vsub.f32 1.0, %v2836
        %v2838 = vmul.f32 %v2835, %v2837
        %v2839 = vadd.f32 %v2835, %v2838
        %vm2840 = vweird.f32 %v2702
        %vm2841 = vweird.f32 %v2835
        %vm2842 = vmor %vm2840, %vm2841
        %v2843 = vsel %vm2842, %v2835, %v2839
        %v2844 = vand.u32 2147483647, %v2702
        %vm2845 = vcmp.eq.f32.partialorder %v2844, 8.507059e+37
        %v2846 = vand.u32 %v2702, 2147483648
        %v2847 = vor.u32 1.1754944e-38, %v2846
        %v2848 = vsel %vm2845, %v2847, %v2843
        %v2849 = vrcp.pop %v2703
        %v2850 = vmul.f32 %v2703, %v2849
        %v2851 = vsub.f32 1.0, %v2850
        %v2852 = vmul.f32 %v2849, %v2851
        %v2853 = vadd.f32 %v2849, %v2852
        %vm2854 = vweird.f32 %v2703
        %vm2855 = vweird.f32 %v2849
        %vm2856 = vmor %vm2854, %vm2855
        %v2857 = vsel %vm2856, %v2849, %v2853
        %v2858 = vand.u32 2147483647, %v2703
        %vm2859 = vcmp.eq.f32.partialorder %v2858, 8.507059e+37
        %v2860 = vand.u32 %v2703, 2147483648
        %v2861 = vor.u32 1.1754944e-38, %v2860
        %v2862 = vsel %vm2859, %v2861, %v2857
        %v2863 = vrcp.pop %v2704
        %v2864 = vmul.f32 %v2704, %v2863
        %v2865 = vsub.f32 1.0, %v2864
        %v2866 = vmul.f32 %v2863, %v2865
        %v2867 = vadd.f32 %v2863, %v2866
        %vm2868 = vweird.f32 %v2704
        %vm2869 = vweird.f32 %v2863
        %vm2870 = vmor %vm2868, %vm2869
        %v2871 = vsel %vm2870, %v2863, %v2867
        %v2872 = vand.u32 2147483647, %v2704
        %vm2873 = vcmp.eq.f32.partialorder %v2872, 8.507059e+37
        %v2874 = vand.u32 %v2704, 2147483648
        %v2875 = vor.u32 1.1754944e-38, %v2874
        %v2876 = vsel %vm2873, %v2875, %v2871
        %v2877 = vrcp.pop %v2705
        %v2878 = vmul.f32 %v2705, %v2877
        %v2879 = vsub.f32 1.0, %v2878
        %v2880 = vmul.f32 %v2877, %v2879
        %v2881 = vadd.f32 %v2877, %v2880
        %vm2882 = vweird.f32 %v2705
        %vm2883 = vweird.f32 %v2877
        %vm2884 = vmor %vm2882, %vm2883
        %v2885 = vsel %vm2884, %v2877, %v2881
        %v2886 = vand.u32 2147483647, %v2705
        %vm2887 = vcmp.eq.f32.partialorder %v2886, 8.507059e+37
        %v2888 = vand.u32 %v2705, 2147483648
        %v2889 = vor.u32 1.1754944e-38, %v2888
        %v2890 = vsel %vm2887, %v2889, %v2885
        %v2891 = vrcp.pop %v2706
        %v2892 = vmul.f32 %v2706, %v2891
        %v2893 = vsub.f32 1.0, %v2892
        %v2894 = vmul.f32 %v2891, %v2893
        %v2895 = vadd.f32 %v2891, %v2894
        %vm2896 = vweird.f32 %v2706
        %vm2897 = vweird.f32 %v2891
        %vm2898 = vmor %vm2896, %vm2897
        %v2899 = vsel %vm2898, %v2891, %v2895
        %v2900 = vand.u32 2147483647, %v2706
        %vm2901 = vcmp.eq.f32.partialorder %v2900, 8.507059e+37
        %v2902 = vand.u32 %v2706, 2147483648
        %v2903 = vor.u32 1.1754944e-38, %v2902
        %v2904 = vsel %vm2901, %v2903, %v2899
        %v2905 = vrcp.pop %v2707
        %v2906 = vmul.f32 %v2707, %v2905
        %v2907 = vsub.f32 1.0, %v2906
        %v2908 = vmul.f32 %v2905, %v2907
        %v2909 = vadd.f32 %v2905, %v2908
        %vm2910 = vweird.f32 %v2707
        %vm2911 = vweird.f32 %v2905
        %vm2912 = vmor %vm2910, %vm2911
        %v2913 = vsel %vm2912, %v2905, %v2909
        %v2914 = vand.u32 2147483647, %v2707
        %vm2915 = vcmp.eq.f32.partialorder %v2914, 8.507059e+37
        %v2916 = vand.u32 %v2707, 2147483648
        %v2917 = vor.u32 1.1754944e-38, %v2916
        %v2918 = vsel %vm2915, %v2917, %v2913
        %v2919 = vrcp.pop %v2708
        %v2920 = vmul.f32 %v2708, %v2919
        %v2921 = vsub.f32 1.0, %v2920
        %v2922 = vmul.f32 %v2919, %v2921
        %v2923 = vadd.f32 %v2919, %v2922
        %vm2924 = vweird.f32 %v2708
        %vm2925 = vweird.f32 %v2919
        %vm2926 = vmor %vm2924, %vm2925
        %v2927 = vsel %vm2926, %v2919, %v2923
        %v2928 = vand.u32 2147483647, %v2708
        %vm2929 = vcmp.eq.f32.partialorder %v2928, 8.507059e+37
        %v2930 = vand.u32 %v2708, 2147483648
        %v2931 = vor.u32 1.1754944e-38, %v2930
        %v2932 = vsel %vm2929, %v2931, %v2927
        %v2933 = vld [vmem:[#allocation4] sm:$0xff]
        %v2934 = vld [vmem:[#allocation4 + $0x8] sm:$0xff]
        %v2935 = vld [vmem:[#allocation4 + $0x10] sm:$0xff]
        %v2936 = vld [vmem:[#allocation4 + $0x18] sm:$0xff]
        %v2937 = vld [vmem:[#allocation4 + $0x20] sm:$0xff]
        %v2938 = vld [vmem:[#allocation4 + $0x28] sm:$0xff]
        %v2939 = vld [vmem:[#allocation4 + $0x30] sm:$0xff]
        %v2940 = vld [vmem:[#allocation4 + $0x38] sm:$0xff]
        %v2941 = vld [vmem:[#allocation4 + $0x40] sm:$0xff]
        %v2942 = vld [vmem:[#allocation4 + $0x48] sm:$0xff]
        %v2943 = vld [vmem:[#allocation4 + $0x50] sm:$0xff]
        %v2944 = vld [vmem:[#allocation4 + $0x58] sm:$0xff]
        %v2945 = vld [vmem:[#allocation4 + $0x60] sm:$0xff]
        %v2946 = vld [vmem:[#allocation4 + $0x68] sm:$0xff]
        %v2947 = vld [vmem:[#allocation4 + $0x70] sm:$0xff]
        %v2948 = vld [vmem:[#allocation4 + $0x78] sm:$0xff]
        %2950 = vset.pattern.permute.xlu0 0
        %2951 = vperm.xlu0 %2950, %v2722
        %v2952 = vpop.permute.xlu0 %2951
        %2955 = vset.pattern.permute.xlu0 0
        %2956 = vperm.xlu0 %2955, %v2736
        %v2957 = vpop.permute.xlu0 %2956
        %2960 = vset.pattern.permute.xlu0 0
        %2961 = vperm.xlu0 %2960, %v2750
        %v2962 = vpop.permute.xlu0 %2961
        %2965 = vset.pattern.permute.xlu0 0
        %2966 = vperm.xlu0 %2965, %v2764
        %v2967 = vpop.permute.xlu0 %2966
        %2970 = vset.pattern.permute.xlu0 0
        %2971 = vperm.xlu0 %2970, %v2778
        %v2972 = vpop.permute.xlu0 %2971
        %2975 = vset.pattern.permute.xlu0 0
        %2976 = vperm.xlu0 %2975, %v2792
        %v2977 = vpop.permute.xlu0 %2976
        %2980 = vset.pattern.permute.xlu0 0
        %2981 = vperm.xlu0 %2980, %v2806
        %v2982 = vpop.permute.xlu0 %2981
        %2985 = vset.pattern.permute.xlu0 0
        %2986 = vperm.xlu0 %2985, %v2820
        %v2987 = vpop.permute.xlu0 %2986
        %2990 = vset.pattern.permute.xlu0 0
        %2991 = vperm.xlu0 %2990, %v2834
        %v2992 = vpop.permute.xlu0 %2991
        %2995 = vset.pattern.permute.xlu0 0
        %2996 = vperm.xlu0 %2995, %v2848
        %v2997 = vpop.permute.xlu0 %2996
        %3000 = vset.pattern.permute.xlu0 0
        %3001 = vperm.xlu0 %3000, %v2862
        %v3002 = vpop.permute.xlu0 %3001
        %3005 = vset.pattern.permute.xlu0 0
        %3006 = vperm.xlu0 %3005, %v2876
        %v3007 = vpop.permute.xlu0 %3006
        %3010 = vset.pattern.permute.xlu0 0
        %3011 = vperm.xlu0 %3010, %v2890
        %v3012 = vpop.permute.xlu0 %3011
        %3015 = vset.pattern.permute.xlu0 0
        %3016 = vperm.xlu0 %3015, %v2904
        %v3017 = vpop.permute.xlu0 %3016
        %3020 = vset.pattern.permute.xlu0 0
        %3021 = vperm.xlu0 %3020, %v2918
        %v3022 = vpop.permute.xlu0 %3021
        %3025 = vset.pattern.permute.xlu0 0
        %3026 = vperm.xlu0 %3025, %v2932
        %v3027 = vpop.permute.xlu0 %3026
        %v3029 = vmul.f32 %v2933, %v2952
        %v3030 = vmul.f32 %v2934, %v2957
        %v3031 = vmul.f32 %v2935, %v2962
        %v3032 = vmul.f32 %v2936, %v2967
        %v3033 = vmul.f32 %v2937, %v2972
        %v3034 = vmul.f32 %v2938, %v2977
        %v3035 = vmul.f32 %v2939, %v2982
        %v3036 = vmul.f32 %v2940, %v2987
        %v3037 = vmul.f32 %v2941, %v2992
        %v3038 = vmul.f32 %v2942, %v2997
        %v3039 = vmul.f32 %v2943, %v3002
        %v3040 = vmul.f32 %v2944, %v3007
        %v3041 = vmul.f32 %v2945, %v3012
        %v3042 = vmul.f32 %v2946, %v3017
        %v3043 = vmul.f32 %v2947, %v3022
        %v3044 = vmul.f32 %v2948, %v3027
        %vm3045 = vcmask 261120
        %3046 = vst.msk [vmem:[%s287] sm:$0xff] %vm3045, %v3029
        %3047 = vst.msk [vmem:[%s287 + $0x8] sm:$0xff] %vm3045, %v3030
        %3048 = vst.msk [vmem:[%s287 + $0x10] sm:$0xff] %vm3045, %v3031
        %3049 = vst.msk [vmem:[%s287 + $0x18] sm:$0xff] %vm3045, %v3032
        %3050 = vst.msk [vmem:[%s287 + $0x20] sm:$0xff] %vm3045, %v3033
        %3051 = vst.msk [vmem:[%s287 + $0x28] sm:$0xff] %vm3045, %v3034
        %3052 = vst.msk [vmem:[%s287 + $0x30] sm:$0xff] %vm3045, %v3035
        %3053 = vst.msk [vmem:[%s287 + $0x38] sm:$0xff] %vm3045, %v3036
        %3054 = vst.msk [vmem:[%s287 + $0x40] sm:$0xff] %vm3045, %v3037
        %3055 = vst.msk [vmem:[%s287 + $0x48] sm:$0xff] %vm3045, %v3038
        %3056 = vst.msk [vmem:[%s287 + $0x50] sm:$0xff] %vm3045, %v3039
        %3057 = vst.msk [vmem:[%s287 + $0x58] sm:$0xff] %vm3045, %v3040
        %3058 = vst.msk [vmem:[%s287 + $0x60] sm:$0xff] %vm3045, %v3041
        %3059 = vst.msk [vmem:[%s287 + $0x68] sm:$0xff] %vm3045, %v3042
        %3060 = vst.msk [vmem:[%s287 + $0x70] sm:$0xff] %vm3045, %v3043
        %3061 = vst.msk [vmem:[%s287 + $0x78] sm:$0xff] %vm3045, %v3044
      $region44: #{attention_forward.6} parent=31 // pred_fallthru
        _
      %s3062 = smul.u32 16, %s20
      %p3063 = scmp.lt.s32.totalorder %s19, 7
      %s3064 = scalar_select %p3063, %s19, 7
      %p3065 = scmp.lt.s32.totalorder %s3062, 15
      %s3066 = scalar_select %p3065, %s3062, 15
      %s3067 = smul.addr %s3064, 16
      %s3068 = sadd.s32 %s3066, %s3067
      %s3069 = smul.addr %s3068, 8
      %s3070 = scalar_lea.vmem %s3, %s3069
      // Predicated region
      $region45: #{attention_forward.6} parent=31 // pred_check
        %p3071 = pneg %p137
      $region46: #{attention_forward.6} parent=31 // pred_check_branch
        %3073 = sbr.rel (%p3071) target = $region48
      $region47: #{attention_forward.6} parent=31 // pred_region
        %s3074 = smul.u32 16, %s20
      $region48: #{attention_forward.6} parent=31 // pred_fallthru
        _
    $region32: #{attention_forward.6} parent=5 // pred_fallthru
      _
    %p3075 = scmp.le.s32.totalorder 2, %s9
    // Predicated region
    $region49: #{attention_forward.6} parent=5 // pred_check
      %p3076 = pneg %p3075
    $region50: #{attention_forward.6} parent=5 // pred_check_branch
      %3078 = sbr.rel (%p3076) target = $region52
    $region51: #{attention_forward.6} parent=5 // pred_region
      %s3079 = ssub.s32 %s9, 2
      // Predicated region
      $region53: #{attention_forward.6} parent=51 // pred_check
        %p3080 = pneg %p143
      $region54: #{attention_forward.6} parent=51 // pred_check_branch
        %3082 = sbr.rel (%p3080) target = $region56
      $region55: #{attention_forward.6} parent=51 // pred_region
        %s3083 = smul.u32 16, %s23
        %p3084 = scmp.lt.s32.totalorder %s22, 7
        %s3085 = scalar_select %p3084, %s22, 7
        %p3086 = scmp.lt.s32.totalorder %s3083, 15
        %s3087 = scalar_select %p3086, %s3083, 15
        %s3088 = smul.addr %s3085, 16
        %s3089 = sadd.s32 %s3087, %s3088
        %s3090 = smul.addr %s3089, 8
        %s3091 = scalar_lea.vmem %s3, %s3090
      $region56: #{attention_forward.6} parent=51 // pred_fallthru
        _
    $region52: #{attention_forward.6} parent=5 // pred_fallthru
      _
  $region6: #{attention_forward.6} parent=0 // loop_footer
    %s13 = sadd.s32 1, %s9
  $region7: #{attention_forward.6} parent=0 // loop_footer_branch
    %8 = sbr.rel target = $region3
  $region8: #{attention_forward.6} parent=0 // loop_exit
    _

</llo_original>
